<compile_context>
chip_gen: v7x
topology: tpu7x:2x2x1
jax: 0.10.0
libtpu: 0.0.40
codegen_flags: <defaults>
</compile_context>

<pallas_src>
import functools
import math

import jax
import jax.numpy as jnp
from jax.experimental import pallas as pl
from jax.experimental.pallas import tpu as pltpu  # noqa: F401  (TPU backend; defaults suffice at this size)


# ------------------------------------------------------------------ helpers ------

def _layernorm(y, g, b, eps):
    mean = jnp.mean(y, axis=-1, keepdims=True)
    var = jnp.mean(jnp.square(y - mean), axis=-1, keepdims=True)
    return (y - mean) * jax.lax.rsqrt(var + eps) * g + b


def _gelu_tanh(x):
    # TODO(synk): PyTorch activation='gelu' is the exact erf form; the tanh approximation
    # (difference < ~1e-3) is used for a guaranteed EUP lowering inside the kernel.
    c = 0.7978845608028654  # sqrt(2/pi)
    return 0.5 * x * (1.0 + jnp.tanh(c * (x + 0.044715 * x * x * x)))


# ------------------------------------------------------------------ kernel -------

def bert_fused_kernel(x_ref, pe_ref,
                      wqkv_ref, bqkv_ref, wo_ref, bo_ref, ln1g_ref, ln1b_ref,
                      w1_ref, b1_ref, w2_ref, b2_ref, ln2g_ref, ln2b_ref,
                      o_ref, *, batch, seq, num_heads, num_layers, eps):
    """Whole BERT forward in one VMEM-resident block.

    x_ref: (B*S, H)   pe_ref: (S, H)
    stacked weights: leading axis = layer index (statically unrolled).
    """
    H = x_ref.shape[-1]
    hd = H // num_heads
    scale = 1.0 / math.sqrt(hd)

    # Positional encoding (broadcast over batch); dropout is identity at inference.
    pe = pe_ref[...]                                              # (S, H)
    x = x_ref[...] + jnp.concatenate([pe] * batch, axis=0)        # (B*S, H)

    for layer in range(num_layers):
        # ---------------- multi-head self-attention ----------------
        # Packed QKV projection on the MXU: (B*S, H) @ (H, 3H).
        qkv = (jnp.dot(x, wqkv_ref[layer], preferred_element_type=jnp.float32)
               + bqkv_ref[layer])                                 # (B*S, 3H)
        wo = wo_ref[layer]                                        # (H, H)

        per_batch = []
        for b in range(batch):
            qkv_b = qkv[b * seq:(b + 1) * seq]                    # (S, 3H), sublane-aligned slice
            acc = jnp.zeros((seq, H), jnp.float32)
            for h in range(num_heads):
                q = qkv_b[:, h * hd:(h + 1) * hd]                 # (S, hd)
                k = qkv_b[:, H + h * hd:H + (h + 1) * hd]
                v = qkv_b[:, 2 * H + h * hd:2 * H + (h + 1) * hd]
                # scores = q @ k^T (contract last dims; avoids an explicit transpose)
                s = jax.lax.dot_general(q, k, (((1,), (1,)), ((), ())),
                                        preferred_element_type=jnp.float32) * scale
                s = s - jnp.max(s, axis=-1, keepdims=True)
                p = jnp.exp(s)
                p = p / jnp.sum(p, axis=-1, keepdims=True)
                o_h = jnp.dot(p, v, preferred_element_type=jnp.float32)       # (S, hd)
                # Fold head-merge into out-projection: ctx @ Wo == sum_h o_h @ Wo[h*hd:(h+1)*hd].
                acc = acc + jnp.dot(o_h, wo[h * hd:(h + 1) * hd, :],
                                    preferred_element_type=jnp.float32)
            per_batch.append(acc)
        attn = jnp.concatenate(per_batch, axis=0)                 # (B*S, H)

        # out-proj bias + residual + LayerNorm1 (post-norm).
        x = _layernorm(attn + bo_ref[layer] + x, ln1g_ref[layer], ln1b_ref[layer], eps)

        # ---------------- feed-forward block ----------------
        h_mid = jnp.dot(x, w1_ref[layer], preferred_element_type=jnp.float32) + b1_ref[layer]
        h_mid = _gelu_tanh(h_mid)
        y = jnp.dot(h_mid, w2_ref[layer], preferred_element_type=jnp.float32) + b2_ref[layer] + x
        x = _layernorm(y, ln2g_ref[layer], ln2b_ref[layer], eps)

    o_ref[...] = x.astype(o_ref.dtype)


# ------------------------------------------------------------------ wrapper ------

def bert_forward(x, pe, params, *, num_heads, eps=1e-5):
    B, S, H = x.shape
    num_layers = params["w_qkv_t"].shape[0]
    kernel = functools.partial(
        bert_fused_kernel, batch=B, seq=S, num_heads=num_heads,
        num_layers=num_layers, eps=eps)
    out = pl.pallas_call(
        kernel,
        out_shape=jax.ShapeDtypeStruct((B * S, H), x.dtype),
    )(
        x.reshape(B * S, H), pe.reshape(S, H),
        params["w_qkv_t"], params["b_qkv"],
        params["w_o_t"], params["b_o"],
        params["ln1_g"], params["ln1_b"],
        params["w1_t"], params["b1"],
        params["w2_t"], params["b2"],
        params["ln2_g"], params["ln2_b"],
    )
    return out.reshape(B, S, H)


# ------------------------------------------------------------------ reference ----

def bert_reference(x, pe, params, *, num_heads, eps=1e-5):
    hp = jax.lax.Precision.HIGHEST
    B, S, H = x.shape
    hd = H // num_heads
    num_layers = params["w_qkv_t"].shape[0]
    y = x + pe
    for layer in range(num_layers):
        p = {k: v[layer] for k, v in params.items()}
        yf = y.reshape(B * S, H)
        qkv = jnp.dot(yf, p["w_qkv_t"], precision=hp) + p["b_qkv"]
        qkv = qkv.reshape(B, S, 3, num_heads, hd)
        q = qkv[:, :, 0].transpose(0, 2, 1, 3)
        k = qkv[:, :, 1].transpose(0, 2, 1, 3)
        v = qkv[:, :, 2].transpose(0, 2, 1, 3)
        s = jnp.einsum("bnqd,bnkd->bnqk", q, k, precision=hp) / math.sqrt(hd)
        s = s - jnp.max(s, axis=-1, keepdims=True)
        pr = jnp.exp(s)
        pr = pr / jnp.sum(pr, axis=-1, keepdims=True)
        a = jnp.einsum("bnqk,bnkd->bnqd", pr, v, precision=hp)
        a = a.transpose(0, 2, 1, 3).reshape(B * S, H)
        y1 = _layernorm(jnp.dot(a, p["w_o_t"], precision=hp) + p["b_o"] + yf,
                        p["ln1_g"], p["ln1_b"], eps)
        h = _gelu_tanh(jnp.dot(y1, p["w1_t"], precision=hp) + p["b1"])
        y2 = _layernorm(jnp.dot(h, p["w2_t"], precision=hp) + p["b2"] + y1,
                        p["ln2_g"], p["ln2_b"], eps)
        y = y2.reshape(B, S, H)
    return y


# ------------------------------------------------------------------ setup --------

def sinusoidal_pe(max_len, d_model):
    position = jnp.arange(max_len, dtype=jnp.float32)[:, None]
    div_term = jnp.exp(
        jnp.arange(0, d_model, 2, dtype=jnp.float32) * -(math.log(10000.0) / d_model)
    )
    a = position * div_term
    pe = jnp.zeros((max_len, d_model), jnp.float32)
    pe = pe.at[:, 0::2].set(jnp.sin(a))
    pe = pe.at[:, 1::2].set(jnp.cos(a))
    return pe


def init_layer(key, hidden):
    d_ff = 4 * hidden
    ks = jax.random.split(key, 8)

    def u(k, shape, fan_in):
        bound = 1.0 / math.sqrt(fan_in)
        return jax.random.uniform(k, shape, jnp.float32, -bound, bound)

    return {
        # weights stored transposed (K, N) so the kernel does plain row-major x @ W.
        "w_qkv_t": u(ks[0], (hidden, 3 * hidden), hidden),
        "b_qkv": u(ks[1], (1, 3 * hidden), hidden),
        "w_o_t": u(ks[2], (hidden, hidden), hidden),
        "b_o": u(ks[3], (1, hidden), hidden),
        "w1_t": u(ks[4], (hidden, d_ff), hidden),
        "b1": u(ks[5], (1, d_ff), hidden),
        "w2_t": u(ks[6], (d_ff, hidden), d_ff),
        "b2": u(ks[7], (1, hidden), d_ff),
        "ln1_g": jnp.ones((1, hidden), jnp.float32),
        "ln1_b": jnp.zeros((1, hidden), jnp.float32),
        "ln2_g": jnp.ones((1, hidden), jnp.float32),
        "ln2_b": jnp.zeros((1, hidden), jnp.float32),
    }


if __name__ == "__main__":
    # Small shapes consistent with the module: batch=2, seq=8, hidden=128, 4 heads, 2 layers.
    B, S, H, NH, NL = 2, 8, 128, 4, 2

    key = jax.random.PRNGKey(0)
    kx, *lkeys = jax.random.split(key, NL + 1)
    x = jax.random.normal(kx, (B, S, H), jnp.float32)
    pe = sinusoidal_pe(512, H)[:S][None]  # (1, S, H)

    layers = [init_layer(k, H) for k in lkeys]
    params = {name: jnp.stack([l[name] for l in layers]) for name in layers[0]}

    fwd = jax.jit(functools.partial(bert_forward, num_heads=NH))
    y = jax.block_until_ready(fwd(x, pe, params))

    # Plain-JAX reference check.
    y_ref = bert_reference(x, pe, params, num_heads=NH)
    assert y.shape == (B, S, H)
    assert bool(jnp.all(jnp.isfinite(y)))
    err = float(jnp.max(jnp.abs(y - y_ref)))
    assert err < 2e-3, f"max abs error {err}"

    print("KERNEL_OK")
</pallas_src>

<mosaic_0001>
module attributes {stable_mosaic.version = 11 : i64} {
  func.func @bert_fused_kernel(%arg0: memref<16x128xf32, #tpu.memory_space<vmem>>, %arg1: memref<8x128xf32, #tpu.memory_space<vmem>>, %arg2: memref<2x128x384xf32, #tpu.memory_space<vmem>>, %arg3: memref<2x1x384xf32, #tpu.memory_space<vmem>>, %arg4: memref<2x128x128xf32, #tpu.memory_space<vmem>>, %arg5: memref<2x1x128xf32, #tpu.memory_space<vmem>>, %arg6: memref<2x1x128xf32, #tpu.memory_space<vmem>>, %arg7: memref<2x1x128xf32, #tpu.memory_space<vmem>>, %arg8: memref<2x128x512xf32, #tpu.memory_space<vmem>>, %arg9: memref<2x1x512xf32, #tpu.memory_space<vmem>>, %arg10: memref<2x512x128xf32, #tpu.memory_space<vmem>>, %arg11: memref<2x1x128xf32, #tpu.memory_space<vmem>>, %arg12: memref<2x1x128xf32, #tpu.memory_space<vmem>>, %arg13: memref<2x1x128xf32, #tpu.memory_space<vmem>>, %arg14: memref<16x128xf32, #tpu.memory_space<vmem>>) attributes {dimension_semantics = [], scalar_prefetch = 0 : i64, scratch_operands = 0 : i64, tpu.core_type = #tpu.core_type<tc>} {
    %c0 = arith.constant 0 : index
    %c0_0 = arith.constant 0 : index
    %0 = vector.load %arg1[%c0, %c0_0] : memref<8x128xf32, #tpu.memory_space<vmem>>, vector<8x128xf32>
    %c0_1 = arith.constant 0 : index
    %c0_2 = arith.constant 0 : index
    %1 = vector.load %arg0[%c0_1, %c0_2] : memref<16x128xf32, #tpu.memory_space<vmem>>, vector<16x128xf32>
    %2 = tpu.concatenate %0, %0 in 0 : vector<8x128xf32>, vector<8x128xf32> -> vector<16x128xf32>
    %3 = arith.addf %1, %2 : vector<16x128xf32>
    %c0_3 = arith.constant 0 : index
    %c0_4 = arith.constant 0 : index
    %c0_5 = arith.constant 0 : index
    %4 = vector.load %arg2[%c0_3, %c0_4, %c0_5] : memref<2x128x384xf32, #tpu.memory_space<vmem>>, vector<1x128x384xf32>
    %5 = vector.shape_cast %4 : vector<1x128x384xf32> to vector<128x384xf32>
    %cst = arith.constant dense<0.000000e+00> : vector<16x384xf32>
    %6 = tpu.matmul %3, %5, %cst {dimension_numbers = #tpu.dot_dimension_numbers<[1], [0], [0], [1], [0, 0, 1, 1], [], []>} : vector<16x128xf32>, vector<128x384xf32>, vector<16x384xf32> -> vector<16x384xf32>
    %c0_6 = arith.constant 0 : index
    %c0_7 = arith.constant 0 : index
    %c0_8 = arith.constant 0 : index
    %7 = vector.load %arg3[%c0_6, %c0_7, %c0_8] : memref<2x1x384xf32, #tpu.memory_space<vmem>>, vector<1x1x384xf32>
    %8 = vector.shape_cast %7 : vector<1x1x384xf32> to vector<1x384xf32>
    %9 = vector.broadcast %8 : vector<1x384xf32> to vector<16x384xf32>
    %10 = arith.addf %6, %9 : vector<16x384xf32>
    %c0_9 = arith.constant 0 : index
    %c0_10 = arith.constant 0 : index
    %c0_11 = arith.constant 0 : index
    %11 = vector.load %arg4[%c0_9, %c0_10, %c0_11] : memref<2x128x128xf32, #tpu.memory_space<vmem>>, vector<1x128x128xf32>
    %12 = vector.shape_cast %11 : vector<1x128x128xf32> to vector<128x128xf32>
    %13 = vector.extract_strided_slice %10 {offsets = [0, 0], sizes = [8, 384], strides = [1, 1]} : vector<16x384xf32> to vector<8x384xf32>
    %cst_12 = arith.constant 0.000000e+00 : f32
    %14 = vector.broadcast %cst_12 : f32 to vector<8x128xf32>
    %15 = vector.extract_strided_slice %13 {offsets = [0, 0], sizes = [8, 32], strides = [1, 1]} : vector<8x384xf32> to vector<8x32xf32>
    %16 = vector.extract_strided_slice %13 {offsets = [0, 128], sizes = [8, 32], strides = [1, 1]} : vector<8x384xf32> to vector<8x32xf32>
    %17 = vector.extract_strided_slice %13 {offsets = [0, 256], sizes = [8, 32], strides = [1, 1]} : vector<8x384xf32> to vector<8x32xf32>
    %cst_13 = arith.constant dense<0.000000e+00> : vector<8x8xf32>
    %18 = tpu.matmul %15, %16, %cst_13 {dimension_numbers = #tpu.dot_dimension_numbers<[1], [1], [0], [0], [0, 0, 1, 0], [], []>} : vector<8x32xf32>, vector<8x32xf32>, vector<8x8xf32> -> vector<8x8xf32>
    %cst_14 = arith.constant 0.176776692 : f32
    %19 = vector.broadcast %cst_14 : f32 to vector<8x8xf32>
    %20 = arith.mulf %18, %19 : vector<8x8xf32>
    %cst_15 = arith.constant dense<0xFF800000> : vector<8xf32>
    %21 = vector.multi_reduction <maximumf>, %20, %cst_15 [1] : vector<8x8xf32> to vector<8xf32>
    %22 = vector.shape_cast %21 : vector<8xf32> to vector<8x1xf32>
    %23 = vector.broadcast %22 : vector<8x1xf32> to vector<8x8xf32>
    %24 = arith.subf %20, %23 : vector<8x8xf32>
    %25 = math.exp %24 : vector<8x8xf32>
    %cst_16 = arith.constant dense<0.000000e+00> : vector<8xf32>
    %26 = vector.multi_reduction <add>, %25, %cst_16 [1] : vector<8x8xf32> to vector<8xf32>
    %27 = vector.shape_cast %26 : vector<8xf32> to vector<8x1xf32>
    %28 = vector.broadcast %27 : vector<8x1xf32> to vector<8x8xf32>
    %29 = arith.divf %25, %28 : vector<8x8xf32>
    %cst_17 = arith.constant dense<0.000000e+00> : vector<8x32xf32>
    %30 = tpu.matmul %29, %17, %cst_17 {dimension_numbers = #tpu.dot_dimension_numbers<[1], [0], [0], [1], [0, 0, 1, 1], [], []>} : vector<8x8xf32>, vector<8x32xf32>, vector<8x32xf32> -> vector<8x32xf32>
    %31 = vector.extract_strided_slice %12 {offsets = [0, 0], sizes = [32, 128], strides = [1, 1]} : vector<128x128xf32> to vector<32x128xf32>
    %cst_18 = arith.constant dense<0.000000e+00> : vector<8x128xf32>
    %32 = tpu.matmul %30, %31, %cst_18 {dimension_numbers = #tpu.dot_dimension_numbers<[1], [0], [0], [1], [0, 0, 1, 1], [], []>} : vector<8x32xf32>, vector<32x128xf32>, vector<8x128xf32> -> vector<8x128xf32>
    %33 = arith.addf %14, %32 : vector<8x128xf32>
    %34 = vector.extract_strided_slice %13 {offsets = [0, 32], sizes = [8, 32], strides = [1, 1]} : vector<8x384xf32> to vector<8x32xf32>
    %35 = vector.extract_strided_slice %13 {offsets = [0, 160], sizes = [8, 32], strides = [1, 1]} : vector<8x384xf32> to vector<8x32xf32>
    %36 = vector.extract_strided_slice %13 {offsets = [0, 288], sizes = [8, 32], strides = [1, 1]} : vector<8x384xf32> to vector<8x32xf32>
    %cst_19 = arith.constant dense<0.000000e+00> : vector<8x8xf32>
    %37 = tpu.matmul %34, %35, %cst_19 {dimension_numbers = #tpu.dot_dimension_numbers<[1], [1], [0], [0], [0, 0, 1, 0], [], []>} : vector<8x32xf32>, vector<8x32xf32>, vector<8x8xf32> -> vector<8x8xf32>
    %cst_20 = arith.constant 0.176776692 : f32
    %38 = vector.broadcast %cst_20 : f32 to vector<8x8xf32>
    %39 = arith.mulf %37, %38 : vector<8x8xf32>
    %cst_21 = arith.constant dense<0xFF800000> : vector<8xf32>
    %40 = vector.multi_reduction <maximumf>, %39, %cst_21 [1] : vector<8x8xf32> to vector<8xf32>
    %41 = vector.shape_cast %40 : vector<8xf32> to vector<8x1xf32>
    %42 = vector.broadcast %41 : vector<8x1xf32> to vector<8x8xf32>
    %43 = arith.subf %39, %42 : vector<8x8xf32>
    %44 = math.exp %43 : vector<8x8xf32>
    %cst_22 = arith.constant dense<0.000000e+00> : vector<8xf32>
    %45 = vector.multi_reduction <add>, %44, %cst_22 [1] : vector<8x8xf32> to vector<8xf32>
    %46 = vector.shape_cast %45 : vector<8xf32> to vector<8x1xf32>
    %47 = vector.broadcast %46 : vector<8x1xf32> to vector<8x8xf32>
    %48 = arith.divf %44, %47 : vector<8x8xf32>
    %cst_23 = arith.constant dense<0.000000e+00> : vector<8x32xf32>
    %49 = tpu.matmul %48, %36, %cst_23 {dimension_numbers = #tpu.dot_dimension_numbers<[1], [0], [0], [1], [0, 0, 1, 1], [], []>} : vector<8x8xf32>, vector<8x32xf32>, vector<8x32xf32> -> vector<8x32xf32>
    %50 = vector.extract_strided_slice %12 {offsets = [32, 0], sizes = [32, 128], strides = [1, 1]} : vector<128x128xf32> to vector<32x128xf32>
    %cst_24 = arith.constant dense<0.000000e+00> : vector<8x128xf32>
    %51 = tpu.matmul %49, %50, %cst_24 {dimension_numbers = #tpu.dot_dimension_numbers<[1], [0], [0], [1], [0, 0, 1, 1], [], []>} : vector<8x32xf32>, vector<32x128xf32>, vector<8x128xf32> -> vector<8x128xf32>
    %52 = arith.addf %33, %51 : vector<8x128xf32>
    %53 = vector.extract_strided_slice %13 {offsets = [0, 64], sizes = [8, 32], strides = [1, 1]} : vector<8x384xf32> to vector<8x32xf32>
    %54 = vector.extract_strided_slice %13 {offsets = [0, 192], sizes = [8, 32], strides = [1, 1]} : vector<8x384xf32> to vector<8x32xf32>
    %55 = vector.extract_strided_slice %13 {offsets = [0, 320], sizes = [8, 32], strides = [1, 1]} : vector<8x384xf32> to vector<8x32xf32>
    %cst_25 = arith.constant dense<0.000000e+00> : vector<8x8xf32>
    %56 = tpu.matmul %53, %54, %cst_25 {dimension_numbers = #tpu.dot_dimension_numbers<[1], [1], [0], [0], [0, 0, 1, 0], [], []>} : vector<8x32xf32>, vector<8x32xf32>, vector<8x8xf32> -> vector<8x8xf32>
    %cst_26 = arith.constant 0.176776692 : f32
    %57 = vector.broadcast %cst_26 : f32 to vector<8x8xf32>
    %58 = arith.mulf %56, %57 : vector<8x8xf32>
    %cst_27 = arith.constant dense<0xFF800000> : vector<8xf32>
    %59 = vector.multi_reduction <maximumf>, %58, %cst_27 [1] : vector<8x8xf32> to vector<8xf32>
    %60 = vector.shape_cast %59 : vector<8xf32> to vector<8x1xf32>
    %61 = vector.broadcast %60 : vector<8x1xf32> to vector<8x8xf32>
    %62 = arith.subf %58, %61 : vector<8x8xf32>
    %63 = math.exp %62 : vector<8x8xf32>
    %cst_28 = arith.constant dense<0.000000e+00> : vector<8xf32>
    %64 = vector.multi_reduction <add>, %63, %cst_28 [1] : vector<8x8xf32> to vector<8xf32>
    %65 = vector.shape_cast %64 : vector<8xf32> to vector<8x1xf32>
    %66 = vector.broadcast %65 : vector<8x1xf32> to vector<8x8xf32>
    %67 = arith.divf %63, %66 : vector<8x8xf32>
    %cst_29 = arith.constant dense<0.000000e+00> : vector<8x32xf32>
    %68 = tpu.matmul %67, %55, %cst_29 {dimension_numbers = #tpu.dot_dimension_numbers<[1], [0], [0], [1], [0, 0, 1, 1], [], []>} : vector<8x8xf32>, vector<8x32xf32>, vector<8x32xf32> -> vector<8x32xf32>
    %69 = vector.extract_strided_slice %12 {offsets = [64, 0], sizes = [32, 128], strides = [1, 1]} : vector<128x128xf32> to vector<32x128xf32>
    %cst_30 = arith.constant dense<0.000000e+00> : vector<8x128xf32>
    %70 = tpu.matmul %68, %69, %cst_30 {dimension_numbers = #tpu.dot_dimension_numbers<[1], [0], [0], [1], [0, 0, 1, 1], [], []>} : vector<8x32xf32>, vector<32x128xf32>, vector<8x128xf32> -> vector<8x128xf32>
    %71 = arith.addf %52, %70 : vector<8x128xf32>
    %72 = vector.extract_strided_slice %13 {offsets = [0, 96], sizes = [8, 32], strides = [1, 1]} : vector<8x384xf32> to vector<8x32xf32>
    %73 = vector.extract_strided_slice %13 {offsets = [0, 224], sizes = [8, 32], strides = [1, 1]} : vector<8x384xf32> to vector<8x32xf32>
    %74 = vector.extract_strided_slice %13 {offsets = [0, 352], sizes = [8, 32], strides = [1, 1]} : vector<8x384xf32> to vector<8x32xf32>
    %cst_31 = arith.constant dense<0.000000e+00> : vector<8x8xf32>
    %75 = tpu.matmul %72, %73, %cst_31 {dimension_numbers = #tpu.dot_dimension_numbers<[1], [1], [0], [0], [0, 0, 1, 0], [], []>} : vector<8x32xf32>, vector<8x32xf32>, vector<8x8xf32> -> vector<8x8xf32>
    %cst_32 = arith.constant 0.176776692 : f32
    %76 = vector.broadcast %cst_32 : f32 to vector<8x8xf32>
    %77 = arith.mulf %75, %76 : vector<8x8xf32>
    %cst_33 = arith.constant dense<0xFF800000> : vector<8xf32>
    %78 = vector.multi_reduction <maximumf>, %77, %cst_33 [1] : vector<8x8xf32> to vector<8xf32>
    %79 = vector.shape_cast %78 : vector<8xf32> to vector<8x1xf32>
    %80 = vector.broadcast %79 : vector<8x1xf32> to vector<8x8xf32>
    %81 = arith.subf %77, %80 : vector<8x8xf32>
    %82 = math.exp %81 : vector<8x8xf32>
    %cst_34 = arith.constant dense<0.000000e+00> : vector<8xf32>
    %83 = vector.multi_reduction <add>, %82, %cst_34 [1] : vector<8x8xf32> to vector<8xf32>
    %84 = vector.shape_cast %83 : vector<8xf32> to vector<8x1xf32>
    %85 = vector.broadcast %84 : vector<8x1xf32> to vector<8x8xf32>
    %86 = arith.divf %82, %85 : vector<8x8xf32>
    %cst_35 = arith.constant dense<0.000000e+00> : vector<8x32xf32>
    %87 = tpu.matmul %86, %74, %cst_35 {dimension_numbers = #tpu.dot_dimension_numbers<[1], [0], [0], [1], [0, 0, 1, 1], [], []>} : vector<8x8xf32>, vector<8x32xf32>, vector<8x32xf32> -> vector<8x32xf32>
    %88 = vector.extract_strided_slice %12 {offsets = [96, 0], sizes = [32, 128], strides = [1, 1]} : vector<128x128xf32> to vector<32x128xf32>
    %cst_36 = arith.constant dense<0.000000e+00> : vector<8x128xf32>
    %89 = tpu.matmul %87, %88, %cst_36 {dimension_numbers = #tpu.dot_dimension_numbers<[1], [0], [0], [1], [0, 0, 1, 1], [], []>} : vector<8x32xf32>, vector<32x128xf32>, vector<8x128xf32> -> vector<8x128xf32>
    %90 = arith.addf %71, %89 : vector<8x128xf32>
    %91 = vector.extract_strided_slice %10 {offsets = [8, 0], sizes = [8, 384], strides = [1, 1]} : vector<16x384xf32> to vector<8x384xf32>
    %cst_37 = arith.constant 0.000000e+00 : f32
    %92 = vector.broadcast %cst_37 : f32 to vector<8x128xf32>
    %93 = vector.extract_strided_slice %91 {offsets = [0, 0], sizes = [8, 32], strides = [1, 1]} : vector<8x384xf32> to vector<8x32xf32>
    %94 = vector.extract_strided_slice %91 {offsets = [0, 128], sizes = [8, 32], strides = [1, 1]} : vector<8x384xf32> to vector<8x32xf32>
    %95 = vector.extract_strided_slice %91 {offsets = [0, 256], sizes = [8, 32], strides = [1, 1]} : vector<8x384xf32> to vector<8x32xf32>
    %cst_38 = arith.constant dense<0.000000e+00> : vector<8x8xf32>
    %96 = tpu.matmul %93, %94, %cst_38 {dimension_numbers = #tpu.dot_dimension_numbers<[1], [1], [0], [0], [0, 0, 1, 0], [], []>} : vector<8x32xf32>, vector<8x32xf32>, vector<8x8xf32> -> vector<8x8xf32>
    %cst_39 = arith.constant 0.176776692 : f32
    %97 = vector.broadcast %cst_39 : f32 to vector<8x8xf32>
    %98 = arith.mulf %96, %97 : vector<8x8xf32>
    %cst_40 = arith.constant dense<0xFF800000> : vector<8xf32>
    %99 = vector.multi_reduction <maximumf>, %98, %cst_40 [1] : vector<8x8xf32> to vector<8xf32>
    %100 = vector.shape_cast %99 : vector<8xf32> to vector<8x1xf32>
    %101 = vector.broadcast %100 : vector<8x1xf32> to vector<8x8xf32>
    %102 = arith.subf %98, %101 : vector<8x8xf32>
    %103 = math.exp %102 : vector<8x8xf32>
    %cst_41 = arith.constant dense<0.000000e+00> : vector<8xf32>
    %104 = vector.multi_reduction <add>, %103, %cst_41 [1] : vector<8x8xf32> to vector<8xf32>
    %105 = vector.shape_cast %104 : vector<8xf32> to vector<8x1xf32>
    %106 = vector.broadcast %105 : vector<8x1xf32> to vector<8x8xf32>
    %107 = arith.divf %103, %106 : vector<8x8xf32>
    %cst_42 = arith.constant dense<0.000000e+00> : vector<8x32xf32>
    %108 = tpu.matmul %107, %95, %cst_42 {dimension_numbers = #tpu.dot_dimension_numbers<[1], [0], [0], [1], [0, 0, 1, 1], [], []>} : vector<8x8xf32>, vector<8x32xf32>, vector<8x32xf32> -> vector<8x32xf32>
    %109 = vector.extract_strided_slice %12 {offsets = [0, 0], sizes = [32, 128], strides = [1, 1]} : vector<128x128xf32> to vector<32x128xf32>
    %cst_43 = arith.constant dense<0.000000e+00> : vector<8x128xf32>
    %110 = tpu.matmul %108, %109, %cst_43 {dimension_numbers = #tpu.dot_dimension_numbers<[1], [0], [0], [1], [0, 0, 1, 1], [], []>} : vector<8x32xf32>, vector<32x128xf32>, vector<8x128xf32> -> vector<8x128xf32>
    %111 = arith.addf %92, %110 : vector<8x128xf32>
    %112 = vector.extract_strided_slice %91 {offsets = [0, 32], sizes = [8, 32], strides = [1, 1]} : vector<8x384xf32> to vector<8x32xf32>
    %113 = vector.extract_strided_slice %91 {offsets = [0, 160], sizes = [8, 32], strides = [1, 1]} : vector<8x384xf32> to vector<8x32xf32>
    %114 = vector.extract_strided_slice %91 {offsets = [0, 288], sizes = [8, 32], strides = [1, 1]} : vector<8x384xf32> to vector<8x32xf32>
    %cst_44 = arith.constant dense<0.000000e+00> : vector<8x8xf32>
    %115 = tpu.matmul %112, %113, %cst_44 {dimension_numbers = #tpu.dot_dimension_numbers<[1], [1], [0], [0], [0, 0, 1, 0], [], []>} : vector<8x32xf32>, vector<8x32xf32>, vector<8x8xf32> -> vector<8x8xf32>
    %cst_45 = arith.constant 0.176776692 : f32
    %116 = vector.broadcast %cst_45 : f32 to vector<8x8xf32>
    %117 = arith.mulf %115, %116 : vector<8x8xf32>
    %cst_46 = arith.constant dense<0xFF800000> : vector<8xf32>
    %118 = vector.multi_reduction <maximumf>, %117, %cst_46 [1] : vector<8x8xf32> to vector<8xf32>
    %119 = vector.shape_cast %118 : vector<8xf32> to vector<8x1xf32>
    %120 = vector.broadcast %119 : vector<8x1xf32> to vector<8x8xf32>
    %121 = arith.subf %117, %120 : vector<8x8xf32>
    %122 = math.exp %121 : vector<8x8xf32>
    %cst_47 = arith.constant dense<0.000000e+00> : vector<8xf32>
    %123 = vector.multi_reduction <add>, %122, %cst_47 [1] : vector<8x8xf32> to vector<8xf32>
    %124 = vector.shape_cast %123 : vector<8xf32> to vector<8x1xf32>
    %125 = vector.broadcast %124 : vector<8x1xf32> to vector<8x8xf32>
    %126 = arith.divf %122, %125 : vector<8x8xf32>
    %cst_48 = arith.constant dense<0.000000e+00> : vector<8x32xf32>
    %127 = tpu.matmul %126, %114, %cst_48 {dimension_numbers = #tpu.dot_dimension_numbers<[1], [0], [0], [1], [0, 0, 1, 1], [], []>} : vector<8x8xf32>, vector<8x32xf32>, vector<8x32xf32> -> vector<8x32xf32>
    %128 = vector.extract_strided_slice %12 {offsets = [32, 0], sizes = [32, 128], strides = [1, 1]} : vector<128x128xf32> to vector<32x128xf32>
    %cst_49 = arith.constant dense<0.000000e+00> : vector<8x128xf32>
    %129 = tpu.matmul %127, %128, %cst_49 {dimension_numbers = #tpu.dot_dimension_numbers<[1], [0], [0], [1], [0, 0, 1, 1], [], []>} : vector<8x32xf32>, vector<32x128xf32>, vector<8x128xf32> -> vector<8x128xf32>
    %130 = arith.addf %111, %129 : vector<8x128xf32>
    %131 = vector.extract_strided_slice %91 {offsets = [0, 64], sizes = [8, 32], strides = [1, 1]} : vector<8x384xf32> to vector<8x32xf32>
    %132 = vector.extract_strided_slice %91 {offsets = [0, 192], sizes = [8, 32], strides = [1, 1]} : vector<8x384xf32> to vector<8x32xf32>
    %133 = vector.extract_strided_slice %91 {offsets = [0, 320], sizes = [8, 32], strides = [1, 1]} : vector<8x384xf32> to vector<8x32xf32>
    %cst_50 = arith.constant dense<0.000000e+00> : vector<8x8xf32>
    %134 = tpu.matmul %131, %132, %cst_50 {dimension_numbers = #tpu.dot_dimension_numbers<[1], [1], [0], [0], [0, 0, 1, 0], [], []>} : vector<8x32xf32>, vector<8x32xf32>, vector<8x8xf32> -> vector<8x8xf32>
    %cst_51 = arith.constant 0.176776692 : f32
    %135 = vector.broadcast %cst_51 : f32 to vector<8x8xf32>
    %136 = arith.mulf %134, %135 : vector<8x8xf32>
    %cst_52 = arith.constant dense<0xFF800000> : vector<8xf32>
    %137 = vector.multi_reduction <maximumf>, %136, %cst_52 [1] : vector<8x8xf32> to vector<8xf32>
    %138 = vector.shape_cast %137 : vector<8xf32> to vector<8x1xf32>
    %139 = vector.broadcast %138 : vector<8x1xf32> to vector<8x8xf32>
    %140 = arith.subf %136, %139 : vector<8x8xf32>
    %141 = math.exp %140 : vector<8x8xf32>
    %cst_53 = arith.constant dense<0.000000e+00> : vector<8xf32>
    %142 = vector.multi_reduction <add>, %141, %cst_53 [1] : vector<8x8xf32> to vector<8xf32>
    %143 = vector.shape_cast %142 : vector<8xf32> to vector<8x1xf32>
    %144 = vector.broadcast %143 : vector<8x1xf32> to vector<8x8xf32>
    %145 = arith.divf %141, %144 : vector<8x8xf32>
    %cst_54 = arith.constant dense<0.000000e+00> : vector<8x32xf32>
    %146 = tpu.matmul %145, %133, %cst_54 {dimension_numbers = #tpu.dot_dimension_numbers<[1], [0], [0], [1], [0, 0, 1, 1], [], []>} : vector<8x8xf32>, vector<8x32xf32>, vector<8x32xf32> -> vector<8x32xf32>
    %147 = vector.extract_strided_slice %12 {offsets = [64, 0], sizes = [32, 128], strides = [1, 1]} : vector<128x128xf32> to vector<32x128xf32>
    %cst_55 = arith.constant dense<0.000000e+00> : vector<8x128xf32>
    %148 = tpu.matmul %146, %147, %cst_55 {dimension_numbers = #tpu.dot_dimension_numbers<[1], [0], [0], [1], [0, 0, 1, 1], [], []>} : vector<8x32xf32>, vector<32x128xf32>, vector<8x128xf32> -> vector<8x128xf32>
    %149 = arith.addf %130, %148 : vector<8x128xf32>
    %150 = vector.extract_strided_slice %91 {offsets = [0, 96], sizes = [8, 32], strides = [1, 1]} : vector<8x384xf32> to vector<8x32xf32>
    %151 = vector.extract_strided_slice %91 {offsets = [0, 224], sizes = [8, 32], strides = [1, 1]} : vector<8x384xf32> to vector<8x32xf32>
    %152 = vector.extract_strided_slice %91 {offsets = [0, 352], sizes = [8, 32], strides = [1, 1]} : vector<8x384xf32> to vector<8x32xf32>
    %cst_56 = arith.constant dense<0.000000e+00> : vector<8x8xf32>
    %153 = tpu.matmul %150, %151, %cst_56 {dimension_numbers = #tpu.dot_dimension_numbers<[1], [1], [0], [0], [0, 0, 1, 0], [], []>} : vector<8x32xf32>, vector<8x32xf32>, vector<8x8xf32> -> vector<8x8xf32>
    %cst_57 = arith.constant 0.176776692 : f32
    %154 = vector.broadcast %cst_57 : f32 to vector<8x8xf32>
    %155 = arith.mulf %153, %154 : vector<8x8xf32>
    %cst_58 = arith.constant dense<0xFF800000> : vector<8xf32>
    %156 = vector.multi_reduction <maximumf>, %155, %cst_58 [1] : vector<8x8xf32> to vector<8xf32>
    %157 = vector.shape_cast %156 : vector<8xf32> to vector<8x1xf32>
    %158 = vector.broadcast %157 : vector<8x1xf32> to vector<8x8xf32>
    %159 = arith.subf %155, %158 : vector<8x8xf32>
    %160 = math.exp %159 : vector<8x8xf32>
    %cst_59 = arith.constant dense<0.000000e+00> : vector<8xf32>
    %161 = vector.multi_reduction <add>, %160, %cst_59 [1] : vector<8x8xf32> to vector<8xf32>
    %162 = vector.shape_cast %161 : vector<8xf32> to vector<8x1xf32>
    %163 = vector.broadcast %162 : vector<8x1xf32> to vector<8x8xf32>
    %164 = arith.divf %160, %163 : vector<8x8xf32>
    %cst_60 = arith.constant dense<0.000000e+00> : vector<8x32xf32>
    %165 = tpu.matmul %164, %152, %cst_60 {dimension_numbers = #tpu.dot_dimension_numbers<[1], [0], [0], [1], [0, 0, 1, 1], [], []>} : vector<8x8xf32>, vector<8x32xf32>, vector<8x32xf32> -> vector<8x32xf32>
    %166 = vector.extract_strided_slice %12 {offsets = [96, 0], sizes = [32, 128], strides = [1, 1]} : vector<128x128xf32> to vector<32x128xf32>
    %cst_61 = arith.constant dense<0.000000e+00> : vector<8x128xf32>
    %167 = tpu.matmul %165, %166, %cst_61 {dimension_numbers = #tpu.dot_dimension_numbers<[1], [0], [0], [1], [0, 0, 1, 1], [], []>} : vector<8x32xf32>, vector<32x128xf32>, vector<8x128xf32> -> vector<8x128xf32>
    %168 = arith.addf %149, %167 : vector<8x128xf32>
    %169 = tpu.concatenate %90, %168 in 0 : vector<8x128xf32>, vector<8x128xf32> -> vector<16x128xf32>
    %c0_62 = arith.constant 0 : index
    %c0_63 = arith.constant 0 : index
    %c0_64 = arith.constant 0 : index
    %170 = vector.load %arg5[%c0_62, %c0_63, %c0_64] : memref<2x1x128xf32, #tpu.memory_space<vmem>>, vector<1x1x128xf32>
    %171 = vector.shape_cast %170 : vector<1x1x128xf32> to vector<1x128xf32>
    %172 = vector.broadcast %171 : vector<1x128xf32> to vector<16x128xf32>
    %173 = arith.addf %169, %172 : vector<16x128xf32>
    %174 = arith.addf %173, %3 : vector<16x128xf32>
    %c0_65 = arith.constant 0 : index
    %c0_66 = arith.constant 0 : index
    %c0_67 = arith.constant 0 : index
    %175 = vector.load %arg6[%c0_65, %c0_66, %c0_67] : memref<2x1x128xf32, #tpu.memory_space<vmem>>, vector<1x1x128xf32>
    %176 = vector.shape_cast %175 : vector<1x1x128xf32> to vector<1x128xf32>
    %c0_68 = arith.constant 0 : index
    %c0_69 = arith.constant 0 : index
    %c0_70 = arith.constant 0 : index
    %177 = vector.load %arg7[%c0_68, %c0_69, %c0_70] : memref<2x1x128xf32, #tpu.memory_space<vmem>>, vector<1x1x128xf32>
    %178 = vector.shape_cast %177 : vector<1x1x128xf32> to vector<1x128xf32>
    %cst_71 = arith.constant dense<0.000000e+00> : vector<16xf32>
    %179 = vector.multi_reduction <add>, %174, %cst_71 [1] : vector<16x128xf32> to vector<16xf32>
    %180 = vector.shape_cast %179 : vector<16xf32> to vector<16x1xf32>
    %cst_72 = arith.constant 1.280000e+02 : f32
    %181 = vector.broadcast %cst_72 : f32 to vector<16x1xf32>
    %182 = arith.divf %180, %181 : vector<16x1xf32>
    %183 = vector.broadcast %182 : vector<16x1xf32> to vector<16x128xf32>
    %184 = arith.subf %174, %183 : vector<16x128xf32>
    %185 = arith.mulf %184, %184 : vector<16x128xf32>
    %cst_73 = arith.constant dense<0.000000e+00> : vector<16xf32>
    %186 = vector.multi_reduction <add>, %185, %cst_73 [1] : vector<16x128xf32> to vector<16xf32>
    %187 = vector.shape_cast %186 : vector<16xf32> to vector<16x1xf32>
    %cst_74 = arith.constant 1.280000e+02 : f32
    %188 = vector.broadcast %cst_74 : f32 to vector<16x1xf32>
    %189 = arith.divf %187, %188 : vector<16x1xf32>
    %190 = vector.broadcast %182 : vector<16x1xf32> to vector<16x128xf32>
    %191 = arith.subf %174, %190 : vector<16x128xf32>
    %cst_75 = arith.constant 9.99999974E-6 : f32
    %192 = vector.broadcast %cst_75 : f32 to vector<16x1xf32>
    %193 = arith.addf %189, %192 : vector<16x1xf32>
    %194 = math.rsqrt %193 : vector<16x1xf32>
    %195 = vector.broadcast %194 : vector<16x1xf32> to vector<16x128xf32>
    %196 = arith.mulf %191, %195 : vector<16x128xf32>
    %197 = vector.broadcast %176 : vector<1x128xf32> to vector<16x128xf32>
    %198 = arith.mulf %196, %197 : vector<16x128xf32>
    %199 = vector.broadcast %178 : vector<1x128xf32> to vector<16x128xf32>
    %200 = arith.addf %198, %199 : vector<16x128xf32>
    %c0_76 = arith.constant 0 : index
    %c0_77 = arith.constant 0 : index
    %c0_78 = arith.constant 0 : index
    %201 = vector.load %arg8[%c0_76, %c0_77, %c0_78] : memref<2x128x512xf32, #tpu.memory_space<vmem>>, vector<1x128x512xf32>
    %202 = vector.shape_cast %201 : vector<1x128x512xf32> to vector<128x512xf32>
    %cst_79 = arith.constant dense<0.000000e+00> : vector<16x512xf32>
    %203 = tpu.matmul %200, %202, %cst_79 {dimension_numbers = #tpu.dot_dimension_numbers<[1], [0], [0], [1], [0, 0, 1, 1], [], []>} : vector<16x128xf32>, vector<128x512xf32>, vector<16x512xf32> -> vector<16x512xf32>
    %c0_80 = arith.constant 0 : index
    %c0_81 = arith.constant 0 : index
    %c0_82 = arith.constant 0 : index
    %204 = vector.load %arg9[%c0_80, %c0_81, %c0_82] : memref<2x1x512xf32, #tpu.memory_space<vmem>>, vector<1x1x512xf32>
    %205 = vector.shape_cast %204 : vector<1x1x512xf32> to vector<1x512xf32>
    %206 = vector.broadcast %205 : vector<1x512xf32> to vector<16x512xf32>
    %207 = arith.addf %203, %206 : vector<16x512xf32>
    %cst_83 = arith.constant 5.000000e-01 : f32
    %208 = vector.broadcast %cst_83 : f32 to vector<16x512xf32>
    %209 = arith.mulf %208, %207 : vector<16x512xf32>
    %cst_84 = arith.constant 4.471500e-02 : f32
    %210 = vector.broadcast %cst_84 : f32 to vector<16x512xf32>
    %211 = arith.mulf %210, %207 : vector<16x512xf32>
    %212 = arith.mulf %211, %207 : vector<16x512xf32>
    %213 = arith.mulf %212, %207 : vector<16x512xf32>
    %214 = arith.addf %207, %213 : vector<16x512xf32>
    %cst_85 = arith.constant 0.797884583 : f32
    %215 = vector.broadcast %cst_85 : f32 to vector<16x512xf32>
    %216 = arith.mulf %215, %214 : vector<16x512xf32>
    %217 = math.tanh %216 : vector<16x512xf32>
    %cst_86 = arith.constant 1.000000e+00 : f32
    %218 = vector.broadcast %cst_86 : f32 to vector<16x512xf32>
    %219 = arith.addf %218, %217 : vector<16x512xf32>
    %220 = arith.mulf %209, %219 : vector<16x512xf32>
    %c0_87 = arith.constant 0 : index
    %c0_88 = arith.constant 0 : index
    %c0_89 = arith.constant 0 : index
    %221 = vector.load %arg10[%c0_87, %c0_88, %c0_89] : memref<2x512x128xf32, #tpu.memory_space<vmem>>, vector<1x512x128xf32>
    %222 = vector.shape_cast %221 : vector<1x512x128xf32> to vector<512x128xf32>
    %cst_90 = arith.constant dense<0.000000e+00> : vector<16x128xf32>
    %223 = tpu.matmul %220, %222, %cst_90 {dimension_numbers = #tpu.dot_dimension_numbers<[1], [0], [0], [1], [0, 0, 1, 1], [], []>} : vector<16x512xf32>, vector<512x128xf32>, vector<16x128xf32> -> vector<16x128xf32>
    %c0_91 = arith.constant 0 : index
    %c0_92 = arith.constant 0 : index
    %c0_93 = arith.constant 0 : index
    %224 = vector.load %arg11[%c0_91, %c0_92, %c0_93] : memref<2x1x128xf32, #tpu.memory_space<vmem>>, vector<1x1x128xf32>
    %225 = vector.shape_cast %224 : vector<1x1x128xf32> to vector<1x128xf32>
    %226 = vector.broadcast %225 : vector<1x128xf32> to vector<16x128xf32>
    %227 = arith.addf %223, %226 : vector<16x128xf32>
    %228 = arith.addf %227, %200 : vector<16x128xf32>
    %c0_94 = arith.constant 0 : index
    %c0_95 = arith.constant 0 : index
    %c0_96 = arith.constant 0 : index
    %229 = vector.load %arg12[%c0_94, %c0_95, %c0_96] : memref<2x1x128xf32, #tpu.memory_space<vmem>>, vector<1x1x128xf32>
    %230 = vector.shape_cast %229 : vector<1x1x128xf32> to vector<1x128xf32>
    %c0_97 = arith.constant 0 : index
    %c0_98 = arith.constant 0 : index
    %c0_99 = arith.constant 0 : index
    %231 = vector.load %arg13[%c0_97, %c0_98, %c0_99] : memref<2x1x128xf32, #tpu.memory_space<vmem>>, vector<1x1x128xf32>
    %232 = vector.shape_cast %231 : vector<1x1x128xf32> to vector<1x128xf32>
    %cst_100 = arith.constant dense<0.000000e+00> : vector<16xf32>
    %233 = vector.multi_reduction <add>, %228, %cst_100 [1] : vector<16x128xf32> to vector<16xf32>
    %234 = vector.shape_cast %233 : vector<16xf32> to vector<16x1xf32>
    %cst_101 = arith.constant 1.280000e+02 : f32
    %235 = vector.broadcast %cst_101 : f32 to vector<16x1xf32>
    %236 = arith.divf %234, %235 : vector<16x1xf32>
    %237 = vector.broadcast %236 : vector<16x1xf32> to vector<16x128xf32>
    %238 = arith.subf %228, %237 : vector<16x128xf32>
    %239 = arith.mulf %238, %238 : vector<16x128xf32>
    %cst_102 = arith.constant dense<0.000000e+00> : vector<16xf32>
    %240 = vector.multi_reduction <add>, %239, %cst_102 [1] : vector<16x128xf32> to vector<16xf32>
    %241 = vector.shape_cast %240 : vector<16xf32> to vector<16x1xf32>
    %cst_103 = arith.constant 1.280000e+02 : f32
    %242 = vector.broadcast %cst_103 : f32 to vector<16x1xf32>
    %243 = arith.divf %241, %242 : vector<16x1xf32>
    %244 = vector.broadcast %236 : vector<16x1xf32> to vector<16x128xf32>
    %245 = arith.subf %228, %244 : vector<16x128xf32>
    %cst_104 = arith.constant 9.99999974E-6 : f32
    %246 = vector.broadcast %cst_104 : f32 to vector<16x1xf32>
    %247 = arith.addf %243, %246 : vector<16x1xf32>
    %248 = math.rsqrt %247 : vector<16x1xf32>
    %249 = vector.broadcast %248 : vector<16x1xf32> to vector<16x128xf32>
    %250 = arith.mulf %245, %249 : vector<16x128xf32>
    %251 = vector.broadcast %230 : vector<1x128xf32> to vector<16x128xf32>
    %252 = arith.mulf %250, %251 : vector<16x128xf32>
    %253 = vector.broadcast %232 : vector<1x128xf32> to vector<16x128xf32>
    %254 = arith.addf %252, %253 : vector<16x128xf32>
    %c1 = arith.constant 1 : index
    %c0_105 = arith.constant 0 : index
    %c0_106 = arith.constant 0 : index
    %255 = vector.load %arg2[%c1, %c0_105, %c0_106] : memref<2x128x384xf32, #tpu.memory_space<vmem>>, vector<1x128x384xf32>
    %256 = vector.shape_cast %255 : vector<1x128x384xf32> to vector<128x384xf32>
    %cst_107 = arith.constant dense<0.000000e+00> : vector<16x384xf32>
    %257 = tpu.matmul %254, %256, %cst_107 {dimension_numbers = #tpu.dot_dimension_numbers<[1], [0], [0], [1], [0, 0, 1, 1], [], []>} : vector<16x128xf32>, vector<128x384xf32>, vector<16x384xf32> -> vector<16x384xf32>
    %c1_108 = arith.constant 1 : index
    %c0_109 = arith.constant 0 : index
    %c0_110 = arith.constant 0 : index
    %258 = vector.load %arg3[%c1_108, %c0_109, %c0_110] : memref<2x1x384xf32, #tpu.memory_space<vmem>>, vector<1x1x384xf32>
    %259 = vector.shape_cast %258 : vector<1x1x384xf32> to vector<1x384xf32>
    %260 = vector.broadcast %259 : vector<1x384xf32> to vector<16x384xf32>
    %261 = arith.addf %257, %260 : vector<16x384xf32>
    %c1_111 = arith.constant 1 : index
    %c0_112 = arith.constant 0 : index
    %c0_113 = arith.constant 0 : index
    %262 = vector.load %arg4[%c1_111, %c0_112, %c0_113] : memref<2x128x128xf32, #tpu.memory_space<vmem>>, vector<1x128x128xf32>
    %263 = vector.shape_cast %262 : vector<1x128x128xf32> to vector<128x128xf32>
    %264 = vector.extract_strided_slice %261 {offsets = [0, 0], sizes = [8, 384], strides = [1, 1]} : vector<16x384xf32> to vector<8x384xf32>
    %cst_114 = arith.constant 0.000000e+00 : f32
    %265 = vector.broadcast %cst_114 : f32 to vector<8x128xf32>
    %266 = vector.extract_strided_slice %264 {offsets = [0, 0], sizes = [8, 32], strides = [1, 1]} : vector<8x384xf32> to vector<8x32xf32>
    %267 = vector.extract_strided_slice %264 {offsets = [0, 128], sizes = [8, 32], strides = [1, 1]} : vector<8x384xf32> to vector<8x32xf32>
    %268 = vector.extract_strided_slice %264 {offsets = [0, 256], sizes = [8, 32], strides = [1, 1]} : vector<8x384xf32> to vector<8x32xf32>
    %cst_115 = arith.constant dense<0.000000e+00> : vector<8x8xf32>
    %269 = tpu.matmul %266, %267, %cst_115 {dimension_numbers = #tpu.dot_dimension_numbers<[1], [1], [0], [0], [0, 0, 1, 0], [], []>} : vector<8x32xf32>, vector<8x32xf32>, vector<8x8xf32> -> vector<8x8xf32>
    %cst_116 = arith.constant 0.176776692 : f32
    %270 = vector.broadcast %cst_116 : f32 to vector<8x8xf32>
    %271 = arith.mulf %269, %270 : vector<8x8xf32>
    %cst_117 = arith.constant dense<0xFF800000> : vector<8xf32>
    %272 = vector.multi_reduction <maximumf>, %271, %cst_117 [1] : vector<8x8xf32> to vector<8xf32>
    %273 = vector.shape_cast %272 : vector<8xf32> to vector<8x1xf32>
    %274 = vector.broadcast %273 : vector<8x1xf32> to vector<8x8xf32>
    %275 = arith.subf %271, %274 : vector<8x8xf32>
    %276 = math.exp %275 : vector<8x8xf32>
    %cst_118 = arith.constant dense<0.000000e+00> : vector<8xf32>
    %277 = vector.multi_reduction <add>, %276, %cst_118 [1] : vector<8x8xf32> to vector<8xf32>
    %278 = vector.shape_cast %277 : vector<8xf32> to vector<8x1xf32>
    %279 = vector.broadcast %278 : vector<8x1xf32> to vector<8x8xf32>
    %280 = arith.divf %276, %279 : vector<8x8xf32>
    %cst_119 = arith.constant dense<0.000000e+00> : vector<8x32xf32>
    %281 = tpu.matmul %280, %268, %cst_119 {dimension_numbers = #tpu.dot_dimension_numbers<[1], [0], [0], [1], [0, 0, 1, 1], [], []>} : vector<8x8xf32>, vector<8x32xf32>, vector<8x32xf32> -> vector<8x32xf32>
    %282 = vector.extract_strided_slice %263 {offsets = [0, 0], sizes = [32, 128], strides = [1, 1]} : vector<128x128xf32> to vector<32x128xf32>
    %cst_120 = arith.constant dense<0.000000e+00> : vector<8x128xf32>
    %283 = tpu.matmul %281, %282, %cst_120 {dimension_numbers = #tpu.dot_dimension_numbers<[1], [0], [0], [1], [0, 0, 1, 1], [], []>} : vector<8x32xf32>, vector<32x128xf32>, vector<8x128xf32> -> vector<8x128xf32>
    %284 = arith.addf %265, %283 : vector<8x128xf32>
    %285 = vector.extract_strided_slice %264 {offsets = [0, 32], sizes = [8, 32], strides = [1, 1]} : vector<8x384xf32> to vector<8x32xf32>
    %286 = vector.extract_strided_slice %264 {offsets = [0, 160], sizes = [8, 32], strides = [1, 1]} : vector<8x384xf32> to vector<8x32xf32>
    %287 = vector.extract_strided_slice %264 {offsets = [0, 288], sizes = [8, 32], strides = [1, 1]} : vector<8x384xf32> to vector<8x32xf32>
    %cst_121 = arith.constant dense<0.000000e+00> : vector<8x8xf32>
    %288 = tpu.matmul %285, %286, %cst_121 {dimension_numbers = #tpu.dot_dimension_numbers<[1], [1], [0], [0], [0, 0, 1, 0], [], []>} : vector<8x32xf32>, vector<8x32xf32>, vector<8x8xf32> -> vector<8x8xf32>
    %cst_122 = arith.constant 0.176776692 : f32
    %289 = vector.broadcast %cst_122 : f32 to vector<8x8xf32>
    %290 = arith.mulf %288, %289 : vector<8x8xf32>
    %cst_123 = arith.constant dense<0xFF800000> : vector<8xf32>
    %291 = vector.multi_reduction <maximumf>, %290, %cst_123 [1] : vector<8x8xf32> to vector<8xf32>
    %292 = vector.shape_cast %291 : vector<8xf32> to vector<8x1xf32>
    %293 = vector.broadcast %292 : vector<8x1xf32> to vector<8x8xf32>
    %294 = arith.subf %290, %293 : vector<8x8xf32>
    %295 = math.exp %294 : vector<8x8xf32>
    %cst_124 = arith.constant dense<0.000000e+00> : vector<8xf32>
    %296 = vector.multi_reduction <add>, %295, %cst_124 [1] : vector<8x8xf32> to vector<8xf32>
    %297 = vector.shape_cast %296 : vector<8xf32> to vector<8x1xf32>
    %298 = vector.broadcast %297 : vector<8x1xf32> to vector<8x8xf32>
    %299 = arith.divf %295, %298 : vector<8x8xf32>
    %cst_125 = arith.constant dense<0.000000e+00> : vector<8x32xf32>
    %300 = tpu.matmul %299, %287, %cst_125 {dimension_numbers = #tpu.dot_dimension_numbers<[1], [0], [0], [1], [0, 0, 1, 1], [], []>} : vector<8x8xf32>, vector<8x32xf32>, vector<8x32xf32> -> vector<8x32xf32>
    %301 = vector.extract_strided_slice %263 {offsets = [32, 0], sizes = [32, 128], strides = [1, 1]} : vector<128x128xf32> to vector<32x128xf32>
    %cst_126 = arith.constant dense<0.000000e+00> : vector<8x128xf32>
    %302 = tpu.matmul %300, %301, %cst_126 {dimension_numbers = #tpu.dot_dimension_numbers<[1], [0], [0], [1], [0, 0, 1, 1], [], []>} : vector<8x32xf32>, vector<32x128xf32>, vector<8x128xf32> -> vector<8x128xf32>
    %303 = arith.addf %284, %302 : vector<8x128xf32>
    %304 = vector.extract_strided_slice %264 {offsets = [0, 64], sizes = [8, 32], strides = [1, 1]} : vector<8x384xf32> to vector<8x32xf32>
    %305 = vector.extract_strided_slice %264 {offsets = [0, 192], sizes = [8, 32], strides = [1, 1]} : vector<8x384xf32> to vector<8x32xf32>
    %306 = vector.extract_strided_slice %264 {offsets = [0, 320], sizes = [8, 32], strides = [1, 1]} : vector<8x384xf32> to vector<8x32xf32>
    %cst_127 = arith.constant dense<0.000000e+00> : vector<8x8xf32>
    %307 = tpu.matmul %304, %305, %cst_127 {dimension_numbers = #tpu.dot_dimension_numbers<[1], [1], [0], [0], [0, 0, 1, 0], [], []>} : vector<8x32xf32>, vector<8x32xf32>, vector<8x8xf32> -> vector<8x8xf32>
    %cst_128 = arith.constant 0.176776692 : f32
    %308 = vector.broadcast %cst_128 : f32 to vector<8x8xf32>
    %309 = arith.mulf %307, %308 : vector<8x8xf32>
    %cst_129 = arith.constant dense<0xFF800000> : vector<8xf32>
    %310 = vector.multi_reduction <maximumf>, %309, %cst_129 [1] : vector<8x8xf32> to vector<8xf32>
    %311 = vector.shape_cast %310 : vector<8xf32> to vector<8x1xf32>
    %312 = vector.broadcast %311 : vector<8x1xf32> to vector<8x8xf32>
    %313 = arith.subf %309, %312 : vector<8x8xf32>
    %314 = math.exp %313 : vector<8x8xf32>
    %cst_130 = arith.constant dense<0.000000e+00> : vector<8xf32>
    %315 = vector.multi_reduction <add>, %314, %cst_130 [1] : vector<8x8xf32> to vector<8xf32>
    %316 = vector.shape_cast %315 : vector<8xf32> to vector<8x1xf32>
    %317 = vector.broadcast %316 : vector<8x1xf32> to vector<8x8xf32>
    %318 = arith.divf %314, %317 : vector<8x8xf32>
    %cst_131 = arith.constant dense<0.000000e+00> : vector<8x32xf32>
    %319 = tpu.matmul %318, %306, %cst_131 {dimension_numbers = #tpu.dot_dimension_numbers<[1], [0], [0], [1], [0, 0, 1, 1], [], []>} : vector<8x8xf32>, vector<8x32xf32>, vector<8x32xf32> -> vector<8x32xf32>
    %320 = vector.extract_strided_slice %263 {offsets = [64, 0], sizes = [32, 128], strides = [1, 1]} : vector<128x128xf32> to vector<32x128xf32>
    %cst_132 = arith.constant dense<0.000000e+00> : vector<8x128xf32>
    %321 = tpu.matmul %319, %320, %cst_132 {dimension_numbers = #tpu.dot_dimension_numbers<[1], [0], [0], [1], [0, 0, 1, 1], [], []>} : vector<8x32xf32>, vector<32x128xf32>, vector<8x128xf32> -> vector<8x128xf32>
    %322 = arith.addf %303, %321 : vector<8x128xf32>
    %323 = vector.extract_strided_slice %264 {offsets = [0, 96], sizes = [8, 32], strides = [1, 1]} : vector<8x384xf32> to vector<8x32xf32>
    %324 = vector.extract_strided_slice %264 {offsets = [0, 224], sizes = [8, 32], strides = [1, 1]} : vector<8x384xf32> to vector<8x32xf32>
    %325 = vector.extract_strided_slice %264 {offsets = [0, 352], sizes = [8, 32], strides = [1, 1]} : vector<8x384xf32> to vector<8x32xf32>
    %cst_133 = arith.constant dense<0.000000e+00> : vector<8x8xf32>
    %326 = tpu.matmul %323, %324, %cst_133 {dimension_numbers = #tpu.dot_dimension_numbers<[1], [1], [0], [0], [0, 0, 1, 0], [], []>} : vector<8x32xf32>, vector<8x32xf32>, vector<8x8xf32> -> vector<8x8xf32>
    %cst_134 = arith.constant 0.176776692 : f32
    %327 = vector.broadcast %cst_134 : f32 to vector<8x8xf32>
    %328 = arith.mulf %326, %327 : vector<8x8xf32>
    %cst_135 = arith.constant dense<0xFF800000> : vector<8xf32>
    %329 = vector.multi_reduction <maximumf>, %328, %cst_135 [1] : vector<8x8xf32> to vector<8xf32>
    %330 = vector.shape_cast %329 : vector<8xf32> to vector<8x1xf32>
    %331 = vector.broadcast %330 : vector<8x1xf32> to vector<8x8xf32>
    %332 = arith.subf %328, %331 : vector<8x8xf32>
    %333 = math.exp %332 : vector<8x8xf32>
    %cst_136 = arith.constant dense<0.000000e+00> : vector<8xf32>
    %334 = vector.multi_reduction <add>, %333, %cst_136 [1] : vector<8x8xf32> to vector<8xf32>
    %335 = vector.shape_cast %334 : vector<8xf32> to vector<8x1xf32>
    %336 = vector.broadcast %335 : vector<8x1xf32> to vector<8x8xf32>
    %337 = arith.divf %333, %336 : vector<8x8xf32>
    %cst_137 = arith.constant dense<0.000000e+00> : vector<8x32xf32>
    %338 = tpu.matmul %337, %325, %cst_137 {dimension_numbers = #tpu.dot_dimension_numbers<[1], [0], [0], [1], [0, 0, 1, 1], [], []>} : vector<8x8xf32>, vector<8x32xf32>, vector<8x32xf32> -> vector<8x32xf32>
    %339 = vector.extract_strided_slice %263 {offsets = [96, 0], sizes = [32, 128], strides = [1, 1]} : vector<128x128xf32> to vector<32x128xf32>
    %cst_138 = arith.constant dense<0.000000e+00> : vector<8x128xf32>
    %340 = tpu.matmul %338, %339, %cst_138 {dimension_numbers = #tpu.dot_dimension_numbers<[1], [0], [0], [1], [0, 0, 1, 1], [], []>} : vector<8x32xf32>, vector<32x128xf32>, vector<8x128xf32> -> vector<8x128xf32>
    %341 = arith.addf %322, %340 : vector<8x128xf32>
    %342 = vector.extract_strided_slice %261 {offsets = [8, 0], sizes = [8, 384], strides = [1, 1]} : vector<16x384xf32> to vector<8x384xf32>
    %cst_139 = arith.constant 0.000000e+00 : f32
    %343 = vector.broadcast %cst_139 : f32 to vector<8x128xf32>
    %344 = vector.extract_strided_slice %342 {offsets = [0, 0], sizes = [8, 32], strides = [1, 1]} : vector<8x384xf32> to vector<8x32xf32>
    %345 = vector.extract_strided_slice %342 {offsets = [0, 128], sizes = [8, 32], strides = [1, 1]} : vector<8x384xf32> to vector<8x32xf32>
    %346 = vector.extract_strided_slice %342 {offsets = [0, 256], sizes = [8, 32], strides = [1, 1]} : vector<8x384xf32> to vector<8x32xf32>
    %cst_140 = arith.constant dense<0.000000e+00> : vector<8x8xf32>
    %347 = tpu.matmul %344, %345, %cst_140 {dimension_numbers = #tpu.dot_dimension_numbers<[1], [1], [0], [0], [0, 0, 1, 0], [], []>} : vector<8x32xf32>, vector<8x32xf32>, vector<8x8xf32> -> vector<8x8xf32>
    %cst_141 = arith.constant 0.176776692 : f32
    %348 = vector.broadcast %cst_141 : f32 to vector<8x8xf32>
    %349 = arith.mulf %347, %348 : vector<8x8xf32>
    %cst_142 = arith.constant dense<0xFF800000> : vector<8xf32>
    %350 = vector.multi_reduction <maximumf>, %349, %cst_142 [1] : vector<8x8xf32> to vector<8xf32>
    %351 = vector.shape_cast %350 : vector<8xf32> to vector<8x1xf32>
    %352 = vector.broadcast %351 : vector<8x1xf32> to vector<8x8xf32>
    %353 = arith.subf %349, %352 : vector<8x8xf32>
    %354 = math.exp %353 : vector<8x8xf32>
    %cst_143 = arith.constant dense<0.000000e+00> : vector<8xf32>
    %355 = vector.multi_reduction <add>, %354, %cst_143 [1] : vector<8x8xf32> to vector<8xf32>
    %356 = vector.shape_cast %355 : vector<8xf32> to vector<8x1xf32>
    %357 = vector.broadcast %356 : vector<8x1xf32> to vector<8x8xf32>
    %358 = arith.divf %354, %357 : vector<8x8xf32>
    %cst_144 = arith.constant dense<0.000000e+00> : vector<8x32xf32>
    %359 = tpu.matmul %358, %346, %cst_144 {dimension_numbers = #tpu.dot_dimension_numbers<[1], [0], [0], [1], [0, 0, 1, 1], [], []>} : vector<8x8xf32>, vector<8x32xf32>, vector<8x32xf32> -> vector<8x32xf32>
    %360 = vector.extract_strided_slice %263 {offsets = [0, 0], sizes = [32, 128], strides = [1, 1]} : vector<128x128xf32> to vector<32x128xf32>
    %cst_145 = arith.constant dense<0.000000e+00> : vector<8x128xf32>
    %361 = tpu.matmul %359, %360, %cst_145 {dimension_numbers = #tpu.dot_dimension_numbers<[1], [0], [0], [1], [0, 0, 1, 1], [], []>} : vector<8x32xf32>, vector<32x128xf32>, vector<8x128xf32> -> vector<8x128xf32>
    %362 = arith.addf %343, %361 : vector<8x128xf32>
    %363 = vector.extract_strided_slice %342 {offsets = [0, 32], sizes = [8, 32], strides = [1, 1]} : vector<8x384xf32> to vector<8x32xf32>
    %364 = vector.extract_strided_slice %342 {offsets = [0, 160], sizes = [8, 32], strides = [1, 1]} : vector<8x384xf32> to vector<8x32xf32>
    %365 = vector.extract_strided_slice %342 {offsets = [0, 288], sizes = [8, 32], strides = [1, 1]} : vector<8x384xf32> to vector<8x32xf32>
    %cst_146 = arith.constant dense<0.000000e+00> : vector<8x8xf32>
    %366 = tpu.matmul %363, %364, %cst_146 {dimension_numbers = #tpu.dot_dimension_numbers<[1], [1], [0], [0], [0, 0, 1, 0], [], []>} : vector<8x32xf32>, vector<8x32xf32>, vector<8x8xf32> -> vector<8x8xf32>
    %cst_147 = arith.constant 0.176776692 : f32
    %367 = vector.broadcast %cst_147 : f32 to vector<8x8xf32>
    %368 = arith.mulf %366, %367 : vector<8x8xf32>
    %cst_148 = arith.constant dense<0xFF800000> : vector<8xf32>
    %369 = vector.multi_reduction <maximumf>, %368, %cst_148 [1] : vector<8x8xf32> to vector<8xf32>
    %370 = vector.shape_cast %369 : vector<8xf32> to vector<8x1xf32>
    %371 = vector.broadcast %370 : vector<8x1xf32> to vector<8x8xf32>
    %372 = arith.subf %368, %371 : vector<8x8xf32>
    %373 = math.exp %372 : vector<8x8xf32>
    %cst_149 = arith.constant dense<0.000000e+00> : vector<8xf32>
    %374 = vector.multi_reduction <add>, %373, %cst_149 [1] : vector<8x8xf32> to vector<8xf32>
    %375 = vector.shape_cast %374 : vector<8xf32> to vector<8x1xf32>
    %376 = vector.broadcast %375 : vector<8x1xf32> to vector<8x8xf32>
    %377 = arith.divf %373, %376 : vector<8x8xf32>
    %cst_150 = arith.constant dense<0.000000e+00> : vector<8x32xf32>
    %378 = tpu.matmul %377, %365, %cst_150 {dimension_numbers = #tpu.dot_dimension_numbers<[1], [0], [0], [1], [0, 0, 1, 1], [], []>} : vector<8x8xf32>, vector<8x32xf32>, vector<8x32xf32> -> vector<8x32xf32>
    %379 = vector.extract_strided_slice %263 {offsets = [32, 0], sizes = [32, 128], strides = [1, 1]} : vector<128x128xf32> to vector<32x128xf32>
    %cst_151 = arith.constant dense<0.000000e+00> : vector<8x128xf32>
    %380 = tpu.matmul %378, %379, %cst_151 {dimension_numbers = #tpu.dot_dimension_numbers<[1], [0], [0], [1], [0, 0, 1, 1], [], []>} : vector<8x32xf32>, vector<32x128xf32>, vector<8x128xf32> -> vector<8x128xf32>
    %381 = arith.addf %362, %380 : vector<8x128xf32>
    %382 = vector.extract_strided_slice %342 {offsets = [0, 64], sizes = [8, 32], strides = [1, 1]} : vector<8x384xf32> to vector<8x32xf32>
    %383 = vector.extract_strided_slice %342 {offsets = [0, 192], sizes = [8, 32], strides = [1, 1]} : vector<8x384xf32> to vector<8x32xf32>
    %384 = vector.extract_strided_slice %342 {offsets = [0, 320], sizes = [8, 32], strides = [1, 1]} : vector<8x384xf32> to vector<8x32xf32>
    %cst_152 = arith.constant dense<0.000000e+00> : vector<8x8xf32>
    %385 = tpu.matmul %382, %383, %cst_152 {dimension_numbers = #tpu.dot_dimension_numbers<[1], [1], [0], [0], [0, 0, 1, 0], [], []>} : vector<8x32xf32>, vector<8x32xf32>, vector<8x8xf32> -> vector<8x8xf32>
    %cst_153 = arith.constant 0.176776692 : f32
    %386 = vector.broadcast %cst_153 : f32 to vector<8x8xf32>
    %387 = arith.mulf %385, %386 : vector<8x8xf32>
    %cst_154 = arith.constant dense<0xFF800000> : vector<8xf32>
    %388 = vector.multi_reduction <maximumf>, %387, %cst_154 [1] : vector<8x8xf32> to vector<8xf32>
    %389 = vector.shape_cast %388 : vector<8xf32> to vector<8x1xf32>
    %390 = vector.broadcast %389 : vector<8x1xf32> to vector<8x8xf32>
    %391 = arith.subf %387, %390 : vector<8x8xf32>
    %392 = math.exp %391 : vector<8x8xf32>
    %cst_155 = arith.constant dense<0.000000e+00> : vector<8xf32>
    %393 = vector.multi_reduction <add>, %392, %cst_155 [1] : vector<8x8xf32> to vector<8xf32>
    %394 = vector.shape_cast %393 : vector<8xf32> to vector<8x1xf32>
    %395 = vector.broadcast %394 : vector<8x1xf32> to vector<8x8xf32>
    %396 = arith.divf %392, %395 : vector<8x8xf32>
    %cst_156 = arith.constant dense<0.000000e+00> : vector<8x32xf32>
    %397 = tpu.matmul %396, %384, %cst_156 {dimension_numbers = #tpu.dot_dimension_numbers<[1], [0], [0], [1], [0, 0, 1, 1], [], []>} : vector<8x8xf32>, vector<8x32xf32>, vector<8x32xf32> -> vector<8x32xf32>
    %398 = vector.extract_strided_slice %263 {offsets = [64, 0], sizes = [32, 128], strides = [1, 1]} : vector<128x128xf32> to vector<32x128xf32>
    %cst_157 = arith.constant dense<0.000000e+00> : vector<8x128xf32>
    %399 = tpu.matmul %397, %398, %cst_157 {dimension_numbers = #tpu.dot_dimension_numbers<[1], [0], [0], [1], [0, 0, 1, 1], [], []>} : vector<8x32xf32>, vector<32x128xf32>, vector<8x128xf32> -> vector<8x128xf32>
    %400 = arith.addf %381, %399 : vector<8x128xf32>
    %401 = vector.extract_strided_slice %342 {offsets = [0, 96], sizes = [8, 32], strides = [1, 1]} : vector<8x384xf32> to vector<8x32xf32>
    %402 = vector.extract_strided_slice %342 {offsets = [0, 224], sizes = [8, 32], strides = [1, 1]} : vector<8x384xf32> to vector<8x32xf32>
    %403 = vector.extract_strided_slice %342 {offsets = [0, 352], sizes = [8, 32], strides = [1, 1]} : vector<8x384xf32> to vector<8x32xf32>
    %cst_158 = arith.constant dense<0.000000e+00> : vector<8x8xf32>
    %404 = tpu.matmul %401, %402, %cst_158 {dimension_numbers = #tpu.dot_dimension_numbers<[1], [1], [0], [0], [0, 0, 1, 0], [], []>} : vector<8x32xf32>, vector<8x32xf32>, vector<8x8xf32> -> vector<8x8xf32>
    %cst_159 = arith.constant 0.176776692 : f32
    %405 = vector.broadcast %cst_159 : f32 to vector<8x8xf32>
    %406 = arith.mulf %404, %405 : vector<8x8xf32>
    %cst_160 = arith.constant dense<0xFF800000> : vector<8xf32>
    %407 = vector.multi_reduction <maximumf>, %406, %cst_160 [1] : vector<8x8xf32> to vector<8xf32>
    %408 = vector.shape_cast %407 : vector<8xf32> to vector<8x1xf32>
    %409 = vector.broadcast %408 : vector<8x1xf32> to vector<8x8xf32>
    %410 = arith.subf %406, %409 : vector<8x8xf32>
    %411 = math.exp %410 : vector<8x8xf32>
    %cst_161 = arith.constant dense<0.000000e+00> : vector<8xf32>
    %412 = vector.multi_reduction <add>, %411, %cst_161 [1] : vector<8x8xf32> to vector<8xf32>
    %413 = vector.shape_cast %412 : vector<8xf32> to vector<8x1xf32>
    %414 = vector.broadcast %413 : vector<8x1xf32> to vector<8x8xf32>
    %415 = arith.divf %411, %414 : vector<8x8xf32>
    %cst_162 = arith.constant dense<0.000000e+00> : vector<8x32xf32>
    %416 = tpu.matmul %415, %403, %cst_162 {dimension_numbers = #tpu.dot_dimension_numbers<[1], [0], [0], [1], [0, 0, 1, 1], [], []>} : vector<8x8xf32>, vector<8x32xf32>, vector<8x32xf32> -> vector<8x32xf32>
    %417 = vector.extract_strided_slice %263 {offsets = [96, 0], sizes = [32, 128], strides = [1, 1]} : vector<128x128xf32> to vector<32x128xf32>
    %cst_163 = arith.constant dense<0.000000e+00> : vector<8x128xf32>
    %418 = tpu.matmul %416, %417, %cst_163 {dimension_numbers = #tpu.dot_dimension_numbers<[1], [0], [0], [1], [0, 0, 1, 1], [], []>} : vector<8x32xf32>, vector<32x128xf32>, vector<8x128xf32> -> vector<8x128xf32>
    %419 = arith.addf %400, %418 : vector<8x128xf32>
    %420 = tpu.concatenate %341, %419 in 0 : vector<8x128xf32>, vector<8x128xf32> -> vector<16x128xf32>
    %c1_164 = arith.constant 1 : index
    %c0_165 = arith.constant 0 : index
    %c0_166 = arith.constant 0 : index
    %421 = vector.load %arg5[%c1_164, %c0_165, %c0_166] : memref<2x1x128xf32, #tpu.memory_space<vmem>>, vector<1x1x128xf32>
    %422 = vector.shape_cast %421 : vector<1x1x128xf32> to vector<1x128xf32>
    %423 = vector.broadcast %422 : vector<1x128xf32> to vector<16x128xf32>
    %424 = arith.addf %420, %423 : vector<16x128xf32>
    %425 = arith.addf %424, %254 : vector<16x128xf32>
    %c1_167 = arith.constant 1 : index
    %c0_168 = arith.constant 0 : index
    %c0_169 = arith.constant 0 : index
    %426 = vector.load %arg6[%c1_167, %c0_168, %c0_169] : memref<2x1x128xf32, #tpu.memory_space<vmem>>, vector<1x1x128xf32>
    %427 = vector.shape_cast %426 : vector<1x1x128xf32> to vector<1x128xf32>
    %c1_170 = arith.constant 1 : index
    %c0_171 = arith.constant 0 : index
    %c0_172 = arith.constant 0 : index
    %428 = vector.load %arg7[%c1_170, %c0_171, %c0_172] : memref<2x1x128xf32, #tpu.memory_space<vmem>>, vector<1x1x128xf32>
    %429 = vector.shape_cast %428 : vector<1x1x128xf32> to vector<1x128xf32>
    %cst_173 = arith.constant dense<0.000000e+00> : vector<16xf32>
    %430 = vector.multi_reduction <add>, %425, %cst_173 [1] : vector<16x128xf32> to vector<16xf32>
    %431 = vector.shape_cast %430 : vector<16xf32> to vector<16x1xf32>
    %cst_174 = arith.constant 1.280000e+02 : f32
    %432 = vector.broadcast %cst_174 : f32 to vector<16x1xf32>
    %433 = arith.divf %431, %432 : vector<16x1xf32>
    %434 = vector.broadcast %433 : vector<16x1xf32> to vector<16x128xf32>
    %435 = arith.subf %425, %434 : vector<16x128xf32>
    %436 = arith.mulf %435, %435 : vector<16x128xf32>
    %cst_175 = arith.constant dense<0.000000e+00> : vector<16xf32>
    %437 = vector.multi_reduction <add>, %436, %cst_175 [1] : vector<16x128xf32> to vector<16xf32>
    %438 = vector.shape_cast %437 : vector<16xf32> to vector<16x1xf32>
    %cst_176 = arith.constant 1.280000e+02 : f32
    %439 = vector.broadcast %cst_176 : f32 to vector<16x1xf32>
    %440 = arith.divf %438, %439 : vector<16x1xf32>
    %441 = vector.broadcast %433 : vector<16x1xf32> to vector<16x128xf32>
    %442 = arith.subf %425, %441 : vector<16x128xf32>
    %cst_177 = arith.constant 9.99999974E-6 : f32
    %443 = vector.broadcast %cst_177 : f32 to vector<16x1xf32>
    %444 = arith.addf %440, %443 : vector<16x1xf32>
    %445 = math.rsqrt %444 : vector<16x1xf32>
    %446 = vector.broadcast %445 : vector<16x1xf32> to vector<16x128xf32>
    %447 = arith.mulf %442, %446 : vector<16x128xf32>
    %448 = vector.broadcast %427 : vector<1x128xf32> to vector<16x128xf32>
    %449 = arith.mulf %447, %448 : vector<16x128xf32>
    %450 = vector.broadcast %429 : vector<1x128xf32> to vector<16x128xf32>
    %451 = arith.addf %449, %450 : vector<16x128xf32>
    %c1_178 = arith.constant 1 : index
    %c0_179 = arith.constant 0 : index
    %c0_180 = arith.constant 0 : index
    %452 = vector.load %arg8[%c1_178, %c0_179, %c0_180] : memref<2x128x512xf32, #tpu.memory_space<vmem>>, vector<1x128x512xf32>
    %453 = vector.shape_cast %452 : vector<1x128x512xf32> to vector<128x512xf32>
    %cst_181 = arith.constant dense<0.000000e+00> : vector<16x512xf32>
    %454 = tpu.matmul %451, %453, %cst_181 {dimension_numbers = #tpu.dot_dimension_numbers<[1], [0], [0], [1], [0, 0, 1, 1], [], []>} : vector<16x128xf32>, vector<128x512xf32>, vector<16x512xf32> -> vector<16x512xf32>
    %c1_182 = arith.constant 1 : index
    %c0_183 = arith.constant 0 : index
    %c0_184 = arith.constant 0 : index
    %455 = vector.load %arg9[%c1_182, %c0_183, %c0_184] : memref<2x1x512xf32, #tpu.memory_space<vmem>>, vector<1x1x512xf32>
    %456 = vector.shape_cast %455 : vector<1x1x512xf32> to vector<1x512xf32>
    %457 = vector.broadcast %456 : vector<1x512xf32> to vector<16x512xf32>
    %458 = arith.addf %454, %457 : vector<16x512xf32>
    %cst_185 = arith.constant 5.000000e-01 : f32
    %459 = vector.broadcast %cst_185 : f32 to vector<16x512xf32>
    %460 = arith.mulf %459, %458 : vector<16x512xf32>
    %cst_186 = arith.constant 4.471500e-02 : f32
    %461 = vector.broadcast %cst_186 : f32 to vector<16x512xf32>
    %462 = arith.mulf %461, %458 : vector<16x512xf32>
    %463 = arith.mulf %462, %458 : vector<16x512xf32>
    %464 = arith.mulf %463, %458 : vector<16x512xf32>
    %465 = arith.addf %458, %464 : vector<16x512xf32>
    %cst_187 = arith.constant 0.797884583 : f32
    %466 = vector.broadcast %cst_187 : f32 to vector<16x512xf32>
    %467 = arith.mulf %466, %465 : vector<16x512xf32>
    %468 = math.tanh %467 : vector<16x512xf32>
    %cst_188 = arith.constant 1.000000e+00 : f32
    %469 = vector.broadcast %cst_188 : f32 to vector<16x512xf32>
    %470 = arith.addf %469, %468 : vector<16x512xf32>
    %471 = arith.mulf %460, %470 : vector<16x512xf32>
    %c1_189 = arith.constant 1 : index
    %c0_190 = arith.constant 0 : index
    %c0_191 = arith.constant 0 : index
    %472 = vector.load %arg10[%c1_189, %c0_190, %c0_191] : memref<2x512x128xf32, #tpu.memory_space<vmem>>, vector<1x512x128xf32>
    %473 = vector.shape_cast %472 : vector<1x512x128xf32> to vector<512x128xf32>
    %cst_192 = arith.constant dense<0.000000e+00> : vector<16x128xf32>
    %474 = tpu.matmul %471, %473, %cst_192 {dimension_numbers = #tpu.dot_dimension_numbers<[1], [0], [0], [1], [0, 0, 1, 1], [], []>} : vector<16x512xf32>, vector<512x128xf32>, vector<16x128xf32> -> vector<16x128xf32>
    %c1_193 = arith.constant 1 : index
    %c0_194 = arith.constant 0 : index
    %c0_195 = arith.constant 0 : index
    %475 = vector.load %arg11[%c1_193, %c0_194, %c0_195] : memref<2x1x128xf32, #tpu.memory_space<vmem>>, vector<1x1x128xf32>
    %476 = vector.shape_cast %475 : vector<1x1x128xf32> to vector<1x128xf32>
    %477 = vector.broadcast %476 : vector<1x128xf32> to vector<16x128xf32>
    %478 = arith.addf %474, %477 : vector<16x128xf32>
    %479 = arith.addf %478, %451 : vector<16x128xf32>
    %c1_196 = arith.constant 1 : index
    %c0_197 = arith.constant 0 : index
    %c0_198 = arith.constant 0 : index
    %480 = vector.load %arg12[%c1_196, %c0_197, %c0_198] : memref<2x1x128xf32, #tpu.memory_space<vmem>>, vector<1x1x128xf32>
    %481 = vector.shape_cast %480 : vector<1x1x128xf32> to vector<1x128xf32>
    %c1_199 = arith.constant 1 : index
    %c0_200 = arith.constant 0 : index
    %c0_201 = arith.constant 0 : index
    %482 = vector.load %arg13[%c1_199, %c0_200, %c0_201] : memref<2x1x128xf32, #tpu.memory_space<vmem>>, vector<1x1x128xf32>
    %483 = vector.shape_cast %482 : vector<1x1x128xf32> to vector<1x128xf32>
    %cst_202 = arith.constant dense<0.000000e+00> : vector<16xf32>
    %484 = vector.multi_reduction <add>, %479, %cst_202 [1] : vector<16x128xf32> to vector<16xf32>
    %485 = vector.shape_cast %484 : vector<16xf32> to vector<16x1xf32>
    %cst_203 = arith.constant 1.280000e+02 : f32
    %486 = vector.broadcast %cst_203 : f32 to vector<16x1xf32>
    %487 = arith.divf %485, %486 : vector<16x1xf32>
    %488 = vector.broadcast %487 : vector<16x1xf32> to vector<16x128xf32>
    %489 = arith.subf %479, %488 : vector<16x128xf32>
    %490 = arith.mulf %489, %489 : vector<16x128xf32>
    %cst_204 = arith.constant dense<0.000000e+00> : vector<16xf32>
    %491 = vector.multi_reduction <add>, %490, %cst_204 [1] : vector<16x128xf32> to vector<16xf32>
    %492 = vector.shape_cast %491 : vector<16xf32> to vector<16x1xf32>
    %cst_205 = arith.constant 1.280000e+02 : f32
    %493 = vector.broadcast %cst_205 : f32 to vector<16x1xf32>
    %494 = arith.divf %492, %493 : vector<16x1xf32>
    %495 = vector.broadcast %487 : vector<16x1xf32> to vector<16x128xf32>
    %496 = arith.subf %479, %495 : vector<16x128xf32>
    %cst_206 = arith.constant 9.99999974E-6 : f32
    %497 = vector.broadcast %cst_206 : f32 to vector<16x1xf32>
    %498 = arith.addf %494, %497 : vector<16x1xf32>
    %499 = math.rsqrt %498 : vector<16x1xf32>
    %500 = vector.broadcast %499 : vector<16x1xf32> to vector<16x128xf32>
    %501 = arith.mulf %496, %500 : vector<16x128xf32>
    %502 = vector.broadcast %481 : vector<1x128xf32> to vector<16x128xf32>
    %503 = arith.mulf %501, %502 : vector<16x128xf32>
    %504 = vector.broadcast %483 : vector<1x128xf32> to vector<16x128xf32>
    %505 = arith.addf %503, %504 : vector<16x128xf32>
    %c0_207 = arith.constant 0 : index
    %c0_208 = arith.constant 0 : index
    %506 = vector.load %arg14[%c0_207, %c0_208] : memref<16x128xf32, #tpu.memory_space<vmem>>, vector<16x128xf32>
    tpu.vector_store %arg14[%c0_207, %c0_208], %505 {strides = array<i32>} : memref<16x128xf32, #tpu.memory_space<vmem>>, vector<16x128xf32>,
    return
  }
}

</mosaic_0001>

<llo_original>
// kernel: bert_forward.1
$region0: #{bert_forward.1}
  #allocation0 [shape = 'u32[]', space=smem, size = 0x4, offset = 0x4, fixed_abs, tag = 'smem constant byte address 0x4 - core index']
  #allocation1 [shape = 'u32[144,128]{1,0:T(1,128)}', space=vmem, size = 0x12000, scoped, tag = 'internal scratch']
  %s0 = inlined_call_operand.hbm [shape: f32[16,128], index: 0, kind: input, shape index: {}]
  %s1 = inlined_call_operand.vmem [shape: f32[8,128], index: 1, kind: input, shape index: {}]
  %s2 = inlined_call_operand.hbm [shape: f32[2,128,384], index: 2, kind: input, shape index: {}]
  %s3 = inlined_call_operand.vmem [shape: f32[2,1,384], index: 3, kind: input, shape index: {}]
  %s4 = inlined_call_operand.hbm [shape: f32[2,128,128], index: 4, kind: input, shape index: {}]
  %s5 = inlined_call_operand.vmem [shape: f32[2,1,128], index: 5, kind: input, shape index: {}]
  %s6 = inlined_call_operand.vmem [shape: f32[2,1,128], index: 6, kind: input, shape index: {}]
  %s7 = inlined_call_operand.vmem [shape: f32[2,1,128], index: 7, kind: input, shape index: {}]
  %s8 = inlined_call_operand.hbm [shape: f32[2,128,512], index: 8, kind: input, shape index: {}]
  %s9 = inlined_call_operand.hbm [shape: f32[2,1,512], index: 9, kind: input, shape index: {}]
  %s10 = inlined_call_operand.hbm [shape: f32[2,512,128], index: 10, kind: input, shape index: {}]
  %s11 = inlined_call_operand.hbm [shape: f32[2,1,128], index: 11, kind: input, shape index: {}]
  %s12 = inlined_call_operand.vmem [shape: f32[2,1,128], index: 12, kind: input, shape index: {}]
  %s13 = inlined_call_operand.vmem [shape: f32[2,1,128], index: 13, kind: input, shape index: {}]
  %s14 = inlined_call_operand.hbm [shape: f32[16,128], index: 14, kind: output, shape index: {}]
  %s15 = sld [smem:[#allocation0]]
  $region94: #{bert_forward.1} parent=0
    _
  %s17 = ssub.s32 1, %s15
  %s18 = scalar_select 0, %s17, %s15
  $region1: #{bert_forward.1} parent=0
    #allocation2 [shape = 'u8[8192]{0}', space=vmem, size = 0x2000, scoped, tag = 'input window, operand 0, single buffered']
    #allocation3 [shape = 's32[1]{0}', space=sflag, size = 0x4, scoped, tag = 'scoped memory for bert_forward.1']
    #allocation4 [shape = 's32[1]{0}', space=sflag, size = 0x4, scoped, tag = 'scoped memory for bert_forward.1']
    #allocation5 [shape = 'u8[393216]{0}', space=vmem, size = 0x60000, scoped, tag = 'input window, operand 2, single buffered']
    #allocation6 [shape = 's32[1]{0}', space=sflag, size = 0x4, scoped, tag = 'scoped memory for bert_forward.1']
    #allocation7 [shape = 'u8[131072]{0}', space=vmem, size = 0x20000, scoped, tag = 'input window, operand 4, single buffered']
    #allocation8 [shape = 'u8[524288]{0}', space=vmem, size = 0x80000, scoped, tag = 'input window, operand 8, single buffered']
    #allocation9 [shape = 's32[1]{0}', space=sflag, size = 0x4, scoped, tag = 'scoped memory for bert_forward.1']
    #allocation10 [shape = 'u8[4096]{0}', space=vmem, size = 0x1000, scoped, tag = 'input window, operand 9, single buffered']
    #allocation11 [shape = 'u8[524288]{0}', space=vmem, size = 0x80000, scoped, tag = 'input window, operand 10, single buffered']
    #allocation12 [shape = 's32[1]{0}', space=sflag, size = 0x4, scoped, tag = 'scoped memory for bert_forward.1']
    #allocation13 [shape = 'u8[1024]{0}', space=vmem, size = 0x400, scoped, tag = 'input window, operand 11, single buffered']
    #allocation14 [shape = 'u8[8192]{0}', space=vmem, size = 0x2000, scoped, tag = 'output window, operand 0, single buffered']
    %19 = vsyncpa [#allocation3], 0
    %20 = vsyncpa [#allocation6], 0
    %21 = vsyncpa [#allocation9], 0
    %22 = vsyncpa [#allocation12], 0
    %23 = vsyncpa [#allocation4], 0
    // Predicated region
    $region2: #{bert_forward.1} parent=1 // pred_check
      _
    $region3: #{bert_forward.1} parent=1 // pred_check_branch
      %25 = sbr.rel (0) target = $region5
    $region4: #{bert_forward.1} parent=1 // pred_region
      %s27 = ssub.s32 256, 256
      %28 = vsyncadd [#allocation3], %s27
      %s29 = sshll.u32 [#allocation2], 4
      %s30 = int_to_ptr.vmem [resolvable:$true] %s29
      %35 = dma.hbm_to_vmem [thread:$0]  %s0, 256, %s30, [#allocation3], 128, 128, 8
    $region5: #{bert_forward.1} parent=1 // pred_fallthru
      _
    // Predicated region
    $region6: #{bert_forward.1} parent=1 // pred_check
      _
    $region7: #{bert_forward.1} parent=1 // pred_check_branch
      %37 = sbr.rel (0) target = $region9
    $region8: #{bert_forward.1} parent=1 // pred_region
      _
    $region9: #{bert_forward.1} parent=1 // pred_fallthru
      _
    // Predicated region
    $region10: #{bert_forward.1} parent=1 // pred_check
      _
    $region11: #{bert_forward.1} parent=1 // pred_check_branch
      %39 = sbr.rel (0) target = $region13
    $region12: #{bert_forward.1} parent=1 // pred_region
      %s41 = ssub.s32 12288, 12288
      %42 = vsyncadd [#allocation6], %s41
      %s43 = sshll.u32 [#allocation5], 4
      %s44 = int_to_ptr.vmem [resolvable:$true] %s43
      %49 = dma.hbm_to_vmem [thread:$0]  %s2, 12288, %s44, [#allocation6], 384, 384, 24
    $region13: #{bert_forward.1} parent=1 // pred_fallthru
      _
    // Predicated region
    $region14: #{bert_forward.1} parent=1 // pred_check
      _
    $region15: #{bert_forward.1} parent=1 // pred_check_branch
      %51 = sbr.rel (0) target = $region17
    $region16: #{bert_forward.1} parent=1 // pred_region
      _
    $region17: #{bert_forward.1} parent=1 // pred_fallthru
      _
    // Predicated region
    $region18: #{bert_forward.1} parent=1 // pred_check
      _
    $region19: #{bert_forward.1} parent=1 // pred_check_branch
      %53 = sbr.rel (0) target = $region21
    $region20: #{bert_forward.1} parent=1 // pred_region
      %s55 = ssub.s32 4096, 4096
      %56 = vsyncadd [#allocation6], %s55
      %s57 = sshll.u32 [#allocation7], 4
      %s58 = int_to_ptr.vmem [resolvable:$true] %s57
      %63 = dma.hbm_to_vmem [thread:$0]  %s4, 4096, %s58, [#allocation6], 128, 128, 8
    $region21: #{bert_forward.1} parent=1 // pred_fallthru
      _
    // Predicated region
    $region22: #{bert_forward.1} parent=1 // pred_check
      _
    $region23: #{bert_forward.1} parent=1 // pred_check_branch
      %65 = sbr.rel (0) target = $region25
    $region24: #{bert_forward.1} parent=1 // pred_region
      _
    $region25: #{bert_forward.1} parent=1 // pred_fallthru
      _
    // Predicated region
    $region26: #{bert_forward.1} parent=1 // pred_check
      _
    $region27: #{bert_forward.1} parent=1 // pred_check_branch
      %67 = sbr.rel (0) target = $region29
    $region28: #{bert_forward.1} parent=1 // pred_region
      _
    $region29: #{bert_forward.1} parent=1 // pred_fallthru
      _
    // Predicated region
    $region30: #{bert_forward.1} parent=1 // pred_check
      _
    $region31: #{bert_forward.1} parent=1 // pred_check_branch
      %69 = sbr.rel (0) target = $region33
    $region32: #{bert_forward.1} parent=1 // pred_region
      _
    $region33: #{bert_forward.1} parent=1 // pred_fallthru
      _
    // Predicated region
    $region34: #{bert_forward.1} parent=1 // pred_check
      _
    $region35: #{bert_forward.1} parent=1 // pred_check_branch
      %71 = sbr.rel (0) target = $region37
    $region36: #{bert_forward.1} parent=1 // pred_region
      %s73 = ssub.s32 16384, 16384
      %74 = vsyncadd [#allocation9], %s73
      %s75 = sshll.u32 [#allocation8], 4
      %s76 = int_to_ptr.vmem [resolvable:$true] %s75
      %81 = dma.hbm_to_vmem [thread:$0]  %s8, 16384, %s76, [#allocation9], 512, 512, 32
    $region37: #{bert_forward.1} parent=1 // pred_fallthru
      _
    // Predicated region
    $region38: #{bert_forward.1} parent=1 // pred_check
      _
    $region39: #{bert_forward.1} parent=1 // pred_check_branch
      %83 = sbr.rel (0) target = $region41
    $region40: #{bert_forward.1} parent=1 // pred_region
      %s85 = ssub.s32 128, 128
      %86 = vsyncadd [#allocation9], %s85
      %s87 = sshll.u32 [#allocation10], 4
      %s88 = int_to_ptr.vmem [resolvable:$true] %s87
      %93 = dma.hbm_to_vmem [thread:$0]  %s9, 128, %s88, [#allocation9], 64, 64, 4
    $region41: #{bert_forward.1} parent=1 // pred_fallthru
      _
    // Predicated region
    $region42: #{bert_forward.1} parent=1 // pred_check
      _
    $region43: #{bert_forward.1} parent=1 // pred_check_branch
      %95 = sbr.rel (0) target = $region45
    $region44: #{bert_forward.1} parent=1 // pred_region
      %s97 = ssub.s32 16384, 16384
      %98 = vsyncadd [#allocation12], %s97
      %s99 = sshll.u32 [#allocation11], 4
      %s100 = int_to_ptr.vmem [resolvable:$true] %s99
      %105 = dma.hbm_to_vmem [thread:$0]  %s10, 16384, %s100, [#allocation12], 128, 128, 8
    $region45: #{bert_forward.1} parent=1 // pred_fallthru
      _
    // Predicated region
    $region46: #{bert_forward.1} parent=1 // pred_check
      _
    $region47: #{bert_forward.1} parent=1 // pred_check_branch
      %107 = sbr.rel (0) target = $region49
    $region48: #{bert_forward.1} parent=1 // pred_region
      %s109 = ssub.s32 32, 32
      %110 = vsyncadd [#allocation12], %s109
      %s111 = sshll.u32 [#allocation13], 4
      %s112 = int_to_ptr.vmem [resolvable:$true] %s111
      %117 = dma.hbm_to_vmem [thread:$0]  %s11, 32, %s112, [#allocation12], 16, 16, 1
    $region49: #{bert_forward.1} parent=1 // pred_fallthru
      _
    // Predicated region
    $region50: #{bert_forward.1} parent=1 // pred_check
      _
    $region51: #{bert_forward.1} parent=1 // pred_check_branch
      %119 = sbr.rel (0) target = $region53
    $region52: #{bert_forward.1} parent=1 // pred_region
      _
    $region53: #{bert_forward.1} parent=1 // pred_fallthru
      _
    // Predicated region
    $region54: #{bert_forward.1} parent=1 // pred_check
      _
    $region55: #{bert_forward.1} parent=1 // pred_check_branch
      %121 = sbr.rel (0) target = $region57
    $region56: #{bert_forward.1} parent=1 // pred_region
      _
    $region57: #{bert_forward.1} parent=1 // pred_fallthru
      _
    // Predicated region
    $region58: #{bert_forward.1} parent=1 // pred_check
      _
    $region59: #{bert_forward.1} parent=1 // pred_check_branch
      %123 = sbr.rel (0) target = $region61
    $region60: #{bert_forward.1} parent=1 // pred_region
      %124 = dma.done [#allocation3], 256
    $region61: #{bert_forward.1} parent=1 // pred_fallthru
      _
    // Predicated region
    $region62: #{bert_forward.1} parent=1 // pred_check
      _
    $region63: #{bert_forward.1} parent=1 // pred_check_branch
      %126 = sbr.rel (0) target = $region65
    $region64: #{bert_forward.1} parent=1 // pred_region
      %127 = dma.done [#allocation6], 12288
    $region65: #{bert_forward.1} parent=1 // pred_fallthru
      _
    // Predicated region
    $region66: #{bert_forward.1} parent=1 // pred_check
      _
    $region67: #{bert_forward.1} parent=1 // pred_check_branch
      %129 = sbr.rel (0) target = $region69
    $region68: #{bert_forward.1} parent=1 // pred_region
      %130 = dma.done [#allocation6], 4096
    $region69: #{bert_forward.1} parent=1 // pred_fallthru
      _
    // Predicated region
    $region70: #{bert_forward.1} parent=1 // pred_check
      _
    $region71: #{bert_forward.1} parent=1 // pred_check_branch
      %132 = sbr.rel (0) target = $region73
    $region72: #{bert_forward.1} parent=1 // pred_region
      %133 = dma.done [#allocation9], 16384
    $region73: #{bert_forward.1} parent=1 // pred_fallthru
      _
    // Predicated region
    $region74: #{bert_forward.1} parent=1 // pred_check
      _
    $region75: #{bert_forward.1} parent=1 // pred_check_branch
      %135 = sbr.rel (0) target = $region77
    $region76: #{bert_forward.1} parent=1 // pred_region
      %136 = dma.done [#allocation9], 128
    $region77: #{bert_forward.1} parent=1 // pred_fallthru
      _
    // Predicated region
    $region78: #{bert_forward.1} parent=1 // pred_check
      _
    $region79: #{bert_forward.1} parent=1 // pred_check_branch
      %138 = sbr.rel (0) target = $region81
    $region80: #{bert_forward.1} parent=1 // pred_region
      %139 = dma.done [#allocation12], 16384
    $region81: #{bert_forward.1} parent=1 // pred_fallthru
      _
    // Predicated region
    $region82: #{bert_forward.1} parent=1 // pred_check
      _
    $region83: #{bert_forward.1} parent=1 // pred_check_branch
      %141 = sbr.rel (0) target = $region85
    $region84: #{bert_forward.1} parent=1 // pred_region
      %142 = dma.done [#allocation12], 32
    $region85: #{bert_forward.1} parent=1 // pred_fallthru
      _
    %v143 = vld [vmem:[%s1] sm:$0xff]
    %v144 = vld [vmem:[#allocation2] sm:$0xff]
    %v145 = vld [vmem:[#allocation2 + $0x8] sm:$0xff]
    %v146 = vadd.f32 %v144, %v143
    %v147 = vadd.f32 %v145, %v143
    %v148 = vld [vmem:[#allocation5] sm:$0xff]
    %v149 = vld [vmem:[#allocation5 + $0x8] sm:$0xff]
    %v150 = vld [vmem:[#allocation5 + $0x10] sm:$0xff]
    %v151 = vld [vmem:[#allocation5 + $0x18] sm:$0xff]
    %v152 = vld [vmem:[#allocation5 + $0x20] sm:$0xff]
    %v153 = vld [vmem:[#allocation5 + $0x28] sm:$0xff]
    %v154 = vld [vmem:[#allocation5 + $0x30] sm:$0xff]
    %v155 = vld [vmem:[#allocation5 + $0x38] sm:$0xff]
    %v156 = vld [vmem:[#allocation5 + $0x40] sm:$0xff]
    %v157 = vld [vmem:[#allocation5 + $0x48] sm:$0xff]
    %v158 = vld [vmem:[#allocation5 + $0x50] sm:$0xff]
    %v159 = vld [vmem:[#allocation5 + $0x58] sm:$0xff]
    %v160 = vld [vmem:[#allocation5 + $0x60] sm:$0xff]
    %v161 = vld [vmem:[#allocation5 + $0x68] sm:$0xff]
    %v162 = vld [vmem:[#allocation5 + $0x70] sm:$0xff]
    %v163 = vld [vmem:[#allocation5 + $0x78] sm:$0xff]
    %v164 = vld [vmem:[#allocation5 + $0x80] sm:$0xff]
    %v165 = vld [vmem:[#allocation5 + $0x88] sm:$0xff]
    %v166 = vld [vmem:[#allocation5 + $0x90] sm:$0xff]
    %v167 = vld [vmem:[#allocation5 + $0x98] sm:$0xff]
    %v168 = vld [vmem:[#allocation5 + $0xa0] sm:$0xff]
    %v169 = vld [vmem:[#allocation5 + $0xa8] sm:$0xff]
    %v170 = vld [vmem:[#allocation5 + $0xb0] sm:$0xff]
    %v171 = vld [vmem:[#allocation5 + $0xb8] sm:$0xff]
    %v172 = vld [vmem:[#allocation5 + $0xc0] sm:$0xff]
    %v173 = vld [vmem:[#allocation5 + $0xc8] sm:$0xff]
    %v174 = vld [vmem:[#allocation5 + $0xd0] sm:$0xff]
    %v175 = vld [vmem:[#allocation5 + $0xd8] sm:$0xff]
    %v176 = vld [vmem:[#allocation5 + $0xe0] sm:$0xff]
    %v177 = vld [vmem:[#allocation5 + $0xe8] sm:$0xff]
    %v178 = vld [vmem:[#allocation5 + $0xf0] sm:$0xff]
    %v179 = vld [vmem:[#allocation5 + $0xf8] sm:$0xff]
    %v180 = vld [vmem:[#allocation5 + $0x100] sm:$0xff]
    %v181 = vld [vmem:[#allocation5 + $0x108] sm:$0xff]
    %v182 = vld [vmem:[#allocation5 + $0x110] sm:$0xff]
    %v183 = vld [vmem:[#allocation5 + $0x118] sm:$0xff]
    %v184 = vld [vmem:[#allocation5 + $0x120] sm:$0xff]
    %v185 = vld [vmem:[#allocation5 + $0x128] sm:$0xff]
    %v186 = vld [vmem:[#allocation5 + $0x130] sm:$0xff]
    %v187 = vld [vmem:[#allocation5 + $0x138] sm:$0xff]
    %v188 = vld [vmem:[#allocation5 + $0x140] sm:$0xff]
    %v189 = vld [vmem:[#allocation5 + $0x148] sm:$0xff]
    %v190 = vld [vmem:[#allocation5 + $0x150] sm:$0xff]
    %v191 = vld [vmem:[#allocation5 + $0x158] sm:$0xff]
    %v192 = vld [vmem:[#allocation5 + $0x160] sm:$0xff]
    %v193 = vld [vmem:[#allocation5 + $0x168] sm:$0xff]
    %v194 = vld [vmem:[#allocation5 + $0x170] sm:$0xff]
    %v195 = vld [vmem:[#allocation5 + $0x178] sm:$0xff]
    %v196 = vld [vmem:[%s3] sm:$0x7]
    %v198 = vlaneseq
    %v199 = vshrl.u32 %v198, 7
    %v200 = vsub.s32 0, %v199
    %v201 = vrot.slane %v196, %v200
    %v202 = vlaneseq
    %v203 = vshrl.u32 %v202, 7
    %v204 = vsub.s32 1, %v203
    %v205 = vrot.slane %v196, %v204
    %v206 = vlaneseq
    %v207 = vshrl.u32 %v206, 7
    %v208 = vsub.s32 2, %v207
    %v209 = vrot.slane %v196, %v208
    %213 = vmatprep.subr.mxu0 %v149
    %214 = vmatpush1.msra.mxu0 %v148
    %215 = vmatprep.subr.mxu0 %v152
    %216 = vmatpush1.msra.mxu0 %v151
    %217 = vmatprep.subr.mxu0 %v155
    %218 = vmatpush1.msra.mxu0 %v154
    %219 = vmatprep.subr.mxu0 %v158
    %220 = vmatpush1.msra.mxu0 %v157
    %221 = vmatprep.subr.mxu0 %v161
    %222 = vmatpush1.msra.mxu0 %v160
    %223 = vmatprep.subr.mxu0 %v164
    %224 = vmatpush1.msra.mxu0 %v163
    %225 = vmatprep.subr.mxu0 %v167
    %226 = vmatpush1.msra.mxu0 %v166
    %227 = vmatprep.subr.mxu0 %v170
    %228 = vmatpush1.msra.mxu0 %v169
    %229 = vmatprep.subr.mxu0 %v173
    %230 = vmatpush1.msra.mxu0 %v172
    %231 = vmatprep.subr.mxu0 %v176
    %232 = vmatpush1.msra.mxu0 %v175
    %233 = vmatprep.subr.mxu0 %v179
    %234 = vmatpush1.msra.mxu0 %v178
    %235 = vmatprep.subr.mxu0 %v182
    %236 = vmatpush1.msra.mxu0 %v181
    %237 = vmatprep.subr.mxu0 %v185
    %238 = vmatpush1.msra.mxu0 %v184
    %239 = vmatprep.subr.mxu0 %v188
    %240 = vmatpush1.msra.mxu0 %v187
    %241 = vmatprep.subr.mxu0 %v191
    %242 = vmatpush1.msra.mxu0 %v190
    %243 = vmatprep.subr.mxu0 %v194
    %244 = vmatpush1.msra.mxu0 %v193
    %245 = vmatprep.subr.mxu0 0.0
    %246 = vmatpush1.msra.mxu0 0.0
    %247 = vmatprep.subr.mxu0 0.0
    %248 = vmatpush1.msra.mxu0 0.0
    %249 = vmatprep.subr.mxu0 0.0
    %250 = vmatpush1.msra.mxu0 0.0
    %251 = vmatprep.subr.mxu0 0.0
    %252 = vmatpush1.msra.mxu0 0.0
    %253 = vmatprep.subr.mxu0 0.0
    %254 = vmatpush1.msra.mxu0 0.0
    %255 = vmatprep.subr.mxu0 0.0
    %256 = vmatpush1.msra.mxu0 0.0
    %257 = vmatprep.subr.mxu0 0.0
    %258 = vmatpush1.msra.mxu0 0.0
    %259 = vmatprep.subr.mxu0 0.0
    %260 = vmatpush1.msra.mxu0 0.0
    %261 = vmatprep.subr.mxu0 0.0
    %262 = vmatpush1.msra.mxu0 0.0
    %263 = vmatprep.subr.mxu0 0.0
    %264 = vmatpush1.msra.mxu0 0.0
    %265 = vmatprep.subr.mxu0 0.0
    %266 = vmatpush1.msra.mxu0 0.0
    %267 = vmatprep.subr.mxu0 0.0
    %268 = vmatpush1.msra.mxu0 0.0
    %269 = vmatprep.subr.mxu0 0.0
    %270 = vmatpush1.msra.mxu0 0.0
    %271 = vmatprep.subr.mxu0 0.0
    %272 = vmatpush1.msra.mxu0 0.0
    %273 = vmatprep.subr.mxu0 0.0
    %274 = vmatpush1.msra.mxu0 0.0
    %275 = vmatprep.subr.mxu0 0.0
    %276 = vmatpush1.msra.mxu0 0.0
    %277 = vmatprep.mubr.f32.mxu0 0.0
    %278 = vmatmul.mubr.f32.gmra.mrb[0].mxu0 %v146
    %v279 = vpop.f32.mrb[0].mxu0
    %v280 = vadd.f32 %v201, %v279
    %v281 = vpop.f32.mrb[0].mxu0
    %v282 = vadd.f32 %v205, %v281
    %283 = vmatprep.mubr.f32.mxu0 0.0
    %284 = vmatmul.mubr.f32.gmra.mrb[0].mxu0 %v147
    %v285 = vpop.f32.mrb[0].mxu0
    %v286 = vadd.f32 %v201, %v285
    %v287 = vpop.f32.mrb[0].mxu0
    %v288 = vadd.f32 %v205, %v287
    %289 = vdwg.mxu0
    %290 = vmatprep.subr.mxu0 0.0
    %291 = vmatpush1.msra.mxu0 %v150
    %292 = vmatprep.subr.mxu0 0.0
    %293 = vmatpush1.msra.mxu0 %v153
    %294 = vmatprep.subr.mxu0 0.0
    %295 = vmatpush1.msra.mxu0 %v156
    %296 = vmatprep.subr.mxu0 0.0
    %297 = vmatpush1.msra.mxu0 %v159
    %298 = vmatprep.subr.mxu0 0.0
    %299 = vmatpush1.msra.mxu0 %v162
    %300 = vmatprep.subr.mxu0 0.0
    %301 = vmatpush1.msra.mxu0 %v165
    %302 = vmatprep.subr.mxu0 0.0
    %303 = vmatpush1.msra.mxu0 %v168
    %304 = vmatprep.subr.mxu0 0.0
    %305 = vmatpush1.msra.mxu0 %v171
    %306 = vmatprep.subr.mxu0 0.0
    %307 = vmatpush1.msra.mxu0 %v174
    %308 = vmatprep.subr.mxu0 0.0
    %309 = vmatpush1.msra.mxu0 %v177
    %310 = vmatprep.subr.mxu0 0.0
    %311 = vmatpush1.msra.mxu0 %v180
    %312 = vmatprep.subr.mxu0 0.0
    %313 = vmatpush1.msra.mxu0 %v183
    %314 = vmatprep.subr.mxu0 0.0
    %315 = vmatpush1.msra.mxu0 %v186
    %316 = vmatprep.subr.mxu0 0.0
    %317 = vmatpush1.msra.mxu0 %v189
    %318 = vmatprep.subr.mxu0 0.0
    %319 = vmatpush1.msra.mxu0 %v192
    %320 = vmatprep.subr.mxu0 0.0
    %321 = vmatpush1.msra.mxu0 %v195
    %322 = vmatprep.subr.mxu0 0.0
    %323 = vmatpush1.msra.mxu0 0.0
    %324 = vmatprep.subr.mxu0 0.0
    %325 = vmatpush1.msra.mxu0 0.0
    %326 = vmatprep.subr.mxu0 0.0
    %327 = vmatpush1.msra.mxu0 0.0
    %328 = vmatprep.subr.mxu0 0.0
    %329 = vmatpush1.msra.mxu0 0.0
    %330 = vmatprep.subr.mxu0 0.0
    %331 = vmatpush1.msra.mxu0 0.0
    %332 = vmatprep.subr.mxu0 0.0
    %333 = vmatpush1.msra.mxu0 0.0
    %334 = vmatprep.subr.mxu0 0.0
    %335 = vmatpush1.msra.mxu0 0.0
    %336 = vmatprep.subr.mxu0 0.0
    %337 = vmatpush1.msra.mxu0 0.0
    %338 = vmatprep.subr.mxu0 0.0
    %339 = vmatpush1.msra.mxu0 0.0
    %340 = vmatprep.subr.mxu0 0.0
    %341 = vmatpush1.msra.mxu0 0.0
    %342 = vmatprep.subr.mxu0 0.0
    %343 = vmatpush1.msra.mxu0 0.0
    %344 = vmatprep.subr.mxu0 0.0
    %345 = vmatpush1.msra.mxu0 0.0
    %346 = vmatprep.subr.mxu0 0.0
    %347 = vmatpush1.msra.mxu0 0.0
    %348 = vmatprep.subr.mxu0 0.0
    %349 = vmatpush1.msra.mxu0 0.0
    %350 = vmatprep.subr.mxu0 0.0
    %351 = vmatpush1.msra.mxu0 0.0
    %352 = vmatprep.subr.mxu0 0.0
    %353 = vmatpush1.msra.mxu0 0.0
    %354 = vmatprep.mubr.f32.mxu0 0.0
    %355 = vmatmul.mubr.f32.gmra.mrb[0].mxu0 %v146
    %v356 = vpop.f32.mrb[0].mxu0
    %v357 = vadd.f32 %v209, %v356
    %v358 = vpop.f32.mrb[0].mxu0
    %359 = vmatprep.mubr.f32.mxu0 0.0
    %360 = vmatmul.mubr.f32.gmra.mrb[0].mxu0 %v147
    %v361 = vpop.f32.mrb[0].mxu0
    %v362 = vadd.f32 %v209, %v361
    %v363 = vpop.f32.mrb[0].mxu0
    %364 = vdwg.mxu0
    %v365 = vld [vmem:[#allocation7] sm:$0xff]
    %v366 = vld [vmem:[#allocation7 + $0x8] sm:$0xff]
    %v367 = vld [vmem:[#allocation7 + $0x10] sm:$0xff]
    %v368 = vld [vmem:[#allocation7 + $0x18] sm:$0xff]
    %v369 = vld [vmem:[#allocation7 + $0x20] sm:$0xff]
    %v370 = vld [vmem:[#allocation7 + $0x28] sm:$0xff]
    %v371 = vld [vmem:[#allocation7 + $0x30] sm:$0xff]
    %v372 = vld [vmem:[#allocation7 + $0x38] sm:$0xff]
    %v373 = vld [vmem:[#allocation7 + $0x40] sm:$0xff]
    %v374 = vld [vmem:[#allocation7 + $0x48] sm:$0xff]
    %v375 = vld [vmem:[#allocation7 + $0x50] sm:$0xff]
    %v376 = vld [vmem:[#allocation7 + $0x58] sm:$0xff]
    %v377 = vld [vmem:[#allocation7 + $0x60] sm:$0xff]
    %v378 = vld [vmem:[#allocation7 + $0x68] sm:$0xff]
    %v379 = vld [vmem:[#allocation7 + $0x70] sm:$0xff]
    %v380 = vld [vmem:[#allocation7 + $0x78] sm:$0xff]
    %vm381 = vcmask 261120
    %v383 = vsel %vm381, %v280, 0
    %v386 = vsel %vm381, %v282, 0
    %388 = vmatprep.subr.mxu0 0.0
    %389 = vmatpush1.xpose.msra.mxu0 %v386
    %390 = vmatprep.subr.mxu0 0.0
    %391 = vmatpush1.xpose.msra.mxu0 0.0
    %392 = vmatprep.subr.mxu0 0.0
    %393 = vmatpush1.xpose.msra.mxu0 0.0
    %394 = vmatprep.subr.mxu0 0.0
    %395 = vmatpush1.xpose.msra.mxu0 0.0
    %396 = vmatprep.subr.mxu0 0.0
    %397 = vmatpush1.xpose.msra.mxu0 0.0
    %398 = vmatprep.subr.mxu0 0.0
    %399 = vmatpush1.xpose.msra.mxu0 0.0
    %400 = vmatprep.subr.mxu0 0.0
    %401 = vmatpush1.xpose.msra.mxu0 0.0
    %402 = vmatprep.subr.mxu0 0.0
    %403 = vmatpush1.xpose.msra.mxu0 0.0
    %404 = vmatprep.subr.mxu0 0.0
    %405 = vmatpush1.xpose.msra.mxu0 0.0
    %406 = vmatprep.subr.mxu0 0.0
    %407 = vmatpush1.xpose.msra.mxu0 0.0
    %408 = vmatprep.subr.mxu0 0.0
    %409 = vmatpush1.xpose.msra.mxu0 0.0
    %410 = vmatprep.subr.mxu0 0.0
    %411 = vmatpush1.xpose.msra.mxu0 0.0
    %412 = vmatprep.subr.mxu0 0.0
    %413 = vmatpush1.xpose.msra.mxu0 0.0
    %414 = vmatprep.subr.mxu0 0.0
    %415 = vmatpush1.xpose.msra.mxu0 0.0
    %416 = vmatprep.subr.mxu0 0.0
    %417 = vmatpush1.xpose.msra.mxu0 0.0
    %418 = vmatprep.subr.mxu0 0.0
    %419 = vmatpush1.xpose.msra.mxu0 0.0
    %420 = vmatprep.subr.mxu0 0.0
    %421 = vmatpush1.xpose.msra.mxu0 0.0
    %422 = vmatprep.subr.mxu0 0.0
    %423 = vmatpush1.xpose.msra.mxu0 0.0
    %424 = vmatprep.subr.mxu0 0.0
    %425 = vmatpush1.xpose.msra.mxu0 0.0
    %426 = vmatprep.subr.mxu0 0.0
    %427 = vmatpush1.xpose.msra.mxu0 0.0
    %428 = vmatprep.subr.mxu0 0.0
    %429 = vmatpush1.xpose.msra.mxu0 0.0
    %430 = vmatprep.subr.mxu0 0.0
    %431 = vmatpush1.xpose.msra.mxu0 0.0
    %432 = vmatprep.subr.mxu0 0.0
    %433 = vmatpush1.xpose.msra.mxu0 0.0
    %434 = vmatprep.subr.mxu0 0.0
    %435 = vmatpush1.xpose.msra.mxu0 0.0
    %436 = vmatprep.subr.mxu0 0.0
    %437 = vmatpush1.xpose.msra.mxu0 0.0
    %438 = vmatprep.subr.mxu0 0.0
    %439 = vmatpush1.xpose.msra.mxu0 0.0
    %440 = vmatprep.subr.mxu0 0.0
    %441 = vmatpush1.xpose.msra.mxu0 0.0
    %442 = vmatprep.subr.mxu0 0.0
    %443 = vmatpush1.xpose.msra.mxu0 0.0
    %444 = vmatprep.subr.mxu0 0.0
    %445 = vmatpush1.xpose.msra.mxu0 0.0
    %446 = vmatprep.subr.mxu0 0.0
    %447 = vmatpush1.xpose.msra.mxu0 0.0
    %448 = vmatprep.subr.mxu0 0.0
    %449 = vmatpush1.xpose.msra.mxu0 0.0
    %450 = vmatprep.subr.mxu0 0.0
    %451 = vmatpush1.xpose.msra.mxu0 0.0
    %452 = vmatprep.mubr.f32.mxu0 0.0
    %453 = vmatmul.mubr.f32.gmra.mrb[0].mxu0 %v383
    %v454 = vpop.f32.mrb[0].mxu0
    %v455 = vadd.f32 0.0, %v454
    %v456 = vpop.f32.mrb[0].mxu0
    %457 = vdwg.mxu0
    %v458 = vmul.f32 %v455, 0.17677669
    %vm459 = vcmask 64512
    %v460 = vsel %vm459, %v458, -inf
    %461 = vmax.xlane.f32.xlu0 %v460
    %v462 = vpop.xlane.xlu0 %461
    %v463 = vsub.f32 %v458, %v462
    %v464 = vmul.f32 %v463, 1.442695
    %v465 = vpow.pop %v464
    %v466 = vsel %vm459, %v465, 0.0
    %467 = vadd.xlane.f32.xlu0 %v466
    %v468 = vpop.xlane.xlu0 %467
    %v469 = vrcp.pop %v468
    %v470 = vmul.f32 %v465, %v469
    %v472 = vsel %vm459, %v470, 0
    %474 = vmatprep.subr.mxu0 0.0
    %475 = vmatpush1.msra.mxu0 %v357
    %476 = vmatprep.subr.mxu0 0.0
    %477 = vmatpush1.msra.mxu0 0.0
    %478 = vmatprep.subr.mxu0 0.0
    %479 = vmatpush1.msra.mxu0 0.0
    %480 = vmatprep.subr.mxu0 0.0
    %481 = vmatpush1.msra.mxu0 0.0
    %482 = vmatprep.subr.mxu0 0.0
    %483 = vmatpush1.msra.mxu0 0.0
    %484 = vmatprep.subr.mxu0 0.0
    %485 = vmatpush1.msra.mxu0 0.0
    %486 = vmatprep.subr.mxu0 0.0
    %487 = vmatpush1.msra.mxu0 0.0
    %488 = vmatprep.subr.mxu0 0.0
    %489 = vmatpush1.msra.mxu0 0.0
    %490 = vmatprep.subr.mxu0 0.0
    %491 = vmatpush1.msra.mxu0 0.0
    %492 = vmatprep.subr.mxu0 0.0
    %493 = vmatpush1.msra.mxu0 0.0
    %494 = vmatprep.subr.mxu0 0.0
    %495 = vmatpush1.msra.mxu0 0.0
    %496 = vmatprep.subr.mxu0 0.0
    %497 = vmatpush1.msra.mxu0 0.0
    %498 = vmatprep.subr.mxu0 0.0
    %499 = vmatpush1.msra.mxu0 0.0
    %500 = vmatprep.subr.mxu0 0.0
    %501 = vmatpush1.msra.mxu0 0.0
    %502 = vmatprep.subr.mxu0 0.0
    %503 = vmatpush1.msra.mxu0 0.0
    %504 = vmatprep.subr.mxu0 0.0
    %505 = vmatpush1.msra.mxu0 0.0
    %506 = vmatprep.subr.mxu0 0.0
    %507 = vmatpush1.msra.mxu0 0.0
    %508 = vmatprep.subr.mxu0 0.0
    %509 = vmatpush1.msra.mxu0 0.0
    %510 = vmatprep.subr.mxu0 0.0
    %511 = vmatpush1.msra.mxu0 0.0
    %512 = vmatprep.subr.mxu0 0.0
    %513 = vmatpush1.msra.mxu0 0.0
    %514 = vmatprep.subr.mxu0 0.0
    %515 = vmatpush1.msra.mxu0 0.0
    %516 = vmatprep.subr.mxu0 0.0
    %517 = vmatpush1.msra.mxu0 0.0
    %518 = vmatprep.subr.mxu0 0.0
    %519 = vmatpush1.msra.mxu0 0.0
    %520 = vmatprep.subr.mxu0 0.0
    %521 = vmatpush1.msra.mxu0 0.0
    %522 = vmatprep.subr.mxu0 0.0
    %523 = vmatpush1.msra.mxu0 0.0
    %524 = vmatprep.subr.mxu0 0.0
    %525 = vmatpush1.msra.mxu0 0.0
    %526 = vmatprep.subr.mxu0 0.0
    %527 = vmatpush1.msra.mxu0 0.0
    %528 = vmatprep.subr.mxu0 0.0
    %529 = vmatpush1.msra.mxu0 0.0
    %530 = vmatprep.subr.mxu0 0.0
    %531 = vmatpush1.msra.mxu0 0.0
    %532 = vmatprep.subr.mxu0 0.0
    %533 = vmatpush1.msra.mxu0 0.0
    %534 = vmatprep.subr.mxu0 0.0
    %535 = vmatpush1.msra.mxu0 0.0
    %536 = vmatprep.subr.mxu0 0.0
    %537 = vmatpush1.msra.mxu0 0.0
    %538 = vmatprep.mubr.f32.mxu0 0.0
    %539 = vmatmul.mubr.f32.gmra.mrb[0].mxu0 %v472
    %v540 = vpop.f32.mrb[0].mxu0
    %v541 = vadd.f32 0.0, %v540
    %v542 = vpop.f32.mrb[0].mxu0
    %543 = vdwg.mxu0
    %544 = vrot.lane.b32.xlu0 %v280, 96
    %v545 = vpop.permute.xlu0 %544
    %546 = vrot.lane.b32.xlu0 %v282, 96
    %v547 = vpop.permute.xlu0 %546
    %v548 = vsel %vm381, %v545, 0
    %v550 = vsel %vm381, %v547, 0
    %552 = vmatprep.subr.mxu0 0.0
    %553 = vmatpush1.xpose.msra.mxu0 %v550
    %554 = vmatprep.subr.mxu0 0.0
    %555 = vmatpush1.xpose.msra.mxu0 0.0
    %556 = vmatprep.subr.mxu0 0.0
    %557 = vmatpush1.xpose.msra.mxu0 0.0
    %558 = vmatprep.subr.mxu0 0.0
    %559 = vmatpush1.xpose.msra.mxu0 0.0
    %560 = vmatprep.subr.mxu0 0.0
    %561 = vmatpush1.xpose.msra.mxu0 0.0
    %562 = vmatprep.subr.mxu0 0.0
    %563 = vmatpush1.xpose.msra.mxu0 0.0
    %564 = vmatprep.subr.mxu0 0.0
    %565 = vmatpush1.xpose.msra.mxu0 0.0
    %566 = vmatprep.subr.mxu0 0.0
    %567 = vmatpush1.xpose.msra.mxu0 0.0
    %568 = vmatprep.subr.mxu0 0.0
    %569 = vmatpush1.xpose.msra.mxu0 0.0
    %570 = vmatprep.subr.mxu0 0.0
    %571 = vmatpush1.xpose.msra.mxu0 0.0
    %572 = vmatprep.subr.mxu0 0.0
    %573 = vmatpush1.xpose.msra.mxu0 0.0
    %574 = vmatprep.subr.mxu0 0.0
    %575 = vmatpush1.xpose.msra.mxu0 0.0
    %576 = vmatprep.subr.mxu0 0.0
    %577 = vmatpush1.xpose.msra.mxu0 0.0
    %578 = vmatprep.subr.mxu0 0.0
    %579 = vmatpush1.xpose.msra.mxu0 0.0
    %580 = vmatprep.subr.mxu0 0.0
    %581 = vmatpush1.xpose.msra.mxu0 0.0
    %582 = vmatprep.subr.mxu0 0.0
    %583 = vmatpush1.xpose.msra.mxu0 0.0
    %584 = vmatprep.subr.mxu0 0.0
    %585 = vmatpush1.xpose.msra.mxu0 0.0
    %586 = vmatprep.subr.mxu0 0.0
    %587 = vmatpush1.xpose.msra.mxu0 0.0
    %588 = vmatprep.subr.mxu0 0.0
    %589 = vmatpush1.xpose.msra.mxu0 0.0
    %590 = vmatprep.subr.mxu0 0.0
    %591 = vmatpush1.xpose.msra.mxu0 0.0
    %592 = vmatprep.subr.mxu0 0.0
    %593 = vmatpush1.xpose.msra.mxu0 0.0
    %594 = vmatprep.subr.mxu0 0.0
    %595 = vmatpush1.xpose.msra.mxu0 0.0
    %596 = vmatprep.subr.mxu0 0.0
    %597 = vmatpush1.xpose.msra.mxu0 0.0
    %598 = vmatprep.subr.mxu0 0.0
    %599 = vmatpush1.xpose.msra.mxu0 0.0
    %600 = vmatprep.subr.mxu0 0.0
    %601 = vmatpush1.xpose.msra.mxu0 0.0
    %602 = vmatprep.subr.mxu0 0.0
    %603 = vmatpush1.xpose.msra.mxu0 0.0
    %604 = vmatprep.subr.mxu0 0.0
    %605 = vmatpush1.xpose.msra.mxu0 0.0
    %606 = vmatprep.subr.mxu0 0.0
    %607 = vmatpush1.xpose.msra.mxu0 0.0
    %608 = vmatprep.subr.mxu0 0.0
    %609 = vmatpush1.xpose.msra.mxu0 0.0
    %610 = vmatprep.subr.mxu0 0.0
    %611 = vmatpush1.xpose.msra.mxu0 0.0
    %612 = vmatprep.subr.mxu0 0.0
    %613 = vmatpush1.xpose.msra.mxu0 0.0
    %614 = vmatprep.subr.mxu0 0.0
    %615 = vmatpush1.xpose.msra.mxu0 0.0
    %616 = vmatprep.mubr.f32.mxu0 0.0
    %617 = vmatmul.mubr.f32.gmra.mrb[0].mxu0 %v548
    %v618 = vpop.f32.mrb[0].mxu0
    %v619 = vadd.f32 0.0, %v618
    %v620 = vpop.f32.mrb[0].mxu0
    %621 = vdwg.mxu0
    %v622 = vmul.f32 %v619, 0.17677669
    %v623 = vsel %vm459, %v622, -inf
    %624 = vmax.xlane.f32.xlu0 %v623
    %v625 = vpop.xlane.xlu0 %624
    %v626 = vsub.f32 %v622, %v625
    %v627 = vmul.f32 %v626, 1.442695
    %v628 = vpow.pop %v627
    %v629 = vsel %vm459, %v628, 0.0
    %630 = vadd.xlane.f32.xlu0 %v629
    %v631 = vpop.xlane.xlu0 %630
    %v632 = vrcp.pop %v631
    %v633 = vmul.f32 %v628, %v632
    %635 = vrot.lane.b32.xlu0 %v357, 96
    %v636 = vpop.permute.xlu0 %635
    %v639 = vsel %vm459, %v633, 0
    %641 = vmatprep.subr.mxu0 0.0
    %642 = vmatpush1.msra.mxu0 %v636
    %643 = vmatprep.subr.mxu0 0.0
    %644 = vmatpush1.msra.mxu0 0.0
    %645 = vmatprep.subr.mxu0 0.0
    %646 = vmatpush1.msra.mxu0 0.0
    %647 = vmatprep.subr.mxu0 0.0
    %648 = vmatpush1.msra.mxu0 0.0
    %649 = vmatprep.subr.mxu0 0.0
    %650 = vmatpush1.msra.mxu0 0.0
    %651 = vmatprep.subr.mxu0 0.0
    %652 = vmatpush1.msra.mxu0 0.0
    %653 = vmatprep.subr.mxu0 0.0
    %654 = vmatpush1.msra.mxu0 0.0
    %655 = vmatprep.subr.mxu0 0.0
    %656 = vmatpush1.msra.mxu0 0.0
    %657 = vmatprep.subr.mxu0 0.0
    %658 = vmatpush1.msra.mxu0 0.0
    %659 = vmatprep.subr.mxu0 0.0
    %660 = vmatpush1.msra.mxu0 0.0
    %661 = vmatprep.subr.mxu0 0.0
    %662 = vmatpush1.msra.mxu0 0.0
    %663 = vmatprep.subr.mxu0 0.0
    %664 = vmatpush1.msra.mxu0 0.0
    %665 = vmatprep.subr.mxu0 0.0
    %666 = vmatpush1.msra.mxu0 0.0
    %667 = vmatprep.subr.mxu0 0.0
    %668 = vmatpush1.msra.mxu0 0.0
    %669 = vmatprep.subr.mxu0 0.0
    %670 = vmatpush1.msra.mxu0 0.0
    %671 = vmatprep.subr.mxu0 0.0
    %672 = vmatpush1.msra.mxu0 0.0
    %673 = vmatprep.subr.mxu0 0.0
    %674 = vmatpush1.msra.mxu0 0.0
    %675 = vmatprep.subr.mxu0 0.0
    %676 = vmatpush1.msra.mxu0 0.0
    %677 = vmatprep.subr.mxu0 0.0
    %678 = vmatpush1.msra.mxu0 0.0
    %679 = vmatprep.subr.mxu0 0.0
    %680 = vmatpush1.msra.mxu0 0.0
    %681 = vmatprep.subr.mxu0 0.0
    %682 = vmatpush1.msra.mxu0 0.0
    %683 = vmatprep.subr.mxu0 0.0
    %684 = vmatpush1.msra.mxu0 0.0
    %685 = vmatprep.subr.mxu0 0.0
    %686 = vmatpush1.msra.mxu0 0.0
    %687 = vmatprep.subr.mxu0 0.0
    %688 = vmatpush1.msra.mxu0 0.0
    %689 = vmatprep.subr.mxu0 0.0
    %690 = vmatpush1.msra.mxu0 0.0
    %691 = vmatprep.subr.mxu0 0.0
    %692 = vmatpush1.msra.mxu0 0.0
    %693 = vmatprep.subr.mxu0 0.0
    %694 = vmatpush1.msra.mxu0 0.0
    %695 = vmatprep.subr.mxu0 0.0
    %696 = vmatpush1.msra.mxu0 0.0
    %697 = vmatprep.subr.mxu0 0.0
    %698 = vmatpush1.msra.mxu0 0.0
    %699 = vmatprep.subr.mxu0 0.0
    %700 = vmatpush1.msra.mxu0 0.0
    %701 = vmatprep.subr.mxu0 0.0
    %702 = vmatpush1.msra.mxu0 0.0
    %703 = vmatprep.subr.mxu0 0.0
    %704 = vmatpush1.msra.mxu0 0.0
    %705 = vmatprep.mubr.f32.mxu0 0.0
    %706 = vmatmul.mubr.f32.gmra.mrb[0].mxu0 %v639
    %v707 = vpop.f32.mrb[0].mxu0
    %v708 = vadd.f32 0.0, %v707
    %v709 = vpop.f32.mrb[0].mxu0
    %710 = vdwg.mxu0
    %v712 = vsel %vm381, %v708, 0
    %714 = vmatprep.subr.mxu0 0.0
    %715 = vmatpush1.msra.mxu0 %v369
    %716 = vmatprep.subr.mxu0 0.0
    %717 = vmatpush1.msra.mxu0 %v370
    %718 = vmatprep.subr.mxu0 0.0
    %719 = vmatpush1.msra.mxu0 %v371
    %720 = vmatprep.subr.mxu0 0.0
    %721 = vmatpush1.msra.mxu0 %v372
    %722 = vmatprep.subr.mxu0 0.0
    %723 = vmatpush1.msra.mxu0 0.0
    %724 = vmatprep.subr.mxu0 0.0
    %725 = vmatpush1.msra.mxu0 0.0
    %726 = vmatprep.subr.mxu0 0.0
    %727 = vmatpush1.msra.mxu0 0.0
    %728 = vmatprep.subr.mxu0 0.0
    %729 = vmatpush1.msra.mxu0 0.0
    %730 = vmatprep.subr.mxu0 0.0
    %731 = vmatpush1.msra.mxu0 0.0
    %732 = vmatprep.subr.mxu0 0.0
    %733 = vmatpush1.msra.mxu0 0.0
    %734 = vmatprep.subr.mxu0 0.0
    %735 = vmatpush1.msra.mxu0 0.0
    %736 = vmatprep.subr.mxu0 0.0
    %737 = vmatpush1.msra.mxu0 0.0
    %738 = vmatprep.subr.mxu0 0.0
    %739 = vmatpush1.msra.mxu0 0.0
    %740 = vmatprep.subr.mxu0 0.0
    %741 = vmatpush1.msra.mxu0 0.0
    %742 = vmatprep.subr.mxu0 0.0
    %743 = vmatpush1.msra.mxu0 0.0
    %744 = vmatprep.subr.mxu0 0.0
    %745 = vmatpush1.msra.mxu0 0.0
    %746 = vmatprep.subr.mxu0 0.0
    %747 = vmatpush1.msra.mxu0 0.0
    %748 = vmatprep.subr.mxu0 0.0
    %749 = vmatpush1.msra.mxu0 0.0
    %750 = vmatprep.subr.mxu0 0.0
    %751 = vmatpush1.msra.mxu0 0.0
    %752 = vmatprep.subr.mxu0 0.0
    %753 = vmatpush1.msra.mxu0 0.0
    %754 = vmatprep.subr.mxu0 0.0
    %755 = vmatpush1.msra.mxu0 0.0
    %756 = vmatprep.subr.mxu0 0.0
    %757 = vmatpush1.msra.mxu0 0.0
    %758 = vmatprep.subr.mxu0 0.0
    %759 = vmatpush1.msra.mxu0 0.0
    %760 = vmatprep.subr.mxu0 0.0
    %761 = vmatpush1.msra.mxu0 0.0
    %762 = vmatprep.subr.mxu0 0.0
    %763 = vmatpush1.msra.mxu0 0.0
    %764 = vmatprep.subr.mxu0 0.0
    %765 = vmatpush1.msra.mxu0 0.0
    %766 = vmatprep.subr.mxu0 0.0
    %767 = vmatpush1.msra.mxu0 0.0
    %768 = vmatprep.subr.mxu0 0.0
    %769 = vmatpush1.msra.mxu0 0.0
    %770 = vmatprep.subr.mxu0 0.0
    %771 = vmatpush1.msra.mxu0 0.0
    %772 = vmatprep.subr.mxu0 0.0
    %773 = vmatpush1.msra.mxu0 0.0
    %774 = vmatprep.subr.mxu0 0.0
    %775 = vmatpush1.msra.mxu0 0.0
    %776 = vmatprep.subr.mxu0 0.0
    %777 = vmatpush1.msra.mxu0 0.0
    %778 = vmatprep.mubr.f32.mxu0 0.0
    %779 = vmatmul.mubr.f32.gmra.mrb[0].mxu0 %v712
    %v780 = vpop.f32.mrb[0].mxu0
    %v781 = vadd.f32 0.0, %v780
    %v782 = vpop.f32.mrb[0].mxu0
    %783 = vdwg.mxu0
    %v785 = vsel %vm381, %v541, 0
    %787 = vmatprep.subr.mxu0 0.0
    %788 = vmatpush1.msra.mxu0 %v365
    %789 = vmatprep.subr.mxu0 0.0
    %790 = vmatpush1.msra.mxu0 %v366
    %791 = vmatprep.subr.mxu0 0.0
    %792 = vmatpush1.msra.mxu0 %v367
    %793 = vmatprep.subr.mxu0 0.0
    %794 = vmatpush1.msra.mxu0 %v368
    %795 = vmatprep.subr.mxu0 0.0
    %796 = vmatpush1.msra.mxu0 0.0
    %797 = vmatprep.subr.mxu0 0.0
    %798 = vmatpush1.msra.mxu0 0.0
    %799 = vmatprep.subr.mxu0 0.0
    %800 = vmatpush1.msra.mxu0 0.0
    %801 = vmatprep.subr.mxu0 0.0
    %802 = vmatpush1.msra.mxu0 0.0
    %803 = vmatprep.subr.mxu0 0.0
    %804 = vmatpush1.msra.mxu0 0.0
    %805 = vmatprep.subr.mxu0 0.0
    %806 = vmatpush1.msra.mxu0 0.0
    %807 = vmatprep.subr.mxu0 0.0
    %808 = vmatpush1.msra.mxu0 0.0
    %809 = vmatprep.subr.mxu0 0.0
    %810 = vmatpush1.msra.mxu0 0.0
    %811 = vmatprep.subr.mxu0 0.0
    %812 = vmatpush1.msra.mxu0 0.0
    %813 = vmatprep.subr.mxu0 0.0
    %814 = vmatpush1.msra.mxu0 0.0
    %815 = vmatprep.subr.mxu0 0.0
    %816 = vmatpush1.msra.mxu0 0.0
    %817 = vmatprep.subr.mxu0 0.0
    %818 = vmatpush1.msra.mxu0 0.0
    %819 = vmatprep.subr.mxu0 0.0
    %820 = vmatpush1.msra.mxu0 0.0
    %821 = vmatprep.subr.mxu0 0.0
    %822 = vmatpush1.msra.mxu0 0.0
    %823 = vmatprep.subr.mxu0 0.0
    %824 = vmatpush1.msra.mxu0 0.0
    %825 = vmatprep.subr.mxu0 0.0
    %826 = vmatpush1.msra.mxu0 0.0
    %827 = vmatprep.subr.mxu0 0.0
    %828 = vmatpush1.msra.mxu0 0.0
    %829 = vmatprep.subr.mxu0 0.0
    %830 = vmatpush1.msra.mxu0 0.0
    %831 = vmatprep.subr.mxu0 0.0
    %832 = vmatpush1.msra.mxu0 0.0
    %833 = vmatprep.subr.mxu0 0.0
    %834 = vmatpush1.msra.mxu0 0.0
    %835 = vmatprep.subr.mxu0 0.0
    %836 = vmatpush1.msra.mxu0 0.0
    %837 = vmatprep.subr.mxu0 0.0
    %838 = vmatpush1.msra.mxu0 0.0
    %839 = vmatprep.subr.mxu0 0.0
    %840 = vmatpush1.msra.mxu0 0.0
    %841 = vmatprep.subr.mxu0 0.0
    %842 = vmatpush1.msra.mxu0 0.0
    %843 = vmatprep.subr.mxu0 0.0
    %844 = vmatpush1.msra.mxu0 0.0
    %845 = vmatprep.subr.mxu0 0.0
    %846 = vmatpush1.msra.mxu0 0.0
    %847 = vmatprep.subr.mxu0 0.0
    %848 = vmatpush1.msra.mxu0 0.0
    %849 = vmatprep.subr.mxu0 0.0
    %850 = vmatpush1.msra.mxu0 0.0
    %851 = vmatprep.mubr.f32.mxu0 0.0
    %852 = vmatmul.mubr.f32.gmra.mrb[0].mxu0 %v785
    %v853 = vpop.f32.mrb[0].mxu0
    %v854 = vadd.f32 %v781, %v853
    %v855 = vpop.f32.mrb[0].mxu0
    %856 = vdwg.mxu0
    %857 = vrot.lane.b32.xlu0 %v280, 64
    %v858 = vpop.permute.xlu0 %857
    %859 = vrot.lane.b32.xlu0 %v282, 64
    %v860 = vpop.permute.xlu0 %859
    %v861 = vsel %vm381, %v858, 0
    %v863 = vsel %vm381, %v860, 0
    %865 = vmatprep.subr.mxu0 0.0
    %866 = vmatpush1.xpose.msra.mxu0 %v863
    %867 = vmatprep.subr.mxu0 0.0
    %868 = vmatpush1.xpose.msra.mxu0 0.0
    %869 = vmatprep.subr.mxu0 0.0
    %870 = vmatpush1.xpose.msra.mxu0 0.0
    %871 = vmatprep.subr.mxu0 0.0
    %872 = vmatpush1.xpose.msra.mxu0 0.0
    %873 = vmatprep.subr.mxu0 0.0
    %874 = vmatpush1.xpose.msra.mxu0 0.0
    %875 = vmatprep.subr.mxu0 0.0
    %876 = vmatpush1.xpose.msra.mxu0 0.0
    %877 = vmatprep.subr.mxu0 0.0
    %878 = vmatpush1.xpose.msra.mxu0 0.0
    %879 = vmatprep.subr.mxu0 0.0
    %880 = vmatpush1.xpose.msra.mxu0 0.0
    %881 = vmatprep.subr.mxu0 0.0
    %882 = vmatpush1.xpose.msra.mxu0 0.0
    %883 = vmatprep.subr.mxu0 0.0
    %884 = vmatpush1.xpose.msra.mxu0 0.0
    %885 = vmatprep.subr.mxu0 0.0
    %886 = vmatpush1.xpose.msra.mxu0 0.0
    %887 = vmatprep.subr.mxu0 0.0
    %888 = vmatpush1.xpose.msra.mxu0 0.0
    %889 = vmatprep.subr.mxu0 0.0
    %890 = vmatpush1.xpose.msra.mxu0 0.0
    %891 = vmatprep.subr.mxu0 0.0
    %892 = vmatpush1.xpose.msra.mxu0 0.0
    %893 = vmatprep.subr.mxu0 0.0
    %894 = vmatpush1.xpose.msra.mxu0 0.0
    %895 = vmatprep.subr.mxu0 0.0
    %896 = vmatpush1.xpose.msra.mxu0 0.0
    %897 = vmatprep.subr.mxu0 0.0
    %898 = vmatpush1.xpose.msra.mxu0 0.0
    %899 = vmatprep.subr.mxu0 0.0
    %900 = vmatpush1.xpose.msra.mxu0 0.0
    %901 = vmatprep.subr.mxu0 0.0
    %902 = vmatpush1.xpose.msra.mxu0 0.0
    %903 = vmatprep.subr.mxu0 0.0
    %904 = vmatpush1.xpose.msra.mxu0 0.0
    %905 = vmatprep.subr.mxu0 0.0
    %906 = vmatpush1.xpose.msra.mxu0 0.0
    %907 = vmatprep.subr.mxu0 0.0
    %908 = vmatpush1.xpose.msra.mxu0 0.0
    %909 = vmatprep.subr.mxu0 0.0
    %910 = vmatpush1.xpose.msra.mxu0 0.0
    %911 = vmatprep.subr.mxu0 0.0
    %912 = vmatpush1.xpose.msra.mxu0 0.0
    %913 = vmatprep.subr.mxu0 0.0
    %914 = vmatpush1.xpose.msra.mxu0 0.0
    %915 = vmatprep.subr.mxu0 0.0
    %916 = vmatpush1.xpose.msra.mxu0 0.0
    %917 = vmatprep.subr.mxu0 0.0
    %918 = vmatpush1.xpose.msra.mxu0 0.0
    %919 = vmatprep.subr.mxu0 0.0
    %920 = vmatpush1.xpose.msra.mxu0 0.0
    %921 = vmatprep.subr.mxu0 0.0
    %922 = vmatpush1.xpose.msra.mxu0 0.0
    %923 = vmatprep.subr.mxu0 0.0
    %924 = vmatpush1.xpose.msra.mxu0 0.0
    %925 = vmatprep.subr.mxu0 0.0
    %926 = vmatpush1.xpose.msra.mxu0 0.0
    %927 = vmatprep.subr.mxu0 0.0
    %928 = vmatpush1.xpose.msra.mxu0 0.0
    %929 = vmatprep.mubr.f32.mxu0 0.0
    %930 = vmatmul.mubr.f32.gmra.mrb[0].mxu0 %v861
    %v931 = vpop.f32.mrb[0].mxu0
    %v932 = vadd.f32 0.0, %v931
    %v933 = vpop.f32.mrb[0].mxu0
    %934 = vdwg.mxu0
    %v935 = vmul.f32 %v932, 0.17677669
    %v936 = vsel %vm459, %v935, -inf
    %937 = vmax.xlane.f32.xlu0 %v936
    %v938 = vpop.xlane.xlu0 %937
    %v939 = vsub.f32 %v935, %v938
    %v940 = vmul.f32 %v939, 1.442695
    %v941 = vpow.pop %v940
    %v942 = vsel %vm459, %v941, 0.0
    %943 = vadd.xlane.f32.xlu0 %v942
    %v944 = vpop.xlane.xlu0 %943
    %v945 = vrcp.pop %v944
    %v946 = vmul.f32 %v941, %v945
    %947 = vrot.lane.b32.xlu0 %v357, 64
    %v948 = vpop.permute.xlu0 %947
    %v951 = vsel %vm459, %v946, 0
    %953 = vmatprep.subr.mxu0 0.0
    %954 = vmatpush1.msra.mxu0 %v948
    %955 = vmatprep.subr.mxu0 0.0
    %956 = vmatpush1.msra.mxu0 0.0
    %957 = vmatprep.subr.mxu0 0.0
    %958 = vmatpush1.msra.mxu0 0.0
    %959 = vmatprep.subr.mxu0 0.0
    %960 = vmatpush1.msra.mxu0 0.0
    %961 = vmatprep.subr.mxu0 0.0
    %962 = vmatpush1.msra.mxu0 0.0
    %963 = vmatprep.subr.mxu0 0.0
    %964 = vmatpush1.msra.mxu0 0.0
    %965 = vmatprep.subr.mxu0 0.0
    %966 = vmatpush1.msra.mxu0 0.0
    %967 = vmatprep.subr.mxu0 0.0
    %968 = vmatpush1.msra.mxu0 0.0
    %969 = vmatprep.subr.mxu0 0.0
    %970 = vmatpush1.msra.mxu0 0.0
    %971 = vmatprep.subr.mxu0 0.0
    %972 = vmatpush1.msra.mxu0 0.0
    %973 = vmatprep.subr.mxu0 0.0
    %974 = vmatpush1.msra.mxu0 0.0
    %975 = vmatprep.subr.mxu0 0.0
    %976 = vmatpush1.msra.mxu0 0.0
    %977 = vmatprep.subr.mxu0 0.0
    %978 = vmatpush1.msra.mxu0 0.0
    %979 = vmatprep.subr.mxu0 0.0
    %980 = vmatpush1.msra.mxu0 0.0
    %981 = vmatprep.subr.mxu0 0.0
    %982 = vmatpush1.msra.mxu0 0.0
    %983 = vmatprep.subr.mxu0 0.0
    %984 = vmatpush1.msra.mxu0 0.0
    %985 = vmatprep.subr.mxu0 0.0
    %986 = vmatpush1.msra.mxu0 0.0
    %987 = vmatprep.subr.mxu0 0.0
    %988 = vmatpush1.msra.mxu0 0.0
    %989 = vmatprep.subr.mxu0 0.0
    %990 = vmatpush1.msra.mxu0 0.0
    %991 = vmatprep.subr.mxu0 0.0
    %992 = vmatpush1.msra.mxu0 0.0
    %993 = vmatprep.subr.mxu0 0.0
    %994 = vmatpush1.msra.mxu0 0.0
    %995 = vmatprep.subr.mxu0 0.0
    %996 = vmatpush1.msra.mxu0 0.0
    %997 = vmatprep.subr.mxu0 0.0
    %998 = vmatpush1.msra.mxu0 0.0
    %999 = vmatprep.subr.mxu0 0.0
    %1000 = vmatpush1.msra.mxu0 0.0
    %1001 = vmatprep.subr.mxu0 0.0
    %1002 = vmatpush1.msra.mxu0 0.0
    %1003 = vmatprep.subr.mxu0 0.0
    %1004 = vmatpush1.msra.mxu0 0.0
    %1005 = vmatprep.subr.mxu0 0.0
    %1006 = vmatpush1.msra.mxu0 0.0
    %1007 = vmatprep.subr.mxu0 0.0
    %1008 = vmatpush1.msra.mxu0 0.0
    %1009 = vmatprep.subr.mxu0 0.0
    %1010 = vmatpush1.msra.mxu0 0.0
    %1011 = vmatprep.subr.mxu0 0.0
    %1012 = vmatpush1.msra.mxu0 0.0
    %1013 = vmatprep.subr.mxu0 0.0
    %1014 = vmatpush1.msra.mxu0 0.0
    %1015 = vmatprep.subr.mxu0 0.0
    %1016 = vmatpush1.msra.mxu0 0.0
    %1017 = vmatprep.mubr.f32.mxu0 0.0
    %1018 = vmatmul.mubr.f32.gmra.mrb[0].mxu0 %v951
    %v1019 = vpop.f32.mrb[0].mxu0
    %v1020 = vadd.f32 0.0, %v1019
    %v1021 = vpop.f32.mrb[0].mxu0
    %1022 = vdwg.mxu0
    %v1024 = vsel %vm381, %v1020, 0
    %1026 = vmatprep.subr.mxu0 0.0
    %1027 = vmatpush1.msra.mxu0 %v373
    %1028 = vmatprep.subr.mxu0 0.0
    %1029 = vmatpush1.msra.mxu0 %v374
    %1030 = vmatprep.subr.mxu0 0.0
    %1031 = vmatpush1.msra.mxu0 %v375
    %1032 = vmatprep.subr.mxu0 0.0
    %1033 = vmatpush1.msra.mxu0 %v376
    %1034 = vmatprep.subr.mxu0 0.0
    %1035 = vmatpush1.msra.mxu0 0.0
    %1036 = vmatprep.subr.mxu0 0.0
    %1037 = vmatpush1.msra.mxu0 0.0
    %1038 = vmatprep.subr.mxu0 0.0
    %1039 = vmatpush1.msra.mxu0 0.0
    %1040 = vmatprep.subr.mxu0 0.0
    %1041 = vmatpush1.msra.mxu0 0.0
    %1042 = vmatprep.subr.mxu0 0.0
    %1043 = vmatpush1.msra.mxu0 0.0
    %1044 = vmatprep.subr.mxu0 0.0
    %1045 = vmatpush1.msra.mxu0 0.0
    %1046 = vmatprep.subr.mxu0 0.0
    %1047 = vmatpush1.msra.mxu0 0.0
    %1048 = vmatprep.subr.mxu0 0.0
    %1049 = vmatpush1.msra.mxu0 0.0
    %1050 = vmatprep.subr.mxu0 0.0
    %1051 = vmatpush1.msra.mxu0 0.0
    %1052 = vmatprep.subr.mxu0 0.0
    %1053 = vmatpush1.msra.mxu0 0.0
    %1054 = vmatprep.subr.mxu0 0.0
    %1055 = vmatpush1.msra.mxu0 0.0
    %1056 = vmatprep.subr.mxu0 0.0
    %1057 = vmatpush1.msra.mxu0 0.0
    %1058 = vmatprep.subr.mxu0 0.0
    %1059 = vmatpush1.msra.mxu0 0.0
    %1060 = vmatprep.subr.mxu0 0.0
    %1061 = vmatpush1.msra.mxu0 0.0
    %1062 = vmatprep.subr.mxu0 0.0
    %1063 = vmatpush1.msra.mxu0 0.0
    %1064 = vmatprep.subr.mxu0 0.0
    %1065 = vmatpush1.msra.mxu0 0.0
    %1066 = vmatprep.subr.mxu0 0.0
    %1067 = vmatpush1.msra.mxu0 0.0
    %1068 = vmatprep.subr.mxu0 0.0
    %1069 = vmatpush1.msra.mxu0 0.0
    %1070 = vmatprep.subr.mxu0 0.0
    %1071 = vmatpush1.msra.mxu0 0.0
    %1072 = vmatprep.subr.mxu0 0.0
    %1073 = vmatpush1.msra.mxu0 0.0
    %1074 = vmatprep.subr.mxu0 0.0
    %1075 = vmatpush1.msra.mxu0 0.0
    %1076 = vmatprep.subr.mxu0 0.0
    %1077 = vmatpush1.msra.mxu0 0.0
    %1078 = vmatprep.subr.mxu0 0.0
    %1079 = vmatpush1.msra.mxu0 0.0
    %1080 = vmatprep.subr.mxu0 0.0
    %1081 = vmatpush1.msra.mxu0 0.0
    %1082 = vmatprep.subr.mxu0 0.0
    %1083 = vmatpush1.msra.mxu0 0.0
    %1084 = vmatprep.subr.mxu0 0.0
    %1085 = vmatpush1.msra.mxu0 0.0
    %1086 = vmatprep.subr.mxu0 0.0
    %1087 = vmatpush1.msra.mxu0 0.0
    %1088 = vmatprep.subr.mxu0 0.0
    %1089 = vmatpush1.msra.mxu0 0.0
    %1090 = vmatprep.mubr.f32.mxu0 0.0
    %1091 = vmatmul.mubr.f32.gmra.mrb[0].mxu0 %v1024
    %v1092 = vpop.f32.mrb[0].mxu0
    %v1093 = vadd.f32 0.0, %v1092
    %v1094 = vpop.f32.mrb[0].mxu0
    %1095 = vdwg.mxu0
    %v1096 = vadd.f32 %v854, %v1093
    %1097 = vrot.lane.b32.xlu0 %v280, 32
    %v1098 = vpop.permute.xlu0 %1097
    %1099 = vrot.lane.b32.xlu0 %v282, 32
    %v1100 = vpop.permute.xlu0 %1099
    %v1101 = vsel %vm381, %v1098, 0
    %v1103 = vsel %vm381, %v1100, 0
    %1105 = vmatprep.subr.mxu0 0.0
    %1106 = vmatpush1.xpose.msra.mxu0 %v1103
    %1107 = vmatprep.subr.mxu0 0.0
    %1108 = vmatpush1.xpose.msra.mxu0 0.0
    %1109 = vmatprep.subr.mxu0 0.0
    %1110 = vmatpush1.xpose.msra.mxu0 0.0
    %1111 = vmatprep.subr.mxu0 0.0
    %1112 = vmatpush1.xpose.msra.mxu0 0.0
    %1113 = vmatprep.subr.mxu0 0.0
    %1114 = vmatpush1.xpose.msra.mxu0 0.0
    %1115 = vmatprep.subr.mxu0 0.0
    %1116 = vmatpush1.xpose.msra.mxu0 0.0
    %1117 = vmatprep.subr.mxu0 0.0
    %1118 = vmatpush1.xpose.msra.mxu0 0.0
    %1119 = vmatprep.subr.mxu0 0.0
    %1120 = vmatpush1.xpose.msra.mxu0 0.0
    %1121 = vmatprep.subr.mxu0 0.0
    %1122 = vmatpush1.xpose.msra.mxu0 0.0
    %1123 = vmatprep.subr.mxu0 0.0
    %1124 = vmatpush1.xpose.msra.mxu0 0.0
    %1125 = vmatprep.subr.mxu0 0.0
    %1126 = vmatpush1.xpose.msra.mxu0 0.0
    %1127 = vmatprep.subr.mxu0 0.0
    %1128 = vmatpush1.xpose.msra.mxu0 0.0
    %1129 = vmatprep.subr.mxu0 0.0
    %1130 = vmatpush1.xpose.msra.mxu0 0.0
    %1131 = vmatprep.subr.mxu0 0.0
    %1132 = vmatpush1.xpose.msra.mxu0 0.0
    %1133 = vmatprep.subr.mxu0 0.0
    %1134 = vmatpush1.xpose.msra.mxu0 0.0
    %1135 = vmatprep.subr.mxu0 0.0
    %1136 = vmatpush1.xpose.msra.mxu0 0.0
    %1137 = vmatprep.subr.mxu0 0.0
    %1138 = vmatpush1.xpose.msra.mxu0 0.0
    %1139 = vmatprep.subr.mxu0 0.0
    %1140 = vmatpush1.xpose.msra.mxu0 0.0
    %1141 = vmatprep.subr.mxu0 0.0
    %1142 = vmatpush1.xpose.msra.mxu0 0.0
    %1143 = vmatprep.subr.mxu0 0.0
    %1144 = vmatpush1.xpose.msra.mxu0 0.0
    %1145 = vmatprep.subr.mxu0 0.0
    %1146 = vmatpush1.xpose.msra.mxu0 0.0
    %1147 = vmatprep.subr.mxu0 0.0
    %1148 = vmatpush1.xpose.msra.mxu0 0.0
    %1149 = vmatprep.subr.mxu0 0.0
    %1150 = vmatpush1.xpose.msra.mxu0 0.0
    %1151 = vmatprep.subr.mxu0 0.0
    %1152 = vmatpush1.xpose.msra.mxu0 0.0
    %1153 = vmatprep.subr.mxu0 0.0
    %1154 = vmatpush1.xpose.msra.mxu0 0.0
    %1155 = vmatprep.subr.mxu0 0.0
    %1156 = vmatpush1.xpose.msra.mxu0 0.0
    %1157 = vmatprep.subr.mxu0 0.0
    %1158 = vmatpush1.xpose.msra.mxu0 0.0
    %1159 = vmatprep.subr.mxu0 0.0
    %1160 = vmatpush1.xpose.msra.mxu0 0.0
    %1161 = vmatprep.subr.mxu0 0.0
    %1162 = vmatpush1.xpose.msra.mxu0 0.0
    %1163 = vmatprep.subr.mxu0 0.0
    %1164 = vmatpush1.xpose.msra.mxu0 0.0
    %1165 = vmatprep.subr.mxu0 0.0
    %1166 = vmatpush1.xpose.msra.mxu0 0.0
    %1167 = vmatprep.subr.mxu0 0.0
    %1168 = vmatpush1.xpose.msra.mxu0 0.0
    %1169 = vmatprep.mubr.f32.mxu0 0.0
    %1170 = vmatmul.mubr.f32.gmra.mrb[0].mxu0 %v1101
    %v1171 = vpop.f32.mrb[0].mxu0
    %v1172 = vadd.f32 0.0, %v1171
    %v1173 = vpop.f32.mrb[0].mxu0
    %1174 = vdwg.mxu0
    %v1175 = vmul.f32 %v1172, 0.17677669
    %v1176 = vsel %vm459, %v1175, -inf
    %1177 = vmax.xlane.f32.xlu0 %v1176
    %v1178 = vpop.xlane.xlu0 %1177
    %v1179 = vsub.f32 %v1175, %v1178
    %v1180 = vmul.f32 %v1179, 1.442695
    %v1181 = vpow.pop %v1180
    %v1182 = vsel %vm459, %v1181, 0.0
    %1183 = vadd.xlane.f32.xlu0 %v1182
    %v1184 = vpop.xlane.xlu0 %1183
    %v1185 = vrcp.pop %v1184
    %v1186 = vmul.f32 %v1181, %v1185
    %1187 = vrot.lane.b32.xlu0 %v357, 32
    %v1188 = vpop.permute.xlu0 %1187
    %v1191 = vsel %vm459, %v1186, 0
    %1193 = vmatprep.subr.mxu0 0.0
    %1194 = vmatpush1.msra.mxu0 %v1188
    %1195 = vmatprep.subr.mxu0 0.0
    %1196 = vmatpush1.msra.mxu0 0.0
    %1197 = vmatprep.subr.mxu0 0.0
    %1198 = vmatpush1.msra.mxu0 0.0
    %1199 = vmatprep.subr.mxu0 0.0
    %1200 = vmatpush1.msra.mxu0 0.0
    %1201 = vmatprep.subr.mxu0 0.0
    %1202 = vmatpush1.msra.mxu0 0.0
    %1203 = vmatprep.subr.mxu0 0.0
    %1204 = vmatpush1.msra.mxu0 0.0
    %1205 = vmatprep.subr.mxu0 0.0
    %1206 = vmatpush1.msra.mxu0 0.0
    %1207 = vmatprep.subr.mxu0 0.0
    %1208 = vmatpush1.msra.mxu0 0.0
    %1209 = vmatprep.subr.mxu0 0.0
    %1210 = vmatpush1.msra.mxu0 0.0
    %1211 = vmatprep.subr.mxu0 0.0
    %1212 = vmatpush1.msra.mxu0 0.0
    %1213 = vmatprep.subr.mxu0 0.0
    %1214 = vmatpush1.msra.mxu0 0.0
    %1215 = vmatprep.subr.mxu0 0.0
    %1216 = vmatpush1.msra.mxu0 0.0
    %1217 = vmatprep.subr.mxu0 0.0
    %1218 = vmatpush1.msra.mxu0 0.0
    %1219 = vmatprep.subr.mxu0 0.0
    %1220 = vmatpush1.msra.mxu0 0.0
    %1221 = vmatprep.subr.mxu0 0.0
    %1222 = vmatpush1.msra.mxu0 0.0
    %1223 = vmatprep.subr.mxu0 0.0
    %1224 = vmatpush1.msra.mxu0 0.0
    %1225 = vmatprep.subr.mxu0 0.0
    %1226 = vmatpush1.msra.mxu0 0.0
    %1227 = vmatprep.subr.mxu0 0.0
    %1228 = vmatpush1.msra.mxu0 0.0
    %1229 = vmatprep.subr.mxu0 0.0
    %1230 = vmatpush1.msra.mxu0 0.0
    %1231 = vmatprep.subr.mxu0 0.0
    %1232 = vmatpush1.msra.mxu0 0.0
    %1233 = vmatprep.subr.mxu0 0.0
    %1234 = vmatpush1.msra.mxu0 0.0
    %1235 = vmatprep.subr.mxu0 0.0
    %1236 = vmatpush1.msra.mxu0 0.0
    %1237 = vmatprep.subr.mxu0 0.0
    %1238 = vmatpush1.msra.mxu0 0.0
    %1239 = vmatprep.subr.mxu0 0.0
    %1240 = vmatpush1.msra.mxu0 0.0
    %1241 = vmatprep.subr.mxu0 0.0
    %1242 = vmatpush1.msra.mxu0 0.0
    %1243 = vmatprep.subr.mxu0 0.0
    %1244 = vmatpush1.msra.mxu0 0.0
    %1245 = vmatprep.subr.mxu0 0.0
    %1246 = vmatpush1.msra.mxu0 0.0
    %1247 = vmatprep.subr.mxu0 0.0
    %1248 = vmatpush1.msra.mxu0 0.0
    %1249 = vmatprep.subr.mxu0 0.0
    %1250 = vmatpush1.msra.mxu0 0.0
    %1251 = vmatprep.subr.mxu0 0.0
    %1252 = vmatpush1.msra.mxu0 0.0
    %1253 = vmatprep.subr.mxu0 0.0
    %1254 = vmatpush1.msra.mxu0 0.0
    %1255 = vmatprep.subr.mxu0 0.0
    %1256 = vmatpush1.msra.mxu0 0.0
    %1257 = vmatprep.mubr.f32.mxu0 0.0
    %1258 = vmatmul.mubr.f32.gmra.mrb[0].mxu0 %v1191
    %v1259 = vpop.f32.mrb[0].mxu0
    %v1260 = vadd.f32 0.0, %v1259
    %v1261 = vpop.f32.mrb[0].mxu0
    %1262 = vdwg.mxu0
    %v1264 = vsel %vm381, %v1260, 0
    %1266 = vmatprep.subr.mxu0 0.0
    %1267 = vmatpush1.msra.mxu0 %v377
    %1268 = vmatprep.subr.mxu0 0.0
    %1269 = vmatpush1.msra.mxu0 %v378
    %1270 = vmatprep.subr.mxu0 0.0
    %1271 = vmatpush1.msra.mxu0 %v379
    %1272 = vmatprep.subr.mxu0 0.0
    %1273 = vmatpush1.msra.mxu0 %v380
    %1274 = vmatprep.subr.mxu0 0.0
    %1275 = vmatpush1.msra.mxu0 0.0
    %1276 = vmatprep.subr.mxu0 0.0
    %1277 = vmatpush1.msra.mxu0 0.0
    %1278 = vmatprep.subr.mxu0 0.0
    %1279 = vmatpush1.msra.mxu0 0.0
    %1280 = vmatprep.subr.mxu0 0.0
    %1281 = vmatpush1.msra.mxu0 0.0
    %1282 = vmatprep.subr.mxu0 0.0
    %1283 = vmatpush1.msra.mxu0 0.0
    %1284 = vmatprep.subr.mxu0 0.0
    %1285 = vmatpush1.msra.mxu0 0.0
    %1286 = vmatprep.subr.mxu0 0.0
    %1287 = vmatpush1.msra.mxu0 0.0
    %1288 = vmatprep.subr.mxu0 0.0
    %1289 = vmatpush1.msra.mxu0 0.0
    %1290 = vmatprep.subr.mxu0 0.0
    %1291 = vmatpush1.msra.mxu0 0.0
    %1292 = vmatprep.subr.mxu0 0.0
    %1293 = vmatpush1.msra.mxu0 0.0
    %1294 = vmatprep.subr.mxu0 0.0
    %1295 = vmatpush1.msra.mxu0 0.0
    %1296 = vmatprep.subr.mxu0 0.0
    %1297 = vmatpush1.msra.mxu0 0.0
    %1298 = vmatprep.subr.mxu0 0.0
    %1299 = vmatpush1.msra.mxu0 0.0
    %1300 = vmatprep.subr.mxu0 0.0
    %1301 = vmatpush1.msra.mxu0 0.0
    %1302 = vmatprep.subr.mxu0 0.0
    %1303 = vmatpush1.msra.mxu0 0.0
    %1304 = vmatprep.subr.mxu0 0.0
    %1305 = vmatpush1.msra.mxu0 0.0
    %1306 = vmatprep.subr.mxu0 0.0
    %1307 = vmatpush1.msra.mxu0 0.0
    %1308 = vmatprep.subr.mxu0 0.0
    %1309 = vmatpush1.msra.mxu0 0.0
    %1310 = vmatprep.subr.mxu0 0.0
    %1311 = vmatpush1.msra.mxu0 0.0
    %1312 = vmatprep.subr.mxu0 0.0
    %1313 = vmatpush1.msra.mxu0 0.0
    %1314 = vmatprep.subr.mxu0 0.0
    %1315 = vmatpush1.msra.mxu0 0.0
    %1316 = vmatprep.subr.mxu0 0.0
    %1317 = vmatpush1.msra.mxu0 0.0
    %1318 = vmatprep.subr.mxu0 0.0
    %1319 = vmatpush1.msra.mxu0 0.0
    %1320 = vmatprep.subr.mxu0 0.0
    %1321 = vmatpush1.msra.mxu0 0.0
    %1322 = vmatprep.subr.mxu0 0.0
    %1323 = vmatpush1.msra.mxu0 0.0
    %1324 = vmatprep.subr.mxu0 0.0
    %1325 = vmatpush1.msra.mxu0 0.0
    %1326 = vmatprep.subr.mxu0 0.0
    %1327 = vmatpush1.msra.mxu0 0.0
    %1328 = vmatprep.subr.mxu0 0.0
    %1329 = vmatpush1.msra.mxu0 0.0
    %1330 = vmatprep.mubr.f32.mxu0 0.0
    %1331 = vmatmul.mubr.f32.gmra.mrb[0].mxu0 %v1264
    %v1332 = vpop.f32.mrb[0].mxu0
    %v1333 = vadd.f32 0.0, %v1332
    %v1334 = vpop.f32.mrb[0].mxu0
    %1335 = vdwg.mxu0
    %v1336 = vadd.f32 %v1096, %v1333
    %v1338 = vsel %vm381, %v286, 0
    %v1341 = vsel %vm381, %v288, 0
    %1343 = vmatprep.subr.mxu0 0.0
    %1344 = vmatpush1.xpose.msra.mxu0 %v1341
    %1345 = vmatprep.subr.mxu0 0.0
    %1346 = vmatpush1.xpose.msra.mxu0 0.0
    %1347 = vmatprep.subr.mxu0 0.0
    %1348 = vmatpush1.xpose.msra.mxu0 0.0
    %1349 = vmatprep.subr.mxu0 0.0
    %1350 = vmatpush1.xpose.msra.mxu0 0.0
    %1351 = vmatprep.subr.mxu0 0.0
    %1352 = vmatpush1.xpose.msra.mxu0 0.0
    %1353 = vmatprep.subr.mxu0 0.0
    %1354 = vmatpush1.xpose.msra.mxu0 0.0
    %1355 = vmatprep.subr.mxu0 0.0
    %1356 = vmatpush1.xpose.msra.mxu0 0.0
    %1357 = vmatprep.subr.mxu0 0.0
    %1358 = vmatpush1.xpose.msra.mxu0 0.0
    %1359 = vmatprep.subr.mxu0 0.0
    %1360 = vmatpush1.xpose.msra.mxu0 0.0
    %1361 = vmatprep.subr.mxu0 0.0
    %1362 = vmatpush1.xpose.msra.mxu0 0.0
    %1363 = vmatprep.subr.mxu0 0.0
    %1364 = vmatpush1.xpose.msra.mxu0 0.0
    %1365 = vmatprep.subr.mxu0 0.0
    %1366 = vmatpush1.xpose.msra.mxu0 0.0
    %1367 = vmatprep.subr.mxu0 0.0
    %1368 = vmatpush1.xpose.msra.mxu0 0.0
    %1369 = vmatprep.subr.mxu0 0.0
    %1370 = vmatpush1.xpose.msra.mxu0 0.0
    %1371 = vmatprep.subr.mxu0 0.0
    %1372 = vmatpush1.xpose.msra.mxu0 0.0
    %1373 = vmatprep.subr.mxu0 0.0
    %1374 = vmatpush1.xpose.msra.mxu0 0.0
    %1375 = vmatprep.subr.mxu0 0.0
    %1376 = vmatpush1.xpose.msra.mxu0 0.0
    %1377 = vmatprep.subr.mxu0 0.0
    %1378 = vmatpush1.xpose.msra.mxu0 0.0
    %1379 = vmatprep.subr.mxu0 0.0
    %1380 = vmatpush1.xpose.msra.mxu0 0.0
    %1381 = vmatprep.subr.mxu0 0.0
    %1382 = vmatpush1.xpose.msra.mxu0 0.0
    %1383 = vmatprep.subr.mxu0 0.0
    %1384 = vmatpush1.xpose.msra.mxu0 0.0
    %1385 = vmatprep.subr.mxu0 0.0
    %1386 = vmatpush1.xpose.msra.mxu0 0.0
    %1387 = vmatprep.subr.mxu0 0.0
    %1388 = vmatpush1.xpose.msra.mxu0 0.0
    %1389 = vmatprep.subr.mxu0 0.0
    %1390 = vmatpush1.xpose.msra.mxu0 0.0
    %1391 = vmatprep.subr.mxu0 0.0
    %1392 = vmatpush1.xpose.msra.mxu0 0.0
    %1393 = vmatprep.subr.mxu0 0.0
    %1394 = vmatpush1.xpose.msra.mxu0 0.0
    %1395 = vmatprep.subr.mxu0 0.0
    %1396 = vmatpush1.xpose.msra.mxu0 0.0
    %1397 = vmatprep.subr.mxu0 0.0
    %1398 = vmatpush1.xpose.msra.mxu0 0.0
    %1399 = vmatprep.subr.mxu0 0.0
    %1400 = vmatpush1.xpose.msra.mxu0 0.0
    %1401 = vmatprep.subr.mxu0 0.0
    %1402 = vmatpush1.xpose.msra.mxu0 0.0
    %1403 = vmatprep.subr.mxu0 0.0
    %1404 = vmatpush1.xpose.msra.mxu0 0.0
    %1405 = vmatprep.subr.mxu0 0.0
    %1406 = vmatpush1.xpose.msra.mxu0 0.0
    %1407 = vmatprep.mubr.f32.mxu0 0.0
    %1408 = vmatmul.mubr.f32.gmra.mrb[0].mxu0 %v1338
    %v1409 = vpop.f32.mrb[0].mxu0
    %v1410 = vadd.f32 0.0, %v1409
    %v1411 = vpop.f32.mrb[0].mxu0
    %1412 = vdwg.mxu0
    %v1413 = vmul.f32 %v1410, 0.17677669
    %v1414 = vsel %vm459, %v1413, -inf
    %1415 = vmax.xlane.f32.xlu0 %v1414
    %v1416 = vpop.xlane.xlu0 %1415
    %v1417 = vsub.f32 %v1413, %v1416
    %v1418 = vmul.f32 %v1417, 1.442695
    %v1419 = vpow.pop %v1418
    %v1420 = vsel %vm459, %v1419, 0.0
    %1421 = vadd.xlane.f32.xlu0 %v1420
    %v1422 = vpop.xlane.xlu0 %1421
    %v1423 = vrcp.pop %v1422
    %v1424 = vmul.f32 %v1419, %v1423
    %v1426 = vsel %vm459, %v1424, 0
    %1428 = vmatprep.subr.mxu0 0.0
    %1429 = vmatpush1.msra.mxu0 %v362
    %1430 = vmatprep.subr.mxu0 0.0
    %1431 = vmatpush1.msra.mxu0 0.0
    %1432 = vmatprep.subr.mxu0 0.0
    %1433 = vmatpush1.msra.mxu0 0.0
    %1434 = vmatprep.subr.mxu0 0.0
    %1435 = vmatpush1.msra.mxu0 0.0
    %1436 = vmatprep.subr.mxu0 0.0
    %1437 = vmatpush1.msra.mxu0 0.0
    %1438 = vmatprep.subr.mxu0 0.0
    %1439 = vmatpush1.msra.mxu0 0.0
    %1440 = vmatprep.subr.mxu0 0.0
    %1441 = vmatpush1.msra.mxu0 0.0
    %1442 = vmatprep.subr.mxu0 0.0
    %1443 = vmatpush1.msra.mxu0 0.0
    %1444 = vmatprep.subr.mxu0 0.0
    %1445 = vmatpush1.msra.mxu0 0.0
    %1446 = vmatprep.subr.mxu0 0.0
    %1447 = vmatpush1.msra.mxu0 0.0
    %1448 = vmatprep.subr.mxu0 0.0
    %1449 = vmatpush1.msra.mxu0 0.0
    %1450 = vmatprep.subr.mxu0 0.0
    %1451 = vmatpush1.msra.mxu0 0.0
    %1452 = vmatprep.subr.mxu0 0.0
    %1453 = vmatpush1.msra.mxu0 0.0
    %1454 = vmatprep.subr.mxu0 0.0
    %1455 = vmatpush1.msra.mxu0 0.0
    %1456 = vmatprep.subr.mxu0 0.0
    %1457 = vmatpush1.msra.mxu0 0.0
    %1458 = vmatprep.subr.mxu0 0.0
    %1459 = vmatpush1.msra.mxu0 0.0
    %1460 = vmatprep.subr.mxu0 0.0
    %1461 = vmatpush1.msra.mxu0 0.0
    %1462 = vmatprep.subr.mxu0 0.0
    %1463 = vmatpush1.msra.mxu0 0.0
    %1464 = vmatprep.subr.mxu0 0.0
    %1465 = vmatpush1.msra.mxu0 0.0
    %1466 = vmatprep.subr.mxu0 0.0
    %1467 = vmatpush1.msra.mxu0 0.0
    %1468 = vmatprep.subr.mxu0 0.0
    %1469 = vmatpush1.msra.mxu0 0.0
    %1470 = vmatprep.subr.mxu0 0.0
    %1471 = vmatpush1.msra.mxu0 0.0
    %1472 = vmatprep.subr.mxu0 0.0
    %1473 = vmatpush1.msra.mxu0 0.0
    %1474 = vmatprep.subr.mxu0 0.0
    %1475 = vmatpush1.msra.mxu0 0.0
    %1476 = vmatprep.subr.mxu0 0.0
    %1477 = vmatpush1.msra.mxu0 0.0
    %1478 = vmatprep.subr.mxu0 0.0
    %1479 = vmatpush1.msra.mxu0 0.0
    %1480 = vmatprep.subr.mxu0 0.0
    %1481 = vmatpush1.msra.mxu0 0.0
    %1482 = vmatprep.subr.mxu0 0.0
    %1483 = vmatpush1.msra.mxu0 0.0
    %1484 = vmatprep.subr.mxu0 0.0
    %1485 = vmatpush1.msra.mxu0 0.0
    %1486 = vmatprep.subr.mxu0 0.0
    %1487 = vmatpush1.msra.mxu0 0.0
    %1488 = vmatprep.subr.mxu0 0.0
    %1489 = vmatpush1.msra.mxu0 0.0
    %1490 = vmatprep.subr.mxu0 0.0
    %1491 = vmatpush1.msra.mxu0 0.0
    %1492 = vmatprep.mubr.f32.mxu0 0.0
    %1493 = vmatmul.mubr.f32.gmra.mrb[0].mxu0 %v1426
    %v1494 = vpop.f32.mrb[0].mxu0
    %v1495 = vadd.f32 0.0, %v1494
    %v1496 = vpop.f32.mrb[0].mxu0
    %1497 = vdwg.mxu0
    %1498 = vrot.lane.b32.xlu0 %v286, 96
    %v1499 = vpop.permute.xlu0 %1498
    %1500 = vrot.lane.b32.xlu0 %v288, 96
    %v1501 = vpop.permute.xlu0 %1500
    %v1502 = vsel %vm381, %v1499, 0
    %v1504 = vsel %vm381, %v1501, 0
    %1506 = vmatprep.subr.mxu0 0.0
    %1507 = vmatpush1.xpose.msra.mxu0 %v1504
    %1508 = vmatprep.subr.mxu0 0.0
    %1509 = vmatpush1.xpose.msra.mxu0 0.0
    %1510 = vmatprep.subr.mxu0 0.0
    %1511 = vmatpush1.xpose.msra.mxu0 0.0
    %1512 = vmatprep.subr.mxu0 0.0
    %1513 = vmatpush1.xpose.msra.mxu0 0.0
    %1514 = vmatprep.subr.mxu0 0.0
    %1515 = vmatpush1.xpose.msra.mxu0 0.0
    %1516 = vmatprep.subr.mxu0 0.0
    %1517 = vmatpush1.xpose.msra.mxu0 0.0
    %1518 = vmatprep.subr.mxu0 0.0
    %1519 = vmatpush1.xpose.msra.mxu0 0.0
    %1520 = vmatprep.subr.mxu0 0.0
    %1521 = vmatpush1.xpose.msra.mxu0 0.0
    %1522 = vmatprep.subr.mxu0 0.0
    %1523 = vmatpush1.xpose.msra.mxu0 0.0
    %1524 = vmatprep.subr.mxu0 0.0
    %1525 = vmatpush1.xpose.msra.mxu0 0.0
    %1526 = vmatprep.subr.mxu0 0.0
    %1527 = vmatpush1.xpose.msra.mxu0 0.0
    %1528 = vmatprep.subr.mxu0 0.0
    %1529 = vmatpush1.xpose.msra.mxu0 0.0
    %1530 = vmatprep.subr.mxu0 0.0
    %1531 = vmatpush1.xpose.msra.mxu0 0.0
    %1532 = vmatprep.subr.mxu0 0.0
    %1533 = vmatpush1.xpose.msra.mxu0 0.0
    %1534 = vmatprep.subr.mxu0 0.0
    %1535 = vmatpush1.xpose.msra.mxu0 0.0
    %1536 = vmatprep.subr.mxu0 0.0
    %1537 = vmatpush1.xpose.msra.mxu0 0.0
    %1538 = vmatprep.subr.mxu0 0.0
    %1539 = vmatpush1.xpose.msra.mxu0 0.0
    %1540 = vmatprep.subr.mxu0 0.0
    %1541 = vmatpush1.xpose.msra.mxu0 0.0
    %1542 = vmatprep.subr.mxu0 0.0
    %1543 = vmatpush1.xpose.msra.mxu0 0.0
    %1544 = vmatprep.subr.mxu0 0.0
    %1545 = vmatpush1.xpose.msra.mxu0 0.0
    %1546 = vmatprep.subr.mxu0 0.0
    %1547 = vmatpush1.xpose.msra.mxu0 0.0
    %1548 = vmatprep.subr.mxu0 0.0
    %1549 = vmatpush1.xpose.msra.mxu0 0.0
    %1550 = vmatprep.subr.mxu0 0.0
    %1551 = vmatpush1.xpose.msra.mxu0 0.0
    %1552 = vmatprep.subr.mxu0 0.0
    %1553 = vmatpush1.xpose.msra.mxu0 0.0
    %1554 = vmatprep.subr.mxu0 0.0
    %1555 = vmatpush1.xpose.msra.mxu0 0.0
    %1556 = vmatprep.subr.mxu0 0.0
    %1557 = vmatpush1.xpose.msra.mxu0 0.0
    %1558 = vmatprep.subr.mxu0 0.0
    %1559 = vmatpush1.xpose.msra.mxu0 0.0
    %1560 = vmatprep.subr.mxu0 0.0
    %1561 = vmatpush1.xpose.msra.mxu0 0.0
    %1562 = vmatprep.subr.mxu0 0.0
    %1563 = vmatpush1.xpose.msra.mxu0 0.0
    %1564 = vmatprep.subr.mxu0 0.0
    %1565 = vmatpush1.xpose.msra.mxu0 0.0
    %1566 = vmatprep.subr.mxu0 0.0
    %1567 = vmatpush1.xpose.msra.mxu0 0.0
    %1568 = vmatprep.subr.mxu0 0.0
    %1569 = vmatpush1.xpose.msra.mxu0 0.0
    %1570 = vmatprep.mubr.f32.mxu0 0.0
    %1571 = vmatmul.mubr.f32.gmra.mrb[0].mxu0 %v1502
    %v1572 = vpop.f32.mrb[0].mxu0
    %v1573 = vadd.f32 0.0, %v1572
    %v1574 = vpop.f32.mrb[0].mxu0
    %1575 = vdwg.mxu0
    %v1576 = vmul.f32 %v1573, 0.17677669
    %v1577 = vsel %vm459, %v1576, -inf
    %1578 = vmax.xlane.f32.xlu0 %v1577
    %v1579 = vpop.xlane.xlu0 %1578
    %v1580 = vsub.f32 %v1576, %v1579
    %v1581 = vmul.f32 %v1580, 1.442695
    %v1582 = vpow.pop %v1581
    %v1583 = vsel %vm459, %v1582, 0.0
    %1584 = vadd.xlane.f32.xlu0 %v1583
    %v1585 = vpop.xlane.xlu0 %1584
    %v1586 = vrcp.pop %v1585
    %v1587 = vmul.f32 %v1582, %v1586
    %1589 = vrot.lane.b32.xlu0 %v362, 96
    %v1590 = vpop.permute.xlu0 %1589
    %v1593 = vsel %vm459, %v1587, 0
    %1595 = vmatprep.subr.mxu0 0.0
    %1596 = vmatpush1.msra.mxu0 %v1590
    %1597 = vmatprep.subr.mxu0 0.0
    %1598 = vmatpush1.msra.mxu0 0.0
    %1599 = vmatprep.subr.mxu0 0.0
    %1600 = vmatpush1.msra.mxu0 0.0
    %1601 = vmatprep.subr.mxu0 0.0
    %1602 = vmatpush1.msra.mxu0 0.0
    %1603 = vmatprep.subr.mxu0 0.0
    %1604 = vmatpush1.msra.mxu0 0.0
    %1605 = vmatprep.subr.mxu0 0.0
    %1606 = vmatpush1.msra.mxu0 0.0
    %1607 = vmatprep.subr.mxu0 0.0
    %1608 = vmatpush1.msra.mxu0 0.0
    %1609 = vmatprep.subr.mxu0 0.0
    %1610 = vmatpush1.msra.mxu0 0.0
    %1611 = vmatprep.subr.mxu0 0.0
    %1612 = vmatpush1.msra.mxu0 0.0
    %1613 = vmatprep.subr.mxu0 0.0
    %1614 = vmatpush1.msra.mxu0 0.0
    %1615 = vmatprep.subr.mxu0 0.0
    %1616 = vmatpush1.msra.mxu0 0.0
    %1617 = vmatprep.subr.mxu0 0.0
    %1618 = vmatpush1.msra.mxu0 0.0
    %1619 = vmatprep.subr.mxu0 0.0
    %1620 = vmatpush1.msra.mxu0 0.0
    %1621 = vmatprep.subr.mxu0 0.0
    %1622 = vmatpush1.msra.mxu0 0.0
    %1623 = vmatprep.subr.mxu0 0.0
    %1624 = vmatpush1.msra.mxu0 0.0
    %1625 = vmatprep.subr.mxu0 0.0
    %1626 = vmatpush1.msra.mxu0 0.0
    %1627 = vmatprep.subr.mxu0 0.0
    %1628 = vmatpush1.msra.mxu0 0.0
    %1629 = vmatprep.subr.mxu0 0.0
    %1630 = vmatpush1.msra.mxu0 0.0
    %1631 = vmatprep.subr.mxu0 0.0
    %1632 = vmatpush1.msra.mxu0 0.0
    %1633 = vmatprep.subr.mxu0 0.0
    %1634 = vmatpush1.msra.mxu0 0.0
    %1635 = vmatprep.subr.mxu0 0.0
    %1636 = vmatpush1.msra.mxu0 0.0
    %1637 = vmatprep.subr.mxu0 0.0
    %1638 = vmatpush1.msra.mxu0 0.0
    %1639 = vmatprep.subr.mxu0 0.0
    %1640 = vmatpush1.msra.mxu0 0.0
    %1641 = vmatprep.subr.mxu0 0.0
    %1642 = vmatpush1.msra.mxu0 0.0
    %1643 = vmatprep.subr.mxu0 0.0
    %1644 = vmatpush1.msra.mxu0 0.0
    %1645 = vmatprep.subr.mxu0 0.0
    %1646 = vmatpush1.msra.mxu0 0.0
    %1647 = vmatprep.subr.mxu0 0.0
    %1648 = vmatpush1.msra.mxu0 0.0
    %1649 = vmatprep.subr.mxu0 0.0
    %1650 = vmatpush1.msra.mxu0 0.0
    %1651 = vmatprep.subr.mxu0 0.0
    %1652 = vmatpush1.msra.mxu0 0.0
    %1653 = vmatprep.subr.mxu0 0.0
    %1654 = vmatpush1.msra.mxu0 0.0
    %1655 = vmatprep.subr.mxu0 0.0
    %1656 = vmatpush1.msra.mxu0 0.0
    %1657 = vmatprep.subr.mxu0 0.0
    %1658 = vmatpush1.msra.mxu0 0.0
    %1659 = vmatprep.mubr.f32.mxu0 0.0
    %1660 = vmatmul.mubr.f32.gmra.mrb[0].mxu0 %v1593
    %v1661 = vpop.f32.mrb[0].mxu0
    %v1662 = vadd.f32 0.0, %v1661
    %v1663 = vpop.f32.mrb[0].mxu0
    %1664 = vdwg.mxu0
    %v1666 = vsel %vm381, %v1662, 0
    %1668 = vmatprep.subr.mxu0 0.0
    %1669 = vmatpush1.msra.mxu0 %v369
    %1670 = vmatprep.subr.mxu0 0.0
    %1671 = vmatpush1.msra.mxu0 %v370
    %1672 = vmatprep.subr.mxu0 0.0
    %1673 = vmatpush1.msra.mxu0 %v371
    %1674 = vmatprep.subr.mxu0 0.0
    %1675 = vmatpush1.msra.mxu0 %v372
    %1676 = vmatprep.subr.mxu0 0.0
    %1677 = vmatpush1.msra.mxu0 0.0
    %1678 = vmatprep.subr.mxu0 0.0
    %1679 = vmatpush1.msra.mxu0 0.0
    %1680 = vmatprep.subr.mxu0 0.0
    %1681 = vmatpush1.msra.mxu0 0.0
    %1682 = vmatprep.subr.mxu0 0.0
    %1683 = vmatpush1.msra.mxu0 0.0
    %1684 = vmatprep.subr.mxu0 0.0
    %1685 = vmatpush1.msra.mxu0 0.0
    %1686 = vmatprep.subr.mxu0 0.0
    %1687 = vmatpush1.msra.mxu0 0.0
    %1688 = vmatprep.subr.mxu0 0.0
    %1689 = vmatpush1.msra.mxu0 0.0
    %1690 = vmatprep.subr.mxu0 0.0
    %1691 = vmatpush1.msra.mxu0 0.0
    %1692 = vmatprep.subr.mxu0 0.0
    %1693 = vmatpush1.msra.mxu0 0.0
    %1694 = vmatprep.subr.mxu0 0.0
    %1695 = vmatpush1.msra.mxu0 0.0
    %1696 = vmatprep.subr.mxu0 0.0
    %1697 = vmatpush1.msra.mxu0 0.0
    %1698 = vmatprep.subr.mxu0 0.0
    %1699 = vmatpush1.msra.mxu0 0.0
    %1700 = vmatprep.subr.mxu0 0.0
    %1701 = vmatpush1.msra.mxu0 0.0
    %1702 = vmatprep.subr.mxu0 0.0
    %1703 = vmatpush1.msra.mxu0 0.0
    %1704 = vmatprep.subr.mxu0 0.0
    %1705 = vmatpush1.msra.mxu0 0.0
    %1706 = vmatprep.subr.mxu0 0.0
    %1707 = vmatpush1.msra.mxu0 0.0
    %1708 = vmatprep.subr.mxu0 0.0
    %1709 = vmatpush1.msra.mxu0 0.0
    %1710 = vmatprep.subr.mxu0 0.0
    %1711 = vmatpush1.msra.mxu0 0.0
    %1712 = vmatprep.subr.mxu0 0.0
    %1713 = vmatpush1.msra.mxu0 0.0
    %1714 = vmatprep.subr.mxu0 0.0
    %1715 = vmatpush1.msra.mxu0 0.0
    %1716 = vmatprep.subr.mxu0 0.0
    %1717 = vmatpush1.msra.mxu0 0.0
    %1718 = vmatprep.subr.mxu0 0.0
    %1719 = vmatpush1.msra.mxu0 0.0
    %1720 = vmatprep.subr.mxu0 0.0
    %1721 = vmatpush1.msra.mxu0 0.0
    %1722 = vmatprep.subr.mxu0 0.0
    %1723 = vmatpush1.msra.mxu0 0.0
    %1724 = vmatprep.subr.mxu0 0.0
    %1725 = vmatpush1.msra.mxu0 0.0
    %1726 = vmatprep.subr.mxu0 0.0
    %1727 = vmatpush1.msra.mxu0 0.0
    %1728 = vmatprep.subr.mxu0 0.0
    %1729 = vmatpush1.msra.mxu0 0.0
    %1730 = vmatprep.subr.mxu0 0.0
    %1731 = vmatpush1.msra.mxu0 0.0
    %1732 = vmatprep.mubr.f32.mxu0 0.0
    %1733 = vmatmul.mubr.f32.gmra.mrb[0].mxu0 %v1666
    %v1734 = vpop.f32.mrb[0].mxu0
    %v1735 = vadd.f32 0.0, %v1734
    %v1736 = vpop.f32.mrb[0].mxu0
    %1737 = vdwg.mxu0
    %v1739 = vsel %vm381, %v1495, 0
    %1741 = vmatprep.subr.mxu0 0.0
    %1742 = vmatpush1.msra.mxu0 %v365
    %1743 = vmatprep.subr.mxu0 0.0
    %1744 = vmatpush1.msra.mxu0 %v366
    %1745 = vmatprep.subr.mxu0 0.0
    %1746 = vmatpush1.msra.mxu0 %v367
    %1747 = vmatprep.subr.mxu0 0.0
    %1748 = vmatpush1.msra.mxu0 %v368
    %1749 = vmatprep.subr.mxu0 0.0
    %1750 = vmatpush1.msra.mxu0 0.0
    %1751 = vmatprep.subr.mxu0 0.0
    %1752 = vmatpush1.msra.mxu0 0.0
    %1753 = vmatprep.subr.mxu0 0.0
    %1754 = vmatpush1.msra.mxu0 0.0
    %1755 = vmatprep.subr.mxu0 0.0
    %1756 = vmatpush1.msra.mxu0 0.0
    %1757 = vmatprep.subr.mxu0 0.0
    %1758 = vmatpush1.msra.mxu0 0.0
    %1759 = vmatprep.subr.mxu0 0.0
    %1760 = vmatpush1.msra.mxu0 0.0
    %1761 = vmatprep.subr.mxu0 0.0
    %1762 = vmatpush1.msra.mxu0 0.0
    %1763 = vmatprep.subr.mxu0 0.0
    %1764 = vmatpush1.msra.mxu0 0.0
    %1765 = vmatprep.subr.mxu0 0.0
    %1766 = vmatpush1.msra.mxu0 0.0
    %1767 = vmatprep.subr.mxu0 0.0
    %1768 = vmatpush1.msra.mxu0 0.0
    %1769 = vmatprep.subr.mxu0 0.0
    %1770 = vmatpush1.msra.mxu0 0.0
    %1771 = vmatprep.subr.mxu0 0.0
    %1772 = vmatpush1.msra.mxu0 0.0
    %1773 = vmatprep.subr.mxu0 0.0
    %1774 = vmatpush1.msra.mxu0 0.0
    %1775 = vmatprep.subr.mxu0 0.0
    %1776 = vmatpush1.msra.mxu0 0.0
    %1777 = vmatprep.subr.mxu0 0.0
    %1778 = vmatpush1.msra.mxu0 0.0
    %1779 = vmatprep.subr.mxu0 0.0
    %1780 = vmatpush1.msra.mxu0 0.0
    %1781 = vmatprep.subr.mxu0 0.0
    %1782 = vmatpush1.msra.mxu0 0.0
    %1783 = vmatprep.subr.mxu0 0.0
    %1784 = vmatpush1.msra.mxu0 0.0
    %1785 = vmatprep.subr.mxu0 0.0
    %1786 = vmatpush1.msra.mxu0 0.0
    %1787 = vmatprep.subr.mxu0 0.0
    %1788 = vmatpush1.msra.mxu0 0.0
    %1789 = vmatprep.subr.mxu0 0.0
    %1790 = vmatpush1.msra.mxu0 0.0
    %1791 = vmatprep.subr.mxu0 0.0
    %1792 = vmatpush1.msra.mxu0 0.0
    %1793 = vmatprep.subr.mxu0 0.0
    %1794 = vmatpush1.msra.mxu0 0.0
    %1795 = vmatprep.subr.mxu0 0.0
    %1796 = vmatpush1.msra.mxu0 0.0
    %1797 = vmatprep.subr.mxu0 0.0
    %1798 = vmatpush1.msra.mxu0 0.0
    %1799 = vmatprep.subr.mxu0 0.0
    %1800 = vmatpush1.msra.mxu0 0.0
    %1801 = vmatprep.subr.mxu0 0.0
    %1802 = vmatpush1.msra.mxu0 0.0
    %1803 = vmatprep.subr.mxu0 0.0
    %1804 = vmatpush1.msra.mxu0 0.0
    %1805 = vmatprep.mubr.f32.mxu0 0.0
    %1806 = vmatmul.mubr.f32.gmra.mrb[0].mxu0 %v1739
    %v1807 = vpop.f32.mrb[0].mxu0
    %v1808 = vadd.f32 %v1735, %v1807
    %v1809 = vpop.f32.mrb[0].mxu0
    %1810 = vdwg.mxu0
    %1811 = vrot.lane.b32.xlu0 %v286, 64
    %v1812 = vpop.permute.xlu0 %1811
    %1813 = vrot.lane.b32.xlu0 %v288, 64
    %v1814 = vpop.permute.xlu0 %1813
    %v1815 = vsel %vm381, %v1812, 0
    %v1817 = vsel %vm381, %v1814, 0
    %1819 = vmatprep.subr.mxu0 0.0
    %1820 = vmatpush1.xpose.msra.mxu0 %v1817
    %1821 = vmatprep.subr.mxu0 0.0
    %1822 = vmatpush1.xpose.msra.mxu0 0.0
    %1823 = vmatprep.subr.mxu0 0.0
    %1824 = vmatpush1.xpose.msra.mxu0 0.0
    %1825 = vmatprep.subr.mxu0 0.0
    %1826 = vmatpush1.xpose.msra.mxu0 0.0
    %1827 = vmatprep.subr.mxu0 0.0
    %1828 = vmatpush1.xpose.msra.mxu0 0.0
    %1829 = vmatprep.subr.mxu0 0.0
    %1830 = vmatpush1.xpose.msra.mxu0 0.0
    %1831 = vmatprep.subr.mxu0 0.0
    %1832 = vmatpush1.xpose.msra.mxu0 0.0
    %1833 = vmatprep.subr.mxu0 0.0
    %1834 = vmatpush1.xpose.msra.mxu0 0.0
    %1835 = vmatprep.subr.mxu0 0.0
    %1836 = vmatpush1.xpose.msra.mxu0 0.0
    %1837 = vmatprep.subr.mxu0 0.0
    %1838 = vmatpush1.xpose.msra.mxu0 0.0
    %1839 = vmatprep.subr.mxu0 0.0
    %1840 = vmatpush1.xpose.msra.mxu0 0.0
    %1841 = vmatprep.subr.mxu0 0.0
    %1842 = vmatpush1.xpose.msra.mxu0 0.0
    %1843 = vmatprep.subr.mxu0 0.0
    %1844 = vmatpush1.xpose.msra.mxu0 0.0
    %1845 = vmatprep.subr.mxu0 0.0
    %1846 = vmatpush1.xpose.msra.mxu0 0.0
    %1847 = vmatprep.subr.mxu0 0.0
    %1848 = vmatpush1.xpose.msra.mxu0 0.0
    %1849 = vmatprep.subr.mxu0 0.0
    %1850 = vmatpush1.xpose.msra.mxu0 0.0
    %1851 = vmatprep.subr.mxu0 0.0
    %1852 = vmatpush1.xpose.msra.mxu0 0.0
    %1853 = vmatprep.subr.mxu0 0.0
    %1854 = vmatpush1.xpose.msra.mxu0 0.0
    %1855 = vmatprep.subr.mxu0 0.0
    %1856 = vmatpush1.xpose.msra.mxu0 0.0
    %1857 = vmatprep.subr.mxu0 0.0
    %1858 = vmatpush1.xpose.msra.mxu0 0.0
    %1859 = vmatprep.subr.mxu0 0.0
    %1860 = vmatpush1.xpose.msra.mxu0 0.0
    %1861 = vmatprep.subr.mxu0 0.0
    %1862 = vmatpush1.xpose.msra.mxu0 0.0
    %1863 = vmatprep.subr.mxu0 0.0
    %1864 = vmatpush1.xpose.msra.mxu0 0.0
    %1865 = vmatprep.subr.mxu0 0.0
    %1866 = vmatpush1.xpose.msra.mxu0 0.0
    %1867 = vmatprep.subr.mxu0 0.0
    %1868 = vmatpush1.xpose.msra.mxu0 0.0
    %1869 = vmatprep.subr.mxu0 0.0
    %1870 = vmatpush1.xpose.msra.mxu0 0.0
    %1871 = vmatprep.subr.mxu0 0.0
    %1872 = vmatpush1.xpose.msra.mxu0 0.0
    %1873 = vmatprep.subr.mxu0 0.0
    %1874 = vmatpush1.xpose.msra.mxu0 0.0
    %1875 = vmatprep.subr.mxu0 0.0
    %1876 = vmatpush1.xpose.msra.mxu0 0.0
    %1877 = vmatprep.subr.mxu0 0.0
    %1878 = vmatpush1.xpose.msra.mxu0 0.0
    %1879 = vmatprep.subr.mxu0 0.0
    %1880 = vmatpush1.xpose.msra.mxu0 0.0
    %1881 = vmatprep.subr.mxu0 0.0
    %1882 = vmatpush1.xpose.msra.mxu0 0.0
    %1883 = vmatprep.mubr.f32.mxu0 0.0
    %1884 = vmatmul.mubr.f32.gmra.mrb[0].mxu0 %v1815
    %v1885 = vpop.f32.mrb[0].mxu0
    %v1886 = vadd.f32 0.0, %v1885
    %v1887 = vpop.f32.mrb[0].mxu0
    %1888 = vdwg.mxu0
    %v1889 = vmul.f32 %v1886, 0.17677669
    %v1890 = vsel %vm459, %v1889, -inf
    %1891 = vmax.xlane.f32.xlu0 %v1890
    %v1892 = vpop.xlane.xlu0 %1891
    %v1893 = vsub.f32 %v1889, %v1892
    %v1894 = vmul.f32 %v1893, 1.442695
    %v1895 = vpow.pop %v1894
    %v1896 = vsel %vm459, %v1895, 0.0
    %1897 = vadd.xlane.f32.xlu0 %v1896
    %v1898 = vpop.xlane.xlu0 %1897
    %v1899 = vrcp.pop %v1898
    %v1900 = vmul.f32 %v1895, %v1899
    %1901 = vrot.lane.b32.xlu0 %v362, 64
    %v1902 = vpop.permute.xlu0 %1901
    %v1905 = vsel %vm459, %v1900, 0
    %1907 = vmatprep.subr.mxu0 0.0
    %1908 = vmatpush1.msra.mxu0 %v1902
    %1909 = vmatprep.subr.mxu0 0.0
    %1910 = vmatpush1.msra.mxu0 0.0
    %1911 = vmatprep.subr.mxu0 0.0
    %1912 = vmatpush1.msra.mxu0 0.0
    %1913 = vmatprep.subr.mxu0 0.0
    %1914 = vmatpush1.msra.mxu0 0.0
    %1915 = vmatprep.subr.mxu0 0.0
    %1916 = vmatpush1.msra.mxu0 0.0
    %1917 = vmatprep.subr.mxu0 0.0
    %1918 = vmatpush1.msra.mxu0 0.0
    %1919 = vmatprep.subr.mxu0 0.0
    %1920 = vmatpush1.msra.mxu0 0.0
    %1921 = vmatprep.subr.mxu0 0.0
    %1922 = vmatpush1.msra.mxu0 0.0
    %1923 = vmatprep.subr.mxu0 0.0
    %1924 = vmatpush1.msra.mxu0 0.0
    %1925 = vmatprep.subr.mxu0 0.0
    %1926 = vmatpush1.msra.mxu0 0.0
    %1927 = vmatprep.subr.mxu0 0.0
    %1928 = vmatpush1.msra.mxu0 0.0
    %1929 = vmatprep.subr.mxu0 0.0
    %1930 = vmatpush1.msra.mxu0 0.0
    %1931 = vmatprep.subr.mxu0 0.0
    %1932 = vmatpush1.msra.mxu0 0.0
    %1933 = vmatprep.subr.mxu0 0.0
    %1934 = vmatpush1.msra.mxu0 0.0
    %1935 = vmatprep.subr.mxu0 0.0
    %1936 = vmatpush1.msra.mxu0 0.0
    %1937 = vmatprep.subr.mxu0 0.0
    %1938 = vmatpush1.msra.mxu0 0.0
    %1939 = vmatprep.subr.mxu0 0.0
    %1940 = vmatpush1.msra.mxu0 0.0
    %1941 = vmatprep.subr.mxu0 0.0
    %1942 = vmatpush1.msra.mxu0 0.0
    %1943 = vmatprep.subr.mxu0 0.0
    %1944 = vmatpush1.msra.mxu0 0.0
    %1945 = vmatprep.subr.mxu0 0.0
    %1946 = vmatpush1.msra.mxu0 0.0
    %1947 = vmatprep.subr.mxu0 0.0
    %1948 = vmatpush1.msra.mxu0 0.0
    %1949 = vmatprep.subr.mxu0 0.0
    %1950 = vmatpush1.msra.mxu0 0.0
    %1951 = vmatprep.subr.mxu0 0.0
    %1952 = vmatpush1.msra.mxu0 0.0
    %1953 = vmatprep.subr.mxu0 0.0
    %1954 = vmatpush1.msra.mxu0 0.0
    %1955 = vmatprep.subr.mxu0 0.0
    %1956 = vmatpush1.msra.mxu0 0.0
    %1957 = vmatprep.subr.mxu0 0.0
    %1958 = vmatpush1.msra.mxu0 0.0
    %1959 = vmatprep.subr.mxu0 0.0
    %1960 = vmatpush1.msra.mxu0 0.0
    %1961 = vmatprep.subr.mxu0 0.0
    %1962 = vmatpush1.msra.mxu0 0.0
    %1963 = vmatprep.subr.mxu0 0.0
    %1964 = vmatpush1.msra.mxu0 0.0
    %1965 = vmatprep.subr.mxu0 0.0
    %1966 = vmatpush1.msra.mxu0 0.0
    %1967 = vmatprep.subr.mxu0 0.0
    %1968 = vmatpush1.msra.mxu0 0.0
    %1969 = vmatprep.subr.mxu0 0.0
    %1970 = vmatpush1.msra.mxu0 0.0
    %1971 = vmatprep.mubr.f32.mxu0 0.0
    %1972 = vmatmul.mubr.f32.gmra.mrb[0].mxu0 %v1905
    %v1973 = vpop.f32.mrb[0].mxu0
    %v1974 = vadd.f32 0.0, %v1973
    %v1975 = vpop.f32.mrb[0].mxu0
    %1976 = vdwg.mxu0
    %v1978 = vsel %vm381, %v1974, 0
    %1980 = vmatprep.subr.mxu0 0.0
    %1981 = vmatpush1.msra.mxu0 %v373
    %1982 = vmatprep.subr.mxu0 0.0
    %1983 = vmatpush1.msra.mxu0 %v374
    %1984 = vmatprep.subr.mxu0 0.0
    %1985 = vmatpush1.msra.mxu0 %v375
    %1986 = vmatprep.subr.mxu0 0.0
    %1987 = vmatpush1.msra.mxu0 %v376
    %1988 = vmatprep.subr.mxu0 0.0
    %1989 = vmatpush1.msra.mxu0 0.0
    %1990 = vmatprep.subr.mxu0 0.0
    %1991 = vmatpush1.msra.mxu0 0.0
    %1992 = vmatprep.subr.mxu0 0.0
    %1993 = vmatpush1.msra.mxu0 0.0
    %1994 = vmatprep.subr.mxu0 0.0
    %1995 = vmatpush1.msra.mxu0 0.0
    %1996 = vmatprep.subr.mxu0 0.0
    %1997 = vmatpush1.msra.mxu0 0.0
    %1998 = vmatprep.subr.mxu0 0.0
    %1999 = vmatpush1.msra.mxu0 0.0
    %2000 = vmatprep.subr.mxu0 0.0
    %2001 = vmatpush1.msra.mxu0 0.0
    %2002 = vmatprep.subr.mxu0 0.0
    %2003 = vmatpush1.msra.mxu0 0.0
    %2004 = vmatprep.subr.mxu0 0.0
    %2005 = vmatpush1.msra.mxu0 0.0
    %2006 = vmatprep.subr.mxu0 0.0
    %2007 = vmatpush1.msra.mxu0 0.0
    %2008 = vmatprep.subr.mxu0 0.0
    %2009 = vmatpush1.msra.mxu0 0.0
    %2010 = vmatprep.subr.mxu0 0.0
    %2011 = vmatpush1.msra.mxu0 0.0
    %2012 = vmatprep.subr.mxu0 0.0
    %2013 = vmatpush1.msra.mxu0 0.0
    %2014 = vmatprep.subr.mxu0 0.0
    %2015 = vmatpush1.msra.mxu0 0.0
    %2016 = vmatprep.subr.mxu0 0.0
    %2017 = vmatpush1.msra.mxu0 0.0
    %2018 = vmatprep.subr.mxu0 0.0
    %2019 = vmatpush1.msra.mxu0 0.0
    %2020 = vmatprep.subr.mxu0 0.0
    %2021 = vmatpush1.msra.mxu0 0.0
    %2022 = vmatprep.subr.mxu0 0.0
    %2023 = vmatpush1.msra.mxu0 0.0
    %2024 = vmatprep.subr.mxu0 0.0
    %2025 = vmatpush1.msra.mxu0 0.0
    %2026 = vmatprep.subr.mxu0 0.0
    %2027 = vmatpush1.msra.mxu0 0.0
    %2028 = vmatprep.subr.mxu0 0.0
    %2029 = vmatpush1.msra.mxu0 0.0
    %2030 = vmatprep.subr.mxu0 0.0
    %2031 = vmatpush1.msra.mxu0 0.0
    %2032 = vmatprep.subr.mxu0 0.0
    %2033 = vmatpush1.msra.mxu0 0.0
    %2034 = vmatprep.subr.mxu0 0.0
    %2035 = vmatpush1.msra.mxu0 0.0
    %2036 = vmatprep.subr.mxu0 0.0
    %2037 = vmatpush1.msra.mxu0 0.0
    %2038 = vmatprep.subr.mxu0 0.0
    %2039 = vmatpush1.msra.mxu0 0.0
    %2040 = vmatprep.subr.mxu0 0.0
    %2041 = vmatpush1.msra.mxu0 0.0
    %2042 = vmatprep.subr.mxu0 0.0
    %2043 = vmatpush1.msra.mxu0 0.0
    %2044 = vmatprep.mubr.f32.mxu0 0.0
    %2045 = vmatmul.mubr.f32.gmra.mrb[0].mxu0 %v1978
    %v2046 = vpop.f32.mrb[0].mxu0
    %v2047 = vadd.f32 0.0, %v2046
    %v2048 = vpop.f32.mrb[0].mxu0
    %2049 = vdwg.mxu0
    %v2050 = vadd.f32 %v1808, %v2047
    %2051 = vrot.lane.b32.xlu0 %v286, 32
    %v2052 = vpop.permute.xlu0 %2051
    %2053 = vrot.lane.b32.xlu0 %v288, 32
    %v2054 = vpop.permute.xlu0 %2053
    %v2055 = vsel %vm381, %v2052, 0
    %v2057 = vsel %vm381, %v2054, 0
    %2059 = vmatprep.subr.mxu0 0.0
    %2060 = vmatpush1.xpose.msra.mxu0 %v2057
    %2061 = vmatprep.subr.mxu0 0.0
    %2062 = vmatpush1.xpose.msra.mxu0 0.0
    %2063 = vmatprep.subr.mxu0 0.0
    %2064 = vmatpush1.xpose.msra.mxu0 0.0
    %2065 = vmatprep.subr.mxu0 0.0
    %2066 = vmatpush1.xpose.msra.mxu0 0.0
    %2067 = vmatprep.subr.mxu0 0.0
    %2068 = vmatpush1.xpose.msra.mxu0 0.0
    %2069 = vmatprep.subr.mxu0 0.0
    %2070 = vmatpush1.xpose.msra.mxu0 0.0
    %2071 = vmatprep.subr.mxu0 0.0
    %2072 = vmatpush1.xpose.msra.mxu0 0.0
    %2073 = vmatprep.subr.mxu0 0.0
    %2074 = vmatpush1.xpose.msra.mxu0 0.0
    %2075 = vmatprep.subr.mxu0 0.0
    %2076 = vmatpush1.xpose.msra.mxu0 0.0
    %2077 = vmatprep.subr.mxu0 0.0
    %2078 = vmatpush1.xpose.msra.mxu0 0.0
    %2079 = vmatprep.subr.mxu0 0.0
    %2080 = vmatpush1.xpose.msra.mxu0 0.0
    %2081 = vmatprep.subr.mxu0 0.0
    %2082 = vmatpush1.xpose.msra.mxu0 0.0
    %2083 = vmatprep.subr.mxu0 0.0
    %2084 = vmatpush1.xpose.msra.mxu0 0.0
    %2085 = vmatprep.subr.mxu0 0.0
    %2086 = vmatpush1.xpose.msra.mxu0 0.0
    %2087 = vmatprep.subr.mxu0 0.0
    %2088 = vmatpush1.xpose.msra.mxu0 0.0
    %2089 = vmatprep.subr.mxu0 0.0
    %2090 = vmatpush1.xpose.msra.mxu0 0.0
    %2091 = vmatprep.subr.mxu0 0.0
    %2092 = vmatpush1.xpose.msra.mxu0 0.0
    %2093 = vmatprep.subr.mxu0 0.0
    %2094 = vmatpush1.xpose.msra.mxu0 0.0
    %2095 = vmatprep.subr.mxu0 0.0
    %2096 = vmatpush1.xpose.msra.mxu0 0.0
    %2097 = vmatprep.subr.mxu0 0.0
    %2098 = vmatpush1.xpose.msra.mxu0 0.0
    %2099 = vmatprep.subr.mxu0 0.0
    %2100 = vmatpush1.xpose.msra.mxu0 0.0
    %2101 = vmatprep.subr.mxu0 0.0
    %2102 = vmatpush1.xpose.msra.mxu0 0.0
    %2103 = vmatprep.subr.mxu0 0.0
    %2104 = vmatpush1.xpose.msra.mxu0 0.0
    %2105 = vmatprep.subr.mxu0 0.0
    %2106 = vmatpush1.xpose.msra.mxu0 0.0
    %2107 = vmatprep.subr.mxu0 0.0
    %2108 = vmatpush1.xpose.msra.mxu0 0.0
    %2109 = vmatprep.subr.mxu0 0.0
    %2110 = vmatpush1.xpose.msra.mxu0 0.0
    %2111 = vmatprep.subr.mxu0 0.0
    %2112 = vmatpush1.xpose.msra.mxu0 0.0
    %2113 = vmatprep.subr.mxu0 0.0
    %2114 = vmatpush1.xpose.msra.mxu0 0.0
    %2115 = vmatprep.subr.mxu0 0.0
    %2116 = vmatpush1.xpose.msra.mxu0 0.0
    %2117 = vmatprep.subr.mxu0 0.0
    %2118 = vmatpush1.xpose.msra.mxu0 0.0
    %2119 = vmatprep.subr.mxu0 0.0
    %2120 = vmatpush1.xpose.msra.mxu0 0.0
    %2121 = vmatprep.subr.mxu0 0.0
    %2122 = vmatpush1.xpose.msra.mxu0 0.0
    %2123 = vmatprep.mubr.f32.mxu0 0.0
    %2124 = vmatmul.mubr.f32.gmra.mrb[0].mxu0 %v2055
    %v2125 = vpop.f32.mrb[0].mxu0
    %v2126 = vadd.f32 0.0, %v2125
    %v2127 = vpop.f32.mrb[0].mxu0
    %2128 = vdwg.mxu0
    %v2129 = vmul.f32 %v2126, 0.17677669
    %v2130 = vsel %vm459, %v2129, -inf
    %2131 = vmax.xlane.f32.xlu0 %v2130
    %v2132 = vpop.xlane.xlu0 %2131
    %v2133 = vsub.f32 %v2129, %v2132
    %v2134 = vmul.f32 %v2133, 1.442695
    %v2135 = vpow.pop %v2134
    %v2136 = vsel %vm459, %v2135, 0.0
    %2137 = vadd.xlane.f32.xlu0 %v2136
    %v2138 = vpop.xlane.xlu0 %2137
    %v2139 = vrcp.pop %v2138
    %v2140 = vmul.f32 %v2135, %v2139
    %2141 = vrot.lane.b32.xlu0 %v362, 32
    %v2142 = vpop.permute.xlu0 %2141
    %v2145 = vsel %vm459, %v2140, 0
    %2147 = vmatprep.subr.mxu0 0.0
    %2148 = vmatpush1.msra.mxu0 %v2142
    %2149 = vmatprep.subr.mxu0 0.0
    %2150 = vmatpush1.msra.mxu0 0.0
    %2151 = vmatprep.subr.mxu0 0.0
    %2152 = vmatpush1.msra.mxu0 0.0
    %2153 = vmatprep.subr.mxu0 0.0
    %2154 = vmatpush1.msra.mxu0 0.0
    %2155 = vmatprep.subr.mxu0 0.0
    %2156 = vmatpush1.msra.mxu0 0.0
    %2157 = vmatprep.subr.mxu0 0.0
    %2158 = vmatpush1.msra.mxu0 0.0
    %2159 = vmatprep.subr.mxu0 0.0
    %2160 = vmatpush1.msra.mxu0 0.0
    %2161 = vmatprep.subr.mxu0 0.0
    %2162 = vmatpush1.msra.mxu0 0.0
    %2163 = vmatprep.subr.mxu0 0.0
    %2164 = vmatpush1.msra.mxu0 0.0
    %2165 = vmatprep.subr.mxu0 0.0
    %2166 = vmatpush1.msra.mxu0 0.0
    %2167 = vmatprep.subr.mxu0 0.0
    %2168 = vmatpush1.msra.mxu0 0.0
    %2169 = vmatprep.subr.mxu0 0.0
    %2170 = vmatpush1.msra.mxu0 0.0
    %2171 = vmatprep.subr.mxu0 0.0
    %2172 = vmatpush1.msra.mxu0 0.0
    %2173 = vmatprep.subr.mxu0 0.0
    %2174 = vmatpush1.msra.mxu0 0.0
    %2175 = vmatprep.subr.mxu0 0.0
    %2176 = vmatpush1.msra.mxu0 0.0
    %2177 = vmatprep.subr.mxu0 0.0
    %2178 = vmatpush1.msra.mxu0 0.0
    %2179 = vmatprep.subr.mxu0 0.0
    %2180 = vmatpush1.msra.mxu0 0.0
    %2181 = vmatprep.subr.mxu0 0.0
    %2182 = vmatpush1.msra.mxu0 0.0
    %2183 = vmatprep.subr.mxu0 0.0
    %2184 = vmatpush1.msra.mxu0 0.0
    %2185 = vmatprep.subr.mxu0 0.0
    %2186 = vmatpush1.msra.mxu0 0.0
    %2187 = vmatprep.subr.mxu0 0.0
    %2188 = vmatpush1.msra.mxu0 0.0
    %2189 = vmatprep.subr.mxu0 0.0
    %2190 = vmatpush1.msra.mxu0 0.0
    %2191 = vmatprep.subr.mxu0 0.0
    %2192 = vmatpush1.msra.mxu0 0.0
    %2193 = vmatprep.subr.mxu0 0.0
    %2194 = vmatpush1.msra.mxu0 0.0
    %2195 = vmatprep.subr.mxu0 0.0
    %2196 = vmatpush1.msra.mxu0 0.0
    %2197 = vmatprep.subr.mxu0 0.0
    %2198 = vmatpush1.msra.mxu0 0.0
    %2199 = vmatprep.subr.mxu0 0.0
    %2200 = vmatpush1.msra.mxu0 0.0
    %2201 = vmatprep.subr.mxu0 0.0
    %2202 = vmatpush1.msra.mxu0 0.0
    %2203 = vmatprep.subr.mxu0 0.0
    %2204 = vmatpush1.msra.mxu0 0.0
    %2205 = vmatprep.subr.mxu0 0.0
    %2206 = vmatpush1.msra.mxu0 0.0
    %2207 = vmatprep.subr.mxu0 0.0
    %2208 = vmatpush1.msra.mxu0 0.0
    %2209 = vmatprep.subr.mxu0 0.0
    %2210 = vmatpush1.msra.mxu0 0.0
    %2211 = vmatprep.mubr.f32.mxu0 0.0
    %2212 = vmatmul.mubr.f32.gmra.mrb[0].mxu0 %v2145
    %v2213 = vpop.f32.mrb[0].mxu0
    %v2214 = vadd.f32 0.0, %v2213
    %v2215 = vpop.f32.mrb[0].mxu0
    %2216 = vdwg.mxu0
    %v2218 = vsel %vm381, %v2214, 0
    %2220 = vmatprep.subr.mxu0 0.0
    %2221 = vmatpush1.msra.mxu0 %v377
    %2222 = vmatprep.subr.mxu0 0.0
    %2223 = vmatpush1.msra.mxu0 %v378
    %2224 = vmatprep.subr.mxu0 0.0
    %2225 = vmatpush1.msra.mxu0 %v379
    %2226 = vmatprep.subr.mxu0 0.0
    %2227 = vmatpush1.msra.mxu0 %v380
    %2228 = vmatprep.subr.mxu0 0.0
    %2229 = vmatpush1.msra.mxu0 0.0
    %2230 = vmatprep.subr.mxu0 0.0
    %2231 = vmatpush1.msra.mxu0 0.0
    %2232 = vmatprep.subr.mxu0 0.0
    %2233 = vmatpush1.msra.mxu0 0.0
    %2234 = vmatprep.subr.mxu0 0.0
    %2235 = vmatpush1.msra.mxu0 0.0
    %2236 = vmatprep.subr.mxu0 0.0
    %2237 = vmatpush1.msra.mxu0 0.0
    %2238 = vmatprep.subr.mxu0 0.0
    %2239 = vmatpush1.msra.mxu0 0.0
    %2240 = vmatprep.subr.mxu0 0.0
    %2241 = vmatpush1.msra.mxu0 0.0
    %2242 = vmatprep.subr.mxu0 0.0
    %2243 = vmatpush1.msra.mxu0 0.0
    %2244 = vmatprep.subr.mxu0 0.0
    %2245 = vmatpush1.msra.mxu0 0.0
    %2246 = vmatprep.subr.mxu0 0.0
    %2247 = vmatpush1.msra.mxu0 0.0
    %2248 = vmatprep.subr.mxu0 0.0
    %2249 = vmatpush1.msra.mxu0 0.0
    %2250 = vmatprep.subr.mxu0 0.0
    %2251 = vmatpush1.msra.mxu0 0.0
    %2252 = vmatprep.subr.mxu0 0.0
    %2253 = vmatpush1.msra.mxu0 0.0
    %2254 = vmatprep.subr.mxu0 0.0
    %2255 = vmatpush1.msra.mxu0 0.0
    %2256 = vmatprep.subr.mxu0 0.0
    %2257 = vmatpush1.msra.mxu0 0.0
    %2258 = vmatprep.subr.mxu0 0.0
    %2259 = vmatpush1.msra.mxu0 0.0
    %2260 = vmatprep.subr.mxu0 0.0
    %2261 = vmatpush1.msra.mxu0 0.0
    %2262 = vmatprep.subr.mxu0 0.0
    %2263 = vmatpush1.msra.mxu0 0.0
    %2264 = vmatprep.subr.mxu0 0.0
    %2265 = vmatpush1.msra.mxu0 0.0
    %2266 = vmatprep.subr.mxu0 0.0
    %2267 = vmatpush1.msra.mxu0 0.0
    %2268 = vmatprep.subr.mxu0 0.0
    %2269 = vmatpush1.msra.mxu0 0.0
    %2270 = vmatprep.subr.mxu0 0.0
    %2271 = vmatpush1.msra.mxu0 0.0
    %2272 = vmatprep.subr.mxu0 0.0
    %2273 = vmatpush1.msra.mxu0 0.0
    %2274 = vmatprep.subr.mxu0 0.0
    %2275 = vmatpush1.msra.mxu0 0.0
    %2276 = vmatprep.subr.mxu0 0.0
    %2277 = vmatpush1.msra.mxu0 0.0
    %2278 = vmatprep.subr.mxu0 0.0
    %2279 = vmatpush1.msra.mxu0 0.0
    %2280 = vmatprep.subr.mxu0 0.0
    %2281 = vmatpush1.msra.mxu0 0.0
    %2282 = vmatprep.subr.mxu0 0.0
    %2283 = vmatpush1.msra.mxu0 0.0
    %2284 = vmatprep.mubr.f32.mxu0 0.0
    %2285 = vmatmul.mubr.f32.gmra.mrb[0].mxu0 %v2218
    %v2286 = vpop.f32.mrb[0].mxu0
    %v2287 = vadd.f32 0.0, %v2286
    %v2288 = vpop.f32.mrb[0].mxu0
    %2289 = vdwg.mxu0
    %v2290 = vadd.f32 %v2050, %v2287
    %v2291 = vld [vmem:[%s5] sm:$0x1]
    %v2293 = vlaneseq
    %v2294 = vshrl.u32 %v2293, 7
    %v2295 = vsub.s32 0, %v2294
    %v2296 = vrot.slane %v2291, %v2295
    %v2298 = vadd.f32 %v1336, %v2296
    %v2299 = vadd.f32 %v2290, %v2296
    %v2300 = vadd.f32 %v2298, %v146
    %v2301 = vadd.f32 %v2299, %v147
    %v2302 = vld [vmem:[%s6] sm:$0x1]
    %v2303 = vld [vmem:[%s7] sm:$0x1]
    %2304 = vadd.xlane.f32.xlu0 %v2300
    %v2305 = vpop.xlane.xlu0 %2304
    %2306 = vadd.xlane.f32.xlu0 %v2301
    %v2307 = vpop.xlane.xlu0 %2306
    %v2308 = vrcp.pop 128.0
    %v2309 = vmul.f32 %v2305, %v2308
    %v2310 = vmul.f32 %v2307, %v2308
    %v2311 = vsub.f32 %v2300, %v2309
    %v2312 = vsub.f32 %v2301, %v2310
    %v2313 = vmul.f32 %v2311, %v2311
    %v2314 = vmul.f32 %v2312, %v2312
    %2315 = vadd.xlane.f32.xlu0 %v2313
    %v2316 = vpop.xlane.xlu0 %2315
    %2317 = vadd.xlane.f32.xlu0 %v2314
    %v2318 = vpop.xlane.xlu0 %2317
    %v2319 = vmul.f32 %v2316, %v2308
    %v2320 = vmul.f32 %v2318, %v2308
    %v2321 = vadd.f32 %v2319, 1e-05
    %v2322 = vadd.f32 %v2320, 1e-05
    %v2323 = vrsqrt.pop %v2321
    %v2324 = vrsqrt.pop %v2322
    %v2325 = vmul.f32 %v2311, %v2323
    %v2326 = vmul.f32 %v2312, %v2324
    %v2328 = vlaneseq
    %v2329 = vshrl.u32 %v2328, 7
    %v2330 = vsub.s32 0, %v2329
    %v2331 = vrot.slane %v2302, %v2330
    %v2333 = vmul.f32 %v2325, %v2331
    %v2334 = vmul.f32 %v2326, %v2331
    %v2336 = vlaneseq
    %v2337 = vshrl.u32 %v2336, 7
    %v2338 = vsub.s32 0, %v2337
    %v2339 = vrot.slane %v2303, %v2338
    %v2341 = vadd.f32 %v2333, %v2339
    %v2342 = vadd.f32 %v2334, %v2339
    %v2343 = vld [vmem:[#allocation8] sm:$0xff]
    %v2344 = vld [vmem:[#allocation8 + $0x8] sm:$0xff]
    %v2345 = vld [vmem:[#allocation8 + $0x10] sm:$0xff]
    %v2346 = vld [vmem:[#allocation8 + $0x18] sm:$0xff]
    %v2347 = vld [vmem:[#allocation8 + $0x20] sm:$0xff]
    %v2348 = vld [vmem:[#allocation8 + $0x28] sm:$0xff]
    %v2349 = vld [vmem:[#allocation8 + $0x30] sm:$0xff]
    %v2350 = vld [vmem:[#allocation8 + $0x38] sm:$0xff]
    %v2351 = vld [vmem:[#allocation8 + $0x40] sm:$0xff]
    %v2352 = vld [vmem:[#allocation8 + $0x48] sm:$0xff]
    %v2353 = vld [vmem:[#allocation8 + $0x50] sm:$0xff]
    %v2354 = vld [vmem:[#allocation8 + $0x58] sm:$0xff]
    %v2355 = vld [vmem:[#allocation8 + $0x60] sm:$0xff]
    %v2356 = vld [vmem:[#allocation8 + $0x68] sm:$0xff]
    %v2357 = vld [vmem:[#allocation8 + $0x70] sm:$0xff]
    %v2358 = vld [vmem:[#allocation8 + $0x78] sm:$0xff]
    %v2359 = vld [vmem:[#allocation8 + $0x80] sm:$0xff]
    %v2360 = vld [vmem:[#allocation8 + $0x88] sm:$0xff]
    %v2361 = vld [vmem:[#allocation8 + $0x90] sm:$0xff]
    %v2362 = vld [vmem:[#allocation8 + $0x98] sm:$0xff]
    %v2363 = vld [vmem:[#allocation8 + $0xa0] sm:$0xff]
    %v2364 = vld [vmem:[#allocation8 + $0xa8] sm:$0xff]
    %v2365 = vld [vmem:[#allocation8 + $0xb0] sm:$0xff]
    %v2366 = vld [vmem:[#allocation8 + $0xb8] sm:$0xff]
    %v2367 = vld [vmem:[#allocation8 + $0xc0] sm:$0xff]
    %v2368 = vld [vmem:[#allocation8 + $0xc8] sm:$0xff]
    %v2369 = vld [vmem:[#allocation8 + $0xd0] sm:$0xff]
    %v2370 = vld [vmem:[#allocation8 + $0xd8] sm:$0xff]
    %v2371 = vld [vmem:[#allocation8 + $0xe0] sm:$0xff]
    %v2372 = vld [vmem:[#allocation8 + $0xe8] sm:$0xff]
    %v2373 = vld [vmem:[#allocation8 + $0xf0] sm:$0xff]
    %v2374 = vld [vmem:[#allocation8 + $0xf8] sm:$0xff]
    %v2375 = vld [vmem:[#allocation8 + $0x100] sm:$0xff]
    %v2376 = vld [vmem:[#allocation8 + $0x108] sm:$0xff]
    %v2377 = vld [vmem:[#allocation8 + $0x110] sm:$0xff]
    %v2378 = vld [vmem:[#allocation8 + $0x118] sm:$0xff]
    %v2379 = vld [vmem:[#allocation8 + $0x120] sm:$0xff]
    %v2380 = vld [vmem:[#allocation8 + $0x128] sm:$0xff]
    %v2381 = vld [vmem:[#allocation8 + $0x130] sm:$0xff]
    %v2382 = vld [vmem:[#allocation8 + $0x138] sm:$0xff]
    %v2383 = vld [vmem:[#allocation8 + $0x140] sm:$0xff]
    %v2384 = vld [vmem:[#allocation8 + $0x148] sm:$0xff]
    %v2385 = vld [vmem:[#allocation8 + $0x150] sm:$0xff]
    %v2386 = vld [vmem:[#allocation8 + $0x158] sm:$0xff]
    %v2387 = vld [vmem:[#allocation8 + $0x160] sm:$0xff]
    %v2388 = vld [vmem:[#allocation8 + $0x168] sm:$0xff]
    %v2389 = vld [vmem:[#allocation8 + $0x170] sm:$0xff]
    %v2390 = vld [vmem:[#allocation8 + $0x178] sm:$0xff]
    %v2391 = vld [vmem:[#allocation8 + $0x180] sm:$0xff]
    %v2392 = vld [vmem:[#allocation8 + $0x188] sm:$0xff]
    %v2393 = vld [vmem:[#allocation8 + $0x190] sm:$0xff]
    %v2394 = vld [vmem:[#allocation8 + $0x198] sm:$0xff]
    %v2395 = vld [vmem:[#allocation8 + $0x1a0] sm:$0xff]
    %v2396 = vld [vmem:[#allocation8 + $0x1a8] sm:$0xff]
    %v2397 = vld [vmem:[#allocation8 + $0x1b0] sm:$0xff]
    %v2398 = vld [vmem:[#allocation8 + $0x1b8] sm:$0xff]
    %v2399 = vld [vmem:[#allocation8 + $0x1c0] sm:$0xff]
    %v2400 = vld [vmem:[#allocation8 + $0x1c8] sm:$0xff]
    %v2401 = vld [vmem:[#allocation8 + $0x1d0] sm:$0xff]
    %v2402 = vld [vmem:[#allocation8 + $0x1d8] sm:$0xff]
    %v2403 = vld [vmem:[#allocation8 + $0x1e0] sm:$0xff]
    %v2404 = vld [vmem:[#allocation8 + $0x1e8] sm:$0xff]
    %v2405 = vld [vmem:[#allocation8 + $0x1f0] sm:$0xff]
    %v2406 = vld [vmem:[#allocation8 + $0x1f8] sm:$0xff]
    %v2407 = vld [vmem:[#allocation10] sm:$0xf]
    %v2409 = vlaneseq
    %v2410 = vshrl.u32 %v2409, 7
    %v2411 = vsub.s32 0, %v2410
    %v2412 = vrot.slane %v2407, %v2411
    %v2413 = vlaneseq
    %v2414 = vshrl.u32 %v2413, 7
    %v2415 = vsub.s32 1, %v2414
    %v2416 = vrot.slane %v2407, %v2415
    %v2417 = vlaneseq
    %v2418 = vshrl.u32 %v2417, 7
    %v2419 = vsub.s32 2, %v2418
    %v2420 = vrot.slane %v2407, %v2419
    %v2421 = vlaneseq
    %v2422 = vshrl.u32 %v2421, 7
    %v2423 = vsub.s32 3, %v2422
    %v2424 = vrot.slane %v2407, %v2423
    %2429 = vmatprep.subr.mxu0 %v2344
    %2430 = vmatpush1.msra.mxu0 %v2343
    %2431 = vmatprep.subr.mxu0 %v2348
    %2432 = vmatpush1.msra.mxu0 %v2347
    %2433 = vmatprep.subr.mxu0 %v2352
    %2434 = vmatpush1.msra.mxu0 %v2351
    %2435 = vmatprep.subr.mxu0 %v2356
    %2436 = vmatpush1.msra.mxu0 %v2355
    %2437 = vmatprep.subr.mxu0 %v2360
    %2438 = vmatpush1.msra.mxu0 %v2359
    %2439 = vmatprep.subr.mxu0 %v2364
    %2440 = vmatpush1.msra.mxu0 %v2363
    %2441 = vmatprep.subr.mxu0 %v2368
    %2442 = vmatpush1.msra.mxu0 %v2367
    %2443 = vmatprep.subr.mxu0 %v2372
    %2444 = vmatpush1.msra.mxu0 %v2371
    %2445 = vmatprep.subr.mxu0 %v2376
    %2446 = vmatpush1.msra.mxu0 %v2375
    %2447 = vmatprep.subr.mxu0 %v2380
    %2448 = vmatpush1.msra.mxu0 %v2379
    %2449 = vmatprep.subr.mxu0 %v2384
    %2450 = vmatpush1.msra.mxu0 %v2383
    %2451 = vmatprep.subr.mxu0 %v2388
    %2452 = vmatpush1.msra.mxu0 %v2387
    %2453 = vmatprep.subr.mxu0 %v2392
    %2454 = vmatpush1.msra.mxu0 %v2391
    %2455 = vmatprep.subr.mxu0 %v2396
    %2456 = vmatpush1.msra.mxu0 %v2395
    %2457 = vmatprep.subr.mxu0 %v2400
    %2458 = vmatpush1.msra.mxu0 %v2399
    %2459 = vmatprep.subr.mxu0 %v2404
    %2460 = vmatpush1.msra.mxu0 %v2403
    %2461 = vmatprep.subr.mxu0 0.0
    %2462 = vmatpush1.msra.mxu0 0.0
    %2463 = vmatprep.subr.mxu0 0.0
    %2464 = vmatpush1.msra.mxu0 0.0
    %2465 = vmatprep.subr.mxu0 0.0
    %2466 = vmatpush1.msra.mxu0 0.0
    %2467 = vmatprep.subr.mxu0 0.0
    %2468 = vmatpush1.msra.mxu0 0.0
    %2469 = vmatprep.subr.mxu0 0.0
    %2470 = vmatpush1.msra.mxu0 0.0
    %2471 = vmatprep.subr.mxu0 0.0
    %2472 = vmatpush1.msra.mxu0 0.0
    %2473 = vmatprep.subr.mxu0 0.0
    %2474 = vmatpush1.msra.mxu0 0.0
    %2475 = vmatprep.subr.mxu0 0.0
    %2476 = vmatpush1.msra.mxu0 0.0
    %2477 = vmatprep.subr.mxu0 0.0
    %2478 = vmatpush1.msra.mxu0 0.0
    %2479 = vmatprep.subr.mxu0 0.0
    %2480 = vmatpush1.msra.mxu0 0.0
    %2481 = vmatprep.subr.mxu0 0.0
    %2482 = vmatpush1.msra.mxu0 0.0
    %2483 = vmatprep.subr.mxu0 0.0
    %2484 = vmatpush1.msra.mxu0 0.0
    %2485 = vmatprep.subr.mxu0 0.0
    %2486 = vmatpush1.msra.mxu0 0.0
    %2487 = vmatprep.subr.mxu0 0.0
    %2488 = vmatpush1.msra.mxu0 0.0
    %2489 = vmatprep.subr.mxu0 0.0
    %2490 = vmatpush1.msra.mxu0 0.0
    %2491 = vmatprep.subr.mxu0 0.0
    %2492 = vmatpush1.msra.mxu0 0.0
    %2493 = vmatprep.mubr.f32.mxu0 0.0
    %2494 = vmatmul.mubr.f32.gmra.mrb[0].mxu0 %v2341
    %v2495 = vpop.f32.mrb[0].mxu0
    %v2496 = vadd.f32 %v2412, %v2495
    %v2497 = vpop.f32.mrb[0].mxu0
    %v2498 = vadd.f32 %v2416, %v2497
    %2499 = vmatprep.mubr.f32.mxu0 0.0
    %2500 = vmatmul.mubr.f32.gmra.mrb[0].mxu0 %v2342
    %v2501 = vpop.f32.mrb[0].mxu0
    %v2502 = vadd.f32 %v2412, %v2501
    %v2503 = vpop.f32.mrb[0].mxu0
    %v2504 = vadd.f32 %v2416, %v2503
    %2505 = vdwg.mxu0
    %2506 = vmatprep.subr.mxu0 %v2346
    %2507 = vmatpush1.msra.mxu0 %v2345
    %2508 = vmatprep.subr.mxu0 %v2350
    %2509 = vmatpush1.msra.mxu0 %v2349
    %2510 = vmatprep.subr.mxu0 %v2354
    %2511 = vmatpush1.msra.mxu0 %v2353
    %2512 = vmatprep.subr.mxu0 %v2358
    %2513 = vmatpush1.msra.mxu0 %v2357
    %2514 = vmatprep.subr.mxu0 %v2362
    %2515 = vmatpush1.msra.mxu0 %v2361
    %2516 = vmatprep.subr.mxu0 %v2366
    %2517 = vmatpush1.msra.mxu0 %v2365
    %2518 = vmatprep.subr.mxu0 %v2370
    %2519 = vmatpush1.msra.mxu0 %v2369
    %2520 = vmatprep.subr.mxu0 %v2374
    %2521 = vmatpush1.msra.mxu0 %v2373
    %2522 = vmatprep.subr.mxu0 %v2378
    %2523 = vmatpush1.msra.mxu0 %v2377
    %2524 = vmatprep.subr.mxu0 %v2382
    %2525 = vmatpush1.msra.mxu0 %v2381
    %2526 = vmatprep.subr.mxu0 %v2386
    %2527 = vmatpush1.msra.mxu0 %v2385
    %2528 = vmatprep.subr.mxu0 %v2390
    %2529 = vmatpush1.msra.mxu0 %v2389
    %2530 = vmatprep.subr.mxu0 %v2394
    %2531 = vmatpush1.msra.mxu0 %v2393
    %2532 = vmatprep.subr.mxu0 %v2398
    %2533 = vmatpush1.msra.mxu0 %v2397
    %2534 = vmatprep.subr.mxu0 %v2402
    %2535 = vmatpush1.msra.mxu0 %v2401
    %2536 = vmatprep.subr.mxu0 %v2406
    %2537 = vmatpush1.msra.mxu0 %v2405
    %2538 = vmatprep.subr.mxu0 0.0
    %2539 = vmatpush1.msra.mxu0 0.0
    %2540 = vmatprep.subr.mxu0 0.0
    %2541 = vmatpush1.msra.mxu0 0.0
    %2542 = vmatprep.subr.mxu0 0.0
    %2543 = vmatpush1.msra.mxu0 0.0
    %2544 = vmatprep.subr.mxu0 0.0
    %2545 = vmatpush1.msra.mxu0 0.0
    %2546 = vmatprep.subr.mxu0 0.0
    %2547 = vmatpush1.msra.mxu0 0.0
    %2548 = vmatprep.subr.mxu0 0.0
    %2549 = vmatpush1.msra.mxu0 0.0
    %2550 = vmatprep.subr.mxu0 0.0
    %2551 = vmatpush1.msra.mxu0 0.0
    %2552 = vmatprep.subr.mxu0 0.0
    %2553 = vmatpush1.msra.mxu0 0.0
    %2554 = vmatprep.subr.mxu0 0.0
    %2555 = vmatpush1.msra.mxu0 0.0
    %2556 = vmatprep.subr.mxu0 0.0
    %2557 = vmatpush1.msra.mxu0 0.0
    %2558 = vmatprep.subr.mxu0 0.0
    %2559 = vmatpush1.msra.mxu0 0.0
    %2560 = vmatprep.subr.mxu0 0.0
    %2561 = vmatpush1.msra.mxu0 0.0
    %2562 = vmatprep.subr.mxu0 0.0
    %2563 = vmatpush1.msra.mxu0 0.0
    %2564 = vmatprep.subr.mxu0 0.0
    %2565 = vmatpush1.msra.mxu0 0.0
    %2566 = vmatprep.subr.mxu0 0.0
    %2567 = vmatpush1.msra.mxu0 0.0
    %2568 = vmatprep.subr.mxu0 0.0
    %2569 = vmatpush1.msra.mxu0 0.0
    %2570 = vmatprep.mubr.f32.mxu0 0.0
    %2571 = vmatmul.mubr.f32.gmra.mrb[0].mxu0 %v2341
    %v2572 = vpop.f32.mrb[0].mxu0
    %v2573 = vadd.f32 %v2420, %v2572
    %v2574 = vpop.f32.mrb[0].mxu0
    %v2575 = vadd.f32 %v2424, %v2574
    %2576 = vmatprep.mubr.f32.mxu0 0.0
    %2577 = vmatmul.mubr.f32.gmra.mrb[0].mxu0 %v2342
    %v2578 = vpop.f32.mrb[0].mxu0
    %v2579 = vadd.f32 %v2420, %v2578
    %v2580 = vpop.f32.mrb[0].mxu0
    %v2581 = vadd.f32 %v2424, %v2580
    %2582 = vdwg.mxu0
    %v2583 = vmul.f32 %v2496, 0.5
    %v2584 = vmul.f32 %v2498, 0.5
    %v2585 = vmul.f32 %v2573, 0.5
    %v2586 = vmul.f32 %v2575, 0.5
    %v2587 = vmul.f32 %v2502, 0.5
    %v2588 = vmul.f32 %v2504, 0.5
    %v2589 = vmul.f32 %v2579, 0.5
    %v2590 = vmul.f32 %v2581, 0.5
    %v2591 = vmul.f32 %v2496, 0.044715
    %v2592 = vmul.f32 %v2498, 0.044715
    %v2593 = vmul.f32 %v2573, 0.044715
    %v2594 = vmul.f32 %v2575, 0.044715
    %v2595 = vmul.f32 %v2502, 0.044715
    %v2596 = vmul.f32 %v2504, 0.044715
    %v2597 = vmul.f32 %v2579, 0.044715
    %v2598 = vmul.f32 %v2581, 0.044715
    %v2599 = vmul.f32 %v2591, %v2496
    %v2600 = vmul.f32 %v2592, %v2498
    %v2601 = vmul.f32 %v2593, %v2573
    %v2602 = vmul.f32 %v2594, %v2575
    %v2603 = vmul.f32 %v2595, %v2502
    %v2604 = vmul.f32 %v2596, %v2504
    %v2605 = vmul.f32 %v2597, %v2579
    %v2606 = vmul.f32 %v2598, %v2581
    %v2607 = vmul.f32 %v2599, %v2496
    %v2608 = vmul.f32 %v2600, %v2498
    %v2609 = vmul.f32 %v2601, %v2573
    %v2610 = vmul.f32 %v2602, %v2575
    %v2611 = vmul.f32 %v2603, %v2502
    %v2612 = vmul.f32 %v2604, %v2504
    %v2613 = vmul.f32 %v2605, %v2579
    %v2614 = vmul.f32 %v2606, %v2581
    %v2615 = vadd.f32 %v2496, %v2607
    %v2616 = vadd.f32 %v2498, %v2608
    %v2617 = vadd.f32 %v2573, %v2609
    %v2618 = vadd.f32 %v2575, %v2610
    %v2619 = vadd.f32 %v2502, %v2611
    %v2620 = vadd.f32 %v2504, %v2612
    %v2621 = vadd.f32 %v2579, %v2613
    %v2622 = vadd.f32 %v2581, %v2614
    %v2623 = vmul.f32 %v2615, 0.7978846
    %v2624 = vmul.f32 %v2616, 0.7978846
    %v2625 = vmul.f32 %v2617, 0.7978846
    %v2626 = vmul.f32 %v2618, 0.7978846
    %v2627 = vmul.f32 %v2619, 0.7978846
    %v2628 = vmul.f32 %v2620, 0.7978846
    %v2629 = vmul.f32 %v2621, 0.7978846
    %v2630 = vmul.f32 %v2622, 0.7978846
    %v2631 = vtanh.pop %v2623
    %v2632 = vtanh.pop %v2624
    %v2633 = vtanh.pop %v2625
    %v2634 = vtanh.pop %v2626
    %v2635 = vtanh.pop %v2627
    %v2636 = vtanh.pop %v2628
    %v2637 = vtanh.pop %v2629
    %v2638 = vtanh.pop %v2630
    %v2639 = vadd.f32 %v2631, 1.0
    %v2640 = vadd.f32 %v2632, 1.0
    %v2641 = vadd.f32 %v2633, 1.0
    %v2642 = vadd.f32 %v2634, 1.0
    %v2643 = vadd.f32 %v2635, 1.0
    %v2644 = vadd.f32 %v2636, 1.0
    %v2645 = vadd.f32 %v2637, 1.0
    %v2646 = vadd.f32 %v2638, 1.0
    %v2647 = vmul.f32 %v2583, %v2639
    %v2648 = vmul.f32 %v2584, %v2640
    %v2649 = vmul.f32 %v2585, %v2641
    %v2650 = vmul.f32 %v2586, %v2642
    %v2651 = vmul.f32 %v2587, %v2643
    %v2652 = vmul.f32 %v2588, %v2644
    %v2653 = vmul.f32 %v2589, %v2645
    %v2654 = vmul.f32 %v2590, %v2646
    %v2655 = vld [vmem:[#allocation11] sm:$0xff]
    %v2656 = vld [vmem:[#allocation11 + $0x8] sm:$0xff]
    %v2657 = vld [vmem:[#allocation11 + $0x10] sm:$0xff]
    %v2658 = vld [vmem:[#allocation11 + $0x18] sm:$0xff]
    %v2659 = vld [vmem:[#allocation11 + $0x20] sm:$0xff]
    %v2660 = vld [vmem:[#allocation11 + $0x28] sm:$0xff]
    %v2661 = vld [vmem:[#allocation11 + $0x30] sm:$0xff]
    %v2662 = vld [vmem:[#allocation11 + $0x38] sm:$0xff]
    %v2663 = vld [vmem:[#allocation11 + $0x40] sm:$0xff]
    %v2664 = vld [vmem:[#allocation11 + $0x48] sm:$0xff]
    %v2665 = vld [vmem:[#allocation11 + $0x50] sm:$0xff]
    %v2666 = vld [vmem:[#allocation11 + $0x58] sm:$0xff]
    %v2667 = vld [vmem:[#allocation11 + $0x60] sm:$0xff]
    %v2668 = vld [vmem:[#allocation11 + $0x68] sm:$0xff]
    %v2669 = vld [vmem:[#allocation11 + $0x70] sm:$0xff]
    %v2670 = vld [vmem:[#allocation11 + $0x78] sm:$0xff]
    %v2671 = vld [vmem:[#allocation11 + $0x80] sm:$0xff]
    %v2672 = vld [vmem:[#allocation11 + $0x88] sm:$0xff]
    %v2673 = vld [vmem:[#allocation11 + $0x90] sm:$0xff]
    %v2674 = vld [vmem:[#allocation11 + $0x98] sm:$0xff]
    %v2675 = vld [vmem:[#allocation11 + $0xa0] sm:$0xff]
    %v2676 = vld [vmem:[#allocation11 + $0xa8] sm:$0xff]
    %v2677 = vld [vmem:[#allocation11 + $0xb0] sm:$0xff]
    %v2678 = vld [vmem:[#allocation11 + $0xb8] sm:$0xff]
    %v2679 = vld [vmem:[#allocation11 + $0xc0] sm:$0xff]
    %v2680 = vld [vmem:[#allocation11 + $0xc8] sm:$0xff]
    %v2681 = vld [vmem:[#allocation11 + $0xd0] sm:$0xff]
    %v2682 = vld [vmem:[#allocation11 + $0xd8] sm:$0xff]
    %v2683 = vld [vmem:[#allocation11 + $0xe0] sm:$0xff]
    %v2684 = vld [vmem:[#allocation11 + $0xe8] sm:$0xff]
    %v2685 = vld [vmem:[#allocation11 + $0xf0] sm:$0xff]
    %v2686 = vld [vmem:[#allocation11 + $0xf8] sm:$0xff]
    %v2687 = vld [vmem:[#allocation11 + $0x100] sm:$0xff]
    %v2688 = vld [vmem:[#allocation11 + $0x108] sm:$0xff]
    %v2689 = vld [vmem:[#allocation11 + $0x110] sm:$0xff]
    %v2690 = vld [vmem:[#allocation11 + $0x118] sm:$0xff]
    %v2691 = vld [vmem:[#allocation11 + $0x120] sm:$0xff]
    %v2692 = vld [vmem:[#allocation11 + $0x128] sm:$0xff]
    %v2693 = vld [vmem:[#allocation11 + $0x130] sm:$0xff]
    %v2694 = vld [vmem:[#allocation11 + $0x138] sm:$0xff]
    %v2695 = vld [vmem:[#allocation11 + $0x140] sm:$0xff]
    %v2696 = vld [vmem:[#allocation11 + $0x148] sm:$0xff]
    %v2697 = vld [vmem:[#allocation11 + $0x150] sm:$0xff]
    %v2698 = vld [vmem:[#allocation11 + $0x158] sm:$0xff]
    %v2699 = vld [vmem:[#allocation11 + $0x160] sm:$0xff]
    %v2700 = vld [vmem:[#allocation11 + $0x168] sm:$0xff]
    %v2701 = vld [vmem:[#allocation11 + $0x170] sm:$0xff]
    %v2702 = vld [vmem:[#allocation11 + $0x178] sm:$0xff]
    %v2703 = vld [vmem:[#allocation11 + $0x180] sm:$0xff]
    %v2704 = vld [vmem:[#allocation11 + $0x188] sm:$0xff]
    %v2705 = vld [vmem:[#allocation11 + $0x190] sm:$0xff]
    %v2706 = vld [vmem:[#allocation11 + $0x198] sm:$0xff]
    %v2707 = vld [vmem:[#allocation11 + $0x1a0] sm:$0xff]
    %v2708 = vld [vmem:[#allocation11 + $0x1a8] sm:$0xff]
    %v2709 = vld [vmem:[#allocation11 + $0x1b0] sm:$0xff]
    %v2710 = vld [vmem:[#allocation11 + $0x1b8] sm:$0xff]
    %v2711 = vld [vmem:[#allocation11 + $0x1c0] sm:$0xff]
    %v2712 = vld [vmem:[#allocation11 + $0x1c8] sm:$0xff]
    %v2713 = vld [vmem:[#allocation11 + $0x1d0] sm:$0xff]
    %v2714 = vld [vmem:[#allocation11 + $0x1d8] sm:$0xff]
    %v2715 = vld [vmem:[#allocation11 + $0x1e0] sm:$0xff]
    %v2716 = vld [vmem:[#allocation11 + $0x1e8] sm:$0xff]
    %v2717 = vld [vmem:[#allocation11 + $0x1f0] sm:$0xff]
    %v2718 = vld [vmem:[#allocation11 + $0x1f8] sm:$0xff]
    %v2719 = vld [vmem:[#allocation13] sm:$0x1]
    %v2721 = vlaneseq
    %v2722 = vshrl.u32 %v2721, 7
    %v2723 = vsub.s32 0, %v2722
    %v2724 = vrot.slane %v2719, %v2723
    %2726 = vmatprep.subr.mxu0 0.0
    %2727 = vmatpush1.msra.mxu0 %v2655
    %2728 = vmatprep.subr.mxu0 0.0
    %2729 = vmatpush1.msra.mxu0 %v2656
    %2730 = vmatprep.subr.mxu0 0.0
    %2731 = vmatpush1.msra.mxu0 %v2657
    %2732 = vmatprep.subr.mxu0 0.0
    %2733 = vmatpush1.msra.mxu0 %v2658
    %2734 = vmatprep.subr.mxu0 0.0
    %2735 = vmatpush1.msra.mxu0 %v2659
    %2736 = vmatprep.subr.mxu0 0.0
    %2737 = vmatpush1.msra.mxu0 %v2660
    %2738 = vmatprep.subr.mxu0 0.0
    %2739 = vmatpush1.msra.mxu0 %v2661
    %2740 = vmatprep.subr.mxu0 0.0
    %2741 = vmatpush1.msra.mxu0 %v2662
    %2742 = vmatprep.subr.mxu0 0.0
    %2743 = vmatpush1.msra.mxu0 %v2663
    %2744 = vmatprep.subr.mxu0 0.0
    %2745 = vmatpush1.msra.mxu0 %v2664
    %2746 = vmatprep.subr.mxu0 0.0
    %2747 = vmatpush1.msra.mxu0 %v2665
    %2748 = vmatprep.subr.mxu0 0.0
    %2749 = vmatpush1.msra.mxu0 %v2666
    %2750 = vmatprep.subr.mxu0 0.0
    %2751 = vmatpush1.msra.mxu0 %v2667
    %2752 = vmatprep.subr.mxu0 0.0
    %2753 = vmatpush1.msra.mxu0 %v2668
    %2754 = vmatprep.subr.mxu0 0.0
    %2755 = vmatpush1.msra.mxu0 %v2669
    %2756 = vmatprep.subr.mxu0 0.0
    %2757 = vmatpush1.msra.mxu0 %v2670
    %2758 = vmatprep.subr.mxu0 0.0
    %2759 = vmatpush1.msra.mxu0 %v2671
    %2760 = vmatprep.subr.mxu0 0.0
    %2761 = vmatpush1.msra.mxu0 %v2672
    %2762 = vmatprep.subr.mxu0 0.0
    %2763 = vmatpush1.msra.mxu0 %v2673
    %2764 = vmatprep.subr.mxu0 0.0
    %2765 = vmatpush1.msra.mxu0 %v2674
    %2766 = vmatprep.subr.mxu0 0.0
    %2767 = vmatpush1.msra.mxu0 %v2675
    %2768 = vmatprep.subr.mxu0 0.0
    %2769 = vmatpush1.msra.mxu0 %v2676
    %2770 = vmatprep.subr.mxu0 0.0
    %2771 = vmatpush1.msra.mxu0 %v2677
    %2772 = vmatprep.subr.mxu0 0.0
    %2773 = vmatpush1.msra.mxu0 %v2678
    %2774 = vmatprep.subr.mxu0 0.0
    %2775 = vmatpush1.msra.mxu0 %v2679
    %2776 = vmatprep.subr.mxu0 0.0
    %2777 = vmatpush1.msra.mxu0 %v2680
    %2778 = vmatprep.subr.mxu0 0.0
    %2779 = vmatpush1.msra.mxu0 %v2681
    %2780 = vmatprep.subr.mxu0 0.0
    %2781 = vmatpush1.msra.mxu0 %v2682
    %2782 = vmatprep.subr.mxu0 0.0
    %2783 = vmatpush1.msra.mxu0 %v2683
    %2784 = vmatprep.subr.mxu0 0.0
    %2785 = vmatpush1.msra.mxu0 %v2684
    %2786 = vmatprep.subr.mxu0 0.0
    %2787 = vmatpush1.msra.mxu0 %v2685
    %2788 = vmatprep.subr.mxu0 0.0
    %2789 = vmatpush1.msra.mxu0 %v2686
    %2790 = vmatprep.mubr.f32.mxu0 %v2648
    %2791 = vmatmul.mubr.f32.gmra.mrb[0].mxu0 %v2647
    %v2792 = vpop.f32.mrb[0].mxu0
    %v2793 = vadd.f32 %v2724, %v2792
    %v2794 = vpop.f32.mrb[0].mxu0
    %2795 = vmatprep.mubr.f32.mxu0 %v2652
    %2796 = vmatmul.mubr.f32.gmra.mrb[0].mxu0 %v2651
    %v2797 = vpop.f32.mrb[0].mxu0
    %v2798 = vadd.f32 %v2724, %v2797
    %v2799 = vpop.f32.mrb[0].mxu0
    %2800 = vdwg.mxu0
    %2801 = vmatprep.subr.mxu0 0.0
    %2802 = vmatpush1.msra.mxu0 %v2687
    %2803 = vmatprep.subr.mxu0 0.0
    %2804 = vmatpush1.msra.mxu0 %v2688
    %2805 = vmatprep.subr.mxu0 0.0
    %2806 = vmatpush1.msra.mxu0 %v2689
    %2807 = vmatprep.subr.mxu0 0.0
    %2808 = vmatpush1.msra.mxu0 %v2690
    %2809 = vmatprep.subr.mxu0 0.0
    %2810 = vmatpush1.msra.mxu0 %v2691
    %2811 = vmatprep.subr.mxu0 0.0
    %2812 = vmatpush1.msra.mxu0 %v2692
    %2813 = vmatprep.subr.mxu0 0.0
    %2814 = vmatpush1.msra.mxu0 %v2693
    %2815 = vmatprep.subr.mxu0 0.0
    %2816 = vmatpush1.msra.mxu0 %v2694
    %2817 = vmatprep.subr.mxu0 0.0
    %2818 = vmatpush1.msra.mxu0 %v2695
    %2819 = vmatprep.subr.mxu0 0.0
    %2820 = vmatpush1.msra.mxu0 %v2696
    %2821 = vmatprep.subr.mxu0 0.0
    %2822 = vmatpush1.msra.mxu0 %v2697
    %2823 = vmatprep.subr.mxu0 0.0
    %2824 = vmatpush1.msra.mxu0 %v2698
    %2825 = vmatprep.subr.mxu0 0.0
    %2826 = vmatpush1.msra.mxu0 %v2699
    %2827 = vmatprep.subr.mxu0 0.0
    %2828 = vmatpush1.msra.mxu0 %v2700
    %2829 = vmatprep.subr.mxu0 0.0
    %2830 = vmatpush1.msra.mxu0 %v2701
    %2831 = vmatprep.subr.mxu0 0.0
    %2832 = vmatpush1.msra.mxu0 %v2702
    %2833 = vmatprep.subr.mxu0 0.0
    %2834 = vmatpush1.msra.mxu0 %v2703
    %2835 = vmatprep.subr.mxu0 0.0
    %2836 = vmatpush1.msra.mxu0 %v2704
    %2837 = vmatprep.subr.mxu0 0.0
    %2838 = vmatpush1.msra.mxu0 %v2705
    %2839 = vmatprep.subr.mxu0 0.0
    %2840 = vmatpush1.msra.mxu0 %v2706
    %2841 = vmatprep.subr.mxu0 0.0
    %2842 = vmatpush1.msra.mxu0 %v2707
    %2843 = vmatprep.subr.mxu0 0.0
    %2844 = vmatpush1.msra.mxu0 %v2708
    %2845 = vmatprep.subr.mxu0 0.0
    %2846 = vmatpush1.msra.mxu0 %v2709
    %2847 = vmatprep.subr.mxu0 0.0
    %2848 = vmatpush1.msra.mxu0 %v2710
    %2849 = vmatprep.subr.mxu0 0.0
    %2850 = vmatpush1.msra.mxu0 %v2711
    %2851 = vmatprep.subr.mxu0 0.0
    %2852 = vmatpush1.msra.mxu0 %v2712
    %2853 = vmatprep.subr.mxu0 0.0
    %2854 = vmatpush1.msra.mxu0 %v2713
    %2855 = vmatprep.subr.mxu0 0.0
    %2856 = vmatpush1.msra.mxu0 %v2714
    %2857 = vmatprep.subr.mxu0 0.0
    %2858 = vmatpush1.msra.mxu0 %v2715
    %2859 = vmatprep.subr.mxu0 0.0
    %2860 = vmatpush1.msra.mxu0 %v2716
    %2861 = vmatprep.subr.mxu0 0.0
    %2862 = vmatpush1.msra.mxu0 %v2717
    %2863 = vmatprep.subr.mxu0 0.0
    %2864 = vmatpush1.msra.mxu0 %v2718
    %2865 = vmatprep.mubr.f32.mxu0 %v2650
    %2866 = vmatmul.mubr.f32.gmra.mrb[0].mxu0 %v2649
    %v2867 = vpop.f32.mrb[0].mxu0
    %v2868 = vadd.f32 %v2793, %v2867
    %v2869 = vpop.f32.mrb[0].mxu0
    %2870 = vmatprep.mubr.f32.mxu0 %v2654
    %2871 = vmatmul.mubr.f32.gmra.mrb[0].mxu0 %v2653
    %v2872 = vpop.f32.mrb[0].mxu0
    %v2873 = vadd.f32 %v2798, %v2872
    %v2874 = vpop.f32.mrb[0].mxu0
    %2875 = vdwg.mxu0
    %v2876 = vadd.f32 %v2868, %v2341
    %v2877 = vadd.f32 %v2873, %v2342
    %v2878 = vld [vmem:[%s12] sm:$0x1]
    %v2879 = vld [vmem:[%s13] sm:$0x1]
    %2880 = vadd.xlane.f32.xlu0 %v2876
    %v2881 = vpop.xlane.xlu0 %2880
    %2882 = vadd.xlane.f32.xlu0 %v2877
    %v2883 = vpop.xlane.xlu0 %2882
    %v2884 = vmul.f32 %v2881, %v2308
    %v2885 = vmul.f32 %v2883, %v2308
    %v2886 = vsub.f32 %v2876, %v2884
    %v2887 = vsub.f32 %v2877, %v2885
    %v2888 = vmul.f32 %v2886, %v2886
    %v2889 = vmul.f32 %v2887, %v2887
    %2890 = vadd.xlane.f32.xlu0 %v2888
    %v2891 = vpop.xlane.xlu0 %2890
    %2892 = vadd.xlane.f32.xlu0 %v2889
    %v2893 = vpop.xlane.xlu0 %2892
    %v2894 = vmul.f32 %v2891, %v2308
    %v2895 = vmul.f32 %v2893, %v2308
    %v2896 = vadd.f32 %v2894, 1e-05
    %v2897 = vadd.f32 %v2895, 1e-05
    %v2898 = vrsqrt.pop %v2896
    %v2899 = vrsqrt.pop %v2897
    %v2900 = vmul.f32 %v2886, %v2898
    %v2901 = vmul.f32 %v2887, %v2899
    %v2903 = vlaneseq
    %v2904 = vshrl.u32 %v2903, 7
    %v2905 = vsub.s32 0, %v2904
    %v2906 = vrot.slane %v2878, %v2905
    %v2908 = vmul.f32 %v2900, %v2906
    %v2909 = vmul.f32 %v2901, %v2906
    %v2911 = vlaneseq
    %v2912 = vshrl.u32 %v2911, 7
    %v2913 = vsub.s32 0, %v2912
    %v2914 = vrot.slane %v2879, %v2913
    %v2916 = vadd.f32 %v2908, %v2914
    %v2917 = vadd.f32 %v2909, %v2914
    %s2918 = scalar_lea.vmem [#allocation5], 384
    %v2919 = vld [vmem:[%s2918] sm:$0xff]
    %v2920 = vld [vmem:[%s2918 + $0x8] sm:$0xff]
    %v2921 = vld [vmem:[%s2918 + $0x10] sm:$0xff]
    %v2922 = vld [vmem:[%s2918 + $0x18] sm:$0xff]
    %v2923 = vld [vmem:[%s2918 + $0x20] sm:$0xff]
    %v2924 = vld [vmem:[%s2918 + $0x28] sm:$0xff]
    %v2925 = vld [vmem:[%s2918 + $0x30] sm:$0xff]
    %v2926 = vld [vmem:[%s2918 + $0x38] sm:$0xff]
    %v2927 = vld [vmem:[%s2918 + $0x40] sm:$0xff]
    %v2928 = vld [vmem:[%s2918 + $0x48] sm:$0xff]
    %v2929 = vld [vmem:[%s2918 + $0x50] sm:$0xff]
    %v2930 = vld [vmem:[%s2918 + $0x58] sm:$0xff]
    %v2931 = vld [vmem:[%s2918 + $0x60] sm:$0xff]
    %v2932 = vld [vmem:[%s2918 + $0x68] sm:$0xff]
    %v2933 = vld [vmem:[%s2918 + $0x70] sm:$0xff]
    %v2934 = vld [vmem:[%s2918 + $0x78] sm:$0xff]
    %v2935 = vld [vmem:[%s2918 + $0x80] sm:$0xff]
    %v2936 = vld [vmem:[%s2918 + $0x88] sm:$0xff]
    %v2937 = vld [vmem:[%s2918 + $0x90] sm:$0xff]
    %v2938 = vld [vmem:[%s2918 + $0x98] sm:$0xff]
    %v2939 = vld [vmem:[%s2918 + $0xa0] sm:$0xff]
    %v2940 = vld [vmem:[%s2918 + $0xa8] sm:$0xff]
    %v2941 = vld [vmem:[%s2918 + $0xb0] sm:$0xff]
    %v2942 = vld [vmem:[%s2918 + $0xb8] sm:$0xff]
    %v2943 = vld [vmem:[%s2918 + $0xc0] sm:$0xff]
    %v2944 = vld [vmem:[%s2918 + $0xc8] sm:$0xff]
    %v2945 = vld [vmem:[%s2918 + $0xd0] sm:$0xff]
    %v2946 = vld [vmem:[%s2918 + $0xd8] sm:$0xff]
    %v2947 = vld [vmem:[%s2918 + $0xe0] sm:$0xff]
    %v2948 = vld [vmem:[%s2918 + $0xe8] sm:$0xff]
    %v2949 = vld [vmem:[%s2918 + $0xf0] sm:$0xff]
    %v2950 = vld [vmem:[%s2918 + $0xf8] sm:$0xff]
    %v2951 = vld [vmem:[%s2918 + $0x100] sm:$0xff]
    %v2952 = vld [vmem:[%s2918 + $0x108] sm:$0xff]
    %v2953 = vld [vmem:[%s2918 + $0x110] sm:$0xff]
    %v2954 = vld [vmem:[%s2918 + $0x118] sm:$0xff]
    %v2955 = vld [vmem:[%s2918 + $0x120] sm:$0xff]
    %v2956 = vld [vmem:[%s2918 + $0x128] sm:$0xff]
    %v2957 = vld [vmem:[%s2918 + $0x130] sm:$0xff]
    %v2958 = vld [vmem:[%s2918 + $0x138] sm:$0xff]
    %v2959 = vld [vmem:[%s2918 + $0x140] sm:$0xff]
    %v2960 = vld [vmem:[%s2918 + $0x148] sm:$0xff]
    %v2961 = vld [vmem:[%s2918 + $0x150] sm:$0xff]
    %v2962 = vld [vmem:[%s2918 + $0x158] sm:$0xff]
    %v2963 = vld [vmem:[%s2918 + $0x160] sm:$0xff]
    %v2964 = vld [vmem:[%s2918 + $0x168] sm:$0xff]
    %v2965 = vld [vmem:[%s2918 + $0x170] sm:$0xff]
    %v2966 = vld [vmem:[%s2918 + $0x178] sm:$0xff]
    %s2967 = scalar_lea.vmem %s3, 3
    %v2968 = vld [vmem:[%s2967] sm:$0x7]
    %v2970 = vlaneseq
    %v2971 = vshrl.u32 %v2970, 7
    %v2972 = vsub.s32 0, %v2971
    %v2973 = vrot.slane %v2968, %v2972
    %v2974 = vlaneseq
    %v2975 = vshrl.u32 %v2974, 7
    %v2976 = vsub.s32 1, %v2975
    %v2977 = vrot.slane %v2968, %v2976
    %v2978 = vlaneseq
    %v2979 = vshrl.u32 %v2978, 7
    %v2980 = vsub.s32 2, %v2979
    %v2981 = vrot.slane %v2968, %v2980
    %2985 = vmatprep.subr.mxu0 %v2920
    %2986 = vmatpush1.msra.mxu0 %v2919
    %2987 = vmatprep.subr.mxu0 %v2923
    %2988 = vmatpush1.msra.mxu0 %v2922
    %2989 = vmatprep.subr.mxu0 %v2926
    %2990 = vmatpush1.msra.mxu0 %v2925
    %2991 = vmatprep.subr.mxu0 %v2929
    %2992 = vmatpush1.msra.mxu0 %v2928
    %2993 = vmatprep.subr.mxu0 %v2932
    %2994 = vmatpush1.msra.mxu0 %v2931
    %2995 = vmatprep.subr.mxu0 %v2935
    %2996 = vmatpush1.msra.mxu0 %v2934
    %2997 = vmatprep.subr.mxu0 %v2938
    %2998 = vmatpush1.msra.mxu0 %v2937
    %2999 = vmatprep.subr.mxu0 %v2941
    %3000 = vmatpush1.msra.mxu0 %v2940
    %3001 = vmatprep.subr.mxu0 %v2944
    %3002 = vmatpush1.msra.mxu0 %v2943
    %3003 = vmatprep.subr.mxu0 %v2947
    %3004 = vmatpush1.msra.mxu0 %v2946
    %3005 = vmatprep.subr.mxu0 %v2950
    %3006 = vmatpush1.msra.mxu0 %v2949
    %3007 = vmatprep.subr.mxu0 %v2953
    %3008 = vmatpush1.msra.mxu0 %v2952
    %3009 = vmatprep.subr.mxu0 %v2956
    %3010 = vmatpush1.msra.mxu0 %v2955
    %3011 = vmatprep.subr.mxu0 %v2959
    %3012 = vmatpush1.msra.mxu0 %v2958
    %3013 = vmatprep.subr.mxu0 %v2962
    %3014 = vmatpush1.msra.mxu0 %v2961
    %3015 = vmatprep.subr.mxu0 %v2965
    %3016 = vmatpush1.msra.mxu0 %v2964
    %3017 = vmatprep.subr.mxu0 0.0
    %3018 = vmatpush1.msra.mxu0 0.0
    %3019 = vmatprep.subr.mxu0 0.0
    %3020 = vmatpush1.msra.mxu0 0.0
    %3021 = vmatprep.subr.mxu0 0.0
    %3022 = vmatpush1.msra.mxu0 0.0
    %3023 = vmatprep.subr.mxu0 0.0
    %3024 = vmatpush1.msra.mxu0 0.0
    %3025 = vmatprep.subr.mxu0 0.0
    %3026 = vmatpush1.msra.mxu0 0.0
    %3027 = vmatprep.subr.mxu0 0.0
    %3028 = vmatpush1.msra.mxu0 0.0
    %3029 = vmatprep.subr.mxu0 0.0
    %3030 = vmatpush1.msra.mxu0 0.0
    %3031 = vmatprep.subr.mxu0 0.0
    %3032 = vmatpush1.msra.mxu0 0.0
    %3033 = vmatprep.subr.mxu0 0.0
    %3034 = vmatpush1.msra.mxu0 0.0
    %3035 = vmatprep.subr.mxu0 0.0
    %3036 = vmatpush1.msra.mxu0 0.0
    %3037 = vmatprep.subr.mxu0 0.0
    %3038 = vmatpush1.msra.mxu0 0.0
    %3039 = vmatprep.subr.mxu0 0.0
    %3040 = vmatpush1.msra.mxu0 0.0
    %3041 = vmatprep.subr.mxu0 0.0
    %3042 = vmatpush1.msra.mxu0 0.0
    %3043 = vmatprep.subr.mxu0 0.0
    %3044 = vmatpush1.msra.mxu0 0.0
    %3045 = vmatprep.subr.mxu0 0.0
    %3046 = vmatpush1.msra.mxu0 0.0
    %3047 = vmatprep.subr.mxu0 0.0
    %3048 = vmatpush1.msra.mxu0 0.0
    %3049 = vmatprep.mubr.f32.mxu0 0.0
    %3050 = vmatmul.mubr.f32.gmra.mrb[0].mxu0 %v2916
    %v3051 = vpop.f32.mrb[0].mxu0
    %v3052 = vadd.f32 %v2973, %v3051
    %v3053 = vpop.f32.mrb[0].mxu0
    %v3054 = vadd.f32 %v2977, %v3053
    %3055 = vmatprep.mubr.f32.mxu0 0.0
    %3056 = vmatmul.mubr.f32.gmra.mrb[0].mxu0 %v2917
    %v3057 = vpop.f32.mrb[0].mxu0
    %v3058 = vadd.f32 %v2973, %v3057
    %v3059 = vpop.f32.mrb[0].mxu0
    %v3060 = vadd.f32 %v2977, %v3059
    %3061 = vdwg.mxu0
    %3062 = vmatprep.subr.mxu0 0.0
    %3063 = vmatpush1.msra.mxu0 %v2921
    %3064 = vmatprep.subr.mxu0 0.0
    %3065 = vmatpush1.msra.mxu0 %v2924
    %3066 = vmatprep.subr.mxu0 0.0
    %3067 = vmatpush1.msra.mxu0 %v2927
    %3068 = vmatprep.subr.mxu0 0.0
    %3069 = vmatpush1.msra.mxu0 %v2930
    %3070 = vmatprep.subr.mxu0 0.0
    %3071 = vmatpush1.msra.mxu0 %v2933
    %3072 = vmatprep.subr.mxu0 0.0
    %3073 = vmatpush1.msra.mxu0 %v2936
    %3074 = vmatprep.subr.mxu0 0.0
    %3075 = vmatpush1.msra.mxu0 %v2939
    %3076 = vmatprep.subr.mxu0 0.0
    %3077 = vmatpush1.msra.mxu0 %v2942
    %3078 = vmatprep.subr.mxu0 0.0
    %3079 = vmatpush1.msra.mxu0 %v2945
    %3080 = vmatprep.subr.mxu0 0.0
    %3081 = vmatpush1.msra.mxu0 %v2948
    %3082 = vmatprep.subr.mxu0 0.0
    %3083 = vmatpush1.msra.mxu0 %v2951
    %3084 = vmatprep.subr.mxu0 0.0
    %3085 = vmatpush1.msra.mxu0 %v2954
    %3086 = vmatprep.subr.mxu0 0.0
    %3087 = vmatpush1.msra.mxu0 %v2957
    %3088 = vmatprep.subr.mxu0 0.0
    %3089 = vmatpush1.msra.mxu0 %v2960
    %3090 = vmatprep.subr.mxu0 0.0
    %3091 = vmatpush1.msra.mxu0 %v2963
    %3092 = vmatprep.subr.mxu0 0.0
    %3093 = vmatpush1.msra.mxu0 %v2966
    %3094 = vmatprep.subr.mxu0 0.0
    %3095 = vmatpush1.msra.mxu0 0.0
    %3096 = vmatprep.subr.mxu0 0.0
    %3097 = vmatpush1.msra.mxu0 0.0
    %3098 = vmatprep.subr.mxu0 0.0
    %3099 = vmatpush1.msra.mxu0 0.0
    %3100 = vmatprep.subr.mxu0 0.0
    %3101 = vmatpush1.msra.mxu0 0.0
    %3102 = vmatprep.subr.mxu0 0.0
    %3103 = vmatpush1.msra.mxu0 0.0
    %3104 = vmatprep.subr.mxu0 0.0
    %3105 = vmatpush1.msra.mxu0 0.0
    %3106 = vmatprep.subr.mxu0 0.0
    %3107 = vmatpush1.msra.mxu0 0.0
    %3108 = vmatprep.subr.mxu0 0.0
    %3109 = vmatpush1.msra.mxu0 0.0
    %3110 = vmatprep.subr.mxu0 0.0
    %3111 = vmatpush1.msra.mxu0 0.0
    %3112 = vmatprep.subr.mxu0 0.0
    %3113 = vmatpush1.msra.mxu0 0.0
    %3114 = vmatprep.subr.mxu0 0.0
    %3115 = vmatpush1.msra.mxu0 0.0
    %3116 = vmatprep.subr.mxu0 0.0
    %3117 = vmatpush1.msra.mxu0 0.0
    %3118 = vmatprep.subr.mxu0 0.0
    %3119 = vmatpush1.msra.mxu0 0.0
    %3120 = vmatprep.subr.mxu0 0.0
    %3121 = vmatpush1.msra.mxu0 0.0
    %3122 = vmatprep.subr.mxu0 0.0
    %3123 = vmatpush1.msra.mxu0 0.0
    %3124 = vmatprep.subr.mxu0 0.0
    %3125 = vmatpush1.msra.mxu0 0.0
    %3126 = vmatprep.mubr.f32.mxu0 0.0
    %3127 = vmatmul.mubr.f32.gmra.mrb[0].mxu0 %v2916
    %v3128 = vpop.f32.mrb[0].mxu0
    %v3129 = vadd.f32 %v2981, %v3128
    %v3130 = vpop.f32.mrb[0].mxu0
    %3131 = vmatprep.mubr.f32.mxu0 0.0
    %3132 = vmatmul.mubr.f32.gmra.mrb[0].mxu0 %v2917
    %v3133 = vpop.f32.mrb[0].mxu0
    %v3134 = vadd.f32 %v2981, %v3133
    %v3135 = vpop.f32.mrb[0].mxu0
    %3136 = vdwg.mxu0
    %s3137 = scalar_lea.vmem [#allocation7], 128
    %v3138 = vld [vmem:[%s3137] sm:$0xff]
    %v3139 = vld [vmem:[%s3137 + $0x8] sm:$0xff]
    %v3140 = vld [vmem:[%s3137 + $0x10] sm:$0xff]
    %v3141 = vld [vmem:[%s3137 + $0x18] sm:$0xff]
    %v3142 = vld [vmem:[%s3137 + $0x20] sm:$0xff]
    %v3143 = vld [vmem:[%s3137 + $0x28] sm:$0xff]
    %v3144 = vld [vmem:[%s3137 + $0x30] sm:$0xff]
    %v3145 = vld [vmem:[%s3137 + $0x38] sm:$0xff]
    %v3146 = vld [vmem:[%s3137 + $0x40] sm:$0xff]
    %v3147 = vld [vmem:[%s3137 + $0x48] sm:$0xff]
    %v3148 = vld [vmem:[%s3137 + $0x50] sm:$0xff]
    %v3149 = vld [vmem:[%s3137 + $0x58] sm:$0xff]
    %v3150 = vld [vmem:[%s3137 + $0x60] sm:$0xff]
    %v3151 = vld [vmem:[%s3137 + $0x68] sm:$0xff]
    %v3152 = vld [vmem:[%s3137 + $0x70] sm:$0xff]
    %v3153 = vld [vmem:[%s3137 + $0x78] sm:$0xff]
    %v3155 = vsel %vm381, %v3052, 0
    %v3158 = vsel %vm381, %v3054, 0
    %3160 = vmatprep.subr.mxu0 0.0
    %3161 = vmatpush1.xpose.msra.mxu0 %v3158
    %3162 = vmatprep.subr.mxu0 0.0
    %3163 = vmatpush1.xpose.msra.mxu0 0.0
    %3164 = vmatprep.subr.mxu0 0.0
    %3165 = vmatpush1.xpose.msra.mxu0 0.0
    %3166 = vmatprep.subr.mxu0 0.0
    %3167 = vmatpush1.xpose.msra.mxu0 0.0
    %3168 = vmatprep.subr.mxu0 0.0
    %3169 = vmatpush1.xpose.msra.mxu0 0.0
    %3170 = vmatprep.subr.mxu0 0.0
    %3171 = vmatpush1.xpose.msra.mxu0 0.0
    %3172 = vmatprep.subr.mxu0 0.0
    %3173 = vmatpush1.xpose.msra.mxu0 0.0
    %3174 = vmatprep.subr.mxu0 0.0
    %3175 = vmatpush1.xpose.msra.mxu0 0.0
    %3176 = vmatprep.subr.mxu0 0.0
    %3177 = vmatpush1.xpose.msra.mxu0 0.0
    %3178 = vmatprep.subr.mxu0 0.0
    %3179 = vmatpush1.xpose.msra.mxu0 0.0
    %3180 = vmatprep.subr.mxu0 0.0
    %3181 = vmatpush1.xpose.msra.mxu0 0.0
    %3182 = vmatprep.subr.mxu0 0.0
    %3183 = vmatpush1.xpose.msra.mxu0 0.0
    %3184 = vmatprep.subr.mxu0 0.0
    %3185 = vmatpush1.xpose.msra.mxu0 0.0
    %3186 = vmatprep.subr.mxu0 0.0
    %3187 = vmatpush1.xpose.msra.mxu0 0.0
    %3188 = vmatprep.subr.mxu0 0.0
    %3189 = vmatpush1.xpose.msra.mxu0 0.0
    %3190 = vmatprep.subr.mxu0 0.0
    %3191 = vmatpush1.xpose.msra.mxu0 0.0
    %3192 = vmatprep.subr.mxu0 0.0
    %3193 = vmatpush1.xpose.msra.mxu0 0.0
    %3194 = vmatprep.subr.mxu0 0.0
    %3195 = vmatpush1.xpose.msra.mxu0 0.0
    %3196 = vmatprep.subr.mxu0 0.0
    %3197 = vmatpush1.xpose.msra.mxu0 0.0
    %3198 = vmatprep.subr.mxu0 0.0
    %3199 = vmatpush1.xpose.msra.mxu0 0.0
    %3200 = vmatprep.subr.mxu0 0.0
    %3201 = vmatpush1.xpose.msra.mxu0 0.0
    %3202 = vmatprep.subr.mxu0 0.0
    %3203 = vmatpush1.xpose.msra.mxu0 0.0
    %3204 = vmatprep.subr.mxu0 0.0
    %3205 = vmatpush1.xpose.msra.mxu0 0.0
    %3206 = vmatprep.subr.mxu0 0.0
    %3207 = vmatpush1.xpose.msra.mxu0 0.0
    %3208 = vmatprep.subr.mxu0 0.0
    %3209 = vmatpush1.xpose.msra.mxu0 0.0
    %3210 = vmatprep.subr.mxu0 0.0
    %3211 = vmatpush1.xpose.msra.mxu0 0.0
    %3212 = vmatprep.subr.mxu0 0.0
    %3213 = vmatpush1.xpose.msra.mxu0 0.0
    %3214 = vmatprep.subr.mxu0 0.0
    %3215 = vmatpush1.xpose.msra.mxu0 0.0
    %3216 = vmatprep.subr.mxu0 0.0
    %3217 = vmatpush1.xpose.msra.mxu0 0.0
    %3218 = vmatprep.subr.mxu0 0.0
    %3219 = vmatpush1.xpose.msra.mxu0 0.0
    %3220 = vmatprep.subr.mxu0 0.0
    %3221 = vmatpush1.xpose.msra.mxu0 0.0
    %3222 = vmatprep.subr.mxu0 0.0
    %3223 = vmatpush1.xpose.msra.mxu0 0.0
    %3224 = vmatprep.mubr.f32.mxu0 0.0
    %3225 = vmatmul.mubr.f32.gmra.mrb[0].mxu0 %v3155
    %v3226 = vpop.f32.mrb[0].mxu0
    %v3227 = vadd.f32 0.0, %v3226
    %v3228 = vpop.f32.mrb[0].mxu0
    %3229 = vdwg.mxu0
    %v3230 = vmul.f32 %v3227, 0.17677669
    %v3231 = vsel %vm459, %v3230, -inf
    %3232 = vmax.xlane.f32.xlu0 %v3231
    %v3233 = vpop.xlane.xlu0 %3232
    %v3234 = vsub.f32 %v3230, %v3233
    %v3235 = vmul.f32 %v3234, 1.442695
    %v3236 = vpow.pop %v3235
    %v3237 = vsel %vm459, %v3236, 0.0
    %3238 = vadd.xlane.f32.xlu0 %v3237
    %v3239 = vpop.xlane.xlu0 %3238
    %v3240 = vrcp.pop %v3239
    %v3241 = vmul.f32 %v3236, %v3240
    %v3243 = vsel %vm459, %v3241, 0
    %3245 = vmatprep.subr.mxu0 0.0
    %3246 = vmatpush1.msra.mxu0 %v3129
    %3247 = vmatprep.subr.mxu0 0.0
    %3248 = vmatpush1.msra.mxu0 0.0
    %3249 = vmatprep.subr.mxu0 0.0
    %3250 = vmatpush1.msra.mxu0 0.0
    %3251 = vmatprep.subr.mxu0 0.0
    %3252 = vmatpush1.msra.mxu0 0.0
    %3253 = vmatprep.subr.mxu0 0.0
    %3254 = vmatpush1.msra.mxu0 0.0
    %3255 = vmatprep.subr.mxu0 0.0
    %3256 = vmatpush1.msra.mxu0 0.0
    %3257 = vmatprep.subr.mxu0 0.0
    %3258 = vmatpush1.msra.mxu0 0.0
    %3259 = vmatprep.subr.mxu0 0.0
    %3260 = vmatpush1.msra.mxu0 0.0
    %3261 = vmatprep.subr.mxu0 0.0
    %3262 = vmatpush1.msra.mxu0 0.0
    %3263 = vmatprep.subr.mxu0 0.0
    %3264 = vmatpush1.msra.mxu0 0.0
    %3265 = vmatprep.subr.mxu0 0.0
    %3266 = vmatpush1.msra.mxu0 0.0
    %3267 = vmatprep.subr.mxu0 0.0
    %3268 = vmatpush1.msra.mxu0 0.0
    %3269 = vmatprep.subr.mxu0 0.0
    %3270 = vmatpush1.msra.mxu0 0.0
    %3271 = vmatprep.subr.mxu0 0.0
    %3272 = vmatpush1.msra.mxu0 0.0
    %3273 = vmatprep.subr.mxu0 0.0
    %3274 = vmatpush1.msra.mxu0 0.0
    %3275 = vmatprep.subr.mxu0 0.0
    %3276 = vmatpush1.msra.mxu0 0.0
    %3277 = vmatprep.subr.mxu0 0.0
    %3278 = vmatpush1.msra.mxu0 0.0
    %3279 = vmatprep.subr.mxu0 0.0
    %3280 = vmatpush1.msra.mxu0 0.0
    %3281 = vmatprep.subr.mxu0 0.0
    %3282 = vmatpush1.msra.mxu0 0.0
    %3283 = vmatprep.subr.mxu0 0.0
    %3284 = vmatpush1.msra.mxu0 0.0
    %3285 = vmatprep.subr.mxu0 0.0
    %3286 = vmatpush1.msra.mxu0 0.0
    %3287 = vmatprep.subr.mxu0 0.0
    %3288 = vmatpush1.msra.mxu0 0.0
    %3289 = vmatprep.subr.mxu0 0.0
    %3290 = vmatpush1.msra.mxu0 0.0
    %3291 = vmatprep.subr.mxu0 0.0
    %3292 = vmatpush1.msra.mxu0 0.0
    %3293 = vmatprep.subr.mxu0 0.0
    %3294 = vmatpush1.msra.mxu0 0.0
    %3295 = vmatprep.subr.mxu0 0.0
    %3296 = vmatpush1.msra.mxu0 0.0
    %3297 = vmatprep.subr.mxu0 0.0
    %3298 = vmatpush1.msra.mxu0 0.0
    %3299 = vmatprep.subr.mxu0 0.0
    %3300 = vmatpush1.msra.mxu0 0.0
    %3301 = vmatprep.subr.mxu0 0.0
    %3302 = vmatpush1.msra.mxu0 0.0
    %3303 = vmatprep.subr.mxu0 0.0
    %3304 = vmatpush1.msra.mxu0 0.0
    %3305 = vmatprep.subr.mxu0 0.0
    %3306 = vmatpush1.msra.mxu0 0.0
    %3307 = vmatprep.subr.mxu0 0.0
    %3308 = vmatpush1.msra.mxu0 0.0
    %3309 = vmatprep.mubr.f32.mxu0 0.0
    %3310 = vmatmul.mubr.f32.gmra.mrb[0].mxu0 %v3243
    %v3311 = vpop.f32.mrb[0].mxu0
    %v3312 = vadd.f32 0.0, %v3311
    %v3313 = vpop.f32.mrb[0].mxu0
    %3314 = vdwg.mxu0
    %3315 = vrot.lane.b32.xlu0 %v3052, 96
    %v3316 = vpop.permute.xlu0 %3315
    %3317 = vrot.lane.b32.xlu0 %v3054, 96
    %v3318 = vpop.permute.xlu0 %3317
    %v3319 = vsel %vm381, %v3316, 0
    %v3321 = vsel %vm381, %v3318, 0
    %3323 = vmatprep.subr.mxu0 0.0
    %3324 = vmatpush1.xpose.msra.mxu0 %v3321
    %3325 = vmatprep.subr.mxu0 0.0
    %3326 = vmatpush1.xpose.msra.mxu0 0.0
    %3327 = vmatprep.subr.mxu0 0.0
    %3328 = vmatpush1.xpose.msra.mxu0 0.0
    %3329 = vmatprep.subr.mxu0 0.0
    %3330 = vmatpush1.xpose.msra.mxu0 0.0
    %3331 = vmatprep.subr.mxu0 0.0
    %3332 = vmatpush1.xpose.msra.mxu0 0.0
    %3333 = vmatprep.subr.mxu0 0.0
    %3334 = vmatpush1.xpose.msra.mxu0 0.0
    %3335 = vmatprep.subr.mxu0 0.0
    %3336 = vmatpush1.xpose.msra.mxu0 0.0
    %3337 = vmatprep.subr.mxu0 0.0
    %3338 = vmatpush1.xpose.msra.mxu0 0.0
    %3339 = vmatprep.subr.mxu0 0.0
    %3340 = vmatpush1.xpose.msra.mxu0 0.0
    %3341 = vmatprep.subr.mxu0 0.0
    %3342 = vmatpush1.xpose.msra.mxu0 0.0
    %3343 = vmatprep.subr.mxu0 0.0
    %3344 = vmatpush1.xpose.msra.mxu0 0.0
    %3345 = vmatprep.subr.mxu0 0.0
    %3346 = vmatpush1.xpose.msra.mxu0 0.0
    %3347 = vmatprep.subr.mxu0 0.0
    %3348 = vmatpush1.xpose.msra.mxu0 0.0
    %3349 = vmatprep.subr.mxu0 0.0
    %3350 = vmatpush1.xpose.msra.mxu0 0.0
    %3351 = vmatprep.subr.mxu0 0.0
    %3352 = vmatpush1.xpose.msra.mxu0 0.0
    %3353 = vmatprep.subr.mxu0 0.0
    %3354 = vmatpush1.xpose.msra.mxu0 0.0
    %3355 = vmatprep.subr.mxu0 0.0
    %3356 = vmatpush1.xpose.msra.mxu0 0.0
    %3357 = vmatprep.subr.mxu0 0.0
    %3358 = vmatpush1.xpose.msra.mxu0 0.0
    %3359 = vmatprep.subr.mxu0 0.0
    %3360 = vmatpush1.xpose.msra.mxu0 0.0
    %3361 = vmatprep.subr.mxu0 0.0
    %3362 = vmatpush1.xpose.msra.mxu0 0.0
    %3363 = vmatprep.subr.mxu0 0.0
    %3364 = vmatpush1.xpose.msra.mxu0 0.0
    %3365 = vmatprep.subr.mxu0 0.0
    %3366 = vmatpush1.xpose.msra.mxu0 0.0
    %3367 = vmatprep.subr.mxu0 0.0
    %3368 = vmatpush1.xpose.msra.mxu0 0.0
    %3369 = vmatprep.subr.mxu0 0.0
    %3370 = vmatpush1.xpose.msra.mxu0 0.0
    %3371 = vmatprep.subr.mxu0 0.0
    %3372 = vmatpush1.xpose.msra.mxu0 0.0
    %3373 = vmatprep.subr.mxu0 0.0
    %3374 = vmatpush1.xpose.msra.mxu0 0.0
    %3375 = vmatprep.subr.mxu0 0.0
    %3376 = vmatpush1.xpose.msra.mxu0 0.0
    %3377 = vmatprep.subr.mxu0 0.0
    %3378 = vmatpush1.xpose.msra.mxu0 0.0
    %3379 = vmatprep.subr.mxu0 0.0
    %3380 = vmatpush1.xpose.msra.mxu0 0.0
    %3381 = vmatprep.subr.mxu0 0.0
    %3382 = vmatpush1.xpose.msra.mxu0 0.0
    %3383 = vmatprep.subr.mxu0 0.0
    %3384 = vmatpush1.xpose.msra.mxu0 0.0
    %3385 = vmatprep.subr.mxu0 0.0
    %3386 = vmatpush1.xpose.msra.mxu0 0.0
    %3387 = vmatprep.mubr.f32.mxu0 0.0
    %3388 = vmatmul.mubr.f32.gmra.mrb[0].mxu0 %v3319
    %v3389 = vpop.f32.mrb[0].mxu0
    %v3390 = vadd.f32 0.0, %v3389
    %v3391 = vpop.f32.mrb[0].mxu0
    %3392 = vdwg.mxu0
    %v3393 = vmul.f32 %v3390, 0.17677669
    %v3394 = vsel %vm459, %v3393, -inf
    %3395 = vmax.xlane.f32.xlu0 %v3394
    %v3396 = vpop.xlane.xlu0 %3395
    %v3397 = vsub.f32 %v3393, %v3396
    %v3398 = vmul.f32 %v3397, 1.442695
    %v3399 = vpow.pop %v3398
    %v3400 = vsel %vm459, %v3399, 0.0
    %3401 = vadd.xlane.f32.xlu0 %v3400
    %v3402 = vpop.xlane.xlu0 %3401
    %v3403 = vrcp.pop %v3402
    %v3404 = vmul.f32 %v3399, %v3403
    %3406 = vrot.lane.b32.xlu0 %v3129, 96
    %v3407 = vpop.permute.xlu0 %3406
    %v3410 = vsel %vm459, %v3404, 0
    %3412 = vmatprep.subr.mxu0 0.0
    %3413 = vmatpush1.msra.mxu0 %v3407
    %3414 = vmatprep.subr.mxu0 0.0
    %3415 = vmatpush1.msra.mxu0 0.0
    %3416 = vmatprep.subr.mxu0 0.0
    %3417 = vmatpush1.msra.mxu0 0.0
    %3418 = vmatprep.subr.mxu0 0.0
    %3419 = vmatpush1.msra.mxu0 0.0
    %3420 = vmatprep.subr.mxu0 0.0
    %3421 = vmatpush1.msra.mxu0 0.0
    %3422 = vmatprep.subr.mxu0 0.0
    %3423 = vmatpush1.msra.mxu0 0.0
    %3424 = vmatprep.subr.mxu0 0.0
    %3425 = vmatpush1.msra.mxu0 0.0
    %3426 = vmatprep.subr.mxu0 0.0
    %3427 = vmatpush1.msra.mxu0 0.0
    %3428 = vmatprep.subr.mxu0 0.0
    %3429 = vmatpush1.msra.mxu0 0.0
    %3430 = vmatprep.subr.mxu0 0.0
    %3431 = vmatpush1.msra.mxu0 0.0
    %3432 = vmatprep.subr.mxu0 0.0
    %3433 = vmatpush1.msra.mxu0 0.0
    %3434 = vmatprep.subr.mxu0 0.0
    %3435 = vmatpush1.msra.mxu0 0.0
    %3436 = vmatprep.subr.mxu0 0.0
    %3437 = vmatpush1.msra.mxu0 0.0
    %3438 = vmatprep.subr.mxu0 0.0
    %3439 = vmatpush1.msra.mxu0 0.0
    %3440 = vmatprep.subr.mxu0 0.0
    %3441 = vmatpush1.msra.mxu0 0.0
    %3442 = vmatprep.subr.mxu0 0.0
    %3443 = vmatpush1.msra.mxu0 0.0
    %3444 = vmatprep.subr.mxu0 0.0
    %3445 = vmatpush1.msra.mxu0 0.0
    %3446 = vmatprep.subr.mxu0 0.0
    %3447 = vmatpush1.msra.mxu0 0.0
    %3448 = vmatprep.subr.mxu0 0.0
    %3449 = vmatpush1.msra.mxu0 0.0
    %3450 = vmatprep.subr.mxu0 0.0
    %3451 = vmatpush1.msra.mxu0 0.0
    %3452 = vmatprep.subr.mxu0 0.0
    %3453 = vmatpush1.msra.mxu0 0.0
    %3454 = vmatprep.subr.mxu0 0.0
    %3455 = vmatpush1.msra.mxu0 0.0
    %3456 = vmatprep.subr.mxu0 0.0
    %3457 = vmatpush1.msra.mxu0 0.0
    %3458 = vmatprep.subr.mxu0 0.0
    %3459 = vmatpush1.msra.mxu0 0.0
    %3460 = vmatprep.subr.mxu0 0.0
    %3461 = vmatpush1.msra.mxu0 0.0
    %3462 = vmatprep.subr.mxu0 0.0
    %3463 = vmatpush1.msra.mxu0 0.0
    %3464 = vmatprep.subr.mxu0 0.0
    %3465 = vmatpush1.msra.mxu0 0.0
    %3466 = vmatprep.subr.mxu0 0.0
    %3467 = vmatpush1.msra.mxu0 0.0
    %3468 = vmatprep.subr.mxu0 0.0
    %3469 = vmatpush1.msra.mxu0 0.0
    %3470 = vmatprep.subr.mxu0 0.0
    %3471 = vmatpush1.msra.mxu0 0.0
    %3472 = vmatprep.subr.mxu0 0.0
    %3473 = vmatpush1.msra.mxu0 0.0
    %3474 = vmatprep.subr.mxu0 0.0
    %3475 = vmatpush1.msra.mxu0 0.0
    %3476 = vmatprep.mubr.f32.mxu0 0.0
    %3477 = vmatmul.mubr.f32.gmra.mrb[0].mxu0 %v3410
    %v3478 = vpop.f32.mrb[0].mxu0
    %v3479 = vadd.f32 0.0, %v3478
    %v3480 = vpop.f32.mrb[0].mxu0
    %3481 = vdwg.mxu0
    %v3483 = vsel %vm381, %v3479, 0
    %3485 = vmatprep.subr.mxu0 0.0
    %3486 = vmatpush1.msra.mxu0 %v3142
    %3487 = vmatprep.subr.mxu0 0.0
    %3488 = vmatpush1.msra.mxu0 %v3143
    %3489 = vmatprep.subr.mxu0 0.0
    %3490 = vmatpush1.msra.mxu0 %v3144
    %3491 = vmatprep.subr.mxu0 0.0
    %3492 = vmatpush1.msra.mxu0 %v3145
    %3493 = vmatprep.subr.mxu0 0.0
    %3494 = vmatpush1.msra.mxu0 0.0
    %3495 = vmatprep.subr.mxu0 0.0
    %3496 = vmatpush1.msra.mxu0 0.0
    %3497 = vmatprep.subr.mxu0 0.0
    %3498 = vmatpush1.msra.mxu0 0.0
    %3499 = vmatprep.subr.mxu0 0.0
    %3500 = vmatpush1.msra.mxu0 0.0
    %3501 = vmatprep.subr.mxu0 0.0
    %3502 = vmatpush1.msra.mxu0 0.0
    %3503 = vmatprep.subr.mxu0 0.0
    %3504 = vmatpush1.msra.mxu0 0.0
    %3505 = vmatprep.subr.mxu0 0.0
    %3506 = vmatpush1.msra.mxu0 0.0
    %3507 = vmatprep.subr.mxu0 0.0
    %3508 = vmatpush1.msra.mxu0 0.0
    %3509 = vmatprep.subr.mxu0 0.0
    %3510 = vmatpush1.msra.mxu0 0.0
    %3511 = vmatprep.subr.mxu0 0.0
    %3512 = vmatpush1.msra.mxu0 0.0
    %3513 = vmatprep.subr.mxu0 0.0
    %3514 = vmatpush1.msra.mxu0 0.0
    %3515 = vmatprep.subr.mxu0 0.0
    %3516 = vmatpush1.msra.mxu0 0.0
    %3517 = vmatprep.subr.mxu0 0.0
    %3518 = vmatpush1.msra.mxu0 0.0
    %3519 = vmatprep.subr.mxu0 0.0
    %3520 = vmatpush1.msra.mxu0 0.0
    %3521 = vmatprep.subr.mxu0 0.0
    %3522 = vmatpush1.msra.mxu0 0.0
    %3523 = vmatprep.subr.mxu0 0.0
    %3524 = vmatpush1.msra.mxu0 0.0
    %3525 = vmatprep.subr.mxu0 0.0
    %3526 = vmatpush1.msra.mxu0 0.0
    %3527 = vmatprep.subr.mxu0 0.0
    %3528 = vmatpush1.msra.mxu0 0.0
    %3529 = vmatprep.subr.mxu0 0.0
    %3530 = vmatpush1.msra.mxu0 0.0
    %3531 = vmatprep.subr.mxu0 0.0
    %3532 = vmatpush1.msra.mxu0 0.0
    %3533 = vmatprep.subr.mxu0 0.0
    %3534 = vmatpush1.msra.mxu0 0.0
    %3535 = vmatprep.subr.mxu0 0.0
    %3536 = vmatpush1.msra.mxu0 0.0
    %3537 = vmatprep.subr.mxu0 0.0
    %3538 = vmatpush1.msra.mxu0 0.0
    %3539 = vmatprep.subr.mxu0 0.0
    %3540 = vmatpush1.msra.mxu0 0.0
    %3541 = vmatprep.subr.mxu0 0.0
    %3542 = vmatpush1.msra.mxu0 0.0
    %3543 = vmatprep.subr.mxu0 0.0
    %3544 = vmatpush1.msra.mxu0 0.0
    %3545 = vmatprep.subr.mxu0 0.0
    %3546 = vmatpush1.msra.mxu0 0.0
    %3547 = vmatprep.subr.mxu0 0.0
    %3548 = vmatpush1.msra.mxu0 0.0
    %3549 = vmatprep.mubr.f32.mxu0 0.0
    %3550 = vmatmul.mubr.f32.gmra.mrb[0].mxu0 %v3483
    %v3551 = vpop.f32.mrb[0].mxu0
    %v3552 = vadd.f32 0.0, %v3551
    %v3553 = vpop.f32.mrb[0].mxu0
    %3554 = vdwg.mxu0
    %v3556 = vsel %vm381, %v3312, 0
    %3558 = vmatprep.subr.mxu0 0.0
    %3559 = vmatpush1.msra.mxu0 %v3138
    %3560 = vmatprep.subr.mxu0 0.0
    %3561 = vmatpush1.msra.mxu0 %v3139
    %3562 = vmatprep.subr.mxu0 0.0
    %3563 = vmatpush1.msra.mxu0 %v3140
    %3564 = vmatprep.subr.mxu0 0.0
    %3565 = vmatpush1.msra.mxu0 %v3141
    %3566 = vmatprep.subr.mxu0 0.0
    %3567 = vmatpush1.msra.mxu0 0.0
    %3568 = vmatprep.subr.mxu0 0.0
    %3569 = vmatpush1.msra.mxu0 0.0
    %3570 = vmatprep.subr.mxu0 0.0
    %3571 = vmatpush1.msra.mxu0 0.0
    %3572 = vmatprep.subr.mxu0 0.0
    %3573 = vmatpush1.msra.mxu0 0.0
    %3574 = vmatprep.subr.mxu0 0.0
    %3575 = vmatpush1.msra.mxu0 0.0
    %3576 = vmatprep.subr.mxu0 0.0
    %3577 = vmatpush1.msra.mxu0 0.0
    %3578 = vmatprep.subr.mxu0 0.0
    %3579 = vmatpush1.msra.mxu0 0.0
    %3580 = vmatprep.subr.mxu0 0.0
    %3581 = vmatpush1.msra.mxu0 0.0
    %3582 = vmatprep.subr.mxu0 0.0
    %3583 = vmatpush1.msra.mxu0 0.0
    %3584 = vmatprep.subr.mxu0 0.0
    %3585 = vmatpush1.msra.mxu0 0.0
    %3586 = vmatprep.subr.mxu0 0.0
    %3587 = vmatpush1.msra.mxu0 0.0
    %3588 = vmatprep.subr.mxu0 0.0
    %3589 = vmatpush1.msra.mxu0 0.0
    %3590 = vmatprep.subr.mxu0 0.0
    %3591 = vmatpush1.msra.mxu0 0.0
    %3592 = vmatprep.subr.mxu0 0.0
    %3593 = vmatpush1.msra.mxu0 0.0
    %3594 = vmatprep.subr.mxu0 0.0
    %3595 = vmatpush1.msra.mxu0 0.0
    %3596 = vmatprep.subr.mxu0 0.0
    %3597 = vmatpush1.msra.mxu0 0.0
    %3598 = vmatprep.subr.mxu0 0.0
    %3599 = vmatpush1.msra.mxu0 0.0
    %3600 = vmatprep.subr.mxu0 0.0
    %3601 = vmatpush1.msra.mxu0 0.0
    %3602 = vmatprep.subr.mxu0 0.0
    %3603 = vmatpush1.msra.mxu0 0.0
    %3604 = vmatprep.subr.mxu0 0.0
    %3605 = vmatpush1.msra.mxu0 0.0
    %3606 = vmatprep.subr.mxu0 0.0
    %3607 = vmatpush1.msra.mxu0 0.0
    %3608 = vmatprep.subr.mxu0 0.0
    %3609 = vmatpush1.msra.mxu0 0.0
    %3610 = vmatprep.subr.mxu0 0.0
    %3611 = vmatpush1.msra.mxu0 0.0
    %3612 = vmatprep.subr.mxu0 0.0
    %3613 = vmatpush1.msra.mxu0 0.0
    %3614 = vmatprep.subr.mxu0 0.0
    %3615 = vmatpush1.msra.mxu0 0.0
    %3616 = vmatprep.subr.mxu0 0.0
    %3617 = vmatpush1.msra.mxu0 0.0
    %3618 = vmatprep.subr.mxu0 0.0
    %3619 = vmatpush1.msra.mxu0 0.0
    %3620 = vmatprep.subr.mxu0 0.0
    %3621 = vmatpush1.msra.mxu0 0.0
    %3622 = vmatprep.mubr.f32.mxu0 0.0
    %3623 = vmatmul.mubr.f32.gmra.mrb[0].mxu0 %v3556
    %v3624 = vpop.f32.mrb[0].mxu0
    %v3625 = vadd.f32 %v3552, %v3624
    %v3626 = vpop.f32.mrb[0].mxu0
    %3627 = vdwg.mxu0
    %3628 = vrot.lane.b32.xlu0 %v3052, 64
    %v3629 = vpop.permute.xlu0 %3628
    %3630 = vrot.lane.b32.xlu0 %v3054, 64
    %v3631 = vpop.permute.xlu0 %3630
    %v3632 = vsel %vm381, %v3629, 0
    %v3634 = vsel %vm381, %v3631, 0
    %3636 = vmatprep.subr.mxu0 0.0
    %3637 = vmatpush1.xpose.msra.mxu0 %v3634
    %3638 = vmatprep.subr.mxu0 0.0
    %3639 = vmatpush1.xpose.msra.mxu0 0.0
    %3640 = vmatprep.subr.mxu0 0.0
    %3641 = vmatpush1.xpose.msra.mxu0 0.0
    %3642 = vmatprep.subr.mxu0 0.0
    %3643 = vmatpush1.xpose.msra.mxu0 0.0
    %3644 = vmatprep.subr.mxu0 0.0
    %3645 = vmatpush1.xpose.msra.mxu0 0.0
    %3646 = vmatprep.subr.mxu0 0.0
    %3647 = vmatpush1.xpose.msra.mxu0 0.0
    %3648 = vmatprep.subr.mxu0 0.0
    %3649 = vmatpush1.xpose.msra.mxu0 0.0
    %3650 = vmatprep.subr.mxu0 0.0
    %3651 = vmatpush1.xpose.msra.mxu0 0.0
    %3652 = vmatprep.subr.mxu0 0.0
    %3653 = vmatpush1.xpose.msra.mxu0 0.0
    %3654 = vmatprep.subr.mxu0 0.0
    %3655 = vmatpush1.xpose.msra.mxu0 0.0
    %3656 = vmatprep.subr.mxu0 0.0
    %3657 = vmatpush1.xpose.msra.mxu0 0.0
    %3658 = vmatprep.subr.mxu0 0.0
    %3659 = vmatpush1.xpose.msra.mxu0 0.0
    %3660 = vmatprep.subr.mxu0 0.0
    %3661 = vmatpush1.xpose.msra.mxu0 0.0
    %3662 = vmatprep.subr.mxu0 0.0
    %3663 = vmatpush1.xpose.msra.mxu0 0.0
    %3664 = vmatprep.subr.mxu0 0.0
    %3665 = vmatpush1.xpose.msra.mxu0 0.0
    %3666 = vmatprep.subr.mxu0 0.0
    %3667 = vmatpush1.xpose.msra.mxu0 0.0
    %3668 = vmatprep.subr.mxu0 0.0
    %3669 = vmatpush1.xpose.msra.mxu0 0.0
    %3670 = vmatprep.subr.mxu0 0.0
    %3671 = vmatpush1.xpose.msra.mxu0 0.0
    %3672 = vmatprep.subr.mxu0 0.0
    %3673 = vmatpush1.xpose.msra.mxu0 0.0
    %3674 = vmatprep.subr.mxu0 0.0
    %3675 = vmatpush1.xpose.msra.mxu0 0.0
    %3676 = vmatprep.subr.mxu0 0.0
    %3677 = vmatpush1.xpose.msra.mxu0 0.0
    %3678 = vmatprep.subr.mxu0 0.0
    %3679 = vmatpush1.xpose.msra.mxu0 0.0
    %3680 = vmatprep.subr.mxu0 0.0
    %3681 = vmatpush1.xpose.msra.mxu0 0.0
    %3682 = vmatprep.subr.mxu0 0.0
    %3683 = vmatpush1.xpose.msra.mxu0 0.0
    %3684 = vmatprep.subr.mxu0 0.0
    %3685 = vmatpush1.xpose.msra.mxu0 0.0
    %3686 = vmatprep.subr.mxu0 0.0
    %3687 = vmatpush1.xpose.msra.mxu0 0.0
    %3688 = vmatprep.subr.mxu0 0.0
    %3689 = vmatpush1.xpose.msra.mxu0 0.0
    %3690 = vmatprep.subr.mxu0 0.0
    %3691 = vmatpush1.xpose.msra.mxu0 0.0
    %3692 = vmatprep.subr.mxu0 0.0
    %3693 = vmatpush1.xpose.msra.mxu0 0.0
    %3694 = vmatprep.subr.mxu0 0.0
    %3695 = vmatpush1.xpose.msra.mxu0 0.0
    %3696 = vmatprep.subr.mxu0 0.0
    %3697 = vmatpush1.xpose.msra.mxu0 0.0
    %3698 = vmatprep.subr.mxu0 0.0
    %3699 = vmatpush1.xpose.msra.mxu0 0.0
    %3700 = vmatprep.mubr.f32.mxu0 0.0
    %3701 = vmatmul.mubr.f32.gmra.mrb[0].mxu0 %v3632
    %v3702 = vpop.f32.mrb[0].mxu0
    %v3703 = vadd.f32 0.0, %v3702
    %v3704 = vpop.f32.mrb[0].mxu0
    %3705 = vdwg.mxu0
    %v3706 = vmul.f32 %v3703, 0.17677669
    %v3707 = vsel %vm459, %v3706, -inf
    %3708 = vmax.xlane.f32.xlu0 %v3707
    %v3709 = vpop.xlane.xlu0 %3708
    %v3710 = vsub.f32 %v3706, %v3709
    %v3711 = vmul.f32 %v3710, 1.442695
    %v3712 = vpow.pop %v3711
    %v3713 = vsel %vm459, %v3712, 0.0
    %3714 = vadd.xlane.f32.xlu0 %v3713
    %v3715 = vpop.xlane.xlu0 %3714
    %v3716 = vrcp.pop %v3715
    %v3717 = vmul.f32 %v3712, %v3716
    %3718 = vrot.lane.b32.xlu0 %v3129, 64
    %v3719 = vpop.permute.xlu0 %3718
    %v3722 = vsel %vm459, %v3717, 0
    %3724 = vmatprep.subr.mxu0 0.0
    %3725 = vmatpush1.msra.mxu0 %v3719
    %3726 = vmatprep.subr.mxu0 0.0
    %3727 = vmatpush1.msra.mxu0 0.0
    %3728 = vmatprep.subr.mxu0 0.0
    %3729 = vmatpush1.msra.mxu0 0.0
    %3730 = vmatprep.subr.mxu0 0.0
    %3731 = vmatpush1.msra.mxu0 0.0
    %3732 = vmatprep.subr.mxu0 0.0
    %3733 = vmatpush1.msra.mxu0 0.0
    %3734 = vmatprep.subr.mxu0 0.0
    %3735 = vmatpush1.msra.mxu0 0.0
    %3736 = vmatprep.subr.mxu0 0.0
    %3737 = vmatpush1.msra.mxu0 0.0
    %3738 = vmatprep.subr.mxu0 0.0
    %3739 = vmatpush1.msra.mxu0 0.0
    %3740 = vmatprep.subr.mxu0 0.0
    %3741 = vmatpush1.msra.mxu0 0.0
    %3742 = vmatprep.subr.mxu0 0.0
    %3743 = vmatpush1.msra.mxu0 0.0
    %3744 = vmatprep.subr.mxu0 0.0
    %3745 = vmatpush1.msra.mxu0 0.0
    %3746 = vmatprep.subr.mxu0 0.0
    %3747 = vmatpush1.msra.mxu0 0.0
    %3748 = vmatprep.subr.mxu0 0.0
    %3749 = vmatpush1.msra.mxu0 0.0
    %3750 = vmatprep.subr.mxu0 0.0
    %3751 = vmatpush1.msra.mxu0 0.0
    %3752 = vmatprep.subr.mxu0 0.0
    %3753 = vmatpush1.msra.mxu0 0.0
    %3754 = vmatprep.subr.mxu0 0.0
    %3755 = vmatpush1.msra.mxu0 0.0
    %3756 = vmatprep.subr.mxu0 0.0
    %3757 = vmatpush1.msra.mxu0 0.0
    %3758 = vmatprep.subr.mxu0 0.0
    %3759 = vmatpush1.msra.mxu0 0.0
    %3760 = vmatprep.subr.mxu0 0.0
    %3761 = vmatpush1.msra.mxu0 0.0
    %3762 = vmatprep.subr.mxu0 0.0
    %3763 = vmatpush1.msra.mxu0 0.0
    %3764 = vmatprep.subr.mxu0 0.0
    %3765 = vmatpush1.msra.mxu0 0.0
    %3766 = vmatprep.subr.mxu0 0.0
    %3767 = vmatpush1.msra.mxu0 0.0
    %3768 = vmatprep.subr.mxu0 0.0
    %3769 = vmatpush1.msra.mxu0 0.0
    %3770 = vmatprep.subr.mxu0 0.0
    %3771 = vmatpush1.msra.mxu0 0.0
    %3772 = vmatprep.subr.mxu0 0.0
    %3773 = vmatpush1.msra.mxu0 0.0
    %3774 = vmatprep.subr.mxu0 0.0
    %3775 = vmatpush1.msra.mxu0 0.0
    %3776 = vmatprep.subr.mxu0 0.0
    %3777 = vmatpush1.msra.mxu0 0.0
    %3778 = vmatprep.subr.mxu0 0.0
    %3779 = vmatpush1.msra.mxu0 0.0
    %3780 = vmatprep.subr.mxu0 0.0
    %3781 = vmatpush1.msra.mxu0 0.0
    %3782 = vmatprep.subr.mxu0 0.0
    %3783 = vmatpush1.msra.mxu0 0.0
    %3784 = vmatprep.subr.mxu0 0.0
    %3785 = vmatpush1.msra.mxu0 0.0
    %3786 = vmatprep.subr.mxu0 0.0
    %3787 = vmatpush1.msra.mxu0 0.0
    %3788 = vmatprep.mubr.f32.mxu0 0.0
    %3789 = vmatmul.mubr.f32.gmra.mrb[0].mxu0 %v3722
    %v3790 = vpop.f32.mrb[0].mxu0
    %v3791 = vadd.f32 0.0, %v3790
    %v3792 = vpop.f32.mrb[0].mxu0
    %3793 = vdwg.mxu0
    %v3795 = vsel %vm381, %v3791, 0
    %3797 = vmatprep.subr.mxu0 0.0
    %3798 = vmatpush1.msra.mxu0 %v3146
    %3799 = vmatprep.subr.mxu0 0.0
    %3800 = vmatpush1.msra.mxu0 %v3147
    %3801 = vmatprep.subr.mxu0 0.0
    %3802 = vmatpush1.msra.mxu0 %v3148
    %3803 = vmatprep.subr.mxu0 0.0
    %3804 = vmatpush1.msra.mxu0 %v3149
    %3805 = vmatprep.subr.mxu0 0.0
    %3806 = vmatpush1.msra.mxu0 0.0
    %3807 = vmatprep.subr.mxu0 0.0
    %3808 = vmatpush1.msra.mxu0 0.0
    %3809 = vmatprep.subr.mxu0 0.0
    %3810 = vmatpush1.msra.mxu0 0.0
    %3811 = vmatprep.subr.mxu0 0.0
    %3812 = vmatpush1.msra.mxu0 0.0
    %3813 = vmatprep.subr.mxu0 0.0
    %3814 = vmatpush1.msra.mxu0 0.0
    %3815 = vmatprep.subr.mxu0 0.0
    %3816 = vmatpush1.msra.mxu0 0.0
    %3817 = vmatprep.subr.mxu0 0.0
    %3818 = vmatpush1.msra.mxu0 0.0
    %3819 = vmatprep.subr.mxu0 0.0
    %3820 = vmatpush1.msra.mxu0 0.0
    %3821 = vmatprep.subr.mxu0 0.0
    %3822 = vmatpush1.msra.mxu0 0.0
    %3823 = vmatprep.subr.mxu0 0.0
    %3824 = vmatpush1.msra.mxu0 0.0
    %3825 = vmatprep.subr.mxu0 0.0
    %3826 = vmatpush1.msra.mxu0 0.0
    %3827 = vmatprep.subr.mxu0 0.0
    %3828 = vmatpush1.msra.mxu0 0.0
    %3829 = vmatprep.subr.mxu0 0.0
    %3830 = vmatpush1.msra.mxu0 0.0
    %3831 = vmatprep.subr.mxu0 0.0
    %3832 = vmatpush1.msra.mxu0 0.0
    %3833 = vmatprep.subr.mxu0 0.0
    %3834 = vmatpush1.msra.mxu0 0.0
    %3835 = vmatprep.subr.mxu0 0.0
    %3836 = vmatpush1.msra.mxu0 0.0
    %3837 = vmatprep.subr.mxu0 0.0
    %3838 = vmatpush1.msra.mxu0 0.0
    %3839 = vmatprep.subr.mxu0 0.0
    %3840 = vmatpush1.msra.mxu0 0.0
    %3841 = vmatprep.subr.mxu0 0.0
    %3842 = vmatpush1.msra.mxu0 0.0
    %3843 = vmatprep.subr.mxu0 0.0
    %3844 = vmatpush1.msra.mxu0 0.0
    %3845 = vmatprep.subr.mxu0 0.0
    %3846 = vmatpush1.msra.mxu0 0.0
    %3847 = vmatprep.subr.mxu0 0.0
    %3848 = vmatpush1.msra.mxu0 0.0
    %3849 = vmatprep.subr.mxu0 0.0
    %3850 = vmatpush1.msra.mxu0 0.0
    %3851 = vmatprep.subr.mxu0 0.0
    %3852 = vmatpush1.msra.mxu0 0.0
    %3853 = vmatprep.subr.mxu0 0.0
    %3854 = vmatpush1.msra.mxu0 0.0
    %3855 = vmatprep.subr.mxu0 0.0
    %3856 = vmatpush1.msra.mxu0 0.0
    %3857 = vmatprep.subr.mxu0 0.0
    %3858 = vmatpush1.msra.mxu0 0.0
    %3859 = vmatprep.subr.mxu0 0.0
    %3860 = vmatpush1.msra.mxu0 0.0
    %3861 = vmatprep.mubr.f32.mxu0 0.0
    %3862 = vmatmul.mubr.f32.gmra.mrb[0].mxu0 %v3795
    %v3863 = vpop.f32.mrb[0].mxu0
    %v3864 = vadd.f32 0.0, %v3863
    %v3865 = vpop.f32.mrb[0].mxu0
    %3866 = vdwg.mxu0
    %v3867 = vadd.f32 %v3625, %v3864
    %3868 = vrot.lane.b32.xlu0 %v3052, 32
    %v3869 = vpop.permute.xlu0 %3868
    %3870 = vrot.lane.b32.xlu0 %v3054, 32
    %v3871 = vpop.permute.xlu0 %3870
    %v3872 = vsel %vm381, %v3869, 0
    %v3874 = vsel %vm381, %v3871, 0
    %3876 = vmatprep.subr.mxu0 0.0
    %3877 = vmatpush1.xpose.msra.mxu0 %v3874
    %3878 = vmatprep.subr.mxu0 0.0
    %3879 = vmatpush1.xpose.msra.mxu0 0.0
    %3880 = vmatprep.subr.mxu0 0.0
    %3881 = vmatpush1.xpose.msra.mxu0 0.0
    %3882 = vmatprep.subr.mxu0 0.0
    %3883 = vmatpush1.xpose.msra.mxu0 0.0
    %3884 = vmatprep.subr.mxu0 0.0
    %3885 = vmatpush1.xpose.msra.mxu0 0.0
    %3886 = vmatprep.subr.mxu0 0.0
    %3887 = vmatpush1.xpose.msra.mxu0 0.0
    %3888 = vmatprep.subr.mxu0 0.0
    %3889 = vmatpush1.xpose.msra.mxu0 0.0
    %3890 = vmatprep.subr.mxu0 0.0
    %3891 = vmatpush1.xpose.msra.mxu0 0.0
    %3892 = vmatprep.subr.mxu0 0.0
    %3893 = vmatpush1.xpose.msra.mxu0 0.0
    %3894 = vmatprep.subr.mxu0 0.0
    %3895 = vmatpush1.xpose.msra.mxu0 0.0
    %3896 = vmatprep.subr.mxu0 0.0
    %3897 = vmatpush1.xpose.msra.mxu0 0.0
    %3898 = vmatprep.subr.mxu0 0.0
    %3899 = vmatpush1.xpose.msra.mxu0 0.0
    %3900 = vmatprep.subr.mxu0 0.0
    %3901 = vmatpush1.xpose.msra.mxu0 0.0
    %3902 = vmatprep.subr.mxu0 0.0
    %3903 = vmatpush1.xpose.msra.mxu0 0.0
    %3904 = vmatprep.subr.mxu0 0.0
    %3905 = vmatpush1.xpose.msra.mxu0 0.0
    %3906 = vmatprep.subr.mxu0 0.0
    %3907 = vmatpush1.xpose.msra.mxu0 0.0
    %3908 = vmatprep.subr.mxu0 0.0
    %3909 = vmatpush1.xpose.msra.mxu0 0.0
    %3910 = vmatprep.subr.mxu0 0.0
    %3911 = vmatpush1.xpose.msra.mxu0 0.0
    %3912 = vmatprep.subr.mxu0 0.0
    %3913 = vmatpush1.xpose.msra.mxu0 0.0
    %3914 = vmatprep.subr.mxu0 0.0
    %3915 = vmatpush1.xpose.msra.mxu0 0.0
    %3916 = vmatprep.subr.mxu0 0.0
    %3917 = vmatpush1.xpose.msra.mxu0 0.0
    %3918 = vmatprep.subr.mxu0 0.0
    %3919 = vmatpush1.xpose.msra.mxu0 0.0
    %3920 = vmatprep.subr.mxu0 0.0
    %3921 = vmatpush1.xpose.msra.mxu0 0.0
    %3922 = vmatprep.subr.mxu0 0.0
    %3923 = vmatpush1.xpose.msra.mxu0 0.0
    %3924 = vmatprep.subr.mxu0 0.0
    %3925 = vmatpush1.xpose.msra.mxu0 0.0
    %3926 = vmatprep.subr.mxu0 0.0
    %3927 = vmatpush1.xpose.msra.mxu0 0.0
    %3928 = vmatprep.subr.mxu0 0.0
    %3929 = vmatpush1.xpose.msra.mxu0 0.0
    %3930 = vmatprep.subr.mxu0 0.0
    %3931 = vmatpush1.xpose.msra.mxu0 0.0
    %3932 = vmatprep.subr.mxu0 0.0
    %3933 = vmatpush1.xpose.msra.mxu0 0.0
    %3934 = vmatprep.subr.mxu0 0.0
    %3935 = vmatpush1.xpose.msra.mxu0 0.0
    %3936 = vmatprep.subr.mxu0 0.0
    %3937 = vmatpush1.xpose.msra.mxu0 0.0
    %3938 = vmatprep.subr.mxu0 0.0
    %3939 = vmatpush1.xpose.msra.mxu0 0.0
    %3940 = vmatprep.mubr.f32.mxu0 0.0
    %3941 = vmatmul.mubr.f32.gmra.mrb[0].mxu0 %v3872
    %v3942 = vpop.f32.mrb[0].mxu0
    %v3943 = vadd.f32 0.0, %v3942
    %v3944 = vpop.f32.mrb[0].mxu0
    %3945 = vdwg.mxu0
    %v3946 = vmul.f32 %v3943, 0.17677669
    %v3947 = vsel %vm459, %v3946, -inf
    %3948 = vmax.xlane.f32.xlu0 %v3947
    %v3949 = vpop.xlane.xlu0 %3948
    %v3950 = vsub.f32 %v3946, %v3949
    %v3951 = vmul.f32 %v3950, 1.442695
    %v3952 = vpow.pop %v3951
    %v3953 = vsel %vm459, %v3952, 0.0
    %3954 = vadd.xlane.f32.xlu0 %v3953
    %v3955 = vpop.xlane.xlu0 %3954
    %v3956 = vrcp.pop %v3955
    %v3957 = vmul.f32 %v3952, %v3956
    %3958 = vrot.lane.b32.xlu0 %v3129, 32
    %v3959 = vpop.permute.xlu0 %3958
    %v3962 = vsel %vm459, %v3957, 0
    %3964 = vmatprep.subr.mxu0 0.0
    %3965 = vmatpush1.msra.mxu0 %v3959
    %3966 = vmatprep.subr.mxu0 0.0
    %3967 = vmatpush1.msra.mxu0 0.0
    %3968 = vmatprep.subr.mxu0 0.0
    %3969 = vmatpush1.msra.mxu0 0.0
    %3970 = vmatprep.subr.mxu0 0.0
    %3971 = vmatpush1.msra.mxu0 0.0
    %3972 = vmatprep.subr.mxu0 0.0
    %3973 = vmatpush1.msra.mxu0 0.0
    %3974 = vmatprep.subr.mxu0 0.0
    %3975 = vmatpush1.msra.mxu0 0.0
    %3976 = vmatprep.subr.mxu0 0.0
    %3977 = vmatpush1.msra.mxu0 0.0
    %3978 = vmatprep.subr.mxu0 0.0
    %3979 = vmatpush1.msra.mxu0 0.0
    %3980 = vmatprep.subr.mxu0 0.0
    %3981 = vmatpush1.msra.mxu0 0.0
    %3982 = vmatprep.subr.mxu0 0.0
    %3983 = vmatpush1.msra.mxu0 0.0
    %3984 = vmatprep.subr.mxu0 0.0
    %3985 = vmatpush1.msra.mxu0 0.0
    %3986 = vmatprep.subr.mxu0 0.0
    %3987 = vmatpush1.msra.mxu0 0.0
    %3988 = vmatprep.subr.mxu0 0.0
    %3989 = vmatpush1.msra.mxu0 0.0
    %3990 = vmatprep.subr.mxu0 0.0
    %3991 = vmatpush1.msra.mxu0 0.0
    %3992 = vmatprep.subr.mxu0 0.0
    %3993 = vmatpush1.msra.mxu0 0.0
    %3994 = vmatprep.subr.mxu0 0.0
    %3995 = vmatpush1.msra.mxu0 0.0
    %3996 = vmatprep.subr.mxu0 0.0
    %3997 = vmatpush1.msra.mxu0 0.0
    %3998 = vmatprep.subr.mxu0 0.0
    %3999 = vmatpush1.msra.mxu0 0.0
    %4000 = vmatprep.subr.mxu0 0.0
    %4001 = vmatpush1.msra.mxu0 0.0
    %4002 = vmatprep.subr.mxu0 0.0
    %4003 = vmatpush1.msra.mxu0 0.0
    %4004 = vmatprep.subr.mxu0 0.0
    %4005 = vmatpush1.msra.mxu0 0.0
    %4006 = vmatprep.subr.mxu0 0.0
    %4007 = vmatpush1.msra.mxu0 0.0
    %4008 = vmatprep.subr.mxu0 0.0
    %4009 = vmatpush1.msra.mxu0 0.0
    %4010 = vmatprep.subr.mxu0 0.0
    %4011 = vmatpush1.msra.mxu0 0.0
    %4012 = vmatprep.subr.mxu0 0.0
    %4013 = vmatpush1.msra.mxu0 0.0
    %4014 = vmatprep.subr.mxu0 0.0
    %4015 = vmatpush1.msra.mxu0 0.0
    %4016 = vmatprep.subr.mxu0 0.0
    %4017 = vmatpush1.msra.mxu0 0.0
    %4018 = vmatprep.subr.mxu0 0.0
    %4019 = vmatpush1.msra.mxu0 0.0
    %4020 = vmatprep.subr.mxu0 0.0
    %4021 = vmatpush1.msra.mxu0 0.0
    %4022 = vmatprep.subr.mxu0 0.0
    %4023 = vmatpush1.msra.mxu0 0.0
    %4024 = vmatprep.subr.mxu0 0.0
    %4025 = vmatpush1.msra.mxu0 0.0
    %4026 = vmatprep.subr.mxu0 0.0
    %4027 = vmatpush1.msra.mxu0 0.0
    %4028 = vmatprep.mubr.f32.mxu0 0.0
    %4029 = vmatmul.mubr.f32.gmra.mrb[0].mxu0 %v3962
    %v4030 = vpop.f32.mrb[0].mxu0
    %v4031 = vadd.f32 0.0, %v4030
    %v4032 = vpop.f32.mrb[0].mxu0
    %4033 = vdwg.mxu0
    %v4035 = vsel %vm381, %v4031, 0
    %4037 = vmatprep.subr.mxu0 0.0
    %4038 = vmatpush1.msra.mxu0 %v3150
    %4039 = vmatprep.subr.mxu0 0.0
    %4040 = vmatpush1.msra.mxu0 %v3151
    %4041 = vmatprep.subr.mxu0 0.0
    %4042 = vmatpush1.msra.mxu0 %v3152
    %4043 = vmatprep.subr.mxu0 0.0
    %4044 = vmatpush1.msra.mxu0 %v3153
    %4045 = vmatprep.subr.mxu0 0.0
    %4046 = vmatpush1.msra.mxu0 0.0
    %4047 = vmatprep.subr.mxu0 0.0
    %4048 = vmatpush1.msra.mxu0 0.0
    %4049 = vmatprep.subr.mxu0 0.0
    %4050 = vmatpush1.msra.mxu0 0.0
    %4051 = vmatprep.subr.mxu0 0.0
    %4052 = vmatpush1.msra.mxu0 0.0
    %4053 = vmatprep.subr.mxu0 0.0
    %4054 = vmatpush1.msra.mxu0 0.0
    %4055 = vmatprep.subr.mxu0 0.0
    %4056 = vmatpush1.msra.mxu0 0.0
    %4057 = vmatprep.subr.mxu0 0.0
    %4058 = vmatpush1.msra.mxu0 0.0
    %4059 = vmatprep.subr.mxu0 0.0
    %4060 = vmatpush1.msra.mxu0 0.0
    %4061 = vmatprep.subr.mxu0 0.0
    %4062 = vmatpush1.msra.mxu0 0.0
    %4063 = vmatprep.subr.mxu0 0.0
    %4064 = vmatpush1.msra.mxu0 0.0
    %4065 = vmatprep.subr.mxu0 0.0
    %4066 = vmatpush1.msra.mxu0 0.0
    %4067 = vmatprep.subr.mxu0 0.0
    %4068 = vmatpush1.msra.mxu0 0.0
    %4069 = vmatprep.subr.mxu0 0.0
    %4070 = vmatpush1.msra.mxu0 0.0
    %4071 = vmatprep.subr.mxu0 0.0
    %4072 = vmatpush1.msra.mxu0 0.0
    %4073 = vmatprep.subr.mxu0 0.0
    %4074 = vmatpush1.msra.mxu0 0.0
    %4075 = vmatprep.subr.mxu0 0.0
    %4076 = vmatpush1.msra.mxu0 0.0
    %4077 = vmatprep.subr.mxu0 0.0
    %4078 = vmatpush1.msra.mxu0 0.0
    %4079 = vmatprep.subr.mxu0 0.0
    %4080 = vmatpush1.msra.mxu0 0.0
    %4081 = vmatprep.subr.mxu0 0.0
    %4082 = vmatpush1.msra.mxu0 0.0
    %4083 = vmatprep.subr.mxu0 0.0
    %4084 = vmatpush1.msra.mxu0 0.0
    %4085 = vmatprep.subr.mxu0 0.0
    %4086 = vmatpush1.msra.mxu0 0.0
    %4087 = vmatprep.subr.mxu0 0.0
    %4088 = vmatpush1.msra.mxu0 0.0
    %4089 = vmatprep.subr.mxu0 0.0
    %4090 = vmatpush1.msra.mxu0 0.0
    %4091 = vmatprep.subr.mxu0 0.0
    %4092 = vmatpush1.msra.mxu0 0.0
    %4093 = vmatprep.subr.mxu0 0.0
    %4094 = vmatpush1.msra.mxu0 0.0
    %4095 = vmatprep.subr.mxu0 0.0
    %4096 = vmatpush1.msra.mxu0 0.0
    %4097 = vmatprep.subr.mxu0 0.0
    %4098 = vmatpush1.msra.mxu0 0.0
    %4099 = vmatprep.subr.mxu0 0.0
    %4100 = vmatpush1.msra.mxu0 0.0
    %4101 = vmatprep.mubr.f32.mxu0 0.0
    %4102 = vmatmul.mubr.f32.gmra.mrb[0].mxu0 %v4035
    %v4103 = vpop.f32.mrb[0].mxu0
    %v4104 = vadd.f32 0.0, %v4103
    %v4105 = vpop.f32.mrb[0].mxu0
    %4106 = vdwg.mxu0
    %v4107 = vadd.f32 %v3867, %v4104
    %v4109 = vsel %vm381, %v3058, 0
    %v4112 = vsel %vm381, %v3060, 0
    %4114 = vmatprep.subr.mxu0 0.0
    %4115 = vmatpush1.xpose.msra.mxu0 %v4112
    %4116 = vmatprep.subr.mxu0 0.0
    %4117 = vmatpush1.xpose.msra.mxu0 0.0
    %4118 = vmatprep.subr.mxu0 0.0
    %4119 = vmatpush1.xpose.msra.mxu0 0.0
    %4120 = vmatprep.subr.mxu0 0.0
    %4121 = vmatpush1.xpose.msra.mxu0 0.0
    %4122 = vmatprep.subr.mxu0 0.0
    %4123 = vmatpush1.xpose.msra.mxu0 0.0
    %4124 = vmatprep.subr.mxu0 0.0
    %4125 = vmatpush1.xpose.msra.mxu0 0.0
    %4126 = vmatprep.subr.mxu0 0.0
    %4127 = vmatpush1.xpose.msra.mxu0 0.0
    %4128 = vmatprep.subr.mxu0 0.0
    %4129 = vmatpush1.xpose.msra.mxu0 0.0
    %4130 = vmatprep.subr.mxu0 0.0
    %4131 = vmatpush1.xpose.msra.mxu0 0.0
    %4132 = vmatprep.subr.mxu0 0.0
    %4133 = vmatpush1.xpose.msra.mxu0 0.0
    %4134 = vmatprep.subr.mxu0 0.0
    %4135 = vmatpush1.xpose.msra.mxu0 0.0
    %4136 = vmatprep.subr.mxu0 0.0
    %4137 = vmatpush1.xpose.msra.mxu0 0.0
    %4138 = vmatprep.subr.mxu0 0.0
    %4139 = vmatpush1.xpose.msra.mxu0 0.0
    %4140 = vmatprep.subr.mxu0 0.0
    %4141 = vmatpush1.xpose.msra.mxu0 0.0
    %4142 = vmatprep.subr.mxu0 0.0
    %4143 = vmatpush1.xpose.msra.mxu0 0.0
    %4144 = vmatprep.subr.mxu0 0.0
    %4145 = vmatpush1.xpose.msra.mxu0 0.0
    %4146 = vmatprep.subr.mxu0 0.0
    %4147 = vmatpush1.xpose.msra.mxu0 0.0
    %4148 = vmatprep.subr.mxu0 0.0
    %4149 = vmatpush1.xpose.msra.mxu0 0.0
    %4150 = vmatprep.subr.mxu0 0.0
    %4151 = vmatpush1.xpose.msra.mxu0 0.0
    %4152 = vmatprep.subr.mxu0 0.0
    %4153 = vmatpush1.xpose.msra.mxu0 0.0
    %4154 = vmatprep.subr.mxu0 0.0
    %4155 = vmatpush1.xpose.msra.mxu0 0.0
    %4156 = vmatprep.subr.mxu0 0.0
    %4157 = vmatpush1.xpose.msra.mxu0 0.0
    %4158 = vmatprep.subr.mxu0 0.0
    %4159 = vmatpush1.xpose.msra.mxu0 0.0
    %4160 = vmatprep.subr.mxu0 0.0
    %4161 = vmatpush1.xpose.msra.mxu0 0.0
    %4162 = vmatprep.subr.mxu0 0.0
    %4163 = vmatpush1.xpose.msra.mxu0 0.0
    %4164 = vmatprep.subr.mxu0 0.0
    %4165 = vmatpush1.xpose.msra.mxu0 0.0
    %4166 = vmatprep.subr.mxu0 0.0
    %4167 = vmatpush1.xpose.msra.mxu0 0.0
    %4168 = vmatprep.subr.mxu0 0.0
    %4169 = vmatpush1.xpose.msra.mxu0 0.0
    %4170 = vmatprep.subr.mxu0 0.0
    %4171 = vmatpush1.xpose.msra.mxu0 0.0
    %4172 = vmatprep.subr.mxu0 0.0
    %4173 = vmatpush1.xpose.msra.mxu0 0.0
    %4174 = vmatprep.subr.mxu0 0.0
    %4175 = vmatpush1.xpose.msra.mxu0 0.0
    %4176 = vmatprep.subr.mxu0 0.0
    %4177 = vmatpush1.xpose.msra.mxu0 0.0
    %4178 = vmatprep.mubr.f32.mxu0 0.0
    %4179 = vmatmul.mubr.f32.gmra.mrb[0].mxu0 %v4109
    %v4180 = vpop.f32.mrb[0].mxu0
    %v4181 = vadd.f32 0.0, %v4180
    %v4182 = vpop.f32.mrb[0].mxu0
    %4183 = vdwg.mxu0
    %v4184 = vmul.f32 %v4181, 0.17677669
    %v4185 = vsel %vm459, %v4184, -inf
    %4186 = vmax.xlane.f32.xlu0 %v4185
    %v4187 = vpop.xlane.xlu0 %4186
    %v4188 = vsub.f32 %v4184, %v4187
    %v4189 = vmul.f32 %v4188, 1.442695
    %v4190 = vpow.pop %v4189
    %v4191 = vsel %vm459, %v4190, 0.0
    %4192 = vadd.xlane.f32.xlu0 %v4191
    %v4193 = vpop.xlane.xlu0 %4192
    %v4194 = vrcp.pop %v4193
    %v4195 = vmul.f32 %v4190, %v4194
    %v4197 = vsel %vm459, %v4195, 0
    %4199 = vmatprep.subr.mxu0 0.0
    %4200 = vmatpush1.msra.mxu0 %v3134
    %4201 = vmatprep.subr.mxu0 0.0
    %4202 = vmatpush1.msra.mxu0 0.0
    %4203 = vmatprep.subr.mxu0 0.0
    %4204 = vmatpush1.msra.mxu0 0.0
    %4205 = vmatprep.subr.mxu0 0.0
    %4206 = vmatpush1.msra.mxu0 0.0
    %4207 = vmatprep.subr.mxu0 0.0
    %4208 = vmatpush1.msra.mxu0 0.0
    %4209 = vmatprep.subr.mxu0 0.0
    %4210 = vmatpush1.msra.mxu0 0.0
    %4211 = vmatprep.subr.mxu0 0.0
    %4212 = vmatpush1.msra.mxu0 0.0
    %4213 = vmatprep.subr.mxu0 0.0
    %4214 = vmatpush1.msra.mxu0 0.0
    %4215 = vmatprep.subr.mxu0 0.0
    %4216 = vmatpush1.msra.mxu0 0.0
    %4217 = vmatprep.subr.mxu0 0.0
    %4218 = vmatpush1.msra.mxu0 0.0
    %4219 = vmatprep.subr.mxu0 0.0
    %4220 = vmatpush1.msra.mxu0 0.0
    %4221 = vmatprep.subr.mxu0 0.0
    %4222 = vmatpush1.msra.mxu0 0.0
    %4223 = vmatprep.subr.mxu0 0.0
    %4224 = vmatpush1.msra.mxu0 0.0
    %4225 = vmatprep.subr.mxu0 0.0
    %4226 = vmatpush1.msra.mxu0 0.0
    %4227 = vmatprep.subr.mxu0 0.0
    %4228 = vmatpush1.msra.mxu0 0.0
    %4229 = vmatprep.subr.mxu0 0.0
    %4230 = vmatpush1.msra.mxu0 0.0
    %4231 = vmatprep.subr.mxu0 0.0
    %4232 = vmatpush1.msra.mxu0 0.0
    %4233 = vmatprep.subr.mxu0 0.0
    %4234 = vmatpush1.msra.mxu0 0.0
    %4235 = vmatprep.subr.mxu0 0.0
    %4236 = vmatpush1.msra.mxu0 0.0
    %4237 = vmatprep.subr.mxu0 0.0
    %4238 = vmatpush1.msra.mxu0 0.0
    %4239 = vmatprep.subr.mxu0 0.0
    %4240 = vmatpush1.msra.mxu0 0.0
    %4241 = vmatprep.subr.mxu0 0.0
    %4242 = vmatpush1.msra.mxu0 0.0
    %4243 = vmatprep.subr.mxu0 0.0
    %4244 = vmatpush1.msra.mxu0 0.0
    %4245 = vmatprep.subr.mxu0 0.0
    %4246 = vmatpush1.msra.mxu0 0.0
    %4247 = vmatprep.subr.mxu0 0.0
    %4248 = vmatpush1.msra.mxu0 0.0
    %4249 = vmatprep.subr.mxu0 0.0
    %4250 = vmatpush1.msra.mxu0 0.0
    %4251 = vmatprep.subr.mxu0 0.0
    %4252 = vmatpush1.msra.mxu0 0.0
    %4253 = vmatprep.subr.mxu0 0.0
    %4254 = vmatpush1.msra.mxu0 0.0
    %4255 = vmatprep.subr.mxu0 0.0
    %4256 = vmatpush1.msra.mxu0 0.0
    %4257 = vmatprep.subr.mxu0 0.0
    %4258 = vmatpush1.msra.mxu0 0.0
    %4259 = vmatprep.subr.mxu0 0.0
    %4260 = vmatpush1.msra.mxu0 0.0
    %4261 = vmatprep.subr.mxu0 0.0
    %4262 = vmatpush1.msra.mxu0 0.0
    %4263 = vmatprep.mubr.f32.mxu0 0.0
    %4264 = vmatmul.mubr.f32.gmra.mrb[0].mxu0 %v4197
    %v4265 = vpop.f32.mrb[0].mxu0
    %v4266 = vadd.f32 0.0, %v4265
    %v4267 = vpop.f32.mrb[0].mxu0
    %4268 = vdwg.mxu0
    %4269 = vrot.lane.b32.xlu0 %v3058, 96
    %v4270 = vpop.permute.xlu0 %4269
    %4271 = vrot.lane.b32.xlu0 %v3060, 96
    %v4272 = vpop.permute.xlu0 %4271
    %v4273 = vsel %vm381, %v4270, 0
    %v4275 = vsel %vm381, %v4272, 0
    %4277 = vmatprep.subr.mxu0 0.0
    %4278 = vmatpush1.xpose.msra.mxu0 %v4275
    %4279 = vmatprep.subr.mxu0 0.0
    %4280 = vmatpush1.xpose.msra.mxu0 0.0
    %4281 = vmatprep.subr.mxu0 0.0
    %4282 = vmatpush1.xpose.msra.mxu0 0.0
    %4283 = vmatprep.subr.mxu0 0.0
    %4284 = vmatpush1.xpose.msra.mxu0 0.0
    %4285 = vmatprep.subr.mxu0 0.0
    %4286 = vmatpush1.xpose.msra.mxu0 0.0
    %4287 = vmatprep.subr.mxu0 0.0
    %4288 = vmatpush1.xpose.msra.mxu0 0.0
    %4289 = vmatprep.subr.mxu0 0.0
    %4290 = vmatpush1.xpose.msra.mxu0 0.0
    %4291 = vmatprep.subr.mxu0 0.0
    %4292 = vmatpush1.xpose.msra.mxu0 0.0
    %4293 = vmatprep.subr.mxu0 0.0
    %4294 = vmatpush1.xpose.msra.mxu0 0.0
    %4295 = vmatprep.subr.mxu0 0.0
    %4296 = vmatpush1.xpose.msra.mxu0 0.0
    %4297 = vmatprep.subr.mxu0 0.0
    %4298 = vmatpush1.xpose.msra.mxu0 0.0
    %4299 = vmatprep.subr.mxu0 0.0
    %4300 = vmatpush1.xpose.msra.mxu0 0.0
    %4301 = vmatprep.subr.mxu0 0.0
    %4302 = vmatpush1.xpose.msra.mxu0 0.0
    %4303 = vmatprep.subr.mxu0 0.0
    %4304 = vmatpush1.xpose.msra.mxu0 0.0
    %4305 = vmatprep.subr.mxu0 0.0
    %4306 = vmatpush1.xpose.msra.mxu0 0.0
    %4307 = vmatprep.subr.mxu0 0.0
    %4308 = vmatpush1.xpose.msra.mxu0 0.0
    %4309 = vmatprep.subr.mxu0 0.0
    %4310 = vmatpush1.xpose.msra.mxu0 0.0
    %4311 = vmatprep.subr.mxu0 0.0
    %4312 = vmatpush1.xpose.msra.mxu0 0.0
    %4313 = vmatprep.subr.mxu0 0.0
    %4314 = vmatpush1.xpose.msra.mxu0 0.0
    %4315 = vmatprep.subr.mxu0 0.0
    %4316 = vmatpush1.xpose.msra.mxu0 0.0
    %4317 = vmatprep.subr.mxu0 0.0
    %4318 = vmatpush1.xpose.msra.mxu0 0.0
    %4319 = vmatprep.subr.mxu0 0.0
    %4320 = vmatpush1.xpose.msra.mxu0 0.0
    %4321 = vmatprep.subr.mxu0 0.0
    %4322 = vmatpush1.xpose.msra.mxu0 0.0
    %4323 = vmatprep.subr.mxu0 0.0
    %4324 = vmatpush1.xpose.msra.mxu0 0.0
    %4325 = vmatprep.subr.mxu0 0.0
    %4326 = vmatpush1.xpose.msra.mxu0 0.0
    %4327 = vmatprep.subr.mxu0 0.0
    %4328 = vmatpush1.xpose.msra.mxu0 0.0
    %4329 = vmatprep.subr.mxu0 0.0
    %4330 = vmatpush1.xpose.msra.mxu0 0.0
    %4331 = vmatprep.subr.mxu0 0.0
    %4332 = vmatpush1.xpose.msra.mxu0 0.0
    %4333 = vmatprep.subr.mxu0 0.0
    %4334 = vmatpush1.xpose.msra.mxu0 0.0
    %4335 = vmatprep.subr.mxu0 0.0
    %4336 = vmatpush1.xpose.msra.mxu0 0.0
    %4337 = vmatprep.subr.mxu0 0.0
    %4338 = vmatpush1.xpose.msra.mxu0 0.0
    %4339 = vmatprep.subr.mxu0 0.0
    %4340 = vmatpush1.xpose.msra.mxu0 0.0
    %4341 = vmatprep.mubr.f32.mxu0 0.0
    %4342 = vmatmul.mubr.f32.gmra.mrb[0].mxu0 %v4273
    %v4343 = vpop.f32.mrb[0].mxu0
    %v4344 = vadd.f32 0.0, %v4343
    %v4345 = vpop.f32.mrb[0].mxu0
    %4346 = vdwg.mxu0
    %v4347 = vmul.f32 %v4344, 0.17677669
    %v4348 = vsel %vm459, %v4347, -inf
    %4349 = vmax.xlane.f32.xlu0 %v4348
    %v4350 = vpop.xlane.xlu0 %4349
    %v4351 = vsub.f32 %v4347, %v4350
    %v4352 = vmul.f32 %v4351, 1.442695
    %v4353 = vpow.pop %v4352
    %v4354 = vsel %vm459, %v4353, 0.0
    %4355 = vadd.xlane.f32.xlu0 %v4354
    %v4356 = vpop.xlane.xlu0 %4355
    %v4357 = vrcp.pop %v4356
    %v4358 = vmul.f32 %v4353, %v4357
    %4360 = vrot.lane.b32.xlu0 %v3134, 96
    %v4361 = vpop.permute.xlu0 %4360
    %v4364 = vsel %vm459, %v4358, 0
    %4366 = vmatprep.subr.mxu0 0.0
    %4367 = vmatpush1.msra.mxu0 %v4361
    %4368 = vmatprep.subr.mxu0 0.0
    %4369 = vmatpush1.msra.mxu0 0.0
    %4370 = vmatprep.subr.mxu0 0.0
    %4371 = vmatpush1.msra.mxu0 0.0
    %4372 = vmatprep.subr.mxu0 0.0
    %4373 = vmatpush1.msra.mxu0 0.0
    %4374 = vmatprep.subr.mxu0 0.0
    %4375 = vmatpush1.msra.mxu0 0.0
    %4376 = vmatprep.subr.mxu0 0.0
    %4377 = vmatpush1.msra.mxu0 0.0
    %4378 = vmatprep.subr.mxu0 0.0
    %4379 = vmatpush1.msra.mxu0 0.0
    %4380 = vmatprep.subr.mxu0 0.0
    %4381 = vmatpush1.msra.mxu0 0.0
    %4382 = vmatprep.subr.mxu0 0.0
    %4383 = vmatpush1.msra.mxu0 0.0
    %4384 = vmatprep.subr.mxu0 0.0
    %4385 = vmatpush1.msra.mxu0 0.0
    %4386 = vmatprep.subr.mxu0 0.0
    %4387 = vmatpush1.msra.mxu0 0.0
    %4388 = vmatprep.subr.mxu0 0.0
    %4389 = vmatpush1.msra.mxu0 0.0
    %4390 = vmatprep.subr.mxu0 0.0
    %4391 = vmatpush1.msra.mxu0 0.0
    %4392 = vmatprep.subr.mxu0 0.0
    %4393 = vmatpush1.msra.mxu0 0.0
    %4394 = vmatprep.subr.mxu0 0.0
    %4395 = vmatpush1.msra.mxu0 0.0
    %4396 = vmatprep.subr.mxu0 0.0
    %4397 = vmatpush1.msra.mxu0 0.0
    %4398 = vmatprep.subr.mxu0 0.0
    %4399 = vmatpush1.msra.mxu0 0.0
    %4400 = vmatprep.subr.mxu0 0.0
    %4401 = vmatpush1.msra.mxu0 0.0
    %4402 = vmatprep.subr.mxu0 0.0
    %4403 = vmatpush1.msra.mxu0 0.0
    %4404 = vmatprep.subr.mxu0 0.0
    %4405 = vmatpush1.msra.mxu0 0.0
    %4406 = vmatprep.subr.mxu0 0.0
    %4407 = vmatpush1.msra.mxu0 0.0
    %4408 = vmatprep.subr.mxu0 0.0
    %4409 = vmatpush1.msra.mxu0 0.0
    %4410 = vmatprep.subr.mxu0 0.0
    %4411 = vmatpush1.msra.mxu0 0.0
    %4412 = vmatprep.subr.mxu0 0.0
    %4413 = vmatpush1.msra.mxu0 0.0
    %4414 = vmatprep.subr.mxu0 0.0
    %4415 = vmatpush1.msra.mxu0 0.0
    %4416 = vmatprep.subr.mxu0 0.0
    %4417 = vmatpush1.msra.mxu0 0.0
    %4418 = vmatprep.subr.mxu0 0.0
    %4419 = vmatpush1.msra.mxu0 0.0
    %4420 = vmatprep.subr.mxu0 0.0
    %4421 = vmatpush1.msra.mxu0 0.0
    %4422 = vmatprep.subr.mxu0 0.0
    %4423 = vmatpush1.msra.mxu0 0.0
    %4424 = vmatprep.subr.mxu0 0.0
    %4425 = vmatpush1.msra.mxu0 0.0
    %4426 = vmatprep.subr.mxu0 0.0
    %4427 = vmatpush1.msra.mxu0 0.0
    %4428 = vmatprep.subr.mxu0 0.0
    %4429 = vmatpush1.msra.mxu0 0.0
    %4430 = vmatprep.mubr.f32.mxu0 0.0
    %4431 = vmatmul.mubr.f32.gmra.mrb[0].mxu0 %v4364
    %v4432 = vpop.f32.mrb[0].mxu0
    %v4433 = vadd.f32 0.0, %v4432
    %v4434 = vpop.f32.mrb[0].mxu0
    %4435 = vdwg.mxu0
    %v4437 = vsel %vm381, %v4433, 0
    %4439 = vmatprep.subr.mxu0 0.0
    %4440 = vmatpush1.msra.mxu0 %v3142
    %4441 = vmatprep.subr.mxu0 0.0
    %4442 = vmatpush1.msra.mxu0 %v3143
    %4443 = vmatprep.subr.mxu0 0.0
    %4444 = vmatpush1.msra.mxu0 %v3144
    %4445 = vmatprep.subr.mxu0 0.0
    %4446 = vmatpush1.msra.mxu0 %v3145
    %4447 = vmatprep.subr.mxu0 0.0
    %4448 = vmatpush1.msra.mxu0 0.0
    %4449 = vmatprep.subr.mxu0 0.0
    %4450 = vmatpush1.msra.mxu0 0.0
    %4451 = vmatprep.subr.mxu0 0.0
    %4452 = vmatpush1.msra.mxu0 0.0
    %4453 = vmatprep.subr.mxu0 0.0
    %4454 = vmatpush1.msra.mxu0 0.0
    %4455 = vmatprep.subr.mxu0 0.0
    %4456 = vmatpush1.msra.mxu0 0.0
    %4457 = vmatprep.subr.mxu0 0.0
    %4458 = vmatpush1.msra.mxu0 0.0
    %4459 = vmatprep.subr.mxu0 0.0
    %4460 = vmatpush1.msra.mxu0 0.0
    %4461 = vmatprep.subr.mxu0 0.0
    %4462 = vmatpush1.msra.mxu0 0.0
    %4463 = vmatprep.subr.mxu0 0.0
    %4464 = vmatpush1.msra.mxu0 0.0
    %4465 = vmatprep.subr.mxu0 0.0
    %4466 = vmatpush1.msra.mxu0 0.0
    %4467 = vmatprep.subr.mxu0 0.0
    %4468 = vmatpush1.msra.mxu0 0.0
    %4469 = vmatprep.subr.mxu0 0.0
    %4470 = vmatpush1.msra.mxu0 0.0
    %4471 = vmatprep.subr.mxu0 0.0
    %4472 = vmatpush1.msra.mxu0 0.0
    %4473 = vmatprep.subr.mxu0 0.0
    %4474 = vmatpush1.msra.mxu0 0.0
    %4475 = vmatprep.subr.mxu0 0.0
    %4476 = vmatpush1.msra.mxu0 0.0
    %4477 = vmatprep.subr.mxu0 0.0
    %4478 = vmatpush1.msra.mxu0 0.0
    %4479 = vmatprep.subr.mxu0 0.0
    %4480 = vmatpush1.msra.mxu0 0.0
    %4481 = vmatprep.subr.mxu0 0.0
    %4482 = vmatpush1.msra.mxu0 0.0
    %4483 = vmatprep.subr.mxu0 0.0
    %4484 = vmatpush1.msra.mxu0 0.0
    %4485 = vmatprep.subr.mxu0 0.0
    %4486 = vmatpush1.msra.mxu0 0.0
    %4487 = vmatprep.subr.mxu0 0.0
    %4488 = vmatpush1.msra.mxu0 0.0
    %4489 = vmatprep.subr.mxu0 0.0
    %4490 = vmatpush1.msra.mxu0 0.0
    %4491 = vmatprep.subr.mxu0 0.0
    %4492 = vmatpush1.msra.mxu0 0.0
    %4493 = vmatprep.subr.mxu0 0.0
    %4494 = vmatpush1.msra.mxu0 0.0
    %4495 = vmatprep.subr.mxu0 0.0
    %4496 = vmatpush1.msra.mxu0 0.0
    %4497 = vmatprep.subr.mxu0 0.0
    %4498 = vmatpush1.msra.mxu0 0.0
    %4499 = vmatprep.subr.mxu0 0.0
    %4500 = vmatpush1.msra.mxu0 0.0
    %4501 = vmatprep.subr.mxu0 0.0
    %4502 = vmatpush1.msra.mxu0 0.0
    %4503 = vmatprep.mubr.f32.mxu0 0.0
    %4504 = vmatmul.mubr.f32.gmra.mrb[0].mxu0 %v4437
    %v4505 = vpop.f32.mrb[0].mxu0
    %v4506 = vadd.f32 0.0, %v4505
    %v4507 = vpop.f32.mrb[0].mxu0
    %4508 = vdwg.mxu0
    %v4510 = vsel %vm381, %v4266, 0
    %4512 = vmatprep.subr.mxu0 0.0
    %4513 = vmatpush1.msra.mxu0 %v3138
    %4514 = vmatprep.subr.mxu0 0.0
    %4515 = vmatpush1.msra.mxu0 %v3139
    %4516 = vmatprep.subr.mxu0 0.0
    %4517 = vmatpush1.msra.mxu0 %v3140
    %4518 = vmatprep.subr.mxu0 0.0
    %4519 = vmatpush1.msra.mxu0 %v3141
    %4520 = vmatprep.subr.mxu0 0.0
    %4521 = vmatpush1.msra.mxu0 0.0
    %4522 = vmatprep.subr.mxu0 0.0
    %4523 = vmatpush1.msra.mxu0 0.0
    %4524 = vmatprep.subr.mxu0 0.0
    %4525 = vmatpush1.msra.mxu0 0.0
    %4526 = vmatprep.subr.mxu0 0.0
    %4527 = vmatpush1.msra.mxu0 0.0
    %4528 = vmatprep.subr.mxu0 0.0
    %4529 = vmatpush1.msra.mxu0 0.0
    %4530 = vmatprep.subr.mxu0 0.0
    %4531 = vmatpush1.msra.mxu0 0.0
    %4532 = vmatprep.subr.mxu0 0.0
    %4533 = vmatpush1.msra.mxu0 0.0
    %4534 = vmatprep.subr.mxu0 0.0
    %4535 = vmatpush1.msra.mxu0 0.0
    %4536 = vmatprep.subr.mxu0 0.0
    %4537 = vmatpush1.msra.mxu0 0.0
    %4538 = vmatprep.subr.mxu0 0.0
    %4539 = vmatpush1.msra.mxu0 0.0
    %4540 = vmatprep.subr.mxu0 0.0
    %4541 = vmatpush1.msra.mxu0 0.0
    %4542 = vmatprep.subr.mxu0 0.0
    %4543 = vmatpush1.msra.mxu0 0.0
    %4544 = vmatprep.subr.mxu0 0.0
    %4545 = vmatpush1.msra.mxu0 0.0
    %4546 = vmatprep.subr.mxu0 0.0
    %4547 = vmatpush1.msra.mxu0 0.0
    %4548 = vmatprep.subr.mxu0 0.0
    %4549 = vmatpush1.msra.mxu0 0.0
    %4550 = vmatprep.subr.mxu0 0.0
    %4551 = vmatpush1.msra.mxu0 0.0
    %4552 = vmatprep.subr.mxu0 0.0
    %4553 = vmatpush1.msra.mxu0 0.0
    %4554 = vmatprep.subr.mxu0 0.0
    %4555 = vmatpush1.msra.mxu0 0.0
    %4556 = vmatprep.subr.mxu0 0.0
    %4557 = vmatpush1.msra.mxu0 0.0
    %4558 = vmatprep.subr.mxu0 0.0
    %4559 = vmatpush1.msra.mxu0 0.0
    %4560 = vmatprep.subr.mxu0 0.0
    %4561 = vmatpush1.msra.mxu0 0.0
    %4562 = vmatprep.subr.mxu0 0.0
    %4563 = vmatpush1.msra.mxu0 0.0
    %4564 = vmatprep.subr.mxu0 0.0
    %4565 = vmatpush1.msra.mxu0 0.0
    %4566 = vmatprep.subr.mxu0 0.0
    %4567 = vmatpush1.msra.mxu0 0.0
    %4568 = vmatprep.subr.mxu0 0.0
    %4569 = vmatpush1.msra.mxu0 0.0
    %4570 = vmatprep.subr.mxu0 0.0
    %4571 = vmatpush1.msra.mxu0 0.0
    %4572 = vmatprep.subr.mxu0 0.0
    %4573 = vmatpush1.msra.mxu0 0.0
    %4574 = vmatprep.subr.mxu0 0.0
    %4575 = vmatpush1.msra.mxu0 0.0
    %4576 = vmatprep.mubr.f32.mxu0 0.0
    %4577 = vmatmul.mubr.f32.gmra.mrb[0].mxu0 %v4510
    %v4578 = vpop.f32.mrb[0].mxu0
    %v4579 = vadd.f32 %v4506, %v4578
    %v4580 = vpop.f32.mrb[0].mxu0
    %4581 = vdwg.mxu0
    %4582 = vrot.lane.b32.xlu0 %v3058, 64
    %v4583 = vpop.permute.xlu0 %4582
    %4584 = vrot.lane.b32.xlu0 %v3060, 64
    %v4585 = vpop.permute.xlu0 %4584
    %v4586 = vsel %vm381, %v4583, 0
    %v4588 = vsel %vm381, %v4585, 0
    %4590 = vmatprep.subr.mxu0 0.0
    %4591 = vmatpush1.xpose.msra.mxu0 %v4588
    %4592 = vmatprep.subr.mxu0 0.0
    %4593 = vmatpush1.xpose.msra.mxu0 0.0
    %4594 = vmatprep.subr.mxu0 0.0
    %4595 = vmatpush1.xpose.msra.mxu0 0.0
    %4596 = vmatprep.subr.mxu0 0.0
    %4597 = vmatpush1.xpose.msra.mxu0 0.0
    %4598 = vmatprep.subr.mxu0 0.0
    %4599 = vmatpush1.xpose.msra.mxu0 0.0
    %4600 = vmatprep.subr.mxu0 0.0
    %4601 = vmatpush1.xpose.msra.mxu0 0.0
    %4602 = vmatprep.subr.mxu0 0.0
    %4603 = vmatpush1.xpose.msra.mxu0 0.0
    %4604 = vmatprep.subr.mxu0 0.0
    %4605 = vmatpush1.xpose.msra.mxu0 0.0
    %4606 = vmatprep.subr.mxu0 0.0
    %4607 = vmatpush1.xpose.msra.mxu0 0.0
    %4608 = vmatprep.subr.mxu0 0.0
    %4609 = vmatpush1.xpose.msra.mxu0 0.0
    %4610 = vmatprep.subr.mxu0 0.0
    %4611 = vmatpush1.xpose.msra.mxu0 0.0
    %4612 = vmatprep.subr.mxu0 0.0
    %4613 = vmatpush1.xpose.msra.mxu0 0.0
    %4614 = vmatprep.subr.mxu0 0.0
    %4615 = vmatpush1.xpose.msra.mxu0 0.0
    %4616 = vmatprep.subr.mxu0 0.0
    %4617 = vmatpush1.xpose.msra.mxu0 0.0
    %4618 = vmatprep.subr.mxu0 0.0
    %4619 = vmatpush1.xpose.msra.mxu0 0.0
    %4620 = vmatprep.subr.mxu0 0.0
    %4621 = vmatpush1.xpose.msra.mxu0 0.0
    %4622 = vmatprep.subr.mxu0 0.0
    %4623 = vmatpush1.xpose.msra.mxu0 0.0
    %4624 = vmatprep.subr.mxu0 0.0
    %4625 = vmatpush1.xpose.msra.mxu0 0.0
    %4626 = vmatprep.subr.mxu0 0.0
    %4627 = vmatpush1.xpose.msra.mxu0 0.0
    %4628 = vmatprep.subr.mxu0 0.0
    %4629 = vmatpush1.xpose.msra.mxu0 0.0
    %4630 = vmatprep.subr.mxu0 0.0
    %4631 = vmatpush1.xpose.msra.mxu0 0.0
    %4632 = vmatprep.subr.mxu0 0.0
    %4633 = vmatpush1.xpose.msra.mxu0 0.0
    %4634 = vmatprep.subr.mxu0 0.0
    %4635 = vmatpush1.xpose.msra.mxu0 0.0
    %4636 = vmatprep.subr.mxu0 0.0
    %4637 = vmatpush1.xpose.msra.mxu0 0.0
    %4638 = vmatprep.subr.mxu0 0.0
    %4639 = vmatpush1.xpose.msra.mxu0 0.0
    %4640 = vmatprep.subr.mxu0 0.0
    %4641 = vmatpush1.xpose.msra.mxu0 0.0
    %4642 = vmatprep.subr.mxu0 0.0
    %4643 = vmatpush1.xpose.msra.mxu0 0.0
    %4644 = vmatprep.subr.mxu0 0.0
    %4645 = vmatpush1.xpose.msra.mxu0 0.0
    %4646 = vmatprep.subr.mxu0 0.0
    %4647 = vmatpush1.xpose.msra.mxu0 0.0
    %4648 = vmatprep.subr.mxu0 0.0
    %4649 = vmatpush1.xpose.msra.mxu0 0.0
    %4650 = vmatprep.subr.mxu0 0.0
    %4651 = vmatpush1.xpose.msra.mxu0 0.0
    %4652 = vmatprep.subr.mxu0 0.0
    %4653 = vmatpush1.xpose.msra.mxu0 0.0
    %4654 = vmatprep.mubr.f32.mxu0 0.0
    %4655 = vmatmul.mubr.f32.gmra.mrb[0].mxu0 %v4586
    %v4656 = vpop.f32.mrb[0].mxu0
    %v4657 = vadd.f32 0.0, %v4656
    %v4658 = vpop.f32.mrb[0].mxu0
    %4659 = vdwg.mxu0
    %v4660 = vmul.f32 %v4657, 0.17677669
    %v4661 = vsel %vm459, %v4660, -inf
    %4662 = vmax.xlane.f32.xlu0 %v4661
    %v4663 = vpop.xlane.xlu0 %4662
    %v4664 = vsub.f32 %v4660, %v4663
    %v4665 = vmul.f32 %v4664, 1.442695
    %v4666 = vpow.pop %v4665
    %v4667 = vsel %vm459, %v4666, 0.0
    %4668 = vadd.xlane.f32.xlu0 %v4667
    %v4669 = vpop.xlane.xlu0 %4668
    %v4670 = vrcp.pop %v4669
    %v4671 = vmul.f32 %v4666, %v4670
    %4672 = vrot.lane.b32.xlu0 %v3134, 64
    %v4673 = vpop.permute.xlu0 %4672
    %v4676 = vsel %vm459, %v4671, 0
    %4678 = vmatprep.subr.mxu0 0.0
    %4679 = vmatpush1.msra.mxu0 %v4673
    %4680 = vmatprep.subr.mxu0 0.0
    %4681 = vmatpush1.msra.mxu0 0.0
    %4682 = vmatprep.subr.mxu0 0.0
    %4683 = vmatpush1.msra.mxu0 0.0
    %4684 = vmatprep.subr.mxu0 0.0
    %4685 = vmatpush1.msra.mxu0 0.0
    %4686 = vmatprep.subr.mxu0 0.0
    %4687 = vmatpush1.msra.mxu0 0.0
    %4688 = vmatprep.subr.mxu0 0.0
    %4689 = vmatpush1.msra.mxu0 0.0
    %4690 = vmatprep.subr.mxu0 0.0
    %4691 = vmatpush1.msra.mxu0 0.0
    %4692 = vmatprep.subr.mxu0 0.0
    %4693 = vmatpush1.msra.mxu0 0.0
    %4694 = vmatprep.subr.mxu0 0.0
    %4695 = vmatpush1.msra.mxu0 0.0
    %4696 = vmatprep.subr.mxu0 0.0
    %4697 = vmatpush1.msra.mxu0 0.0
    %4698 = vmatprep.subr.mxu0 0.0
    %4699 = vmatpush1.msra.mxu0 0.0
    %4700 = vmatprep.subr.mxu0 0.0
    %4701 = vmatpush1.msra.mxu0 0.0
    %4702 = vmatprep.subr.mxu0 0.0
    %4703 = vmatpush1.msra.mxu0 0.0
    %4704 = vmatprep.subr.mxu0 0.0
    %4705 = vmatpush1.msra.mxu0 0.0
    %4706 = vmatprep.subr.mxu0 0.0
    %4707 = vmatpush1.msra.mxu0 0.0
    %4708 = vmatprep.subr.mxu0 0.0
    %4709 = vmatpush1.msra.mxu0 0.0
    %4710 = vmatprep.subr.mxu0 0.0
    %4711 = vmatpush1.msra.mxu0 0.0
    %4712 = vmatprep.subr.mxu0 0.0
    %4713 = vmatpush1.msra.mxu0 0.0
    %4714 = vmatprep.subr.mxu0 0.0
    %4715 = vmatpush1.msra.mxu0 0.0
    %4716 = vmatprep.subr.mxu0 0.0
    %4717 = vmatpush1.msra.mxu0 0.0
    %4718 = vmatprep.subr.mxu0 0.0
    %4719 = vmatpush1.msra.mxu0 0.0
    %4720 = vmatprep.subr.mxu0 0.0
    %4721 = vmatpush1.msra.mxu0 0.0
    %4722 = vmatprep.subr.mxu0 0.0
    %4723 = vmatpush1.msra.mxu0 0.0
    %4724 = vmatprep.subr.mxu0 0.0
    %4725 = vmatpush1.msra.mxu0 0.0
    %4726 = vmatprep.subr.mxu0 0.0
    %4727 = vmatpush1.msra.mxu0 0.0
    %4728 = vmatprep.subr.mxu0 0.0
    %4729 = vmatpush1.msra.mxu0 0.0
    %4730 = vmatprep.subr.mxu0 0.0
    %4731 = vmatpush1.msra.mxu0 0.0
    %4732 = vmatprep.subr.mxu0 0.0
    %4733 = vmatpush1.msra.mxu0 0.0
    %4734 = vmatprep.subr.mxu0 0.0
    %4735 = vmatpush1.msra.mxu0 0.0
    %4736 = vmatprep.subr.mxu0 0.0
    %4737 = vmatpush1.msra.mxu0 0.0
    %4738 = vmatprep.subr.mxu0 0.0
    %4739 = vmatpush1.msra.mxu0 0.0
    %4740 = vmatprep.subr.mxu0 0.0
    %4741 = vmatpush1.msra.mxu0 0.0
    %4742 = vmatprep.mubr.f32.mxu0 0.0
    %4743 = vmatmul.mubr.f32.gmra.mrb[0].mxu0 %v4676
    %v4744 = vpop.f32.mrb[0].mxu0
    %v4745 = vadd.f32 0.0, %v4744
    %v4746 = vpop.f32.mrb[0].mxu0
    %4747 = vdwg.mxu0
    %v4749 = vsel %vm381, %v4745, 0
    %4751 = vmatprep.subr.mxu0 0.0
    %4752 = vmatpush1.msra.mxu0 %v3146
    %4753 = vmatprep.subr.mxu0 0.0
    %4754 = vmatpush1.msra.mxu0 %v3147
    %4755 = vmatprep.subr.mxu0 0.0
    %4756 = vmatpush1.msra.mxu0 %v3148
    %4757 = vmatprep.subr.mxu0 0.0
    %4758 = vmatpush1.msra.mxu0 %v3149
    %4759 = vmatprep.subr.mxu0 0.0
    %4760 = vmatpush1.msra.mxu0 0.0
    %4761 = vmatprep.subr.mxu0 0.0
    %4762 = vmatpush1.msra.mxu0 0.0
    %4763 = vmatprep.subr.mxu0 0.0
    %4764 = vmatpush1.msra.mxu0 0.0
    %4765 = vmatprep.subr.mxu0 0.0
    %4766 = vmatpush1.msra.mxu0 0.0
    %4767 = vmatprep.subr.mxu0 0.0
    %4768 = vmatpush1.msra.mxu0 0.0
    %4769 = vmatprep.subr.mxu0 0.0
    %4770 = vmatpush1.msra.mxu0 0.0
    %4771 = vmatprep.subr.mxu0 0.0
    %4772 = vmatpush1.msra.mxu0 0.0
    %4773 = vmatprep.subr.mxu0 0.0
    %4774 = vmatpush1.msra.mxu0 0.0
    %4775 = vmatprep.subr.mxu0 0.0
    %4776 = vmatpush1.msra.mxu0 0.0
    %4777 = vmatprep.subr.mxu0 0.0
    %4778 = vmatpush1.msra.mxu0 0.0
    %4779 = vmatprep.subr.mxu0 0.0
    %4780 = vmatpush1.msra.mxu0 0.0
    %4781 = vmatprep.subr.mxu0 0.0
    %4782 = vmatpush1.msra.mxu0 0.0
    %4783 = vmatprep.subr.mxu0 0.0
    %4784 = vmatpush1.msra.mxu0 0.0
    %4785 = vmatprep.subr.mxu0 0.0
    %4786 = vmatpush1.msra.mxu0 0.0
    %4787 = vmatprep.subr.mxu0 0.0
    %4788 = vmatpush1.msra.mxu0 0.0
    %4789 = vmatprep.subr.mxu0 0.0
    %4790 = vmatpush1.msra.mxu0 0.0
    %4791 = vmatprep.subr.mxu0 0.0
    %4792 = vmatpush1.msra.mxu0 0.0
    %4793 = vmatprep.subr.mxu0 0.0
    %4794 = vmatpush1.msra.mxu0 0.0
    %4795 = vmatprep.subr.mxu0 0.0
    %4796 = vmatpush1.msra.mxu0 0.0
    %4797 = vmatprep.subr.mxu0 0.0
    %4798 = vmatpush1.msra.mxu0 0.0
    %4799 = vmatprep.subr.mxu0 0.0
    %4800 = vmatpush1.msra.mxu0 0.0
    %4801 = vmatprep.subr.mxu0 0.0
    %4802 = vmatpush1.msra.mxu0 0.0
    %4803 = vmatprep.subr.mxu0 0.0
    %4804 = vmatpush1.msra.mxu0 0.0
    %4805 = vmatprep.subr.mxu0 0.0
    %4806 = vmatpush1.msra.mxu0 0.0
    %4807 = vmatprep.subr.mxu0 0.0
    %4808 = vmatpush1.msra.mxu0 0.0
    %4809 = vmatprep.subr.mxu0 0.0
    %4810 = vmatpush1.msra.mxu0 0.0
    %4811 = vmatprep.subr.mxu0 0.0
    %4812 = vmatpush1.msra.mxu0 0.0
    %4813 = vmatprep.subr.mxu0 0.0
    %4814 = vmatpush1.msra.mxu0 0.0
    %4815 = vmatprep.mubr.f32.mxu0 0.0
    %4816 = vmatmul.mubr.f32.gmra.mrb[0].mxu0 %v4749
    %v4817 = vpop.f32.mrb[0].mxu0
    %v4818 = vadd.f32 0.0, %v4817
    %v4819 = vpop.f32.mrb[0].mxu0
    %4820 = vdwg.mxu0
    %v4821 = vadd.f32 %v4579, %v4818
    %4822 = vrot.lane.b32.xlu0 %v3058, 32
    %v4823 = vpop.permute.xlu0 %4822
    %4824 = vrot.lane.b32.xlu0 %v3060, 32
    %v4825 = vpop.permute.xlu0 %4824
    %v4826 = vsel %vm381, %v4823, 0
    %v4828 = vsel %vm381, %v4825, 0
    %4830 = vmatprep.subr.mxu0 0.0
    %4831 = vmatpush1.xpose.msra.mxu0 %v4828
    %4832 = vmatprep.subr.mxu0 0.0
    %4833 = vmatpush1.xpose.msra.mxu0 0.0
    %4834 = vmatprep.subr.mxu0 0.0
    %4835 = vmatpush1.xpose.msra.mxu0 0.0
    %4836 = vmatprep.subr.mxu0 0.0
    %4837 = vmatpush1.xpose.msra.mxu0 0.0
    %4838 = vmatprep.subr.mxu0 0.0
    %4839 = vmatpush1.xpose.msra.mxu0 0.0
    %4840 = vmatprep.subr.mxu0 0.0
    %4841 = vmatpush1.xpose.msra.mxu0 0.0
    %4842 = vmatprep.subr.mxu0 0.0
    %4843 = vmatpush1.xpose.msra.mxu0 0.0
    %4844 = vmatprep.subr.mxu0 0.0
    %4845 = vmatpush1.xpose.msra.mxu0 0.0
    %4846 = vmatprep.subr.mxu0 0.0
    %4847 = vmatpush1.xpose.msra.mxu0 0.0
    %4848 = vmatprep.subr.mxu0 0.0
    %4849 = vmatpush1.xpose.msra.mxu0 0.0
    %4850 = vmatprep.subr.mxu0 0.0
    %4851 = vmatpush1.xpose.msra.mxu0 0.0
    %4852 = vmatprep.subr.mxu0 0.0
    %4853 = vmatpush1.xpose.msra.mxu0 0.0
    %4854 = vmatprep.subr.mxu0 0.0
    %4855 = vmatpush1.xpose.msra.mxu0 0.0
    %4856 = vmatprep.subr.mxu0 0.0
    %4857 = vmatpush1.xpose.msra.mxu0 0.0
    %4858 = vmatprep.subr.mxu0 0.0
    %4859 = vmatpush1.xpose.msra.mxu0 0.0
    %4860 = vmatprep.subr.mxu0 0.0
    %4861 = vmatpush1.xpose.msra.mxu0 0.0
    %4862 = vmatprep.subr.mxu0 0.0
    %4863 = vmatpush1.xpose.msra.mxu0 0.0
    %4864 = vmatprep.subr.mxu0 0.0
    %4865 = vmatpush1.xpose.msra.mxu0 0.0
    %4866 = vmatprep.subr.mxu0 0.0
    %4867 = vmatpush1.xpose.msra.mxu0 0.0
    %4868 = vmatprep.subr.mxu0 0.0
    %4869 = vmatpush1.xpose.msra.mxu0 0.0
    %4870 = vmatprep.subr.mxu0 0.0
    %4871 = vmatpush1.xpose.msra.mxu0 0.0
    %4872 = vmatprep.subr.mxu0 0.0
    %4873 = vmatpush1.xpose.msra.mxu0 0.0
    %4874 = vmatprep.subr.mxu0 0.0
    %4875 = vmatpush1.xpose.msra.mxu0 0.0
    %4876 = vmatprep.subr.mxu0 0.0
    %4877 = vmatpush1.xpose.msra.mxu0 0.0
    %4878 = vmatprep.subr.mxu0 0.0
    %4879 = vmatpush1.xpose.msra.mxu0 0.0
    %4880 = vmatprep.subr.mxu0 0.0
    %4881 = vmatpush1.xpose.msra.mxu0 0.0
    %4882 = vmatprep.subr.mxu0 0.0
    %4883 = vmatpush1.xpose.msra.mxu0 0.0
    %4884 = vmatprep.subr.mxu0 0.0
    %4885 = vmatpush1.xpose.msra.mxu0 0.0
    %4886 = vmatprep.subr.mxu0 0.0
    %4887 = vmatpush1.xpose.msra.mxu0 0.0
    %4888 = vmatprep.subr.mxu0 0.0
    %4889 = vmatpush1.xpose.msra.mxu0 0.0
    %4890 = vmatprep.subr.mxu0 0.0
    %4891 = vmatpush1.xpose.msra.mxu0 0.0
    %4892 = vmatprep.subr.mxu0 0.0
    %4893 = vmatpush1.xpose.msra.mxu0 0.0
    %4894 = vmatprep.mubr.f32.mxu0 0.0
    %4895 = vmatmul.mubr.f32.gmra.mrb[0].mxu0 %v4826
    %v4896 = vpop.f32.mrb[0].mxu0
    %v4897 = vadd.f32 0.0, %v4896
    %v4898 = vpop.f32.mrb[0].mxu0
    %4899 = vdwg.mxu0
    %v4900 = vmul.f32 %v4897, 0.17677669
    %v4901 = vsel %vm459, %v4900, -inf
    %4902 = vmax.xlane.f32.xlu0 %v4901
    %v4903 = vpop.xlane.xlu0 %4902
    %v4904 = vsub.f32 %v4900, %v4903
    %v4905 = vmul.f32 %v4904, 1.442695
    %v4906 = vpow.pop %v4905
    %v4907 = vsel %vm459, %v4906, 0.0
    %4908 = vadd.xlane.f32.xlu0 %v4907
    %v4909 = vpop.xlane.xlu0 %4908
    %v4910 = vrcp.pop %v4909
    %v4911 = vmul.f32 %v4906, %v4910
    %4912 = vrot.lane.b32.xlu0 %v3134, 32
    %v4913 = vpop.permute.xlu0 %4912
    %v4916 = vsel %vm459, %v4911, 0
    %4918 = vmatprep.subr.mxu0 0.0
    %4919 = vmatpush1.msra.mxu0 %v4913
    %4920 = vmatprep.subr.mxu0 0.0
    %4921 = vmatpush1.msra.mxu0 0.0
    %4922 = vmatprep.subr.mxu0 0.0
    %4923 = vmatpush1.msra.mxu0 0.0
    %4924 = vmatprep.subr.mxu0 0.0
    %4925 = vmatpush1.msra.mxu0 0.0
    %4926 = vmatprep.subr.mxu0 0.0
    %4927 = vmatpush1.msra.mxu0 0.0
    %4928 = vmatprep.subr.mxu0 0.0
    %4929 = vmatpush1.msra.mxu0 0.0
    %4930 = vmatprep.subr.mxu0 0.0
    %4931 = vmatpush1.msra.mxu0 0.0
    %4932 = vmatprep.subr.mxu0 0.0
    %4933 = vmatpush1.msra.mxu0 0.0
    %4934 = vmatprep.subr.mxu0 0.0
    %4935 = vmatpush1.msra.mxu0 0.0
    %4936 = vmatprep.subr.mxu0 0.0
    %4937 = vmatpush1.msra.mxu0 0.0
    %4938 = vmatprep.subr.mxu0 0.0
    %4939 = vmatpush1.msra.mxu0 0.0
    %4940 = vmatprep.subr.mxu0 0.0
    %4941 = vmatpush1.msra.mxu0 0.0
    %4942 = vmatprep.subr.mxu0 0.0
    %4943 = vmatpush1.msra.mxu0 0.0
    %4944 = vmatprep.subr.mxu0 0.0
    %4945 = vmatpush1.msra.mxu0 0.0
    %4946 = vmatprep.subr.mxu0 0.0
    %4947 = vmatpush1.msra.mxu0 0.0
    %4948 = vmatprep.subr.mxu0 0.0
    %4949 = vmatpush1.msra.mxu0 0.0
    %4950 = vmatprep.subr.mxu0 0.0
    %4951 = vmatpush1.msra.mxu0 0.0
    %4952 = vmatprep.subr.mxu0 0.0
    %4953 = vmatpush1.msra.mxu0 0.0
    %4954 = vmatprep.subr.mxu0 0.0
    %4955 = vmatpush1.msra.mxu0 0.0
    %4956 = vmatprep.subr.mxu0 0.0
    %4957 = vmatpush1.msra.mxu0 0.0
    %4958 = vmatprep.subr.mxu0 0.0
    %4959 = vmatpush1.msra.mxu0 0.0
    %4960 = vmatprep.subr.mxu0 0.0
    %4961 = vmatpush1.msra.mxu0 0.0
    %4962 = vmatprep.subr.mxu0 0.0
    %4963 = vmatpush1.msra.mxu0 0.0
    %4964 = vmatprep.subr.mxu0 0.0
    %4965 = vmatpush1.msra.mxu0 0.0
    %4966 = vmatprep.subr.mxu0 0.0
    %4967 = vmatpush1.msra.mxu0 0.0
    %4968 = vmatprep.subr.mxu0 0.0
    %4969 = vmatpush1.msra.mxu0 0.0
    %4970 = vmatprep.subr.mxu0 0.0
    %4971 = vmatpush1.msra.mxu0 0.0
    %4972 = vmatprep.subr.mxu0 0.0
    %4973 = vmatpush1.msra.mxu0 0.0
    %4974 = vmatprep.subr.mxu0 0.0
    %4975 = vmatpush1.msra.mxu0 0.0
    %4976 = vmatprep.subr.mxu0 0.0
    %4977 = vmatpush1.msra.mxu0 0.0
    %4978 = vmatprep.subr.mxu0 0.0
    %4979 = vmatpush1.msra.mxu0 0.0
    %4980 = vmatprep.subr.mxu0 0.0
    %4981 = vmatpush1.msra.mxu0 0.0
    %4982 = vmatprep.mubr.f32.mxu0 0.0
    %4983 = vmatmul.mubr.f32.gmra.mrb[0].mxu0 %v4916
    %v4984 = vpop.f32.mrb[0].mxu0
    %v4985 = vadd.f32 0.0, %v4984
    %v4986 = vpop.f32.mrb[0].mxu0
    %4987 = vdwg.mxu0
    %v4989 = vsel %vm381, %v4985, 0
    %4991 = vmatprep.subr.mxu0 0.0
    %4992 = vmatpush1.msra.mxu0 %v3150
    %4993 = vmatprep.subr.mxu0 0.0
    %4994 = vmatpush1.msra.mxu0 %v3151
    %4995 = vmatprep.subr.mxu0 0.0
    %4996 = vmatpush1.msra.mxu0 %v3152
    %4997 = vmatprep.subr.mxu0 0.0
    %4998 = vmatpush1.msra.mxu0 %v3153
    %4999 = vmatprep.subr.mxu0 0.0
    %5000 = vmatpush1.msra.mxu0 0.0
    %5001 = vmatprep.subr.mxu0 0.0
    %5002 = vmatpush1.msra.mxu0 0.0
    %5003 = vmatprep.subr.mxu0 0.0
    %5004 = vmatpush1.msra.mxu0 0.0
    %5005 = vmatprep.subr.mxu0 0.0
    %5006 = vmatpush1.msra.mxu0 0.0
    %5007 = vmatprep.subr.mxu0 0.0
    %5008 = vmatpush1.msra.mxu0 0.0
    %5009 = vmatprep.subr.mxu0 0.0
    %5010 = vmatpush1.msra.mxu0 0.0
    %5011 = vmatprep.subr.mxu0 0.0
    %5012 = vmatpush1.msra.mxu0 0.0
    %5013 = vmatprep.subr.mxu0 0.0
    %5014 = vmatpush1.msra.mxu0 0.0
    %5015 = vmatprep.subr.mxu0 0.0
    %5016 = vmatpush1.msra.mxu0 0.0
    %5017 = vmatprep.subr.mxu0 0.0
    %5018 = vmatpush1.msra.mxu0 0.0
    %5019 = vmatprep.subr.mxu0 0.0
    %5020 = vmatpush1.msra.mxu0 0.0
    %5021 = vmatprep.subr.mxu0 0.0
    %5022 = vmatpush1.msra.mxu0 0.0
    %5023 = vmatprep.subr.mxu0 0.0
    %5024 = vmatpush1.msra.mxu0 0.0
    %5025 = vmatprep.subr.mxu0 0.0
    %5026 = vmatpush1.msra.mxu0 0.0
    %5027 = vmatprep.subr.mxu0 0.0
    %5028 = vmatpush1.msra.mxu0 0.0
    %5029 = vmatprep.subr.mxu0 0.0
    %5030 = vmatpush1.msra.mxu0 0.0
    %5031 = vmatprep.subr.mxu0 0.0
    %5032 = vmatpush1.msra.mxu0 0.0
    %5033 = vmatprep.subr.mxu0 0.0
    %5034 = vmatpush1.msra.mxu0 0.0
    %5035 = vmatprep.subr.mxu0 0.0
    %5036 = vmatpush1.msra.mxu0 0.0
    %5037 = vmatprep.subr.mxu0 0.0
    %5038 = vmatpush1.msra.mxu0 0.0
    %5039 = vmatprep.subr.mxu0 0.0
    %5040 = vmatpush1.msra.mxu0 0.0
    %5041 = vmatprep.subr.mxu0 0.0
    %5042 = vmatpush1.msra.mxu0 0.0
    %5043 = vmatprep.subr.mxu0 0.0
    %5044 = vmatpush1.msra.mxu0 0.0
    %5045 = vmatprep.subr.mxu0 0.0
    %5046 = vmatpush1.msra.mxu0 0.0
    %5047 = vmatprep.subr.mxu0 0.0
    %5048 = vmatpush1.msra.mxu0 0.0
    %5049 = vmatprep.subr.mxu0 0.0
    %5050 = vmatpush1.msra.mxu0 0.0
    %5051 = vmatprep.subr.mxu0 0.0
    %5052 = vmatpush1.msra.mxu0 0.0
    %5053 = vmatprep.subr.mxu0 0.0
    %5054 = vmatpush1.msra.mxu0 0.0
    %5055 = vmatprep.mubr.f32.mxu0 0.0
    %5056 = vmatmul.mubr.f32.gmra.mrb[0].mxu0 %v4989
    %v5057 = vpop.f32.mrb[0].mxu0
    %v5058 = vadd.f32 0.0, %v5057
    %v5059 = vpop.f32.mrb[0].mxu0
    %5060 = vdwg.mxu0
    %v5061 = vadd.f32 %v4821, %v5058
    %s5062 = scalar_lea.vmem %s5, 1
    %v5063 = vld [vmem:[%s5062] sm:$0x1]
    %v5065 = vlaneseq
    %v5066 = vshrl.u32 %v5065, 7
    %v5067 = vsub.s32 0, %v5066
    %v5068 = vrot.slane %v5063, %v5067
    %v5070 = vadd.f32 %v4107, %v5068
    %v5071 = vadd.f32 %v5061, %v5068
    %v5072 = vadd.f32 %v5070, %v2916
    %v5073 = vadd.f32 %v5071, %v2917
    %s5074 = scalar_lea.vmem %s6, 1
    %v5075 = vld [vmem:[%s5074] sm:$0x1]
    %s5076 = scalar_lea.vmem %s7, 1
    %v5077 = vld [vmem:[%s5076] sm:$0x1]
    %5078 = vadd.xlane.f32.xlu0 %v5072
    %v5079 = vpop.xlane.xlu0 %5078
    %5080 = vadd.xlane.f32.xlu0 %v5073
    %v5081 = vpop.xlane.xlu0 %5080
    %v5082 = vmul.f32 %v5079, %v2308
    %v5083 = vmul.f32 %v5081, %v2308
    %v5084 = vsub.f32 %v5072, %v5082
    %v5085 = vsub.f32 %v5073, %v5083
    %v5086 = vmul.f32 %v5084, %v5084
    %v5087 = vmul.f32 %v5085, %v5085
    %5088 = vadd.xlane.f32.xlu0 %v5086
    %v5089 = vpop.xlane.xlu0 %5088
    %5090 = vadd.xlane.f32.xlu0 %v5087
    %v5091 = vpop.xlane.xlu0 %5090
    %v5092 = vmul.f32 %v5089, %v2308
    %v5093 = vmul.f32 %v5091, %v2308
    %v5094 = vadd.f32 %v5092, 1e-05
    %v5095 = vadd.f32 %v5093, 1e-05
    %v5096 = vrsqrt.pop %v5094
    %v5097 = vrsqrt.pop %v5095
    %v5098 = vmul.f32 %v5084, %v5096
    %v5099 = vmul.f32 %v5085, %v5097
    %v5101 = vlaneseq
    %v5102 = vshrl.u32 %v5101, 7
    %v5103 = vsub.s32 0, %v5102
    %v5104 = vrot.slane %v5075, %v5103
    %v5106 = vmul.f32 %v5098, %v5104
    %v5107 = vmul.f32 %v5099, %v5104
    %v5109 = vlaneseq
    %v5110 = vshrl.u32 %v5109, 7
    %v5111 = vsub.s32 0, %v5110
    %v5112 = vrot.slane %v5077, %v5111
    %v5114 = vadd.f32 %v5106, %v5112
    %v5115 = vadd.f32 %v5107, %v5112
    %s5116 = scalar_lea.vmem [#allocation8], 512
    %v5117 = vld [vmem:[%s5116] sm:$0xff]
    %v5118 = vld [vmem:[%s5116 + $0x8] sm:$0xff]
    %v5119 = vld [vmem:[%s5116 + $0x10] sm:$0xff]
    %v5120 = vld [vmem:[%s5116 + $0x18] sm:$0xff]
    %v5121 = vld [vmem:[%s5116 + $0x20] sm:$0xff]
    %v5122 = vld [vmem:[%s5116 + $0x28] sm:$0xff]
    %v5123 = vld [vmem:[%s5116 + $0x30] sm:$0xff]
    %v5124 = vld [vmem:[%s5116 + $0x38] sm:$0xff]
    %v5125 = vld [vmem:[%s5116 + $0x40] sm:$0xff]
    %v5126 = vld [vmem:[%s5116 + $0x48] sm:$0xff]
    %v5127 = vld [vmem:[%s5116 + $0x50] sm:$0xff]
    %v5128 = vld [vmem:[%s5116 + $0x58] sm:$0xff]
    %v5129 = vld [vmem:[%s5116 + $0x60] sm:$0xff]
    %v5130 = vld [vmem:[%s5116 + $0x68] sm:$0xff]
    %v5131 = vld [vmem:[%s5116 + $0x70] sm:$0xff]
    %v5132 = vld [vmem:[%s5116 + $0x78] sm:$0xff]
    %v5133 = vld [vmem:[%s5116 + $0x80] sm:$0xff]
    %v5134 = vld [vmem:[%s5116 + $0x88] sm:$0xff]
    %v5135 = vld [vmem:[%s5116 + $0x90] sm:$0xff]
    %v5136 = vld [vmem:[%s5116 + $0x98] sm:$0xff]
    %v5137 = vld [vmem:[%s5116 + $0xa0] sm:$0xff]
    %v5138 = vld [vmem:[%s5116 + $0xa8] sm:$0xff]
    %v5139 = vld [vmem:[%s5116 + $0xb0] sm:$0xff]
    %v5140 = vld [vmem:[%s5116 + $0xb8] sm:$0xff]
    %v5141 = vld [vmem:[%s5116 + $0xc0] sm:$0xff]
    %v5142 = vld [vmem:[%s5116 + $0xc8] sm:$0xff]
    %v5143 = vld [vmem:[%s5116 + $0xd0] sm:$0xff]
    %v5144 = vld [vmem:[%s5116 + $0xd8] sm:$0xff]
    %v5145 = vld [vmem:[%s5116 + $0xe0] sm:$0xff]
    %v5146 = vld [vmem:[%s5116 + $0xe8] sm:$0xff]
    %v5147 = vld [vmem:[%s5116 + $0xf0] sm:$0xff]
    %v5148 = vld [vmem:[%s5116 + $0xf8] sm:$0xff]
    %v5149 = vld [vmem:[%s5116 + $0x100] sm:$0xff]
    %v5150 = vld [vmem:[%s5116 + $0x108] sm:$0xff]
    %v5151 = vld [vmem:[%s5116 + $0x110] sm:$0xff]
    %v5152 = vld [vmem:[%s5116 + $0x118] sm:$0xff]
    %v5153 = vld [vmem:[%s5116 + $0x120] sm:$0xff]
    %v5154 = vld [vmem:[%s5116 + $0x128] sm:$0xff]
    %v5155 = vld [vmem:[%s5116 + $0x130] sm:$0xff]
    %v5156 = vld [vmem:[%s5116 + $0x138] sm:$0xff]
    %v5157 = vld [vmem:[%s5116 + $0x140] sm:$0xff]
    %v5158 = vld [vmem:[%s5116 + $0x148] sm:$0xff]
    %v5159 = vld [vmem:[%s5116 + $0x150] sm:$0xff]
    %v5160 = vld [vmem:[%s5116 + $0x158] sm:$0xff]
    %v5161 = vld [vmem:[%s5116 + $0x160] sm:$0xff]
    %v5162 = vld [vmem:[%s5116 + $0x168] sm:$0xff]
    %v5163 = vld [vmem:[%s5116 + $0x170] sm:$0xff]
    %v5164 = vld [vmem:[%s5116 + $0x178] sm:$0xff]
    %v5165 = vld [vmem:[%s5116 + $0x180] sm:$0xff]
    %v5166 = vld [vmem:[%s5116 + $0x188] sm:$0xff]
    %v5167 = vld [vmem:[%s5116 + $0x190] sm:$0xff]
    %v5168 = vld [vmem:[%s5116 + $0x198] sm:$0xff]
    %v5169 = vld [vmem:[%s5116 + $0x1a0] sm:$0xff]
    %v5170 = vld [vmem:[%s5116 + $0x1a8] sm:$0xff]
    %v5171 = vld [vmem:[%s5116 + $0x1b0] sm:$0xff]
    %v5172 = vld [vmem:[%s5116 + $0x1b8] sm:$0xff]
    %v5173 = vld [vmem:[%s5116 + $0x1c0] sm:$0xff]
    %v5174 = vld [vmem:[%s5116 + $0x1c8] sm:$0xff]
    %v5175 = vld [vmem:[%s5116 + $0x1d0] sm:$0xff]
    %v5176 = vld [vmem:[%s5116 + $0x1d8] sm:$0xff]
    %v5177 = vld [vmem:[%s5116 + $0x1e0] sm:$0xff]
    %v5178 = vld [vmem:[%s5116 + $0x1e8] sm:$0xff]
    %v5179 = vld [vmem:[%s5116 + $0x1f0] sm:$0xff]
    %v5180 = vld [vmem:[%s5116 + $0x1f8] sm:$0xff]
    %s5181 = scalar_lea.vmem [#allocation10], 4
    %v5182 = vld [vmem:[%s5181] sm:$0xf]
    %v5184 = vlaneseq
    %v5185 = vshrl.u32 %v5184, 7
    %v5186 = vsub.s32 0, %v5185
    %v5187 = vrot.slane %v5182, %v5186
    %v5188 = vlaneseq
    %v5189 = vshrl.u32 %v5188, 7
    %v5190 = vsub.s32 1, %v5189
    %v5191 = vrot.slane %v5182, %v5190
    %v5192 = vlaneseq
    %v5193 = vshrl.u32 %v5192, 7
    %v5194 = vsub.s32 2, %v5193
    %v5195 = vrot.slane %v5182, %v5194
    %v5196 = vlaneseq
    %v5197 = vshrl.u32 %v5196, 7
    %v5198 = vsub.s32 3, %v5197
    %v5199 = vrot.slane %v5182, %v5198
    %5204 = vmatprep.subr.mxu0 %v5118
    %5205 = vmatpush1.msra.mxu0 %v5117
    %5206 = vmatprep.subr.mxu0 %v5122
    %5207 = vmatpush1.msra.mxu0 %v5121
    %5208 = vmatprep.subr.mxu0 %v5126
    %5209 = vmatpush1.msra.mxu0 %v5125
    %5210 = vmatprep.subr.mxu0 %v5130
    %5211 = vmatpush1.msra.mxu0 %v5129
    %5212 = vmatprep.subr.mxu0 %v5134
    %5213 = vmatpush1.msra.mxu0 %v5133
    %5214 = vmatprep.subr.mxu0 %v5138
    %5215 = vmatpush1.msra.mxu0 %v5137
    %5216 = vmatprep.subr.mxu0 %v5142
    %5217 = vmatpush1.msra.mxu0 %v5141
    %5218 = vmatprep.subr.mxu0 %v5146
    %5219 = vmatpush1.msra.mxu0 %v5145
    %5220 = vmatprep.subr.mxu0 %v5150
    %5221 = vmatpush1.msra.mxu0 %v5149
    %5222 = vmatprep.subr.mxu0 %v5154
    %5223 = vmatpush1.msra.mxu0 %v5153
    %5224 = vmatprep.subr.mxu0 %v5158
    %5225 = vmatpush1.msra.mxu0 %v5157
    %5226 = vmatprep.subr.mxu0 %v5162
    %5227 = vmatpush1.msra.mxu0 %v5161
    %5228 = vmatprep.subr.mxu0 %v5166
    %5229 = vmatpush1.msra.mxu0 %v5165
    %5230 = vmatprep.subr.mxu0 %v5170
    %5231 = vmatpush1.msra.mxu0 %v5169
    %5232 = vmatprep.subr.mxu0 %v5174
    %5233 = vmatpush1.msra.mxu0 %v5173
    %5234 = vmatprep.subr.mxu0 %v5178
    %5235 = vmatpush1.msra.mxu0 %v5177
    %5236 = vmatprep.subr.mxu0 0.0
    %5237 = vmatpush1.msra.mxu0 0.0
    %5238 = vmatprep.subr.mxu0 0.0
    %5239 = vmatpush1.msra.mxu0 0.0
    %5240 = vmatprep.subr.mxu0 0.0
    %5241 = vmatpush1.msra.mxu0 0.0
    %5242 = vmatprep.subr.mxu0 0.0
    %5243 = vmatpush1.msra.mxu0 0.0
    %5244 = vmatprep.subr.mxu0 0.0
    %5245 = vmatpush1.msra.mxu0 0.0
    %5246 = vmatprep.subr.mxu0 0.0
    %5247 = vmatpush1.msra.mxu0 0.0
    %5248 = vmatprep.subr.mxu0 0.0
    %5249 = vmatpush1.msra.mxu0 0.0
    %5250 = vmatprep.subr.mxu0 0.0
    %5251 = vmatpush1.msra.mxu0 0.0
    %5252 = vmatprep.subr.mxu0 0.0
    %5253 = vmatpush1.msra.mxu0 0.0
    %5254 = vmatprep.subr.mxu0 0.0
    %5255 = vmatpush1.msra.mxu0 0.0
    %5256 = vmatprep.subr.mxu0 0.0
    %5257 = vmatpush1.msra.mxu0 0.0
    %5258 = vmatprep.subr.mxu0 0.0
    %5259 = vmatpush1.msra.mxu0 0.0
    %5260 = vmatprep.subr.mxu0 0.0
    %5261 = vmatpush1.msra.mxu0 0.0
    %5262 = vmatprep.subr.mxu0 0.0
    %5263 = vmatpush1.msra.mxu0 0.0
    %5264 = vmatprep.subr.mxu0 0.0
    %5265 = vmatpush1.msra.mxu0 0.0
    %5266 = vmatprep.subr.mxu0 0.0
    %5267 = vmatpush1.msra.mxu0 0.0
    %5268 = vmatprep.mubr.f32.mxu0 0.0
    %5269 = vmatmul.mubr.f32.gmra.mrb[0].mxu0 %v5114
    %v5270 = vpop.f32.mrb[0].mxu0
    %v5271 = vadd.f32 %v5187, %v5270
    %v5272 = vpop.f32.mrb[0].mxu0
    %v5273 = vadd.f32 %v5191, %v5272
    %5274 = vmatprep.mubr.f32.mxu0 0.0
    %5275 = vmatmul.mubr.f32.gmra.mrb[0].mxu0 %v5115
    %v5276 = vpop.f32.mrb[0].mxu0
    %v5277 = vadd.f32 %v5187, %v5276
    %v5278 = vpop.f32.mrb[0].mxu0
    %v5279 = vadd.f32 %v5191, %v5278
    %5280 = vdwg.mxu0
    %5281 = vmatprep.subr.mxu0 %v5120
    %5282 = vmatpush1.msra.mxu0 %v5119
    %5283 = vmatprep.subr.mxu0 %v5124
    %5284 = vmatpush1.msra.mxu0 %v5123
    %5285 = vmatprep.subr.mxu0 %v5128
    %5286 = vmatpush1.msra.mxu0 %v5127
    %5287 = vmatprep.subr.mxu0 %v5132
    %5288 = vmatpush1.msra.mxu0 %v5131
    %5289 = vmatprep.subr.mxu0 %v5136
    %5290 = vmatpush1.msra.mxu0 %v5135
    %5291 = vmatprep.subr.mxu0 %v5140
    %5292 = vmatpush1.msra.mxu0 %v5139
    %5293 = vmatprep.subr.mxu0 %v5144
    %5294 = vmatpush1.msra.mxu0 %v5143
    %5295 = vmatprep.subr.mxu0 %v5148
    %5296 = vmatpush1.msra.mxu0 %v5147
    %5297 = vmatprep.subr.mxu0 %v5152
    %5298 = vmatpush1.msra.mxu0 %v5151
    %5299 = vmatprep.subr.mxu0 %v5156
    %5300 = vmatpush1.msra.mxu0 %v5155
    %5301 = vmatprep.subr.mxu0 %v5160
    %5302 = vmatpush1.msra.mxu0 %v5159
    %5303 = vmatprep.subr.mxu0 %v5164
    %5304 = vmatpush1.msra.mxu0 %v5163
    %5305 = vmatprep.subr.mxu0 %v5168
    %5306 = vmatpush1.msra.mxu0 %v5167
    %5307 = vmatprep.subr.mxu0 %v5172
    %5308 = vmatpush1.msra.mxu0 %v5171
    %5309 = vmatprep.subr.mxu0 %v5176
    %5310 = vmatpush1.msra.mxu0 %v5175
    %5311 = vmatprep.subr.mxu0 %v5180
    %5312 = vmatpush1.msra.mxu0 %v5179
    %5313 = vmatprep.subr.mxu0 0.0
    %5314 = vmatpush1.msra.mxu0 0.0
    %5315 = vmatprep.subr.mxu0 0.0
    %5316 = vmatpush1.msra.mxu0 0.0
    %5317 = vmatprep.subr.mxu0 0.0
    %5318 = vmatpush1.msra.mxu0 0.0
    %5319 = vmatprep.subr.mxu0 0.0
    %5320 = vmatpush1.msra.mxu0 0.0
    %5321 = vmatprep.subr.mxu0 0.0
    %5322 = vmatpush1.msra.mxu0 0.0
    %5323 = vmatprep.subr.mxu0 0.0
    %5324 = vmatpush1.msra.mxu0 0.0
    %5325 = vmatprep.subr.mxu0 0.0
    %5326 = vmatpush1.msra.mxu0 0.0
    %5327 = vmatprep.subr.mxu0 0.0
    %5328 = vmatpush1.msra.mxu0 0.0
    %5329 = vmatprep.subr.mxu0 0.0
    %5330 = vmatpush1.msra.mxu0 0.0
    %5331 = vmatprep.subr.mxu0 0.0
    %5332 = vmatpush1.msra.mxu0 0.0
    %5333 = vmatprep.subr.mxu0 0.0
    %5334 = vmatpush1.msra.mxu0 0.0
    %5335 = vmatprep.subr.mxu0 0.0
    %5336 = vmatpush1.msra.mxu0 0.0
    %5337 = vmatprep.subr.mxu0 0.0
    %5338 = vmatpush1.msra.mxu0 0.0
    %5339 = vmatprep.subr.mxu0 0.0
    %5340 = vmatpush1.msra.mxu0 0.0
    %5341 = vmatprep.subr.mxu0 0.0
    %5342 = vmatpush1.msra.mxu0 0.0
    %5343 = vmatprep.subr.mxu0 0.0
    %5344 = vmatpush1.msra.mxu0 0.0
    %5345 = vmatprep.mubr.f32.mxu0 0.0
    %5346 = vmatmul.mubr.f32.gmra.mrb[0].mxu0 %v5114
    %v5347 = vpop.f32.mrb[0].mxu0
    %v5348 = vadd.f32 %v5195, %v5347
    %v5349 = vpop.f32.mrb[0].mxu0
    %v5350 = vadd.f32 %v5199, %v5349
    %5351 = vmatprep.mubr.f32.mxu0 0.0
    %5352 = vmatmul.mubr.f32.gmra.mrb[0].mxu0 %v5115
    %v5353 = vpop.f32.mrb[0].mxu0
    %v5354 = vadd.f32 %v5195, %v5353
    %v5355 = vpop.f32.mrb[0].mxu0
    %v5356 = vadd.f32 %v5199, %v5355
    %5357 = vdwg.mxu0
    %v5358 = vmul.f32 %v5271, 0.5
    %v5359 = vmul.f32 %v5273, 0.5
    %v5360 = vmul.f32 %v5348, 0.5
    %v5361 = vmul.f32 %v5350, 0.5
    %v5362 = vmul.f32 %v5277, 0.5
    %v5363 = vmul.f32 %v5279, 0.5
    %v5364 = vmul.f32 %v5354, 0.5
    %v5365 = vmul.f32 %v5356, 0.5
    %v5366 = vmul.f32 %v5271, 0.044715
    %v5367 = vmul.f32 %v5273, 0.044715
    %v5368 = vmul.f32 %v5348, 0.044715
    %v5369 = vmul.f32 %v5350, 0.044715
    %v5370 = vmul.f32 %v5277, 0.044715
    %v5371 = vmul.f32 %v5279, 0.044715
    %v5372 = vmul.f32 %v5354, 0.044715
    %v5373 = vmul.f32 %v5356, 0.044715
    %v5374 = vmul.f32 %v5366, %v5271
    %v5375 = vmul.f32 %v5367, %v5273
    %v5376 = vmul.f32 %v5368, %v5348
    %v5377 = vmul.f32 %v5369, %v5350
    %v5378 = vmul.f32 %v5370, %v5277
    %v5379 = vmul.f32 %v5371, %v5279
    %v5380 = vmul.f32 %v5372, %v5354
    %v5381 = vmul.f32 %v5373, %v5356
    %v5382 = vmul.f32 %v5374, %v5271
    %v5383 = vmul.f32 %v5375, %v5273
    %v5384 = vmul.f32 %v5376, %v5348
    %v5385 = vmul.f32 %v5377, %v5350
    %v5386 = vmul.f32 %v5378, %v5277
    %v5387 = vmul.f32 %v5379, %v5279
    %v5388 = vmul.f32 %v5380, %v5354
    %v5389 = vmul.f32 %v5381, %v5356
    %v5390 = vadd.f32 %v5271, %v5382
    %v5391 = vadd.f32 %v5273, %v5383
    %v5392 = vadd.f32 %v5348, %v5384
    %v5393 = vadd.f32 %v5350, %v5385
    %v5394 = vadd.f32 %v5277, %v5386
    %v5395 = vadd.f32 %v5279, %v5387
    %v5396 = vadd.f32 %v5354, %v5388
    %v5397 = vadd.f32 %v5356, %v5389
    %v5398 = vmul.f32 %v5390, 0.7978846
    %v5399 = vmul.f32 %v5391, 0.7978846
    %v5400 = vmul.f32 %v5392, 0.7978846
    %v5401 = vmul.f32 %v5393, 0.7978846
    %v5402 = vmul.f32 %v5394, 0.7978846
    %v5403 = vmul.f32 %v5395, 0.7978846
    %v5404 = vmul.f32 %v5396, 0.7978846
    %v5405 = vmul.f32 %v5397, 0.7978846
    %v5406 = vtanh.pop %v5398
    %v5407 = vtanh.pop %v5399
    %v5408 = vtanh.pop %v5400
    %v5409 = vtanh.pop %v5401
    %v5410 = vtanh.pop %v5402
    %v5411 = vtanh.pop %v5403
    %v5412 = vtanh.pop %v5404
    %v5413 = vtanh.pop %v5405
    %v5414 = vadd.f32 %v5406, 1.0
    %v5415 = vadd.f32 %v5407, 1.0
    %v5416 = vadd.f32 %v5408, 1.0
    %v5417 = vadd.f32 %v5409, 1.0
    %v5418 = vadd.f32 %v5410, 1.0
    %v5419 = vadd.f32 %v5411, 1.0
    %v5420 = vadd.f32 %v5412, 1.0
    %v5421 = vadd.f32 %v5413, 1.0
    %v5422 = vmul.f32 %v5358, %v5414
    %v5423 = vmul.f32 %v5359, %v5415
    %v5424 = vmul.f32 %v5360, %v5416
    %v5425 = vmul.f32 %v5361, %v5417
    %v5426 = vmul.f32 %v5362, %v5418
    %v5427 = vmul.f32 %v5363, %v5419
    %v5428 = vmul.f32 %v5364, %v5420
    %v5429 = vmul.f32 %v5365, %v5421
    %s5430 = scalar_lea.vmem [#allocation11], 512
    %v5431 = vld [vmem:[%s5430] sm:$0xff]
    %v5432 = vld [vmem:[%s5430 + $0x8] sm:$0xff]
    %v5433 = vld [vmem:[%s5430 + $0x10] sm:$0xff]
    %v5434 = vld [vmem:[%s5430 + $0x18] sm:$0xff]
    %v5435 = vld [vmem:[%s5430 + $0x20] sm:$0xff]
    %v5436 = vld [vmem:[%s5430 + $0x28] sm:$0xff]
    %v5437 = vld [vmem:[%s5430 + $0x30] sm:$0xff]
    %v5438 = vld [vmem:[%s5430 + $0x38] sm:$0xff]
    %v5439 = vld [vmem:[%s5430 + $0x40] sm:$0xff]
    %v5440 = vld [vmem:[%s5430 + $0x48] sm:$0xff]
    %v5441 = vld [vmem:[%s5430 + $0x50] sm:$0xff]
    %v5442 = vld [vmem:[%s5430 + $0x58] sm:$0xff]
    %v5443 = vld [vmem:[%s5430 + $0x60] sm:$0xff]
    %v5444 = vld [vmem:[%s5430 + $0x68] sm:$0xff]
    %v5445 = vld [vmem:[%s5430 + $0x70] sm:$0xff]
    %v5446 = vld [vmem:[%s5430 + $0x78] sm:$0xff]
    %v5447 = vld [vmem:[%s5430 + $0x80] sm:$0xff]
    %v5448 = vld [vmem:[%s5430 + $0x88] sm:$0xff]
    %v5449 = vld [vmem:[%s5430 + $0x90] sm:$0xff]
    %v5450 = vld [vmem:[%s5430 + $0x98] sm:$0xff]
    %v5451 = vld [vmem:[%s5430 + $0xa0] sm:$0xff]
    %v5452 = vld [vmem:[%s5430 + $0xa8] sm:$0xff]
    %v5453 = vld [vmem:[%s5430 + $0xb0] sm:$0xff]
    %v5454 = vld [vmem:[%s5430 + $0xb8] sm:$0xff]
    %v5455 = vld [vmem:[%s5430 + $0xc0] sm:$0xff]
    %v5456 = vld [vmem:[%s5430 + $0xc8] sm:$0xff]
    %v5457 = vld [vmem:[%s5430 + $0xd0] sm:$0xff]
    %v5458 = vld [vmem:[%s5430 + $0xd8] sm:$0xff]
    %v5459 = vld [vmem:[%s5430 + $0xe0] sm:$0xff]
    %v5460 = vld [vmem:[%s5430 + $0xe8] sm:$0xff]
    %v5461 = vld [vmem:[%s5430 + $0xf0] sm:$0xff]
    %v5462 = vld [vmem:[%s5430 + $0xf8] sm:$0xff]
    %v5463 = vld [vmem:[%s5430 + $0x100] sm:$0xff]
    %v5464 = vld [vmem:[%s5430 + $0x108] sm:$0xff]
    %v5465 = vld [vmem:[%s5430 + $0x110] sm:$0xff]
    %v5466 = vld [vmem:[%s5430 + $0x118] sm:$0xff]
    %v5467 = vld [vmem:[%s5430 + $0x120] sm:$0xff]
    %v5468 = vld [vmem:[%s5430 + $0x128] sm:$0xff]
    %v5469 = vld [vmem:[%s5430 + $0x130] sm:$0xff]
    %v5470 = vld [vmem:[%s5430 + $0x138] sm:$0xff]
    %v5471 = vld [vmem:[%s5430 + $0x140] sm:$0xff]
    %v5472 = vld [vmem:[%s5430 + $0x148] sm:$0xff]
    %v5473 = vld [vmem:[%s5430 + $0x150] sm:$0xff]
    %v5474 = vld [vmem:[%s5430 + $0x158] sm:$0xff]
    %v5475 = vld [vmem:[%s5430 + $0x160] sm:$0xff]
    %v5476 = vld [vmem:[%s5430 + $0x168] sm:$0xff]
    %v5477 = vld [vmem:[%s5430 + $0x170] sm:$0xff]
    %v5478 = vld [vmem:[%s5430 + $0x178] sm:$0xff]
    %v5479 = vld [vmem:[%s5430 + $0x180] sm:$0xff]
    %v5480 = vld [vmem:[%s5430 + $0x188] sm:$0xff]
    %v5481 = vld [vmem:[%s5430 + $0x190] sm:$0xff]
    %v5482 = vld [vmem:[%s5430 + $0x198] sm:$0xff]
    %v5483 = vld [vmem:[%s5430 + $0x1a0] sm:$0xff]
    %v5484 = vld [vmem:[%s5430 + $0x1a8] sm:$0xff]
    %v5485 = vld [vmem:[%s5430 + $0x1b0] sm:$0xff]
    %v5486 = vld [vmem:[%s5430 + $0x1b8] sm:$0xff]
    %v5487 = vld [vmem:[%s5430 + $0x1c0] sm:$0xff]
    %v5488 = vld [vmem:[%s5430 + $0x1c8] sm:$0xff]
    %v5489 = vld [vmem:[%s5430 + $0x1d0] sm:$0xff]
    %v5490 = vld [vmem:[%s5430 + $0x1d8] sm:$0xff]
    %v5491 = vld [vmem:[%s5430 + $0x1e0] sm:$0xff]
    %v5492 = vld [vmem:[%s5430 + $0x1e8] sm:$0xff]
    %v5493 = vld [vmem:[%s5430 + $0x1f0] sm:$0xff]
    %v5494 = vld [vmem:[%s5430 + $0x1f8] sm:$0xff]
    %s5495 = scalar_lea.vmem [#allocation13], 1
    %v5496 = vld [vmem:[%s5495] sm:$0x1]
    %v5498 = vlaneseq
    %v5499 = vshrl.u32 %v5498, 7
    %v5500 = vsub.s32 0, %v5499
    %v5501 = vrot.slane %v5496, %v5500
    %5503 = vmatprep.subr.mxu0 0.0
    %5504 = vmatpush1.msra.mxu0 %v5431
    %5505 = vmatprep.subr.mxu0 0.0
    %5506 = vmatpush1.msra.mxu0 %v5432
    %5507 = vmatprep.subr.mxu0 0.0
    %5508 = vmatpush1.msra.mxu0 %v5433
    %5509 = vmatprep.subr.mxu0 0.0
    %5510 = vmatpush1.msra.mxu0 %v5434
    %5511 = vmatprep.subr.mxu0 0.0
    %5512 = vmatpush1.msra.mxu0 %v5435
    %5513 = vmatprep.subr.mxu0 0.0
    %5514 = vmatpush1.msra.mxu0 %v5436
    %5515 = vmatprep.subr.mxu0 0.0
    %5516 = vmatpush1.msra.mxu0 %v5437
    %5517 = vmatprep.subr.mxu0 0.0
    %5518 = vmatpush1.msra.mxu0 %v5438
    %5519 = vmatprep.subr.mxu0 0.0
    %5520 = vmatpush1.msra.mxu0 %v5439
    %5521 = vmatprep.subr.mxu0 0.0
    %5522 = vmatpush1.msra.mxu0 %v5440
    %5523 = vmatprep.subr.mxu0 0.0
    %5524 = vmatpush1.msra.mxu0 %v5441
    %5525 = vmatprep.subr.mxu0 0.0
    %5526 = vmatpush1.msra.mxu0 %v5442
    %5527 = vmatprep.subr.mxu0 0.0
    %5528 = vmatpush1.msra.mxu0 %v5443
    %5529 = vmatprep.subr.mxu0 0.0
    %5530 = vmatpush1.msra.mxu0 %v5444
    %5531 = vmatprep.subr.mxu0 0.0
    %5532 = vmatpush1.msra.mxu0 %v5445
    %5533 = vmatprep.subr.mxu0 0.0
    %5534 = vmatpush1.msra.mxu0 %v5446
    %5535 = vmatprep.subr.mxu0 0.0
    %5536 = vmatpush1.msra.mxu0 %v5447
    %5537 = vmatprep.subr.mxu0 0.0
    %5538 = vmatpush1.msra.mxu0 %v5448
    %5539 = vmatprep.subr.mxu0 0.0
    %5540 = vmatpush1.msra.mxu0 %v5449
    %5541 = vmatprep.subr.mxu0 0.0
    %5542 = vmatpush1.msra.mxu0 %v5450
    %5543 = vmatprep.subr.mxu0 0.0
    %5544 = vmatpush1.msra.mxu0 %v5451
    %5545 = vmatprep.subr.mxu0 0.0
    %5546 = vmatpush1.msra.mxu0 %v5452
    %5547 = vmatprep.subr.mxu0 0.0
    %5548 = vmatpush1.msra.mxu0 %v5453
    %5549 = vmatprep.subr.mxu0 0.0
    %5550 = vmatpush1.msra.mxu0 %v5454
    %5551 = vmatprep.subr.mxu0 0.0
    %5552 = vmatpush1.msra.mxu0 %v5455
    %5553 = vmatprep.subr.mxu0 0.0
    %5554 = vmatpush1.msra.mxu0 %v5456
    %5555 = vmatprep.subr.mxu0 0.0
    %5556 = vmatpush1.msra.mxu0 %v5457
    %5557 = vmatprep.subr.mxu0 0.0
    %5558 = vmatpush1.msra.mxu0 %v5458
    %5559 = vmatprep.subr.mxu0 0.0
    %5560 = vmatpush1.msra.mxu0 %v5459
    %5561 = vmatprep.subr.mxu0 0.0
    %5562 = vmatpush1.msra.mxu0 %v5460
    %5563 = vmatprep.subr.mxu0 0.0
    %5564 = vmatpush1.msra.mxu0 %v5461
    %5565 = vmatprep.subr.mxu0 0.0
    %5566 = vmatpush1.msra.mxu0 %v5462
    %5567 = vmatprep.mubr.f32.mxu0 %v5423
    %5568 = vmatmul.mubr.f32.gmra.mrb[0].mxu0 %v5422
    %v5569 = vpop.f32.mrb[0].mxu0
    %v5570 = vadd.f32 %v5501, %v5569
    %v5571 = vpop.f32.mrb[0].mxu0
    %5572 = vmatprep.mubr.f32.mxu0 %v5427
    %5573 = vmatmul.mubr.f32.gmra.mrb[0].mxu0 %v5426
    %v5574 = vpop.f32.mrb[0].mxu0
    %v5575 = vadd.f32 %v5501, %v5574
    %v5576 = vpop.f32.mrb[0].mxu0
    %5577 = vdwg.mxu0
    %5578 = vmatprep.subr.mxu0 0.0
    %5579 = vmatpush1.msra.mxu0 %v5463
    %5580 = vmatprep.subr.mxu0 0.0
    %5581 = vmatpush1.msra.mxu0 %v5464
    %5582 = vmatprep.subr.mxu0 0.0
    %5583 = vmatpush1.msra.mxu0 %v5465
    %5584 = vmatprep.subr.mxu0 0.0
    %5585 = vmatpush1.msra.mxu0 %v5466
    %5586 = vmatprep.subr.mxu0 0.0
    %5587 = vmatpush1.msra.mxu0 %v5467
    %5588 = vmatprep.subr.mxu0 0.0
    %5589 = vmatpush1.msra.mxu0 %v5468
    %5590 = vmatprep.subr.mxu0 0.0
    %5591 = vmatpush1.msra.mxu0 %v5469
    %5592 = vmatprep.subr.mxu0 0.0
    %5593 = vmatpush1.msra.mxu0 %v5470
    %5594 = vmatprep.subr.mxu0 0.0
    %5595 = vmatpush1.msra.mxu0 %v5471
    %5596 = vmatprep.subr.mxu0 0.0
    %5597 = vmatpush1.msra.mxu0 %v5472
    %5598 = vmatprep.subr.mxu0 0.0
    %5599 = vmatpush1.msra.mxu0 %v5473
    %5600 = vmatprep.subr.mxu0 0.0
    %5601 = vmatpush1.msra.mxu0 %v5474
    %5602 = vmatprep.subr.mxu0 0.0
    %5603 = vmatpush1.msra.mxu0 %v5475
    %5604 = vmatprep.subr.mxu0 0.0
    %5605 = vmatpush1.msra.mxu0 %v5476
    %5606 = vmatprep.subr.mxu0 0.0
    %5607 = vmatpush1.msra.mxu0 %v5477
    %5608 = vmatprep.subr.mxu0 0.0
    %5609 = vmatpush1.msra.mxu0 %v5478
    %5610 = vmatprep.subr.mxu0 0.0
    %5611 = vmatpush1.msra.mxu0 %v5479
    %5612 = vmatprep.subr.mxu0 0.0
    %5613 = vmatpush1.msra.mxu0 %v5480
    %5614 = vmatprep.subr.mxu0 0.0
    %5615 = vmatpush1.msra.mxu0 %v5481
    %5616 = vmatprep.subr.mxu0 0.0
    %5617 = vmatpush1.msra.mxu0 %v5482
    %5618 = vmatprep.subr.mxu0 0.0
    %5619 = vmatpush1.msra.mxu0 %v5483
    %5620 = vmatprep.subr.mxu0 0.0
    %5621 = vmatpush1.msra.mxu0 %v5484
    %5622 = vmatprep.subr.mxu0 0.0
    %5623 = vmatpush1.msra.mxu0 %v5485
    %5624 = vmatprep.subr.mxu0 0.0
    %5625 = vmatpush1.msra.mxu0 %v5486
    %5626 = vmatprep.subr.mxu0 0.0
    %5627 = vmatpush1.msra.mxu0 %v5487
    %5628 = vmatprep.subr.mxu0 0.0
    %5629 = vmatpush1.msra.mxu0 %v5488
    %5630 = vmatprep.subr.mxu0 0.0
    %5631 = vmatpush1.msra.mxu0 %v5489
    %5632 = vmatprep.subr.mxu0 0.0
    %5633 = vmatpush1.msra.mxu0 %v5490
    %5634 = vmatprep.subr.mxu0 0.0
    %5635 = vmatpush1.msra.mxu0 %v5491
    %5636 = vmatprep.subr.mxu0 0.0
    %5637 = vmatpush1.msra.mxu0 %v5492
    %5638 = vmatprep.subr.mxu0 0.0
    %5639 = vmatpush1.msra.mxu0 %v5493
    %5640 = vmatprep.subr.mxu0 0.0
    %5641 = vmatpush1.msra.mxu0 %v5494
    %5642 = vmatprep.mubr.f32.mxu0 %v5425
    %5643 = vmatmul.mubr.f32.gmra.mrb[0].mxu0 %v5424
    %v5644 = vpop.f32.mrb[0].mxu0
    %v5645 = vadd.f32 %v5570, %v5644
    %v5646 = vpop.f32.mrb[0].mxu0
    %5647 = vmatprep.mubr.f32.mxu0 %v5429
    %5648 = vmatmul.mubr.f32.gmra.mrb[0].mxu0 %v5428
    %v5649 = vpop.f32.mrb[0].mxu0
    %v5650 = vadd.f32 %v5575, %v5649
    %v5651 = vpop.f32.mrb[0].mxu0
    %5652 = vdwg.mxu0
    %v5653 = vadd.f32 %v5645, %v5114
    %v5654 = vadd.f32 %v5650, %v5115
    %s5655 = scalar_lea.vmem %s12, 1
    %v5656 = vld [vmem:[%s5655] sm:$0x1]
    %s5657 = scalar_lea.vmem %s13, 1
    %v5658 = vld [vmem:[%s5657] sm:$0x1]
    %5659 = vadd.xlane.f32.xlu0 %v5653
    %v5660 = vpop.xlane.xlu0 %5659
    %5661 = vadd.xlane.f32.xlu0 %v5654
    %v5662 = vpop.xlane.xlu0 %5661
    %v5663 = vmul.f32 %v5660, %v2308
    %v5664 = vmul.f32 %v5662, %v2308
    %v5665 = vsub.f32 %v5653, %v5663
    %v5666 = vsub.f32 %v5654, %v5664
    %v5667 = vmul.f32 %v5665, %v5665
    %v5668 = vmul.f32 %v5666, %v5666
    %5669 = vadd.xlane.f32.xlu0 %v5667
    %v5670 = vpop.xlane.xlu0 %5669
    %5671 = vadd.xlane.f32.xlu0 %v5668
    %v5672 = vpop.xlane.xlu0 %5671
    %v5673 = vmul.f32 %v5670, %v2308
    %v5674 = vmul.f32 %v5672, %v2308
    %v5675 = vadd.f32 %v5673, 1e-05
    %v5676 = vadd.f32 %v5674, 1e-05
    %v5677 = vrsqrt.pop %v5675
    %v5678 = vrsqrt.pop %v5676
    %v5679 = vmul.f32 %v5665, %v5677
    %v5680 = vmul.f32 %v5666, %v5678
    %v5682 = vlaneseq
    %v5683 = vshrl.u32 %v5682, 7
    %v5684 = vsub.s32 0, %v5683
    %v5685 = vrot.slane %v5656, %v5684
    %v5687 = vmul.f32 %v5679, %v5685
    %v5688 = vmul.f32 %v5680, %v5685
    %v5690 = vlaneseq
    %v5691 = vshrl.u32 %v5690, 7
    %v5692 = vsub.s32 0, %v5691
    %v5693 = vrot.slane %v5658, %v5692
    %v5695 = vadd.f32 %v5687, %v5693
    %v5696 = vadd.f32 %v5688, %v5693
    %5697 = vst [vmem:[#allocation14] sm:$0xff] %v5695
    %5698 = vst [vmem:[#allocation14 + $0x8] sm:$0xff] %v5696
    // Predicated region
    $region86: #{bert_forward.1} parent=1 // pred_check
      _
    $region87: #{bert_forward.1} parent=1 // pred_check_branch
      %5700 = sbr.rel (0) target = $region89
    $region88: #{bert_forward.1} parent=1 // pred_region
      %s5702 = ssub.s32 256, 256
      %5703 = vsyncadd [#allocation4], %s5702
      %s5704 = sshll.u32 [#allocation14], 4
      %s5705 = int_to_ptr.vmem [resolvable:$true] %s5704
      %5710 = dma.vmem_to_hbm [thread:$0]  %s5705, 256, %s14, [#allocation4], 128, 128, 8
    $region89: #{bert_forward.1} parent=1 // pred_fallthru
      _
    // Predicated region
    $region90: #{bert_forward.1} parent=1 // pred_check
      _
    $region91: #{bert_forward.1} parent=1 // pred_check_branch
      %5712 = sbr.rel (0) target = $region93
    $region92: #{bert_forward.1} parent=1 // pred_region
      %5713 = dma.done [#allocation4], 256
    $region93: #{bert_forward.1} parent=1 // pred_fallthru
      _
    %5714 = vsyncpa [#allocation3], 1
    %5715 = vsyncpa [#allocation6], 1
    %5716 = vsyncpa [#allocation9], 1
    %5717 = vsyncpa [#allocation12], 1
    %5718 = vsyncpa [#allocation4], 1

</llo_original>
